<compile_context>
chip_gen: v7x
topology: tpu7x:2x2x1
jax: 0.10.0
libtpu: 0.0.40
codegen_flags: <defaults>
</compile_context>

<pallas_src>
import functools

import jax
import jax.numpy as jnp
from jax.experimental import pallas as pl
from jax.experimental.pallas import tpu as pltpu


def _round_up(v, m):
    return (v + m - 1) // m * m


# ----------------------------------------------------------------------------
# Fused forward kernel: conv1 -> conv2 -> classifier head + neuron head
# ----------------------------------------------------------------------------
def _fused_forward_kernel(
    x_ref,      # (X_ROWS, CIN_P)  zero-padded, spatially-flattened input image
    mask_ref,   # (HWIN_P, 1)      1.0 where an accumulator row is a real pixel
    w1_ref,     # (9, CIN_P, C1P)  conv1 weights, one (Cin, Cout) slab per tap
    b1_ref,     # (1, C1P)
    w2_ref,     # (9, C1P, C2P)
    b2_ref,     # (1, C2P)
    fcw_ref,    # (C2P, NCLS_P)
    fcb_ref,    # (1, NCLS_P)
    ow_ref,     # (C1P, NNEU_P)
    ob_ref,     # (1, NNEU_P)
    clf_ref,    # out (1, NCLS_P)
    neu_ref,    # out (1, NNEU_P)
    a1p_ref,    # scratch (A1_ROWS, C1P) f32: zero-padded act1 (conv2's input)
    *,
    wp,         # padded image width  (W + 2)
    hwin,       # number of rows per shifted conv window (>= H*(W+2), mult of 8)
    a1_shift,   # sublane-alignment shift applied to act1's position in a1p_ref
    inv_hw,     # 1.0 / (H * W)
):
    f32 = jnp.float32
    taps = [ky * wp + kx for ky in range(3) for kx in range(3)]
    mask = mask_ref[...]                                        # (HWIN, 1)
    ones_row = jnp.ones((1, hwin), f32)

    # ---- conv1: 9 shifted accumulating MXU dots; accumulator stays in vregs --
    acc1 = jnp.dot(x_ref[pl.ds(taps[0], hwin), :], w1_ref[0],
                   preferred_element_type=f32)
    for k in range(1, 9):
        acc1 = acc1 + jnp.dot(x_ref[pl.ds(taps[k], hwin), :], w1_ref[k],
                              preferred_element_type=f32)
    act1 = jnp.maximum(acc1 + b1_ref[...], 0.0) * mask          # (HWIN, C1P)

    # Neuron-head global-avg-pool fused into the conv1 epilogue, on the MXU.
    pooled1 = jnp.dot(ones_row, act1, preferred_element_type=f32) * inv_hw

    # Re-pad act1 into conv2's flattened-padded layout.  The interior store
    # starts at a multiple-of-8 sublane offset (a1_shift chosen for that).
    a1p_ref[...] = jnp.zeros_like(a1p_ref)
    a1p_ref[pl.ds(a1_shift + wp + 1, hwin), :] = act1

    # ---- conv2: same 9-tap accumulation over the VMEM-resident padded act1 ---
    acc2 = jnp.dot(a1p_ref[pl.ds(taps[0] + a1_shift, hwin), :], w2_ref[0],
                   preferred_element_type=f32)
    for k in range(1, 9):
        acc2 = acc2 + jnp.dot(a1p_ref[pl.ds(taps[k] + a1_shift, hwin), :],
                              w2_ref[k], preferred_element_type=f32)
    act2 = jnp.maximum(acc2 + b2_ref[...], 0.0) * mask          # (HWIN, C2P)
    pooled2 = jnp.dot(ones_row, act2, preferred_element_type=f32) * inv_hw

    # ---- classifier head: GAP(act2) @ fc (lane-dense, 128-wide output) -------
    clf = jnp.dot(pooled2, fcw_ref[...], preferred_element_type=f32) + fcb_ref[...]
    clf_ref[...] = clf.astype(clf_ref.dtype)

    # ---- neuron head: GAP(act1) @ out_w, then ELU + 1 (256-wide output) ------
    z = jnp.dot(pooled1, ow_ref[...], preferred_element_type=f32) + ob_ref[...]
    elu = jnp.where(z > 0.0, z, jnp.exp(jnp.minimum(z, 0.0)) - 1.0)
    neu_ref[...] = (elu + 1.0).astype(neu_ref.dtype)


# ----------------------------------------------------------------------------
# Wrapper: layout prep (tiny XLA glue) + single pallas_call
# ----------------------------------------------------------------------------
def neuron_net_forward(params, x_nchw):
    """Returns (clf_out, neuron_out), matching the PyTorch module semantics."""
    f32 = jnp.float32
    n, cin, h, w = x_nchw.shape
    c1 = params["conv1_w"].shape[3]
    c2 = params["conv2_w"].shape[3]
    n_cls = params["fc_w"].shape[1]
    n_neu = params["out_w"].shape[1]

    cin_p = _round_up(cin, 8)           # contraction dims sublane-aligned
    c1_p = _round_up(c1, 8)
    c2_p = _round_up(c2, 8)
    ncls_p = _round_up(n_cls, 128)      # lane-dense head outputs
    nneu_p = _round_up(n_neu, 128)

    hp, wp = h + 2, w + 2
    hwin = _round_up(h * wp, 8)         # rows per shifted conv window
    x_rows = _round_up(2 * wp + 2 + hwin, 8)        # last tap stays in-bounds
    a1_off = _round_up(wp + 1, 8)                   # aligned act1 store offset
    a1_shift = a1_off - (wp + 1)
    a1_rows = _round_up(2 * wp + 2 + a1_shift + hwin, 8)

    # ---- wrapper-side layout prep (pure, tiny data movement) -----------------
    xt = jnp.transpose(x_nchw, (0, 2, 3, 1))                              # NHWC
    xp = jnp.pad(xt, ((0, 0), (1, 1), (1, 1), (0, cin_p - cin)))          # pad
    xf = xp.reshape(n, hp * wp, cin_p)
    xf = jnp.pad(xf, ((0, 0), (0, x_rows - hp * wp), (0, 0)))             # rows

    q = jnp.arange(hwin, dtype=jnp.int32)
    mask = ((q < h * wp) & ((q % wp) < w)).astype(f32).reshape(hwin, 1)

    # Zero-padded weights / biases (padded rows & columns are zero so they never
    # leak into valid outputs; the wrapper slices the valid columns back out).
    w1 = jnp.zeros((9, cin_p, c1_p), f32).at[:, :cin, :c1].set(
        params["conv1_w"].reshape(9, cin, c1))
    b1 = jnp.zeros((1, c1_p), f32).at[0, :c1].set(params["conv1_b"])
    w2 = jnp.zeros((9, c1_p, c2_p), f32).at[:, :c1, :c2].set(
        params["conv2_w"].reshape(9, c1, c2))
    b2 = jnp.zeros((1, c2_p), f32).at[0, :c2].set(params["conv2_b"])
    fcw = jnp.zeros((c2_p, ncls_p), f32).at[:c2, :n_cls].set(params["fc_w"])
    fcb = jnp.zeros((1, ncls_p), f32).at[0, :n_cls].set(params["fc_b"])
    ow = jnp.zeros((c1_p, nneu_p), f32).at[:c1, :n_neu].set(params["out_w"])
    ob = jnp.zeros((1, nneu_p), f32).at[0, :n_neu].set(params["out_b"])

    kernel = functools.partial(
        _fused_forward_kernel, wp=wp, hwin=hwin, a1_shift=a1_shift,
        inv_hw=1.0 / (h * w))

    flops = n * (9 * 2 * hwin * cin_p * c1_p
                 + 9 * 2 * hwin * c1_p * c2_p
                 + 2 * hwin * (c1_p + c2_p)
                 + 2 * c2_p * ncls_p + 2 * c1_p * nneu_p)
    bytes_accessed = 4 * (xf.size + mask.size + w1.size + b1.size + w2.size
                          + b2.size + fcw.size + fcb.size + ow.size + ob.size
                          + n * (ncls_p + nneu_p))

    grid_spec = pltpu.PrefetchScalarGridSpec(
        num_scalar_prefetch=0,
        grid=(n,),
        in_specs=[
            pl.BlockSpec((None, x_rows, cin_p), lambda b: (b, 0, 0)),   # x
            pl.BlockSpec((hwin, 1), lambda b: (0, 0)),                  # mask
            pl.BlockSpec((9, cin_p, c1_p), lambda b: (0, 0, 0)),        # w1
            pl.BlockSpec((1, c1_p), lambda b: (0, 0)),                  # b1
            pl.BlockSpec((9, c1_p, c2_p), lambda b: (0, 0, 0)),         # w2
            pl.BlockSpec((1, c2_p), lambda b: (0, 0)),                  # b2
            pl.BlockSpec((c2_p, ncls_p), lambda b: (0, 0)),             # fc_w
            pl.BlockSpec((1, ncls_p), lambda b: (0, 0)),                # fc_b
            pl.BlockSpec((c1_p, nneu_p), lambda b: (0, 0)),             # out_w
            pl.BlockSpec((1, nneu_p), lambda b: (0, 0)),                # out_b
        ],
        out_specs=[
            pl.BlockSpec((None, 1, ncls_p), lambda b: (b, 0, 0)),       # clf
            pl.BlockSpec((None, 1, nneu_p), lambda b: (b, 0, 0)),       # neurons
        ],
        scratch_shapes=[
            pltpu.VMEM((a1_rows, c1_p), f32),   # zero-padded act1 (conv2 input)
        ],
    )

    clf_pad, neu_pad = pl.pallas_call(
        kernel,
        grid_spec=grid_spec,
        out_shape=(jax.ShapeDtypeStruct((n, 1, ncls_p), f32),
                   jax.ShapeDtypeStruct((n, 1, nneu_p), f32)),
        compiler_params=pltpu.CompilerParams(
            dimension_semantics=("parallel",)),
        cost_estimate=pl.CostEstimate(
            flops=flops, transcendentals=n * nneu_p,
            bytes_accessed=bytes_accessed),
    )(xf, mask, w1, b1, w2, b2, fcw, fcb, ow, ob)

    clf_out = clf_pad[:, 0, :n_cls]
    neuron_out = neu_pad[:, 0, :n_neu]
    return clf_out, neuron_out


# ----------------------------------------------------------------------------
# Parameters + pure-JAX reference (for correctness check)
# ----------------------------------------------------------------------------
def init_params(key, cin=3, c_act=8, c2=16, n_classes=10, n_neurons_out=255):
    ks = jax.random.split(key, 8)
    s = 0.1
    return {
        "conv1_w": s * jax.random.normal(ks[0], (3, 3, cin, c_act), jnp.float32),
        "conv1_b": s * jax.random.normal(ks[1], (c_act,), jnp.float32),
        "conv2_w": s * jax.random.normal(ks[2], (3, 3, c_act, c2), jnp.float32),
        "conv2_b": s * jax.random.normal(ks[3], (c2,), jnp.float32),
        "fc_w": s * jax.random.normal(ks[4], (c2, n_classes), jnp.float32),
        "fc_b": s * jax.random.normal(ks[5], (n_classes,), jnp.float32),
        "out_w": s * jax.random.normal(ks[6], (c_act, n_neurons_out), jnp.float32),
        "out_b": s * jax.random.normal(ks[7], (n_neurons_out,), jnp.float32),
    }


def _ref_conv3x3_relu(x_nhwc, w_hwio, b):
    y = jax.lax.conv_general_dilated(
        x_nhwc, w_hwio, window_strides=(1, 1), padding="SAME",
        dimension_numbers=("NHWC", "HWIO", "NHWC"))
    return jnp.maximum(y + b, 0.0)


def _ref_forward(params, x_nchw):
    x = jnp.transpose(x_nchw, (0, 2, 3, 1))
    act1 = _ref_conv3x3_relu(x, params["conv1_w"], params["conv1_b"])
    act2 = _ref_conv3x3_relu(act1, params["conv2_w"], params["conv2_b"])
    clf = jnp.mean(act2, axis=(1, 2)) @ params["fc_w"] + params["fc_b"]
    neuron = jnp.mean(act1, axis=(1, 2)) @ params["out_w"] + params["out_b"]
    neuron = jnp.where(neuron > 0, neuron,
                       jnp.exp(jnp.minimum(neuron, 0.0)) - 1.0) + 1.0
    return clf, neuron


# ----------------------------------------------------------------------------
if __name__ == "__main__":
    # small shapes: batch=2, img=(3,16,16), hooked channels=8, n_neurons_out=255
    key = jax.random.PRNGKey(0)
    kx, kp = jax.random.split(key)
    x = jax.random.normal(kx, (2, 3, 16, 16), jnp.float32)        # NCHW input
    params = init_params(kp)

    fwd = jax.jit(neuron_net_forward)
    clf_out, neuron_out = fwd(params, x)
    jax.block_until_ready((clf_out, neuron_out))

    clf_ref, neuron_ref = _ref_forward(params, x)
    assert clf_out.shape == (2, 10) and neuron_out.shape == (2, 255)
    assert jnp.allclose(clf_out, clf_ref, atol=5e-3, rtol=5e-3)
    assert jnp.allclose(neuron_out, neuron_ref, atol=5e-3, rtol=5e-3)

    print("KERNEL_OK")
</pallas_src>

<mosaic_0001>
module attributes {stable_mosaic.version = 11 : i64} {
  func.func @_fused_forward_kernel(%arg0: i32, %arg1: memref<1x328x8xf32, #tpu.memory_space<vmem>>, %arg2: memref<288x1xf32, #tpu.memory_space<vmem>>, %arg3: memref<9x8x8xf32, #tpu.memory_space<vmem>>, %arg4: memref<1x8xf32, #tpu.memory_space<vmem>>, %arg5: memref<9x8x16xf32, #tpu.memory_space<vmem>>, %arg6: memref<1x16xf32, #tpu.memory_space<vmem>>, %arg7: memref<16x128xf32, #tpu.memory_space<vmem>>, %arg8: memref<1x128xf32, #tpu.memory_space<vmem>>, %arg9: memref<8x256xf32, #tpu.memory_space<vmem>>, %arg10: memref<1x256xf32, #tpu.memory_space<vmem>>, %arg11: memref<1x1x128xf32, #tpu.memory_space<vmem>>, %arg12: memref<1x1x256xf32, #tpu.memory_space<vmem>>, %arg13: memref<336x8xf32, #tpu.memory_space<vmem>>) attributes {dimension_semantics = [#tpu.dimension_semantics<parallel>], iteration_bounds = array<i64: 2>, scalar_prefetch = 0 : i64, scratch_operands = 1 : i64, tpu.core_type = #tpu.core_type<tc>, window_params = [{transform_indices = @transform_0, window_bounds = array<i64: 1, 328, 8>}, {pipeline_mode = #tpu.pipeline_mode<synchronous>, transform_indices = @transform_1, window_bounds = array<i64: 288, 1>}, {pipeline_mode = #tpu.pipeline_mode<synchronous>, transform_indices = @transform_2, window_bounds = array<i64: 9, 8, 8>}, {pipeline_mode = #tpu.pipeline_mode<synchronous>, transform_indices = @transform_3, window_bounds = array<i64: 1, 8>}, {pipeline_mode = #tpu.pipeline_mode<synchronous>, transform_indices = @transform_4, window_bounds = array<i64: 9, 8, 16>}, {pipeline_mode = #tpu.pipeline_mode<synchronous>, transform_indices = @transform_5, window_bounds = array<i64: 1, 16>}, {pipeline_mode = #tpu.pipeline_mode<synchronous>, transform_indices = @transform_6, window_bounds = array<i64: 16, 128>}, {pipeline_mode = #tpu.pipeline_mode<synchronous>, transform_indices = @transform_7, window_bounds = array<i64: 1, 128>}, {pipeline_mode = #tpu.pipeline_mode<synchronous>, transform_indices = @transform_8, window_bounds = array<i64: 8, 256>}, {pipeline_mode = #tpu.pipeline_mode<synchronous>, transform_indices = @transform_9, window_bounds = array<i64: 1, 256>}, {transform_indices = @transform_10, window_bounds = array<i64: 1, 1, 128>}, {transform_indices = @transform_11, window_bounds = array<i64: 1, 1, 256>}]} {
    %c0 = arith.constant 0 : index
    %c0_0 = arith.constant 0 : index
    %0 = vector.load %arg2[%c0, %c0_0] : memref<288x1xf32, #tpu.memory_space<vmem>>, vector<288x1xf32>
    %cst = arith.constant 1.000000e+00 : f32
    %1 = vector.broadcast %cst : f32 to vector<1x288xf32>
    %c0_1 = arith.constant 0 : index
    %c0_2 = arith.constant 0 : index
    %c0_3 = arith.constant 0 : index
    %2 = vector.load %arg1[%c0_1, %c0_2, %c0_3] : memref<1x328x8xf32, #tpu.memory_space<vmem>>, vector<1x288x8xf32>
    %3 = vector.shape_cast %2 : vector<1x288x8xf32> to vector<288x8xf32>
    %c0_4 = arith.constant 0 : index
    %c0_5 = arith.constant 0 : index
    %c0_6 = arith.constant 0 : index
    %4 = vector.load %arg3[%c0_4, %c0_5, %c0_6] : memref<9x8x8xf32, #tpu.memory_space<vmem>>, vector<1x8x8xf32>
    %5 = vector.shape_cast %4 : vector<1x8x8xf32> to vector<8x8xf32>
    %cst_7 = arith.constant dense<0.000000e+00> : vector<288x8xf32>
    %6 = tpu.matmul %3, %5, %cst_7 {dimension_numbers = #tpu.dot_dimension_numbers<[1], [0], [0], [1], [0, 0, 1, 1], [], []>} : vector<288x8xf32>, vector<8x8xf32>, vector<288x8xf32> -> vector<288x8xf32>
    %c0_8 = arith.constant 0 : index
    %c1 = arith.constant 1 : index
    %c0_9 = arith.constant 0 : index
    %7 = vector.load %arg1[%c0_8, %c1, %c0_9] : memref<1x328x8xf32, #tpu.memory_space<vmem>>, vector<1x288x8xf32>
    %8 = vector.shape_cast %7 : vector<1x288x8xf32> to vector<288x8xf32>
    %c1_10 = arith.constant 1 : index
    %c0_11 = arith.constant 0 : index
    %c0_12 = arith.constant 0 : index
    %9 = vector.load %arg3[%c1_10, %c0_11, %c0_12] : memref<9x8x8xf32, #tpu.memory_space<vmem>>, vector<1x8x8xf32>
    %10 = vector.shape_cast %9 : vector<1x8x8xf32> to vector<8x8xf32>
    %cst_13 = arith.constant dense<0.000000e+00> : vector<288x8xf32>
    %11 = tpu.matmul %8, %10, %cst_13 {dimension_numbers = #tpu.dot_dimension_numbers<[1], [0], [0], [1], [0, 0, 1, 1], [], []>} : vector<288x8xf32>, vector<8x8xf32>, vector<288x8xf32> -> vector<288x8xf32>
    %12 = arith.addf %6, %11 : vector<288x8xf32>
    %c0_14 = arith.constant 0 : index
    %c2 = arith.constant 2 : index
    %c0_15 = arith.constant 0 : index
    %13 = vector.load %arg1[%c0_14, %c2, %c0_15] : memref<1x328x8xf32, #tpu.memory_space<vmem>>, vector<1x288x8xf32>
    %14 = vector.shape_cast %13 : vector<1x288x8xf32> to vector<288x8xf32>
    %c2_16 = arith.constant 2 : index
    %c0_17 = arith.constant 0 : index
    %c0_18 = arith.constant 0 : index
    %15 = vector.load %arg3[%c2_16, %c0_17, %c0_18] : memref<9x8x8xf32, #tpu.memory_space<vmem>>, vector<1x8x8xf32>
    %16 = vector.shape_cast %15 : vector<1x8x8xf32> to vector<8x8xf32>
    %cst_19 = arith.constant dense<0.000000e+00> : vector<288x8xf32>
    %17 = tpu.matmul %14, %16, %cst_19 {dimension_numbers = #tpu.dot_dimension_numbers<[1], [0], [0], [1], [0, 0, 1, 1], [], []>} : vector<288x8xf32>, vector<8x8xf32>, vector<288x8xf32> -> vector<288x8xf32>
    %18 = arith.addf %12, %17 : vector<288x8xf32>
    %c0_20 = arith.constant 0 : index
    %c18 = arith.constant 18 : index
    %c0_21 = arith.constant 0 : index
    %19 = vector.load %arg1[%c0_20, %c18, %c0_21] : memref<1x328x8xf32, #tpu.memory_space<vmem>>, vector<1x288x8xf32>
    %20 = vector.shape_cast %19 : vector<1x288x8xf32> to vector<288x8xf32>
    %c3 = arith.constant 3 : index
    %c0_22 = arith.constant 0 : index
    %c0_23 = arith.constant 0 : index
    %21 = vector.load %arg3[%c3, %c0_22, %c0_23] : memref<9x8x8xf32, #tpu.memory_space<vmem>>, vector<1x8x8xf32>
    %22 = vector.shape_cast %21 : vector<1x8x8xf32> to vector<8x8xf32>
    %cst_24 = arith.constant dense<0.000000e+00> : vector<288x8xf32>
    %23 = tpu.matmul %20, %22, %cst_24 {dimension_numbers = #tpu.dot_dimension_numbers<[1], [0], [0], [1], [0, 0, 1, 1], [], []>} : vector<288x8xf32>, vector<8x8xf32>, vector<288x8xf32> -> vector<288x8xf32>
    %24 = arith.addf %18, %23 : vector<288x8xf32>
    %c0_25 = arith.constant 0 : index
    %c19 = arith.constant 19 : index
    %c0_26 = arith.constant 0 : index
    %25 = vector.load %arg1[%c0_25, %c19, %c0_26] : memref<1x328x8xf32, #tpu.memory_space<vmem>>, vector<1x288x8xf32>
    %26 = vector.shape_cast %25 : vector<1x288x8xf32> to vector<288x8xf32>
    %c4 = arith.constant 4 : index
    %c0_27 = arith.constant 0 : index
    %c0_28 = arith.constant 0 : index
    %27 = vector.load %arg3[%c4, %c0_27, %c0_28] : memref<9x8x8xf32, #tpu.memory_space<vmem>>, vector<1x8x8xf32>
    %28 = vector.shape_cast %27 : vector<1x8x8xf32> to vector<8x8xf32>
    %cst_29 = arith.constant dense<0.000000e+00> : vector<288x8xf32>
    %29 = tpu.matmul %26, %28, %cst_29 {dimension_numbers = #tpu.dot_dimension_numbers<[1], [0], [0], [1], [0, 0, 1, 1], [], []>} : vector<288x8xf32>, vector<8x8xf32>, vector<288x8xf32> -> vector<288x8xf32>
    %30 = arith.addf %24, %29 : vector<288x8xf32>
    %c0_30 = arith.constant 0 : index
    %c20 = arith.constant 20 : index
    %c0_31 = arith.constant 0 : index
    %31 = vector.load %arg1[%c0_30, %c20, %c0_31] : memref<1x328x8xf32, #tpu.memory_space<vmem>>, vector<1x288x8xf32>
    %32 = vector.shape_cast %31 : vector<1x288x8xf32> to vector<288x8xf32>
    %c5 = arith.constant 5 : index
    %c0_32 = arith.constant 0 : index
    %c0_33 = arith.constant 0 : index
    %33 = vector.load %arg3[%c5, %c0_32, %c0_33] : memref<9x8x8xf32, #tpu.memory_space<vmem>>, vector<1x8x8xf32>
    %34 = vector.shape_cast %33 : vector<1x8x8xf32> to vector<8x8xf32>
    %cst_34 = arith.constant dense<0.000000e+00> : vector<288x8xf32>
    %35 = tpu.matmul %32, %34, %cst_34 {dimension_numbers = #tpu.dot_dimension_numbers<[1], [0], [0], [1], [0, 0, 1, 1], [], []>} : vector<288x8xf32>, vector<8x8xf32>, vector<288x8xf32> -> vector<288x8xf32>
    %36 = arith.addf %30, %35 : vector<288x8xf32>
    %c0_35 = arith.constant 0 : index
    %c36 = arith.constant 36 : index
    %c0_36 = arith.constant 0 : index
    %37 = vector.load %arg1[%c0_35, %c36, %c0_36] : memref<1x328x8xf32, #tpu.memory_space<vmem>>, vector<1x288x8xf32>
    %38 = vector.shape_cast %37 : vector<1x288x8xf32> to vector<288x8xf32>
    %c6 = arith.constant 6 : index
    %c0_37 = arith.constant 0 : index
    %c0_38 = arith.constant 0 : index
    %39 = vector.load %arg3[%c6, %c0_37, %c0_38] : memref<9x8x8xf32, #tpu.memory_space<vmem>>, vector<1x8x8xf32>
    %40 = vector.shape_cast %39 : vector<1x8x8xf32> to vector<8x8xf32>
    %cst_39 = arith.constant dense<0.000000e+00> : vector<288x8xf32>
    %41 = tpu.matmul %38, %40, %cst_39 {dimension_numbers = #tpu.dot_dimension_numbers<[1], [0], [0], [1], [0, 0, 1, 1], [], []>} : vector<288x8xf32>, vector<8x8xf32>, vector<288x8xf32> -> vector<288x8xf32>
    %42 = arith.addf %36, %41 : vector<288x8xf32>
    %c0_40 = arith.constant 0 : index
    %c37 = arith.constant 37 : index
    %c0_41 = arith.constant 0 : index
    %43 = vector.load %arg1[%c0_40, %c37, %c0_41] : memref<1x328x8xf32, #tpu.memory_space<vmem>>, vector<1x288x8xf32>
    %44 = vector.shape_cast %43 : vector<1x288x8xf32> to vector<288x8xf32>
    %c7 = arith.constant 7 : index
    %c0_42 = arith.constant 0 : index
    %c0_43 = arith.constant 0 : index
    %45 = vector.load %arg3[%c7, %c0_42, %c0_43] : memref<9x8x8xf32, #tpu.memory_space<vmem>>, vector<1x8x8xf32>
    %46 = vector.shape_cast %45 : vector<1x8x8xf32> to vector<8x8xf32>
    %cst_44 = arith.constant dense<0.000000e+00> : vector<288x8xf32>
    %47 = tpu.matmul %44, %46, %cst_44 {dimension_numbers = #tpu.dot_dimension_numbers<[1], [0], [0], [1], [0, 0, 1, 1], [], []>} : vector<288x8xf32>, vector<8x8xf32>, vector<288x8xf32> -> vector<288x8xf32>
    %48 = arith.addf %42, %47 : vector<288x8xf32>
    %c0_45 = arith.constant 0 : index
    %c38 = arith.constant 38 : index
    %c0_46 = arith.constant 0 : index
    %49 = vector.load %arg1[%c0_45, %c38, %c0_46] : memref<1x328x8xf32, #tpu.memory_space<vmem>>, vector<1x288x8xf32>
    %50 = vector.shape_cast %49 : vector<1x288x8xf32> to vector<288x8xf32>
    %c8 = arith.constant 8 : index
    %c0_47 = arith.constant 0 : index
    %c0_48 = arith.constant 0 : index
    %51 = vector.load %arg3[%c8, %c0_47, %c0_48] : memref<9x8x8xf32, #tpu.memory_space<vmem>>, vector<1x8x8xf32>
    %52 = vector.shape_cast %51 : vector<1x8x8xf32> to vector<8x8xf32>
    %cst_49 = arith.constant dense<0.000000e+00> : vector<288x8xf32>
    %53 = tpu.matmul %50, %52, %cst_49 {dimension_numbers = #tpu.dot_dimension_numbers<[1], [0], [0], [1], [0, 0, 1, 1], [], []>} : vector<288x8xf32>, vector<8x8xf32>, vector<288x8xf32> -> vector<288x8xf32>
    %54 = arith.addf %48, %53 : vector<288x8xf32>
    %c0_50 = arith.constant 0 : index
    %c0_51 = arith.constant 0 : index
    %55 = vector.load %arg4[%c0_50, %c0_51] : memref<1x8xf32, #tpu.memory_space<vmem>>, vector<1x8xf32>
    %56 = vector.broadcast %55 : vector<1x8xf32> to vector<288x8xf32>
    %57 = arith.addf %54, %56 : vector<288x8xf32>
    %cst_52 = arith.constant 0.000000e+00 : f32
    %58 = vector.broadcast %cst_52 : f32 to vector<288x8xf32>
    %59 = arith.maximumf %57, %58 : vector<288x8xf32>
    %60 = vector.broadcast %0 : vector<288x1xf32> to vector<288x8xf32>
    %61 = arith.mulf %59, %60 : vector<288x8xf32>
    %cst_53 = arith.constant dense<0.000000e+00> : vector<1x8xf32>
    %62 = tpu.matmul %1, %61, %cst_53 {dimension_numbers = #tpu.dot_dimension_numbers<[1], [0], [0], [1], [0, 0, 1, 1], [], []>} : vector<1x288xf32>, vector<288x8xf32>, vector<1x8xf32> -> vector<1x8xf32>
    %cst_54 = arith.constant 3.906250e-03 : f32
    %63 = vector.broadcast %cst_54 : f32 to vector<1x8xf32>
    %64 = arith.mulf %62, %63 : vector<1x8xf32>
    %cst_55 = arith.constant 0.000000e+00 : f32
    %65 = vector.broadcast %cst_55 : f32 to vector<336x8xf32>
    %c0_56 = arith.constant 0 : index
    %c0_57 = arith.constant 0 : index
    %66 = vector.load %arg13[%c0_56, %c0_57] : memref<336x8xf32, #tpu.memory_space<vmem>>, vector<336x8xf32>
    tpu.vector_store %arg13[%c0_56, %c0_57], %65 {strides = array<i32>} : memref<336x8xf32, #tpu.memory_space<vmem>>, vector<336x8xf32>,
    %c24 = arith.constant 24 : index
    %c0_58 = arith.constant 0 : index
    %67 = vector.load %arg13[%c24, %c0_58] : memref<336x8xf32, #tpu.memory_space<vmem>>, vector<288x8xf32>
    tpu.vector_store %arg13[%c24, %c0_58], %61 {strides = array<i32>} : memref<336x8xf32, #tpu.memory_space<vmem>>, vector<288x8xf32>,
    %c5_59 = arith.constant 5 : index
    %c0_60 = arith.constant 0 : index
    %68 = vector.load %arg13[%c5_59, %c0_60] : memref<336x8xf32, #tpu.memory_space<vmem>>, vector<288x8xf32>
    %c0_61 = arith.constant 0 : index
    %c0_62 = arith.constant 0 : index
    %c0_63 = arith.constant 0 : index
    %69 = vector.load %arg5[%c0_61, %c0_62, %c0_63] : memref<9x8x16xf32, #tpu.memory_space<vmem>>, vector<1x8x16xf32>
    %70 = vector.shape_cast %69 : vector<1x8x16xf32> to vector<8x16xf32>
    %cst_64 = arith.constant dense<0.000000e+00> : vector<288x16xf32>
    %71 = tpu.matmul %68, %70, %cst_64 {dimension_numbers = #tpu.dot_dimension_numbers<[1], [0], [0], [1], [0, 0, 1, 1], [], []>} : vector<288x8xf32>, vector<8x16xf32>, vector<288x16xf32> -> vector<288x16xf32>
    %c6_65 = arith.constant 6 : index
    %c0_66 = arith.constant 0 : index
    %72 = vector.load %arg13[%c6_65, %c0_66] : memref<336x8xf32, #tpu.memory_space<vmem>>, vector<288x8xf32>
    %c1_67 = arith.constant 1 : index
    %c0_68 = arith.constant 0 : index
    %c0_69 = arith.constant 0 : index
    %73 = vector.load %arg5[%c1_67, %c0_68, %c0_69] : memref<9x8x16xf32, #tpu.memory_space<vmem>>, vector<1x8x16xf32>
    %74 = vector.shape_cast %73 : vector<1x8x16xf32> to vector<8x16xf32>
    %cst_70 = arith.constant dense<0.000000e+00> : vector<288x16xf32>
    %75 = tpu.matmul %72, %74, %cst_70 {dimension_numbers = #tpu.dot_dimension_numbers<[1], [0], [0], [1], [0, 0, 1, 1], [], []>} : vector<288x8xf32>, vector<8x16xf32>, vector<288x16xf32> -> vector<288x16xf32>
    %76 = arith.addf %71, %75 : vector<288x16xf32>
    %c7_71 = arith.constant 7 : index
    %c0_72 = arith.constant 0 : index
    %77 = vector.load %arg13[%c7_71, %c0_72] : memref<336x8xf32, #tpu.memory_space<vmem>>, vector<288x8xf32>
    %c2_73 = arith.constant 2 : index
    %c0_74 = arith.constant 0 : index
    %c0_75 = arith.constant 0 : index
    %78 = vector.load %arg5[%c2_73, %c0_74, %c0_75] : memref<9x8x16xf32, #tpu.memory_space<vmem>>, vector<1x8x16xf32>
    %79 = vector.shape_cast %78 : vector<1x8x16xf32> to vector<8x16xf32>
    %cst_76 = arith.constant dense<0.000000e+00> : vector<288x16xf32>
    %80 = tpu.matmul %77, %79, %cst_76 {dimension_numbers = #tpu.dot_dimension_numbers<[1], [0], [0], [1], [0, 0, 1, 1], [], []>} : vector<288x8xf32>, vector<8x16xf32>, vector<288x16xf32> -> vector<288x16xf32>
    %81 = arith.addf %76, %80 : vector<288x16xf32>
    %c23 = arith.constant 23 : index
    %c0_77 = arith.constant 0 : index
    %82 = vector.load %arg13[%c23, %c0_77] : memref<336x8xf32, #tpu.memory_space<vmem>>, vector<288x8xf32>
    %c3_78 = arith.constant 3 : index
    %c0_79 = arith.constant 0 : index
    %c0_80 = arith.constant 0 : index
    %83 = vector.load %arg5[%c3_78, %c0_79, %c0_80] : memref<9x8x16xf32, #tpu.memory_space<vmem>>, vector<1x8x16xf32>
    %84 = vector.shape_cast %83 : vector<1x8x16xf32> to vector<8x16xf32>
    %cst_81 = arith.constant dense<0.000000e+00> : vector<288x16xf32>
    %85 = tpu.matmul %82, %84, %cst_81 {dimension_numbers = #tpu.dot_dimension_numbers<[1], [0], [0], [1], [0, 0, 1, 1], [], []>} : vector<288x8xf32>, vector<8x16xf32>, vector<288x16xf32> -> vector<288x16xf32>
    %86 = arith.addf %81, %85 : vector<288x16xf32>
    %c24_82 = arith.constant 24 : index
    %c0_83 = arith.constant 0 : index
    %87 = vector.load %arg13[%c24_82, %c0_83] : memref<336x8xf32, #tpu.memory_space<vmem>>, vector<288x8xf32>
    %c4_84 = arith.constant 4 : index
    %c0_85 = arith.constant 0 : index
    %c0_86 = arith.constant 0 : index
    %88 = vector.load %arg5[%c4_84, %c0_85, %c0_86] : memref<9x8x16xf32, #tpu.memory_space<vmem>>, vector<1x8x16xf32>
    %89 = vector.shape_cast %88 : vector<1x8x16xf32> to vector<8x16xf32>
    %cst_87 = arith.constant dense<0.000000e+00> : vector<288x16xf32>
    %90 = tpu.matmul %87, %89, %cst_87 {dimension_numbers = #tpu.dot_dimension_numbers<[1], [0], [0], [1], [0, 0, 1, 1], [], []>} : vector<288x8xf32>, vector<8x16xf32>, vector<288x16xf32> -> vector<288x16xf32>
    %91 = arith.addf %86, %90 : vector<288x16xf32>
    %c25 = arith.constant 25 : index
    %c0_88 = arith.constant 0 : index
    %92 = vector.load %arg13[%c25, %c0_88] : memref<336x8xf32, #tpu.memory_space<vmem>>, vector<288x8xf32>
    %c5_89 = arith.constant 5 : index
    %c0_90 = arith.constant 0 : index
    %c0_91 = arith.constant 0 : index
    %93 = vector.load %arg5[%c5_89, %c0_90, %c0_91] : memref<9x8x16xf32, #tpu.memory_space<vmem>>, vector<1x8x16xf32>
    %94 = vector.shape_cast %93 : vector<1x8x16xf32> to vector<8x16xf32>
    %cst_92 = arith.constant dense<0.000000e+00> : vector<288x16xf32>
    %95 = tpu.matmul %92, %94, %cst_92 {dimension_numbers = #tpu.dot_dimension_numbers<[1], [0], [0], [1], [0, 0, 1, 1], [], []>} : vector<288x8xf32>, vector<8x16xf32>, vector<288x16xf32> -> vector<288x16xf32>
    %96 = arith.addf %91, %95 : vector<288x16xf32>
    %c41 = arith.constant 41 : index
    %c0_93 = arith.constant 0 : index
    %97 = vector.load %arg13[%c41, %c0_93] : memref<336x8xf32, #tpu.memory_space<vmem>>, vector<288x8xf32>
    %c6_94 = arith.constant 6 : index
    %c0_95 = arith.constant 0 : index
    %c0_96 = arith.constant 0 : index
    %98 = vector.load %arg5[%c6_94, %c0_95, %c0_96] : memref<9x8x16xf32, #tpu.memory_space<vmem>>, vector<1x8x16xf32>
    %99 = vector.shape_cast %98 : vector<1x8x16xf32> to vector<8x16xf32>
    %cst_97 = arith.constant dense<0.000000e+00> : vector<288x16xf32>
    %100 = tpu.matmul %97, %99, %cst_97 {dimension_numbers = #tpu.dot_dimension_numbers<[1], [0], [0], [1], [0, 0, 1, 1], [], []>} : vector<288x8xf32>, vector<8x16xf32>, vector<288x16xf32> -> vector<288x16xf32>
    %101 = arith.addf %96, %100 : vector<288x16xf32>
    %c42 = arith.constant 42 : index
    %c0_98 = arith.constant 0 : index
    %102 = vector.load %arg13[%c42, %c0_98] : memref<336x8xf32, #tpu.memory_space<vmem>>, vector<288x8xf32>
    %c7_99 = arith.constant 7 : index
    %c0_100 = arith.constant 0 : index
    %c0_101 = arith.constant 0 : index
    %103 = vector.load %arg5[%c7_99, %c0_100, %c0_101] : memref<9x8x16xf32, #tpu.memory_space<vmem>>, vector<1x8x16xf32>
    %104 = vector.shape_cast %103 : vector<1x8x16xf32> to vector<8x16xf32>
    %cst_102 = arith.constant dense<0.000000e+00> : vector<288x16xf32>
    %105 = tpu.matmul %102, %104, %cst_102 {dimension_numbers = #tpu.dot_dimension_numbers<[1], [0], [0], [1], [0, 0, 1, 1], [], []>} : vector<288x8xf32>, vector<8x16xf32>, vector<288x16xf32> -> vector<288x16xf32>
    %106 = arith.addf %101, %105 : vector<288x16xf32>
    %c43 = arith.constant 43 : index
    %c0_103 = arith.constant 0 : index
    %107 = vector.load %arg13[%c43, %c0_103] : memref<336x8xf32, #tpu.memory_space<vmem>>, vector<288x8xf32>
    %c8_104 = arith.constant 8 : index
    %c0_105 = arith.constant 0 : index
    %c0_106 = arith.constant 0 : index
    %108 = vector.load %arg5[%c8_104, %c0_105, %c0_106] : memref<9x8x16xf32, #tpu.memory_space<vmem>>, vector<1x8x16xf32>
    %109 = vector.shape_cast %108 : vector<1x8x16xf32> to vector<8x16xf32>
    %cst_107 = arith.constant dense<0.000000e+00> : vector<288x16xf32>
    %110 = tpu.matmul %107, %109, %cst_107 {dimension_numbers = #tpu.dot_dimension_numbers<[1], [0], [0], [1], [0, 0, 1, 1], [], []>} : vector<288x8xf32>, vector<8x16xf32>, vector<288x16xf32> -> vector<288x16xf32>
    %111 = arith.addf %106, %110 : vector<288x16xf32>
    %c0_108 = arith.constant 0 : index
    %c0_109 = arith.constant 0 : index
    %112 = vector.load %arg6[%c0_108, %c0_109] : memref<1x16xf32, #tpu.memory_space<vmem>>, vector<1x16xf32>
    %113 = vector.broadcast %112 : vector<1x16xf32> to vector<288x16xf32>
    %114 = arith.addf %111, %113 : vector<288x16xf32>
    %cst_110 = arith.constant 0.000000e+00 : f32
    %115 = vector.broadcast %cst_110 : f32 to vector<288x16xf32>
    %116 = arith.maximumf %114, %115 : vector<288x16xf32>
    %117 = vector.broadcast %0 : vector<288x1xf32> to vector<288x16xf32>
    %118 = arith.mulf %116, %117 : vector<288x16xf32>
    %cst_111 = arith.constant dense<0.000000e+00> : vector<1x16xf32>
    %119 = tpu.matmul %1, %118, %cst_111 {dimension_numbers = #tpu.dot_dimension_numbers<[1], [0], [0], [1], [0, 0, 1, 1], [], []>} : vector<1x288xf32>, vector<288x16xf32>, vector<1x16xf32> -> vector<1x16xf32>
    %cst_112 = arith.constant 3.906250e-03 : f32
    %120 = vector.broadcast %cst_112 : f32 to vector<1x16xf32>
    %121 = arith.mulf %119, %120 : vector<1x16xf32>
    %c0_113 = arith.constant 0 : index
    %c0_114 = arith.constant 0 : index
    %122 = vector.load %arg7[%c0_113, %c0_114] : memref<16x128xf32, #tpu.memory_space<vmem>>, vector<16x128xf32>
    %cst_115 = arith.constant dense<0.000000e+00> : vector<1x128xf32>
    %123 = tpu.matmul %121, %122, %cst_115 {dimension_numbers = #tpu.dot_dimension_numbers<[1], [0], [0], [1], [0, 0, 1, 1], [], []>} : vector<1x16xf32>, vector<16x128xf32>, vector<1x128xf32> -> vector<1x128xf32>
    %c0_116 = arith.constant 0 : index
    %c0_117 = arith.constant 0 : index
    %124 = vector.load %arg8[%c0_116, %c0_117] : memref<1x128xf32, #tpu.memory_space<vmem>>, vector<1x128xf32>
    %125 = arith.addf %123, %124 : vector<1x128xf32>
    %c0_118 = arith.constant 0 : index
    %c0_119 = arith.constant 0 : index
    %c0_120 = arith.constant 0 : index
    %126 = vector.load %arg11[%c0_118, %c0_119, %c0_120] : memref<1x1x128xf32, #tpu.memory_space<vmem>>, vector<1x1x128xf32>
    %127 = vector.shape_cast %126 : vector<1x1x128xf32> to vector<1x128xf32>
    %128 = vector.shape_cast %125 : vector<1x128xf32> to vector<1x1x128xf32>
    tpu.vector_store %arg11[%c0_118, %c0_119, %c0_120], %128 {strides = array<i32>} : memref<1x1x128xf32, #tpu.memory_space<vmem>>, vector<1x1x128xf32>,
    %c0_121 = arith.constant 0 : index
    %c0_122 = arith.constant 0 : index
    %129 = vector.load %arg9[%c0_121, %c0_122] : memref<8x256xf32, #tpu.memory_space<vmem>>, vector<8x256xf32>
    %cst_123 = arith.constant dense<0.000000e+00> : vector<1x256xf32>
    %130 = tpu.matmul %64, %129, %cst_123 {dimension_numbers = #tpu.dot_dimension_numbers<[1], [0], [0], [1], [0, 0, 1, 1], [], []>} : vector<1x8xf32>, vector<8x256xf32>, vector<1x256xf32> -> vector<1x256xf32>
    %c0_124 = arith.constant 0 : index
    %c0_125 = arith.constant 0 : index
    %131 = vector.load %arg10[%c0_124, %c0_125] : memref<1x256xf32, #tpu.memory_space<vmem>>, vector<1x256xf32>
    %132 = arith.addf %130, %131 : vector<1x256xf32>
    %cst_126 = arith.constant 0.000000e+00 : f32
    %133 = vector.broadcast %cst_126 : f32 to vector<1x256xf32>
    %134 = arith.cmpf ogt, %132, %133 : vector<1x256xf32>
    %cst_127 = arith.constant 0.000000e+00 : f32
    %135 = vector.broadcast %cst_127 : f32 to vector<1x256xf32>
    %136 = arith.minimumf %132, %135 : vector<1x256xf32>
    %137 = math.exp %136 : vector<1x256xf32>
    %cst_128 = arith.constant 1.000000e+00 : f32
    %138 = vector.broadcast %cst_128 : f32 to vector<1x256xf32>
    %139 = arith.subf %137, %138 : vector<1x256xf32>
    %140 = arith.select %134, %132, %139 : vector<1x256xi1>, vector<1x256xf32>
    %cst_129 = arith.constant 1.000000e+00 : f32
    %141 = vector.broadcast %cst_129 : f32 to vector<1x256xf32>
    %142 = arith.addf %140, %141 : vector<1x256xf32>
    %c0_130 = arith.constant 0 : index
    %c0_131 = arith.constant 0 : index
    %c0_132 = arith.constant 0 : index
    %143 = vector.load %arg12[%c0_130, %c0_131, %c0_132] : memref<1x1x256xf32, #tpu.memory_space<vmem>>, vector<1x1x256xf32>
    %144 = vector.shape_cast %143 : vector<1x1x256xf32> to vector<1x256xf32>
    %145 = vector.shape_cast %142 : vector<1x256xf32> to vector<1x1x256xf32>
    tpu.vector_store %arg12[%c0_130, %c0_131, %c0_132], %145 {strides = array<i32>} : memref<1x1x256xf32, #tpu.memory_space<vmem>>, vector<1x1x256xf32>,
    return
  }
  func.func @transform_0(%arg0: i32) -> (i32, i32, i32) {
    %c0_i32 = arith.constant 0 : i32
    %c0_i32_0 = arith.constant 0 : i32
    %c0_i32_1 = arith.constant 0 : i32
    return %arg0, %c0_i32, %c0_i32_0 : i32, i32, i32
  }
  func.func @transform_1(%arg0: i32) -> (i32, i32) {
    %c0_i32 = arith.constant 0 : i32
    %c0_i32_0 = arith.constant 0 : i32
    %c0_i32_1 = arith.constant 0 : i32
    return %c0_i32, %c0_i32_0 : i32, i32
  }
  func.func @transform_2(%arg0: i32) -> (i32, i32, i32) {
    %c0_i32 = arith.constant 0 : i32
    %c0_i32_0 = arith.constant 0 : i32
    %c0_i32_1 = arith.constant 0 : i32
    %c0_i32_2 = arith.constant 0 : i32
    return %c0_i32, %c0_i32_0, %c0_i32_1 : i32, i32, i32
  }
  func.func @transform_3(%arg0: i32) -> (i32, i32) {
    %c0_i32 = arith.constant 0 : i32
    %c0_i32_0 = arith.constant 0 : i32
    %c0_i32_1 = arith.constant 0 : i32
    return %c0_i32, %c0_i32_0 : i32, i32
  }
  func.func @transform_4(%arg0: i32) -> (i32, i32, i32) {
    %c0_i32 = arith.constant 0 : i32
    %c0_i32_0 = arith.constant 0 : i32
    %c0_i32_1 = arith.constant 0 : i32
    %c0_i32_2 = arith.constant 0 : i32
    return %c0_i32, %c0_i32_0, %c0_i32_1 : i32, i32, i32
  }
  func.func @transform_5(%arg0: i32) -> (i32, i32) {
    %c0_i32 = arith.constant 0 : i32
    %c0_i32_0 = arith.constant 0 : i32
    %c0_i32_1 = arith.constant 0 : i32
    return %c0_i32, %c0_i32_0 : i32, i32
  }
  func.func @transform_6(%arg0: i32) -> (i32, i32) {
    %c0_i32 = arith.constant 0 : i32
    %c0_i32_0 = arith.constant 0 : i32
    %c0_i32_1 = arith.constant 0 : i32
    return %c0_i32, %c0_i32_0 : i32, i32
  }
  func.func @transform_7(%arg0: i32) -> (i32, i32) {
    %c0_i32 = arith.constant 0 : i32
    %c0_i32_0 = arith.constant 0 : i32
    %c0_i32_1 = arith.constant 0 : i32
    return %c0_i32, %c0_i32_0 : i32, i32
  }
  func.func @transform_8(%arg0: i32) -> (i32, i32) {
    %c0_i32 = arith.constant 0 : i32
    %c0_i32_0 = arith.constant 0 : i32
    %c0_i32_1 = arith.constant 0 : i32
    return %c0_i32, %c0_i32_0 : i32, i32
  }
  func.func @transform_9(%arg0: i32) -> (i32, i32) {
    %c0_i32 = arith.constant 0 : i32
    %c0_i32_0 = arith.constant 0 : i32
    %c0_i32_1 = arith.constant 0 : i32
    return %c0_i32, %c0_i32_0 : i32, i32
  }
  func.func @transform_10(%arg0: i32) -> (i32, i32, i32) {
    %c0_i32 = arith.constant 0 : i32
    %c0_i32_0 = arith.constant 0 : i32
    %c0_i32_1 = arith.constant 0 : i32
    return %arg0, %c0_i32, %c0_i32_0 : i32, i32, i32
  }
  func.func @transform_11(%arg0: i32) -> (i32, i32, i32) {
    %c0_i32 = arith.constant 0 : i32
    %c0_i32_0 = arith.constant 0 : i32
    %c0_i32_1 = arith.constant 0 : i32
    return %arg0, %c0_i32, %c0_i32_0 : i32, i32, i32
  }
}

</mosaic_0001>

<llo_original>
// kernel: neuron_net_forward.1
$region0: #{neuron_net_forward.1}
  #allocation0 [shape = 'u32[]', space=smem, size = 0x4, offset = 0x4, fixed_abs, tag = 'smem constant byte address 0x4 - core index']
  #allocation1 [shape = 'u32[144,128]{1,0:T(1,128)}', space=vmem, size = 0x12000, scoped, tag = 'internal scratch']
  #allocation2 [shape = 'f32[336,8]{1,0:T(8,128)}', space=vmem, size = 0x2a000, scoped, tag = 'scratch operand']
  %s0 = inlined_call_operand.vmem [shape: f32[2,328,8], index: 0, kind: input, shape index: {}]
  %s1 = inlined_call_operand.vmem [shape: f32[288,1], index: 1, kind: input, shape index: {}]
  %s2 = inlined_call_operand.vmem [shape: f32[9,8,8], index: 2, kind: input, shape index: {}]
  %s3 = inlined_call_operand.vmem [shape: f32[1,8], index: 3, kind: input, shape index: {}]
  %s4 = inlined_call_operand.vmem [shape: f32[9,8,16], index: 4, kind: input, shape index: {}]
  %s5 = inlined_call_operand.vmem [shape: f32[1,16], index: 5, kind: input, shape index: {}]
  %s6 = inlined_call_operand.vmem [shape: f32[16,128], index: 6, kind: input, shape index: {}]
  %s7 = inlined_call_operand.vmem [shape: f32[1,128], index: 7, kind: input, shape index: {}]
  %s8 = inlined_call_operand.vmem [shape: f32[8,256], index: 8, kind: input, shape index: {}]
  %s9 = inlined_call_operand.vmem [shape: f32[1,256], index: 9, kind: input, shape index: {}]
  %s10 = inlined_call_operand.hbm [shape: f32[2,1,128], index: 10, kind: output, shape index: {0}]
  %s11 = inlined_call_operand.vmem [shape: f32[2,1,256], index: 11, kind: output, shape index: {1}]
  %12 = xla_tuple %s10, %s11
  %s13 = sld [smem:[#allocation0]]
  $region81: #{neuron_net_forward.1} parent=0
    _
  %s15 = ssub.s32 1, %s13
  %s16 = scalar_select 0, %s15, %s13
  $region1: #{neuron_net_forward.1} parent=0
    #allocation3 [shape = 'u8[1024]{0}', space=vmem, size = 0x400, scoped, tag = 'output window, operand 0']
    #allocation4 [shape = 's32[2]{0}', space=sflag, size = 0x8, scoped, tag = 'scoped memory for neuron_net_forward.1']
    %17 = vsyncpa [#allocation4], 0
    %s18 = scalar_lea.sflag [#allocation4], 1
    %19 = vsyncpa %s18, 0
    loop: start=0, step=1, limit=4
    $region2: #{neuron_net_forward.1} parent=1 // loop_pre_header
      _
    $region3: #{neuron_net_forward.1} parent=1 // loop_header
      %s21 = sphi 0, %s25
      %p22 = scmp.ge.s32.totalorder %s21, 4
      %s31 = sphi 0, %s33
      %s34 = sphi 0, %s31
      %s35 = sphi 0, %s34
      %s51 = sphi 0, %s35
      %s55 = sphi 0, %s55
      %s57 = sphi 0, %s55
      %s58 = sphi 0, %s57
      %s72 = sphi 0, %s58
      %s76 = sphi 0, %s76
      %s78 = sphi 0, %s76
      %s79 = sphi 0, %s78
      %s93 = sphi 0, %s79
      %s97 = sphi 0, %s97
      %s99 = sphi 0, %s97
      %s100 = sphi 0, %s99
      %s114 = sphi 0, %s100
      %s118 = sphi 0, %s118
      %s120 = sphi 0, %s118
      %s121 = sphi 0, %s120
      %s135 = sphi 0, %s121
      %s139 = sphi 0, %s139
      %s141 = sphi 0, %s139
      %s142 = sphi 0, %s141
      %s156 = sphi 0, %s142
      %s160 = sphi 0, %s160
      %s162 = sphi 0, %s160
      %s163 = sphi 0, %s162
      %s177 = sphi 0, %s163
      %s181 = sphi 0, %s181
      %s183 = sphi 0, %s181
      %s184 = sphi 0, %s183
      %s198 = sphi 0, %s184
      %s202 = sphi 0, %s202
      %s204 = sphi 0, %s202
      %s205 = sphi 0, %s204
      %s219 = sphi 0, %s205
      %s223 = sphi 0, %s223
      %s225 = sphi 0, %s223
      %s226 = sphi 0, %s225
      %s240 = sphi 0, %s226
      %s246 = sphi 0, %s248
      %s249 = sphi 0, %s246
      %s250 = sphi 0, %s249
      %s266 = sphi 0, %s250
      %s272 = sphi 0, %s274
      %s275 = sphi 0, %s272
      %s276 = sphi 0, %s275
      %s292 = sphi 0, %s276
    $region4: #{neuron_net_forward.1} parent=1 // loop_header_branch
      %24 = sbr.rel (%p22) target = $region8
    $region5: #{neuron_net_forward.1} parent=1 // loop_body
      %s26 = ssub.s32 %s21, 1
      %s27 = ssub.s32 %s21, 2
      %s28 = sadd.s32 %s21, 1
      %s29 = ssub.s32 %s21, %s28
      %p30 = scmp.eq.s32.totalorder %s29, 0
      %s32 = sadd.s32 %s31, 1
      %s33 = scalar_select %p30, %s31, %s32
      %p36 = pneg %p30
      %p37 = scmp.eq.s32.totalorder %s21, 1
      %p38 = por %p36, %p37
      %p39 = scmp.ne.s32.totalorder %s31, %s34
      %p40 = scmp.eq.s32.totalorder %s21, 0
      %p41 = por %p39, %p40
      %p42 = scmp.ne.s32.totalorder %s31, %s34
      %p43 = scmp.eq.s32.totalorder %s26, 1
      %p44 = por %p42, %p43
      %p45 = scmp.ne.s32.totalorder %s34, %s35
      %p46 = scmp.eq.s32.totalorder %s26, 0
      %p47 = por %p45, %p46
      %p48 = scmp.ne.s32.totalorder %s34, %s35
      %p49 = scmp.eq.s32.totalorder %s27, 1
      %p50 = por %p48, %p49
      %p52 = scmp.ne.s32.totalorder %s35, %s51
      %p53 = scmp.eq.s32.totalorder %s27, 0
      %p54 = por %p52, %p53
      %s56 = sadd.s32 %s55, 1
      %p59 = scmp.eq.s32.totalorder %s21, 1
      %p60 = scmp.ne.s32.totalorder %s55, %s57
      %p61 = scmp.eq.s32.totalorder %s21, 0
      %p62 = por %p60, %p61
      %p63 = scmp.ne.s32.totalorder %s55, %s57
      %p64 = scmp.eq.s32.totalorder %s26, 1
      %p65 = por %p63, %p64
      %p66 = scmp.ne.s32.totalorder %s57, %s58
      %p67 = scmp.eq.s32.totalorder %s26, 0
      %p68 = por %p66, %p67
      %p69 = scmp.ne.s32.totalorder %s57, %s58
      %p70 = scmp.eq.s32.totalorder %s27, 1
      %p71 = por %p69, %p70
      %p73 = scmp.ne.s32.totalorder %s58, %s72
      %p74 = scmp.eq.s32.totalorder %s27, 0
      %p75 = por %p73, %p74
      %s77 = sadd.s32 %s76, 1
      %p80 = scmp.eq.s32.totalorder %s21, 1
      %p81 = scmp.ne.s32.totalorder %s76, %s78
      %p82 = scmp.eq.s32.totalorder %s21, 0
      %p83 = por %p81, %p82
      %p84 = scmp.ne.s32.totalorder %s76, %s78
      %p85 = scmp.eq.s32.totalorder %s26, 1
      %p86 = por %p84, %p85
      %p87 = scmp.ne.s32.totalorder %s78, %s79
      %p88 = scmp.eq.s32.totalorder %s26, 0
      %p89 = por %p87, %p88
      %p90 = scmp.ne.s32.totalorder %s78, %s79
      %p91 = scmp.eq.s32.totalorder %s27, 1
      %p92 = por %p90, %p91
      %p94 = scmp.ne.s32.totalorder %s79, %s93
      %p95 = scmp.eq.s32.totalorder %s27, 0
      %p96 = por %p94, %p95
      %s98 = sadd.s32 %s97, 1
      %p101 = scmp.eq.s32.totalorder %s21, 1
      %p102 = scmp.ne.s32.totalorder %s97, %s99
      %p103 = scmp.eq.s32.totalorder %s21, 0
      %p104 = por %p102, %p103
      %p105 = scmp.ne.s32.totalorder %s97, %s99
      %p106 = scmp.eq.s32.totalorder %s26, 1
      %p107 = por %p105, %p106
      %p108 = scmp.ne.s32.totalorder %s99, %s100
      %p109 = scmp.eq.s32.totalorder %s26, 0
      %p110 = por %p108, %p109
      %p111 = scmp.ne.s32.totalorder %s99, %s100
      %p112 = scmp.eq.s32.totalorder %s27, 1
      %p113 = por %p111, %p112
      %p115 = scmp.ne.s32.totalorder %s100, %s114
      %p116 = scmp.eq.s32.totalorder %s27, 0
      %p117 = por %p115, %p116
      %s119 = sadd.s32 %s118, 1
      %p122 = scmp.eq.s32.totalorder %s21, 1
      %p123 = scmp.ne.s32.totalorder %s118, %s120
      %p124 = scmp.eq.s32.totalorder %s21, 0
      %p125 = por %p123, %p124
      %p126 = scmp.ne.s32.totalorder %s118, %s120
      %p127 = scmp.eq.s32.totalorder %s26, 1
      %p128 = por %p126, %p127
      %p129 = scmp.ne.s32.totalorder %s120, %s121
      %p130 = scmp.eq.s32.totalorder %s26, 0
      %p131 = por %p129, %p130
      %p132 = scmp.ne.s32.totalorder %s120, %s121
      %p133 = scmp.eq.s32.totalorder %s27, 1
      %p134 = por %p132, %p133
      %p136 = scmp.ne.s32.totalorder %s121, %s135
      %p137 = scmp.eq.s32.totalorder %s27, 0
      %p138 = por %p136, %p137
      %s140 = sadd.s32 %s139, 1
      %p143 = scmp.eq.s32.totalorder %s21, 1
      %p144 = scmp.ne.s32.totalorder %s139, %s141
      %p145 = scmp.eq.s32.totalorder %s21, 0
      %p146 = por %p144, %p145
      %p147 = scmp.ne.s32.totalorder %s139, %s141
      %p148 = scmp.eq.s32.totalorder %s26, 1
      %p149 = por %p147, %p148
      %p150 = scmp.ne.s32.totalorder %s141, %s142
      %p151 = scmp.eq.s32.totalorder %s26, 0
      %p152 = por %p150, %p151
      %p153 = scmp.ne.s32.totalorder %s141, %s142
      %p154 = scmp.eq.s32.totalorder %s27, 1
      %p155 = por %p153, %p154
      %p157 = scmp.ne.s32.totalorder %s142, %s156
      %p158 = scmp.eq.s32.totalorder %s27, 0
      %p159 = por %p157, %p158
      %s161 = sadd.s32 %s160, 1
      %p164 = scmp.eq.s32.totalorder %s21, 1
      %p165 = scmp.ne.s32.totalorder %s160, %s162
      %p166 = scmp.eq.s32.totalorder %s21, 0
      %p167 = por %p165, %p166
      %p168 = scmp.ne.s32.totalorder %s160, %s162
      %p169 = scmp.eq.s32.totalorder %s26, 1
      %p170 = por %p168, %p169
      %p171 = scmp.ne.s32.totalorder %s162, %s163
      %p172 = scmp.eq.s32.totalorder %s26, 0
      %p173 = por %p171, %p172
      %p174 = scmp.ne.s32.totalorder %s162, %s163
      %p175 = scmp.eq.s32.totalorder %s27, 1
      %p176 = por %p174, %p175
      %p178 = scmp.ne.s32.totalorder %s163, %s177
      %p179 = scmp.eq.s32.totalorder %s27, 0
      %p180 = por %p178, %p179
      %s182 = sadd.s32 %s181, 1
      %p185 = scmp.eq.s32.totalorder %s21, 1
      %p186 = scmp.ne.s32.totalorder %s181, %s183
      %p187 = scmp.eq.s32.totalorder %s21, 0
      %p188 = por %p186, %p187
      %p189 = scmp.ne.s32.totalorder %s181, %s183
      %p190 = scmp.eq.s32.totalorder %s26, 1
      %p191 = por %p189, %p190
      %p192 = scmp.ne.s32.totalorder %s183, %s184
      %p193 = scmp.eq.s32.totalorder %s26, 0
      %p194 = por %p192, %p193
      %p195 = scmp.ne.s32.totalorder %s183, %s184
      %p196 = scmp.eq.s32.totalorder %s27, 1
      %p197 = por %p195, %p196
      %p199 = scmp.ne.s32.totalorder %s184, %s198
      %p200 = scmp.eq.s32.totalorder %s27, 0
      %p201 = por %p199, %p200
      %s203 = sadd.s32 %s202, 1
      %p206 = scmp.eq.s32.totalorder %s21, 1
      %p207 = scmp.ne.s32.totalorder %s202, %s204
      %p208 = scmp.eq.s32.totalorder %s21, 0
      %p209 = por %p207, %p208
      %p210 = scmp.ne.s32.totalorder %s202, %s204
      %p211 = scmp.eq.s32.totalorder %s26, 1
      %p212 = por %p210, %p211
      %p213 = scmp.ne.s32.totalorder %s204, %s205
      %p214 = scmp.eq.s32.totalorder %s26, 0
      %p215 = por %p213, %p214
      %p216 = scmp.ne.s32.totalorder %s204, %s205
      %p217 = scmp.eq.s32.totalorder %s27, 1
      %p218 = por %p216, %p217
      %p220 = scmp.ne.s32.totalorder %s205, %s219
      %p221 = scmp.eq.s32.totalorder %s27, 0
      %p222 = por %p220, %p221
      %s224 = sadd.s32 %s223, 1
      %p227 = scmp.eq.s32.totalorder %s21, 1
      %p228 = scmp.ne.s32.totalorder %s223, %s225
      %p229 = scmp.eq.s32.totalorder %s21, 0
      %p230 = por %p228, %p229
      %p231 = scmp.ne.s32.totalorder %s223, %s225
      %p232 = scmp.eq.s32.totalorder %s26, 1
      %p233 = por %p231, %p232
      %p234 = scmp.ne.s32.totalorder %s225, %s226
      %p235 = scmp.eq.s32.totalorder %s26, 0
      %p236 = por %p234, %p235
      %p237 = scmp.ne.s32.totalorder %s225, %s226
      %p238 = scmp.eq.s32.totalorder %s27, 1
      %p239 = por %p237, %p238
      %p241 = scmp.ne.s32.totalorder %s226, %s240
      %p242 = scmp.eq.s32.totalorder %s27, 0
      %p243 = por %p241, %p242
      %s244 = ssub.s32 %s21, %s28
      %p245 = scmp.eq.s32.totalorder %s244, 0
      %s247 = sadd.s32 %s246, 1
      %s248 = scalar_select %p245, %s246, %s247
      %p251 = pneg %p245
      %p252 = scmp.eq.s32.totalorder %s21, 1
      %p253 = por %p251, %p252
      %p254 = scmp.ne.s32.totalorder %s246, %s249
      %p255 = scmp.eq.s32.totalorder %s21, 0
      %p256 = por %p254, %p255
      %p257 = scmp.ne.s32.totalorder %s246, %s249
      %p258 = scmp.eq.s32.totalorder %s26, 1
      %p259 = por %p257, %p258
      %p260 = scmp.ne.s32.totalorder %s249, %s250
      %p261 = scmp.eq.s32.totalorder %s26, 0
      %p262 = por %p260, %p261
      %p263 = scmp.ne.s32.totalorder %s249, %s250
      %p264 = scmp.eq.s32.totalorder %s27, 1
      %p265 = por %p263, %p264
      %p267 = scmp.ne.s32.totalorder %s250, %s266
      %p268 = scmp.eq.s32.totalorder %s27, 0
      %p269 = por %p267, %p268
      %s270 = ssub.s32 %s21, %s28
      %p271 = scmp.eq.s32.totalorder %s270, 0
      %s273 = sadd.s32 %s272, 1
      %s274 = scalar_select %p271, %s272, %s273
      %p277 = pneg %p271
      %p278 = scmp.eq.s32.totalorder %s21, 1
      %p279 = por %p277, %p278
      %p280 = scmp.ne.s32.totalorder %s272, %s275
      %p281 = scmp.eq.s32.totalorder %s21, 0
      %p282 = por %p280, %p281
      %p283 = scmp.ne.s32.totalorder %s272, %s275
      %p284 = scmp.eq.s32.totalorder %s26, 1
      %p285 = por %p283, %p284
      %p286 = scmp.ne.s32.totalorder %s275, %s276
      %p287 = scmp.eq.s32.totalorder %s26, 0
      %p288 = por %p286, %p287
      %p289 = scmp.ne.s32.totalorder %s275, %s276
      %p290 = scmp.eq.s32.totalorder %s27, 1
      %p291 = por %p289, %p290
      %p293 = scmp.ne.s32.totalorder %s276, %s292
      %p294 = scmp.eq.s32.totalorder %s27, 0
      %p295 = por %p293, %p294
      %p296 = scmp.le.s32.totalorder 1, %s21
      %p297 = scmp.lt.s32.totalorder %s21, 3
      %p298 = pnand %p296, %p297
      %p299 = pneg %p298
      // Predicated region
      $region9: #{neuron_net_forward.1} parent=5 // pred_check
        _
      $region10: #{neuron_net_forward.1} parent=5 // pred_check_branch
        %301 = sbr.rel (%p298) target = $region12
      $region11: #{neuron_net_forward.1} parent=5 // pred_region
        %s302 = ssub.s32 %s21, 1
        // Predicated region
        $region13: #{neuron_net_forward.1} parent=11 // pred_check
          %p303 = pneg %p68
        $region14: #{neuron_net_forward.1} parent=11 // pred_check_branch
          %305 = sbr.rel (%p303) target = $region16
        $region15: #{neuron_net_forward.1} parent=11 // pred_region
          _
        $region16: #{neuron_net_forward.1} parent=11 // pred_fallthru
          _
        // Predicated region
        $region17: #{neuron_net_forward.1} parent=11 // pred_check
          %p306 = pneg %p89
        $region18: #{neuron_net_forward.1} parent=11 // pred_check_branch
          %308 = sbr.rel (%p306) target = $region20
        $region19: #{neuron_net_forward.1} parent=11 // pred_region
          _
        $region20: #{neuron_net_forward.1} parent=11 // pred_fallthru
          _
        // Predicated region
        $region21: #{neuron_net_forward.1} parent=11 // pred_check
          %p309 = pneg %p110
        $region22: #{neuron_net_forward.1} parent=11 // pred_check_branch
          %311 = sbr.rel (%p309) target = $region24
        $region23: #{neuron_net_forward.1} parent=11 // pred_region
          _
        $region24: #{neuron_net_forward.1} parent=11 // pred_fallthru
          _
        // Predicated region
        $region25: #{neuron_net_forward.1} parent=11 // pred_check
          %p312 = pneg %p131
        $region26: #{neuron_net_forward.1} parent=11 // pred_check_branch
          %314 = sbr.rel (%p312) target = $region28
        $region27: #{neuron_net_forward.1} parent=11 // pred_region
          _
        $region28: #{neuron_net_forward.1} parent=11 // pred_fallthru
          _
        // Predicated region
        $region29: #{neuron_net_forward.1} parent=11 // pred_check
          %p315 = pneg %p152
        $region30: #{neuron_net_forward.1} parent=11 // pred_check_branch
          %317 = sbr.rel (%p315) target = $region32
        $region31: #{neuron_net_forward.1} parent=11 // pred_region
          _
        $region32: #{neuron_net_forward.1} parent=11 // pred_fallthru
          _
        // Predicated region
        $region33: #{neuron_net_forward.1} parent=11 // pred_check
          %p318 = pneg %p173
        $region34: #{neuron_net_forward.1} parent=11 // pred_check_branch
          %320 = sbr.rel (%p318) target = $region36
        $region35: #{neuron_net_forward.1} parent=11 // pred_region
          _
        $region36: #{neuron_net_forward.1} parent=11 // pred_fallthru
          _
        // Predicated region
        $region37: #{neuron_net_forward.1} parent=11 // pred_check
          %p321 = pneg %p194
        $region38: #{neuron_net_forward.1} parent=11 // pred_check_branch
          %323 = sbr.rel (%p321) target = $region40
        $region39: #{neuron_net_forward.1} parent=11 // pred_region
          _
        $region40: #{neuron_net_forward.1} parent=11 // pred_fallthru
          _
        // Predicated region
        $region41: #{neuron_net_forward.1} parent=11 // pred_check
          %p324 = pneg %p215
        $region42: #{neuron_net_forward.1} parent=11 // pred_check_branch
          %326 = sbr.rel (%p324) target = $region44
        $region43: #{neuron_net_forward.1} parent=11 // pred_region
          _
        $region44: #{neuron_net_forward.1} parent=11 // pred_fallthru
          _
        // Predicated region
        $region45: #{neuron_net_forward.1} parent=11 // pred_check
          %p327 = pneg %p236
        $region46: #{neuron_net_forward.1} parent=11 // pred_check_branch
          %329 = sbr.rel (%p327) target = $region48
        $region47: #{neuron_net_forward.1} parent=11 // pred_region
          _
        $region48: #{neuron_net_forward.1} parent=11 // pred_fallthru
          _
      $region12: #{neuron_net_forward.1} parent=5 // pred_fallthru
        _
      %p330 = scmp.lt.s32.totalorder %s21, 2
      // Predicated region
      $region49: #{neuron_net_forward.1} parent=5 // pred_check
        %p331 = pneg %p330
      $region50: #{neuron_net_forward.1} parent=5 // pred_check_branch
        %333 = sbr.rel (%p331) target = $region52
      $region51: #{neuron_net_forward.1} parent=5 // pred_region
        // Predicated region
        $region53: #{neuron_net_forward.1} parent=51 // pred_check
          %p334 = pneg %p41
        $region54: #{neuron_net_forward.1} parent=51 // pred_check_branch
          %336 = sbr.rel (%p334) target = $region56
        $region55: #{neuron_net_forward.1} parent=51 // pred_region
          %p337 = scmp.lt.s32.totalorder %s21, 1
          %s338 = scalar_select %p337, %s21, 1
          %s339 = smul.addr %s338, 41
          %s340 = smul.addr %s339, 8
          %s341 = scalar_lea.vmem %s0, %s340
        $region56: #{neuron_net_forward.1} parent=51 // pred_fallthru
          _
      $region52: #{neuron_net_forward.1} parent=5 // pred_fallthru
        _
      %p342 = scmp.le.s32.totalorder 1, %s21
      %p343 = scmp.lt.s32.totalorder %s21, 3
      %p344 = pnand %p342, %p343
      %p345 = pneg %p344
      // Predicated region
      $region57: #{neuron_net_forward.1} parent=5 // pred_check
        _
      $region58: #{neuron_net_forward.1} parent=5 // pred_check_branch
        %347 = sbr.rel (%p344) target = $region60
      $region59: #{neuron_net_forward.1} parent=5 // pred_region
        %s348 = ssub.s32 %s21, 1
        %p349 = scmp.lt.s32.totalorder %s26, 1
        %s350 = scalar_select %p349, %s26, 1
        %s351 = smul.addr %s350, 41
        %s352 = smul.addr %s351, 8
        %s353 = scalar_lea.vmem %s0, %s352
        %p354 = pneg %p47
        %p355 = pneg %p44
        %p356 = pneg %p68
        %p357 = pneg %p65
        %p358 = pneg %p89
        %p359 = pneg %p86
        %p360 = pneg %p110
        %p361 = pneg %p107
        %p362 = pneg %p131
        %p363 = pneg %p128
        %p364 = pneg %p152
        %p365 = pneg %p149
        %p366 = pneg %p173
        %p367 = pneg %p170
        %p368 = pneg %p194
        %p369 = pneg %p191
        %p370 = pneg %p215
        %p371 = pneg %p212
        %p372 = pneg %p236
        %p373 = pneg %p233
        %p374 = pneg %p262
        %p375 = pneg %p259
        %s376 = sand.u32 %s249, 1
        %s377 = scalar_lea.sflag [#allocation4], %s376
        %s378 = sand.u32 %s249, 1
        %s379 = scalar_lea.vmem [#allocation3], %s378
        %p380 = pneg %p288
        %p381 = pneg %p285
        %p382 = scmp.lt.s32.totalorder %s26, 1
        %s383 = scalar_select %p382, %s26, 1
        %s384 = smul.addr %s383, 2
        %s385 = scalar_lea.vmem %s11, %s384
        %p386 = scmp.lt.s32.totalorder %s26, 1
        %s387 = scalar_select %p386, %s26, 1
        %s388 = smul.addr %s387, 41
        %s389 = smul.addr %s388, 8
        %s390 = scalar_lea.vmem %s0, %s389
        %p391 = scmp.lt.s32.totalorder %s26, 1
        %s392 = scalar_select %p391, %s26, 1
        %s393 = smul.addr %s392, 2
        %s394 = scalar_lea.vmem %s11, %s393
        %v395 = vld [vmem:[%s1] sm:$0xff]
        %v396 = vld [vmem:[%s1 + $0x8] sm:$0xff]
        %v397 = vld [vmem:[%s1 + $0x10] sm:$0xff]
        %v398 = vld [vmem:[%s1 + $0x18] sm:$0xff]
        %v399 = vld [vmem:[%s1 + $0x20] sm:$0xff]
        %v400 = vld [vmem:[%s1 + $0x28] sm:$0xff]
        %v401 = vld [vmem:[%s1 + $0x30] sm:$0xff]
        %v402 = vld [vmem:[%s1 + $0x38] sm:$0xff]
        %v403 = vld [vmem:[%s1 + $0x40] sm:$0xff]
        %v404 = vld [vmem:[%s1 + $0x48] sm:$0xff]
        %v405 = vld [vmem:[%s1 + $0x50] sm:$0xff]
        %v406 = vld [vmem:[%s1 + $0x58] sm:$0xff]
        %v407 = vld [vmem:[%s1 + $0x60] sm:$0xff]
        %v408 = vld [vmem:[%s1 + $0x68] sm:$0xff]
        %v409 = vld [vmem:[%s1 + $0x70] sm:$0xff]
        %v410 = vld [vmem:[%s1 + $0x78] sm:$0xff]
        %v411 = vld [vmem:[%s1 + $0x80] sm:$0xff]
        %v412 = vld [vmem:[%s1 + $0x88] sm:$0xff]
        %v413 = vld [vmem:[%s1 + $0x90] sm:$0xff]
        %v414 = vld [vmem:[%s1 + $0x98] sm:$0xff]
        %v415 = vld [vmem:[%s1 + $0xa0] sm:$0xff]
        %v416 = vld [vmem:[%s1 + $0xa8] sm:$0xff]
        %v417 = vld [vmem:[%s1 + $0xb0] sm:$0xff]
        %v418 = vld [vmem:[%s1 + $0xb8] sm:$0xff]
        %v419 = vld [vmem:[%s1 + $0xc0] sm:$0xff]
        %v420 = vld [vmem:[%s1 + $0xc8] sm:$0xff]
        %v421 = vld [vmem:[%s1 + $0xd0] sm:$0xff]
        %v422 = vld [vmem:[%s1 + $0xd8] sm:$0xff]
        %v423 = vld [vmem:[%s1 + $0xe0] sm:$0xff]
        %v424 = vld [vmem:[%s1 + $0xe8] sm:$0xff]
        %v425 = vld [vmem:[%s1 + $0xf0] sm:$0xff]
        %v426 = vld [vmem:[%s1 + $0xf8] sm:$0xff]
        %v427 = vld [vmem:[%s1 + $0x100] sm:$0xff]
        %v428 = vld [vmem:[%s1 + $0x108] sm:$0xff]
        %v429 = vld [vmem:[%s1 + $0x110] sm:$0xff]
        %v430 = vld [vmem:[%s1 + $0x118] sm:$0xff]
        %v431 = vld [vmem:[%s390] sm:$0xff]
        %v432 = vld [vmem:[%s390 + $0x8] sm:$0xff]
        %v433 = vld [vmem:[%s390 + $0x10] sm:$0xff]
        %v434 = vld [vmem:[%s390 + $0x18] sm:$0xff]
        %v435 = vld [vmem:[%s390 + $0x20] sm:$0xff]
        %v436 = vld [vmem:[%s390 + $0x28] sm:$0xff]
        %v437 = vld [vmem:[%s390 + $0x30] sm:$0xff]
        %v438 = vld [vmem:[%s390 + $0x38] sm:$0xff]
        %v439 = vld [vmem:[%s390 + $0x40] sm:$0xff]
        %v440 = vld [vmem:[%s390 + $0x48] sm:$0xff]
        %v441 = vld [vmem:[%s390 + $0x50] sm:$0xff]
        %v442 = vld [vmem:[%s390 + $0x58] sm:$0xff]
        %v443 = vld [vmem:[%s390 + $0x60] sm:$0xff]
        %v444 = vld [vmem:[%s390 + $0x68] sm:$0xff]
        %v445 = vld [vmem:[%s390 + $0x70] sm:$0xff]
        %v446 = vld [vmem:[%s390 + $0x78] sm:$0xff]
        %v447 = vld [vmem:[%s390 + $0x80] sm:$0xff]
        %v448 = vld [vmem:[%s390 + $0x88] sm:$0xff]
        %v449 = vld [vmem:[%s390 + $0x90] sm:$0xff]
        %v450 = vld [vmem:[%s390 + $0x98] sm:$0xff]
        %v451 = vld [vmem:[%s390 + $0xa0] sm:$0xff]
        %v452 = vld [vmem:[%s390 + $0xa8] sm:$0xff]
        %v453 = vld [vmem:[%s390 + $0xb0] sm:$0xff]
        %v454 = vld [vmem:[%s390 + $0xb8] sm:$0xff]
        %v455 = vld [vmem:[%s390 + $0xc0] sm:$0xff]
        %v456 = vld [vmem:[%s390 + $0xc8] sm:$0xff]
        %v457 = vld [vmem:[%s390 + $0xd0] sm:$0xff]
        %v458 = vld [vmem:[%s390 + $0xd8] sm:$0xff]
        %v459 = vld [vmem:[%s390 + $0xe0] sm:$0xff]
        %v460 = vld [vmem:[%s390 + $0xe8] sm:$0xff]
        %v461 = vld [vmem:[%s390 + $0xf0] sm:$0xff]
        %v462 = vld [vmem:[%s390 + $0xf8] sm:$0xff]
        %v463 = vld [vmem:[%s390 + $0x100] sm:$0xff]
        %v464 = vld [vmem:[%s390 + $0x108] sm:$0xff]
        %v465 = vld [vmem:[%s390 + $0x110] sm:$0xff]
        %v466 = vld [vmem:[%s390 + $0x118] sm:$0xff]
        %v467 = vld [vmem:[%s2] sm:$0xff]
        %v468 = vld [vmem:[%s390 + $0x1] sm:$0xff]
        %v469 = vld [vmem:[%s390 + $0x9] sm:$0xff]
        %v470 = vld [vmem:[%s390 + $0x11] sm:$0xff]
        %v471 = vld [vmem:[%s390 + $0x19] sm:$0xff]
        %v472 = vld [vmem:[%s390 + $0x21] sm:$0xff]
        %v473 = vld [vmem:[%s390 + $0x29] sm:$0xff]
        %v474 = vld [vmem:[%s390 + $0x31] sm:$0xff]
        %v475 = vld [vmem:[%s390 + $0x39] sm:$0xff]
        %v476 = vld [vmem:[%s390 + $0x41] sm:$0xff]
        %v477 = vld [vmem:[%s390 + $0x49] sm:$0xff]
        %v478 = vld [vmem:[%s390 + $0x51] sm:$0xff]
        %v479 = vld [vmem:[%s390 + $0x59] sm:$0xff]
        %v480 = vld [vmem:[%s390 + $0x61] sm:$0xff]
        %v481 = vld [vmem:[%s390 + $0x69] sm:$0xff]
        %v482 = vld [vmem:[%s390 + $0x71] sm:$0xff]
        %v483 = vld [vmem:[%s390 + $0x79] sm:$0xff]
        %v484 = vld [vmem:[%s390 + $0x81] sm:$0xff]
        %v485 = vld [vmem:[%s390 + $0x89] sm:$0xff]
        %v486 = vld [vmem:[%s390 + $0x91] sm:$0xff]
        %v487 = vld [vmem:[%s390 + $0x99] sm:$0xff]
        %v488 = vld [vmem:[%s390 + $0xa1] sm:$0xff]
        %v489 = vld [vmem:[%s390 + $0xa9] sm:$0xff]
        %v490 = vld [vmem:[%s390 + $0xb1] sm:$0xff]
        %v491 = vld [vmem:[%s390 + $0xb9] sm:$0xff]
        %v492 = vld [vmem:[%s390 + $0xc1] sm:$0xff]
        %v493 = vld [vmem:[%s390 + $0xc9] sm:$0xff]
        %v494 = vld [vmem:[%s390 + $0xd1] sm:$0xff]
        %v495 = vld [vmem:[%s390 + $0xd9] sm:$0xff]
        %v496 = vld [vmem:[%s390 + $0xe1] sm:$0xff]
        %v497 = vld [vmem:[%s390 + $0xe9] sm:$0xff]
        %v498 = vld [vmem:[%s390 + $0xf1] sm:$0xff]
        %v499 = vld [vmem:[%s390 + $0xf9] sm:$0xff]
        %v500 = vld [vmem:[%s390 + $0x101] sm:$0xff]
        %v501 = vld [vmem:[%s390 + $0x109] sm:$0xff]
        %v502 = vld [vmem:[%s390 + $0x111] sm:$0xff]
        %v503 = vld [vmem:[%s390 + $0x119] sm:$0xff]
        %s504 = scalar_lea.vmem %s2, 8
        %v505 = vld [vmem:[%s504] sm:$0xff]
        %vm506 = vcmask 64512
        %v508 = vsel %vm506, %v468, 0
        %v511 = vsel %vm506, %v469, 0
        %v514 = vsel %vm506, %v470, 0
        %v517 = vsel %vm506, %v471, 0
        %v520 = vsel %vm506, %v472, 0
        %v523 = vsel %vm506, %v473, 0
        %v526 = vsel %vm506, %v474, 0
        %v529 = vsel %vm506, %v475, 0
        %v532 = vsel %vm506, %v476, 0
        %v535 = vsel %vm506, %v477, 0
        %v538 = vsel %vm506, %v478, 0
        %v541 = vsel %vm506, %v479, 0
        %v544 = vsel %vm506, %v480, 0
        %v547 = vsel %vm506, %v481, 0
        %v550 = vsel %vm506, %v482, 0
        %v553 = vsel %vm506, %v483, 0
        %v556 = vsel %vm506, %v484, 0
        %v559 = vsel %vm506, %v485, 0
        %v562 = vsel %vm506, %v486, 0
        %v565 = vsel %vm506, %v487, 0
        %v568 = vsel %vm506, %v488, 0
        %v571 = vsel %vm506, %v489, 0
        %v574 = vsel %vm506, %v490, 0
        %v577 = vsel %vm506, %v491, 0
        %v580 = vsel %vm506, %v492, 0
        %v583 = vsel %vm506, %v493, 0
        %v586 = vsel %vm506, %v494, 0
        %v589 = vsel %vm506, %v495, 0
        %v592 = vsel %vm506, %v496, 0
        %v595 = vsel %vm506, %v497, 0
        %v598 = vsel %vm506, %v498, 0
        %v601 = vsel %vm506, %v499, 0
        %v604 = vsel %vm506, %v500, 0
        %v607 = vsel %vm506, %v501, 0
        %v610 = vsel %vm506, %v502, 0
        %v613 = vsel %vm506, %v503, 0
        %615 = vmatprep.subr.mxu0 0.0
        %616 = vmatpush1.msra.mxu0 %v505
        %617 = vmatprep.subr.mxu0 0.0
        %618 = vmatpush1.msra.mxu0 0.0
        %619 = vmatprep.subr.mxu0 0.0
        %620 = vmatpush1.msra.mxu0 0.0
        %621 = vmatprep.subr.mxu0 0.0
        %622 = vmatpush1.msra.mxu0 0.0
        %623 = vmatprep.subr.mxu0 0.0
        %624 = vmatpush1.msra.mxu0 0.0
        %625 = vmatprep.subr.mxu0 0.0
        %626 = vmatpush1.msra.mxu0 0.0
        %627 = vmatprep.subr.mxu0 0.0
        %628 = vmatpush1.msra.mxu0 0.0
        %629 = vmatprep.subr.mxu0 0.0
        %630 = vmatpush1.msra.mxu0 0.0
        %631 = vmatprep.subr.mxu0 0.0
        %632 = vmatpush1.msra.mxu0 0.0
        %633 = vmatprep.subr.mxu0 0.0
        %634 = vmatpush1.msra.mxu0 0.0
        %635 = vmatprep.subr.mxu0 0.0
        %636 = vmatpush1.msra.mxu0 0.0
        %637 = vmatprep.subr.mxu0 0.0
        %638 = vmatpush1.msra.mxu0 0.0
        %639 = vmatprep.subr.mxu0 0.0
        %640 = vmatpush1.msra.mxu0 0.0
        %641 = vmatprep.subr.mxu0 0.0
        %642 = vmatpush1.msra.mxu0 0.0
        %643 = vmatprep.subr.mxu0 0.0
        %644 = vmatpush1.msra.mxu0 0.0
        %645 = vmatprep.subr.mxu0 0.0
        %646 = vmatpush1.msra.mxu0 0.0
        %647 = vmatprep.subr.mxu0 0.0
        %648 = vmatpush1.msra.mxu0 0.0
        %649 = vmatprep.subr.mxu0 0.0
        %650 = vmatpush1.msra.mxu0 0.0
        %651 = vmatprep.subr.mxu0 0.0
        %652 = vmatpush1.msra.mxu0 0.0
        %653 = vmatprep.subr.mxu0 0.0
        %654 = vmatpush1.msra.mxu0 0.0
        %655 = vmatprep.subr.mxu0 0.0
        %656 = vmatpush1.msra.mxu0 0.0
        %657 = vmatprep.subr.mxu0 0.0
        %658 = vmatpush1.msra.mxu0 0.0
        %659 = vmatprep.subr.mxu0 0.0
        %660 = vmatpush1.msra.mxu0 0.0
        %661 = vmatprep.subr.mxu0 0.0
        %662 = vmatpush1.msra.mxu0 0.0
        %663 = vmatprep.subr.mxu0 0.0
        %664 = vmatpush1.msra.mxu0 0.0
        %665 = vmatprep.subr.mxu0 0.0
        %666 = vmatpush1.msra.mxu0 0.0
        %667 = vmatprep.subr.mxu0 0.0
        %668 = vmatpush1.msra.mxu0 0.0
        %669 = vmatprep.subr.mxu0 0.0
        %670 = vmatpush1.msra.mxu0 0.0
        %671 = vmatprep.subr.mxu0 0.0
        %672 = vmatpush1.msra.mxu0 0.0
        %673 = vmatprep.subr.mxu0 0.0
        %674 = vmatpush1.msra.mxu0 0.0
        %675 = vmatprep.subr.mxu0 0.0
        %676 = vmatpush1.msra.mxu0 0.0
        %677 = vmatprep.subr.mxu0 0.0
        %678 = vmatpush1.msra.mxu0 0.0
        %679 = vmatprep.mubr.f32.mxu0 0.0
        %680 = vmatmul.mubr.f32.gmra.mrb[0].mxu0 %v508
        %v681 = vpop.f32.mrb[0].mxu0
        %v682 = vadd.f32 0.0, %v681
        %v683 = vpop.f32.mrb[0].mxu0
        %684 = vmatprep.mubr.f32.mxu0 0.0
        %685 = vmatmul.mubr.f32.gmra.mrb[0].mxu0 %v511
        %v686 = vpop.f32.mrb[0].mxu0
        %v687 = vadd.f32 0.0, %v686
        %v688 = vpop.f32.mrb[0].mxu0
        %689 = vmatprep.mubr.f32.mxu0 0.0
        %690 = vmatmul.mubr.f32.gmra.mrb[0].mxu0 %v514
        %v691 = vpop.f32.mrb[0].mxu0
        %v692 = vadd.f32 0.0, %v691
        %v693 = vpop.f32.mrb[0].mxu0
        %694 = vmatprep.mubr.f32.mxu0 0.0
        %695 = vmatmul.mubr.f32.gmra.mrb[0].mxu0 %v517
        %v696 = vpop.f32.mrb[0].mxu0
        %v697 = vadd.f32 0.0, %v696
        %v698 = vpop.f32.mrb[0].mxu0
        %699 = vmatprep.mubr.f32.mxu0 0.0
        %700 = vmatmul.mubr.f32.gmra.mrb[0].mxu0 %v520
        %v701 = vpop.f32.mrb[0].mxu0
        %v702 = vadd.f32 0.0, %v701
        %v703 = vpop.f32.mrb[0].mxu0
        %704 = vmatprep.mubr.f32.mxu0 0.0
        %705 = vmatmul.mubr.f32.gmra.mrb[0].mxu0 %v523
        %v706 = vpop.f32.mrb[0].mxu0
        %v707 = vadd.f32 0.0, %v706
        %v708 = vpop.f32.mrb[0].mxu0
        %709 = vmatprep.mubr.f32.mxu0 0.0
        %710 = vmatmul.mubr.f32.gmra.mrb[0].mxu0 %v526
        %v711 = vpop.f32.mrb[0].mxu0
        %v712 = vadd.f32 0.0, %v711
        %v713 = vpop.f32.mrb[0].mxu0
        %714 = vmatprep.mubr.f32.mxu0 0.0
        %715 = vmatmul.mubr.f32.gmra.mrb[0].mxu0 %v529
        %v716 = vpop.f32.mrb[0].mxu0
        %v717 = vadd.f32 0.0, %v716
        %v718 = vpop.f32.mrb[0].mxu0
        %719 = vmatprep.mubr.f32.mxu0 0.0
        %720 = vmatmul.mubr.f32.gmra.mrb[0].mxu0 %v532
        %v721 = vpop.f32.mrb[0].mxu0
        %v722 = vadd.f32 0.0, %v721
        %v723 = vpop.f32.mrb[0].mxu0
        %724 = vmatprep.mubr.f32.mxu0 0.0
        %725 = vmatmul.mubr.f32.gmra.mrb[0].mxu0 %v535
        %v726 = vpop.f32.mrb[0].mxu0
        %v727 = vadd.f32 0.0, %v726
        %v728 = vpop.f32.mrb[0].mxu0
        %729 = vmatprep.mubr.f32.mxu0 0.0
        %730 = vmatmul.mubr.f32.gmra.mrb[0].mxu0 %v538
        %v731 = vpop.f32.mrb[0].mxu0
        %v732 = vadd.f32 0.0, %v731
        %v733 = vpop.f32.mrb[0].mxu0
        %734 = vmatprep.mubr.f32.mxu0 0.0
        %735 = vmatmul.mubr.f32.gmra.mrb[0].mxu0 %v541
        %v736 = vpop.f32.mrb[0].mxu0
        %v737 = vadd.f32 0.0, %v736
        %v738 = vpop.f32.mrb[0].mxu0
        %739 = vmatprep.mubr.f32.mxu0 0.0
        %740 = vmatmul.mubr.f32.gmra.mrb[0].mxu0 %v544
        %v741 = vpop.f32.mrb[0].mxu0
        %v742 = vadd.f32 0.0, %v741
        %v743 = vpop.f32.mrb[0].mxu0
        %744 = vmatprep.mubr.f32.mxu0 0.0
        %745 = vmatmul.mubr.f32.gmra.mrb[0].mxu0 %v547
        %v746 = vpop.f32.mrb[0].mxu0
        %v747 = vadd.f32 0.0, %v746
        %v748 = vpop.f32.mrb[0].mxu0
        %749 = vmatprep.mubr.f32.mxu0 0.0
        %750 = vmatmul.mubr.f32.gmra.mrb[0].mxu0 %v550
        %v751 = vpop.f32.mrb[0].mxu0
        %v752 = vadd.f32 0.0, %v751
        %v753 = vpop.f32.mrb[0].mxu0
        %754 = vmatprep.mubr.f32.mxu0 0.0
        %755 = vmatmul.mubr.f32.gmra.mrb[0].mxu0 %v553
        %v756 = vpop.f32.mrb[0].mxu0
        %v757 = vadd.f32 0.0, %v756
        %v758 = vpop.f32.mrb[0].mxu0
        %759 = vmatprep.mubr.f32.mxu0 0.0
        %760 = vmatmul.mubr.f32.gmra.mrb[0].mxu0 %v556
        %v761 = vpop.f32.mrb[0].mxu0
        %v762 = vadd.f32 0.0, %v761
        %v763 = vpop.f32.mrb[0].mxu0
        %764 = vmatprep.mubr.f32.mxu0 0.0
        %765 = vmatmul.mubr.f32.gmra.mrb[0].mxu0 %v559
        %v766 = vpop.f32.mrb[0].mxu0
        %v767 = vadd.f32 0.0, %v766
        %v768 = vpop.f32.mrb[0].mxu0
        %769 = vmatprep.mubr.f32.mxu0 0.0
        %770 = vmatmul.mubr.f32.gmra.mrb[0].mxu0 %v562
        %v771 = vpop.f32.mrb[0].mxu0
        %v772 = vadd.f32 0.0, %v771
        %v773 = vpop.f32.mrb[0].mxu0
        %774 = vmatprep.mubr.f32.mxu0 0.0
        %775 = vmatmul.mubr.f32.gmra.mrb[0].mxu0 %v565
        %v776 = vpop.f32.mrb[0].mxu0
        %v777 = vadd.f32 0.0, %v776
        %v778 = vpop.f32.mrb[0].mxu0
        %779 = vmatprep.mubr.f32.mxu0 0.0
        %780 = vmatmul.mubr.f32.gmra.mrb[0].mxu0 %v568
        %v781 = vpop.f32.mrb[0].mxu0
        %v782 = vadd.f32 0.0, %v781
        %v783 = vpop.f32.mrb[0].mxu0
        %784 = vmatprep.mubr.f32.mxu0 0.0
        %785 = vmatmul.mubr.f32.gmra.mrb[0].mxu0 %v571
        %v786 = vpop.f32.mrb[0].mxu0
        %v787 = vadd.f32 0.0, %v786
        %v788 = vpop.f32.mrb[0].mxu0
        %789 = vmatprep.mubr.f32.mxu0 0.0
        %790 = vmatmul.mubr.f32.gmra.mrb[0].mxu0 %v574
        %v791 = vpop.f32.mrb[0].mxu0
        %v792 = vadd.f32 0.0, %v791
        %v793 = vpop.f32.mrb[0].mxu0
        %794 = vmatprep.mubr.f32.mxu0 0.0
        %795 = vmatmul.mubr.f32.gmra.mrb[0].mxu0 %v577
        %v796 = vpop.f32.mrb[0].mxu0
        %v797 = vadd.f32 0.0, %v796
        %v798 = vpop.f32.mrb[0].mxu0
        %799 = vmatprep.mubr.f32.mxu0 0.0
        %800 = vmatmul.mubr.f32.gmra.mrb[0].mxu0 %v580
        %v801 = vpop.f32.mrb[0].mxu0
        %v802 = vadd.f32 0.0, %v801
        %v803 = vpop.f32.mrb[0].mxu0
        %804 = vmatprep.mubr.f32.mxu0 0.0
        %805 = vmatmul.mubr.f32.gmra.mrb[0].mxu0 %v583
        %v806 = vpop.f32.mrb[0].mxu0
        %v807 = vadd.f32 0.0, %v806
        %v808 = vpop.f32.mrb[0].mxu0
        %809 = vmatprep.mubr.f32.mxu0 0.0
        %810 = vmatmul.mubr.f32.gmra.mrb[0].mxu0 %v586
        %v811 = vpop.f32.mrb[0].mxu0
        %v812 = vadd.f32 0.0, %v811
        %v813 = vpop.f32.mrb[0].mxu0
        %814 = vmatprep.mubr.f32.mxu0 0.0
        %815 = vmatmul.mubr.f32.gmra.mrb[0].mxu0 %v589
        %v816 = vpop.f32.mrb[0].mxu0
        %v817 = vadd.f32 0.0, %v816
        %v818 = vpop.f32.mrb[0].mxu0
        %819 = vmatprep.mubr.f32.mxu0 0.0
        %820 = vmatmul.mubr.f32.gmra.mrb[0].mxu0 %v592
        %v821 = vpop.f32.mrb[0].mxu0
        %v822 = vadd.f32 0.0, %v821
        %v823 = vpop.f32.mrb[0].mxu0
        %824 = vmatprep.mubr.f32.mxu0 0.0
        %825 = vmatmul.mubr.f32.gmra.mrb[0].mxu0 %v595
        %v826 = vpop.f32.mrb[0].mxu0
        %v827 = vadd.f32 0.0, %v826
        %v828 = vpop.f32.mrb[0].mxu0
        %829 = vmatprep.mubr.f32.mxu0 0.0
        %830 = vmatmul.mubr.f32.gmra.mrb[0].mxu0 %v598
        %v831 = vpop.f32.mrb[0].mxu0
        %v832 = vadd.f32 0.0, %v831
        %v833 = vpop.f32.mrb[0].mxu0
        %834 = vmatprep.mubr.f32.mxu0 0.0
        %835 = vmatmul.mubr.f32.gmra.mrb[0].mxu0 %v601
        %v836 = vpop.f32.mrb[0].mxu0
        %v837 = vadd.f32 0.0, %v836
        %v838 = vpop.f32.mrb[0].mxu0
        %839 = vmatprep.mubr.f32.mxu0 0.0
        %840 = vmatmul.mubr.f32.gmra.mrb[0].mxu0 %v604
        %v841 = vpop.f32.mrb[0].mxu0
        %v842 = vadd.f32 0.0, %v841
        %v843 = vpop.f32.mrb[0].mxu0
        %844 = vmatprep.mubr.f32.mxu0 0.0
        %845 = vmatmul.mubr.f32.gmra.mrb[0].mxu0 %v607
        %v846 = vpop.f32.mrb[0].mxu0
        %v847 = vadd.f32 0.0, %v846
        %v848 = vpop.f32.mrb[0].mxu0
        %849 = vmatprep.mubr.f32.mxu0 0.0
        %850 = vmatmul.mubr.f32.gmra.mrb[0].mxu0 %v610
        %v851 = vpop.f32.mrb[0].mxu0
        %v852 = vadd.f32 0.0, %v851
        %v853 = vpop.f32.mrb[0].mxu0
        %854 = vmatprep.mubr.f32.mxu0 0.0
        %855 = vmatmul.mubr.f32.gmra.mrb[0].mxu0 %v613
        %v856 = vpop.f32.mrb[0].mxu0
        %v857 = vadd.f32 0.0, %v856
        %v858 = vpop.f32.mrb[0].mxu0
        %859 = vdwg.mxu0
        %v861 = vsel %vm506, %v431, 0
        %v864 = vsel %vm506, %v432, 0
        %v867 = vsel %vm506, %v433, 0
        %v870 = vsel %vm506, %v434, 0
        %v873 = vsel %vm506, %v435, 0
        %v876 = vsel %vm506, %v436, 0
        %v879 = vsel %vm506, %v437, 0
        %v882 = vsel %vm506, %v438, 0
        %v885 = vsel %vm506, %v439, 0
        %v888 = vsel %vm506, %v440, 0
        %v891 = vsel %vm506, %v441, 0
        %v894 = vsel %vm506, %v442, 0
        %v897 = vsel %vm506, %v443, 0
        %v900 = vsel %vm506, %v444, 0
        %v903 = vsel %vm506, %v445, 0
        %v906 = vsel %vm506, %v446, 0
        %v909 = vsel %vm506, %v447, 0
        %v912 = vsel %vm506, %v448, 0
        %v915 = vsel %vm506, %v449, 0
        %v918 = vsel %vm506, %v450, 0
        %v921 = vsel %vm506, %v451, 0
        %v924 = vsel %vm506, %v452, 0
        %v927 = vsel %vm506, %v453, 0
        %v930 = vsel %vm506, %v454, 0
        %v933 = vsel %vm506, %v455, 0
        %v936 = vsel %vm506, %v456, 0
        %v939 = vsel %vm506, %v457, 0
        %v942 = vsel %vm506, %v458, 0
        %v945 = vsel %vm506, %v459, 0
        %v948 = vsel %vm506, %v460, 0
        %v951 = vsel %vm506, %v461, 0
        %v954 = vsel %vm506, %v462, 0
        %v957 = vsel %vm506, %v463, 0
        %v960 = vsel %vm506, %v464, 0
        %v963 = vsel %vm506, %v465, 0
        %v966 = vsel %vm506, %v466, 0
        %968 = vmatprep.subr.mxu0 0.0
        %969 = vmatpush1.msra.mxu0 %v467
        %970 = vmatprep.subr.mxu0 0.0
        %971 = vmatpush1.msra.mxu0 0.0
        %972 = vmatprep.subr.mxu0 0.0
        %973 = vmatpush1.msra.mxu0 0.0
        %974 = vmatprep.subr.mxu0 0.0
        %975 = vmatpush1.msra.mxu0 0.0
        %976 = vmatprep.subr.mxu0 0.0
        %977 = vmatpush1.msra.mxu0 0.0
        %978 = vmatprep.subr.mxu0 0.0
        %979 = vmatpush1.msra.mxu0 0.0
        %980 = vmatprep.subr.mxu0 0.0
        %981 = vmatpush1.msra.mxu0 0.0
        %982 = vmatprep.subr.mxu0 0.0
        %983 = vmatpush1.msra.mxu0 0.0
        %984 = vmatprep.subr.mxu0 0.0
        %985 = vmatpush1.msra.mxu0 0.0
        %986 = vmatprep.subr.mxu0 0.0
        %987 = vmatpush1.msra.mxu0 0.0
        %988 = vmatprep.subr.mxu0 0.0
        %989 = vmatpush1.msra.mxu0 0.0
        %990 = vmatprep.subr.mxu0 0.0
        %991 = vmatpush1.msra.mxu0 0.0
        %992 = vmatprep.subr.mxu0 0.0
        %993 = vmatpush1.msra.mxu0 0.0
        %994 = vmatprep.subr.mxu0 0.0
        %995 = vmatpush1.msra.mxu0 0.0
        %996 = vmatprep.subr.mxu0 0.0
        %997 = vmatpush1.msra.mxu0 0.0
        %998 = vmatprep.subr.mxu0 0.0
        %999 = vmatpush1.msra.mxu0 0.0
        %1000 = vmatprep.subr.mxu0 0.0
        %1001 = vmatpush1.msra.mxu0 0.0
        %1002 = vmatprep.subr.mxu0 0.0
        %1003 = vmatpush1.msra.mxu0 0.0
        %1004 = vmatprep.subr.mxu0 0.0
        %1005 = vmatpush1.msra.mxu0 0.0
        %1006 = vmatprep.subr.mxu0 0.0
        %1007 = vmatpush1.msra.mxu0 0.0
        %1008 = vmatprep.subr.mxu0 0.0
        %1009 = vmatpush1.msra.mxu0 0.0
        %1010 = vmatprep.subr.mxu0 0.0
        %1011 = vmatpush1.msra.mxu0 0.0
        %1012 = vmatprep.subr.mxu0 0.0
        %1013 = vmatpush1.msra.mxu0 0.0
        %1014 = vmatprep.subr.mxu0 0.0
        %1015 = vmatpush1.msra.mxu0 0.0
        %1016 = vmatprep.subr.mxu0 0.0
        %1017 = vmatpush1.msra.mxu0 0.0
        %1018 = vmatprep.subr.mxu0 0.0
        %1019 = vmatpush1.msra.mxu0 0.0
        %1020 = vmatprep.subr.mxu0 0.0
        %1021 = vmatpush1.msra.mxu0 0.0
        %1022 = vmatprep.subr.mxu0 0.0
        %1023 = vmatpush1.msra.mxu0 0.0
        %1024 = vmatprep.subr.mxu0 0.0
        %1025 = vmatpush1.msra.mxu0 0.0
        %1026 = vmatprep.subr.mxu0 0.0
        %1027 = vmatpush1.msra.mxu0 0.0
        %1028 = vmatprep.subr.mxu0 0.0
        %1029 = vmatpush1.msra.mxu0 0.0
        %1030 = vmatprep.subr.mxu0 0.0
        %1031 = vmatpush1.msra.mxu0 0.0
        %1032 = vmatprep.mubr.f32.mxu0 0.0
        %1033 = vmatmul.mubr.f32.gmra.mrb[0].mxu0 %v861
        %v1034 = vpop.f32.mrb[0].mxu0
        %v1035 = vadd.f32 %v682, %v1034
        %v1036 = vpop.f32.mrb[0].mxu0
        %1037 = vmatprep.mubr.f32.mxu0 0.0
        %1038 = vmatmul.mubr.f32.gmra.mrb[0].mxu0 %v864
        %v1039 = vpop.f32.mrb[0].mxu0
        %v1040 = vadd.f32 %v687, %v1039
        %v1041 = vpop.f32.mrb[0].mxu0
        %1042 = vmatprep.mubr.f32.mxu0 0.0
        %1043 = vmatmul.mubr.f32.gmra.mrb[0].mxu0 %v867
        %v1044 = vpop.f32.mrb[0].mxu0
        %v1045 = vadd.f32 %v692, %v1044
        %v1046 = vpop.f32.mrb[0].mxu0
        %1047 = vmatprep.mubr.f32.mxu0 0.0
        %1048 = vmatmul.mubr.f32.gmra.mrb[0].mxu0 %v870
        %v1049 = vpop.f32.mrb[0].mxu0
        %v1050 = vadd.f32 %v697, %v1049
        %v1051 = vpop.f32.mrb[0].mxu0
        %1052 = vmatprep.mubr.f32.mxu0 0.0
        %1053 = vmatmul.mubr.f32.gmra.mrb[0].mxu0 %v873
        %v1054 = vpop.f32.mrb[0].mxu0
        %v1055 = vadd.f32 %v702, %v1054
        %v1056 = vpop.f32.mrb[0].mxu0
        %1057 = vmatprep.mubr.f32.mxu0 0.0
        %1058 = vmatmul.mubr.f32.gmra.mrb[0].mxu0 %v876
        %v1059 = vpop.f32.mrb[0].mxu0
        %v1060 = vadd.f32 %v707, %v1059
        %v1061 = vpop.f32.mrb[0].mxu0
        %1062 = vmatprep.mubr.f32.mxu0 0.0
        %1063 = vmatmul.mubr.f32.gmra.mrb[0].mxu0 %v879
        %v1064 = vpop.f32.mrb[0].mxu0
        %v1065 = vadd.f32 %v712, %v1064
        %v1066 = vpop.f32.mrb[0].mxu0
        %1067 = vmatprep.mubr.f32.mxu0 0.0
        %1068 = vmatmul.mubr.f32.gmra.mrb[0].mxu0 %v882
        %v1069 = vpop.f32.mrb[0].mxu0
        %v1070 = vadd.f32 %v717, %v1069
        %v1071 = vpop.f32.mrb[0].mxu0
        %1072 = vmatprep.mubr.f32.mxu0 0.0
        %1073 = vmatmul.mubr.f32.gmra.mrb[0].mxu0 %v885
        %v1074 = vpop.f32.mrb[0].mxu0
        %v1075 = vadd.f32 %v722, %v1074
        %v1076 = vpop.f32.mrb[0].mxu0
        %1077 = vmatprep.mubr.f32.mxu0 0.0
        %1078 = vmatmul.mubr.f32.gmra.mrb[0].mxu0 %v888
        %v1079 = vpop.f32.mrb[0].mxu0
        %v1080 = vadd.f32 %v727, %v1079
        %v1081 = vpop.f32.mrb[0].mxu0
        %1082 = vmatprep.mubr.f32.mxu0 0.0
        %1083 = vmatmul.mubr.f32.gmra.mrb[0].mxu0 %v891
        %v1084 = vpop.f32.mrb[0].mxu0
        %v1085 = vadd.f32 %v732, %v1084
        %v1086 = vpop.f32.mrb[0].mxu0
        %1087 = vmatprep.mubr.f32.mxu0 0.0
        %1088 = vmatmul.mubr.f32.gmra.mrb[0].mxu0 %v894
        %v1089 = vpop.f32.mrb[0].mxu0
        %v1090 = vadd.f32 %v737, %v1089
        %v1091 = vpop.f32.mrb[0].mxu0
        %1092 = vmatprep.mubr.f32.mxu0 0.0
        %1093 = vmatmul.mubr.f32.gmra.mrb[0].mxu0 %v897
        %v1094 = vpop.f32.mrb[0].mxu0
        %v1095 = vadd.f32 %v742, %v1094
        %v1096 = vpop.f32.mrb[0].mxu0
        %1097 = vmatprep.mubr.f32.mxu0 0.0
        %1098 = vmatmul.mubr.f32.gmra.mrb[0].mxu0 %v900
        %v1099 = vpop.f32.mrb[0].mxu0
        %v1100 = vadd.f32 %v747, %v1099
        %v1101 = vpop.f32.mrb[0].mxu0
        %1102 = vmatprep.mubr.f32.mxu0 0.0
        %1103 = vmatmul.mubr.f32.gmra.mrb[0].mxu0 %v903
        %v1104 = vpop.f32.mrb[0].mxu0
        %v1105 = vadd.f32 %v752, %v1104
        %v1106 = vpop.f32.mrb[0].mxu0
        %1107 = vmatprep.mubr.f32.mxu0 0.0
        %1108 = vmatmul.mubr.f32.gmra.mrb[0].mxu0 %v906
        %v1109 = vpop.f32.mrb[0].mxu0
        %v1110 = vadd.f32 %v757, %v1109
        %v1111 = vpop.f32.mrb[0].mxu0
        %1112 = vmatprep.mubr.f32.mxu0 0.0
        %1113 = vmatmul.mubr.f32.gmra.mrb[0].mxu0 %v909
        %v1114 = vpop.f32.mrb[0].mxu0
        %v1115 = vadd.f32 %v762, %v1114
        %v1116 = vpop.f32.mrb[0].mxu0
        %1117 = vmatprep.mubr.f32.mxu0 0.0
        %1118 = vmatmul.mubr.f32.gmra.mrb[0].mxu0 %v912
        %v1119 = vpop.f32.mrb[0].mxu0
        %v1120 = vadd.f32 %v767, %v1119
        %v1121 = vpop.f32.mrb[0].mxu0
        %1122 = vmatprep.mubr.f32.mxu0 0.0
        %1123 = vmatmul.mubr.f32.gmra.mrb[0].mxu0 %v915
        %v1124 = vpop.f32.mrb[0].mxu0
        %v1125 = vadd.f32 %v772, %v1124
        %v1126 = vpop.f32.mrb[0].mxu0
        %1127 = vmatprep.mubr.f32.mxu0 0.0
        %1128 = vmatmul.mubr.f32.gmra.mrb[0].mxu0 %v918
        %v1129 = vpop.f32.mrb[0].mxu0
        %v1130 = vadd.f32 %v777, %v1129
        %v1131 = vpop.f32.mrb[0].mxu0
        %1132 = vmatprep.mubr.f32.mxu0 0.0
        %1133 = vmatmul.mubr.f32.gmra.mrb[0].mxu0 %v921
        %v1134 = vpop.f32.mrb[0].mxu0
        %v1135 = vadd.f32 %v782, %v1134
        %v1136 = vpop.f32.mrb[0].mxu0
        %1137 = vmatprep.mubr.f32.mxu0 0.0
        %1138 = vmatmul.mubr.f32.gmra.mrb[0].mxu0 %v924
        %v1139 = vpop.f32.mrb[0].mxu0
        %v1140 = vadd.f32 %v787, %v1139
        %v1141 = vpop.f32.mrb[0].mxu0
        %1142 = vmatprep.mubr.f32.mxu0 0.0
        %1143 = vmatmul.mubr.f32.gmra.mrb[0].mxu0 %v927
        %v1144 = vpop.f32.mrb[0].mxu0
        %v1145 = vadd.f32 %v792, %v1144
        %v1146 = vpop.f32.mrb[0].mxu0
        %1147 = vmatprep.mubr.f32.mxu0 0.0
        %1148 = vmatmul.mubr.f32.gmra.mrb[0].mxu0 %v930
        %v1149 = vpop.f32.mrb[0].mxu0
        %v1150 = vadd.f32 %v797, %v1149
        %v1151 = vpop.f32.mrb[0].mxu0
        %1152 = vmatprep.mubr.f32.mxu0 0.0
        %1153 = vmatmul.mubr.f32.gmra.mrb[0].mxu0 %v933
        %v1154 = vpop.f32.mrb[0].mxu0
        %v1155 = vadd.f32 %v802, %v1154
        %v1156 = vpop.f32.mrb[0].mxu0
        %1157 = vmatprep.mubr.f32.mxu0 0.0
        %1158 = vmatmul.mubr.f32.gmra.mrb[0].mxu0 %v936
        %v1159 = vpop.f32.mrb[0].mxu0
        %v1160 = vadd.f32 %v807, %v1159
        %v1161 = vpop.f32.mrb[0].mxu0
        %1162 = vmatprep.mubr.f32.mxu0 0.0
        %1163 = vmatmul.mubr.f32.gmra.mrb[0].mxu0 %v939
        %v1164 = vpop.f32.mrb[0].mxu0
        %v1165 = vadd.f32 %v812, %v1164
        %v1166 = vpop.f32.mrb[0].mxu0
        %1167 = vmatprep.mubr.f32.mxu0 0.0
        %1168 = vmatmul.mubr.f32.gmra.mrb[0].mxu0 %v942
        %v1169 = vpop.f32.mrb[0].mxu0
        %v1170 = vadd.f32 %v817, %v1169
        %v1171 = vpop.f32.mrb[0].mxu0
        %1172 = vmatprep.mubr.f32.mxu0 0.0
        %1173 = vmatmul.mubr.f32.gmra.mrb[0].mxu0 %v945
        %v1174 = vpop.f32.mrb[0].mxu0
        %v1175 = vadd.f32 %v822, %v1174
        %v1176 = vpop.f32.mrb[0].mxu0
        %1177 = vmatprep.mubr.f32.mxu0 0.0
        %1178 = vmatmul.mubr.f32.gmra.mrb[0].mxu0 %v948
        %v1179 = vpop.f32.mrb[0].mxu0
        %v1180 = vadd.f32 %v827, %v1179
        %v1181 = vpop.f32.mrb[0].mxu0
        %1182 = vmatprep.mubr.f32.mxu0 0.0
        %1183 = vmatmul.mubr.f32.gmra.mrb[0].mxu0 %v951
        %v1184 = vpop.f32.mrb[0].mxu0
        %v1185 = vadd.f32 %v832, %v1184
        %v1186 = vpop.f32.mrb[0].mxu0
        %1187 = vmatprep.mubr.f32.mxu0 0.0
        %1188 = vmatmul.mubr.f32.gmra.mrb[0].mxu0 %v954
        %v1189 = vpop.f32.mrb[0].mxu0
        %v1190 = vadd.f32 %v837, %v1189
        %v1191 = vpop.f32.mrb[0].mxu0
        %1192 = vmatprep.mubr.f32.mxu0 0.0
        %1193 = vmatmul.mubr.f32.gmra.mrb[0].mxu0 %v957
        %v1194 = vpop.f32.mrb[0].mxu0
        %v1195 = vadd.f32 %v842, %v1194
        %v1196 = vpop.f32.mrb[0].mxu0
        %1197 = vmatprep.mubr.f32.mxu0 0.0
        %1198 = vmatmul.mubr.f32.gmra.mrb[0].mxu0 %v960
        %v1199 = vpop.f32.mrb[0].mxu0
        %v1200 = vadd.f32 %v847, %v1199
        %v1201 = vpop.f32.mrb[0].mxu0
        %1202 = vmatprep.mubr.f32.mxu0 0.0
        %1203 = vmatmul.mubr.f32.gmra.mrb[0].mxu0 %v963
        %v1204 = vpop.f32.mrb[0].mxu0
        %v1205 = vadd.f32 %v852, %v1204
        %v1206 = vpop.f32.mrb[0].mxu0
        %1207 = vmatprep.mubr.f32.mxu0 0.0
        %1208 = vmatmul.mubr.f32.gmra.mrb[0].mxu0 %v966
        %v1209 = vpop.f32.mrb[0].mxu0
        %v1210 = vadd.f32 %v857, %v1209
        %v1211 = vpop.f32.mrb[0].mxu0
        %1212 = vdwg.mxu0
        %v1213 = vld [vmem:[%s390 + $0x2] sm:$0xff]
        %v1214 = vld [vmem:[%s390 + $0xa] sm:$0xff]
        %v1215 = vld [vmem:[%s390 + $0x12] sm:$0xff]
        %v1216 = vld [vmem:[%s390 + $0x1a] sm:$0xff]
        %v1217 = vld [vmem:[%s390 + $0x22] sm:$0xff]
        %v1218 = vld [vmem:[%s390 + $0x2a] sm:$0xff]
        %v1219 = vld [vmem:[%s390 + $0x32] sm:$0xff]
        %v1220 = vld [vmem:[%s390 + $0x3a] sm:$0xff]
        %v1221 = vld [vmem:[%s390 + $0x42] sm:$0xff]
        %v1222 = vld [vmem:[%s390 + $0x4a] sm:$0xff]
        %v1223 = vld [vmem:[%s390 + $0x52] sm:$0xff]
        %v1224 = vld [vmem:[%s390 + $0x5a] sm:$0xff]
        %v1225 = vld [vmem:[%s390 + $0x62] sm:$0xff]
        %v1226 = vld [vmem:[%s390 + $0x6a] sm:$0xff]
        %v1227 = vld [vmem:[%s390 + $0x72] sm:$0xff]
        %v1228 = vld [vmem:[%s390 + $0x7a] sm:$0xff]
        %v1229 = vld [vmem:[%s390 + $0x82] sm:$0xff]
        %v1230 = vld [vmem:[%s390 + $0x8a] sm:$0xff]
        %v1231 = vld [vmem:[%s390 + $0x92] sm:$0xff]
        %v1232 = vld [vmem:[%s390 + $0x9a] sm:$0xff]
        %v1233 = vld [vmem:[%s390 + $0xa2] sm:$0xff]
        %v1234 = vld [vmem:[%s390 + $0xaa] sm:$0xff]
        %v1235 = vld [vmem:[%s390 + $0xb2] sm:$0xff]
        %v1236 = vld [vmem:[%s390 + $0xba] sm:$0xff]
        %v1237 = vld [vmem:[%s390 + $0xc2] sm:$0xff]
        %v1238 = vld [vmem:[%s390 + $0xca] sm:$0xff]
        %v1239 = vld [vmem:[%s390 + $0xd2] sm:$0xff]
        %v1240 = vld [vmem:[%s390 + $0xda] sm:$0xff]
        %v1241 = vld [vmem:[%s390 + $0xe2] sm:$0xff]
        %v1242 = vld [vmem:[%s390 + $0xea] sm:$0xff]
        %v1243 = vld [vmem:[%s390 + $0xf2] sm:$0xff]
        %v1244 = vld [vmem:[%s390 + $0xfa] sm:$0xff]
        %v1245 = vld [vmem:[%s390 + $0x102] sm:$0xff]
        %v1246 = vld [vmem:[%s390 + $0x10a] sm:$0xff]
        %v1247 = vld [vmem:[%s390 + $0x112] sm:$0xff]
        %v1248 = vld [vmem:[%s390 + $0x11a] sm:$0xff]
        %s1249 = scalar_lea.vmem %s2, 16
        %v1250 = vld [vmem:[%s1249] sm:$0xff]
        %v1252 = vsel %vm506, %v1213, 0
        %v1255 = vsel %vm506, %v1214, 0
        %v1258 = vsel %vm506, %v1215, 0
        %v1261 = vsel %vm506, %v1216, 0
        %v1264 = vsel %vm506, %v1217, 0
        %v1267 = vsel %vm506, %v1218, 0
        %v1270 = vsel %vm506, %v1219, 0
        %v1273 = vsel %vm506, %v1220, 0
        %v1276 = vsel %vm506, %v1221, 0
        %v1279 = vsel %vm506, %v1222, 0
        %v1282 = vsel %vm506, %v1223, 0
        %v1285 = vsel %vm506, %v1224, 0
        %v1288 = vsel %vm506, %v1225, 0
        %v1291 = vsel %vm506, %v1226, 0
        %v1294 = vsel %vm506, %v1227, 0
        %v1297 = vsel %vm506, %v1228, 0
        %v1300 = vsel %vm506, %v1229, 0
        %v1303 = vsel %vm506, %v1230, 0
        %v1306 = vsel %vm506, %v1231, 0
        %v1309 = vsel %vm506, %v1232, 0
        %v1312 = vsel %vm506, %v1233, 0
        %v1315 = vsel %vm506, %v1234, 0
        %v1318 = vsel %vm506, %v1235, 0
        %v1321 = vsel %vm506, %v1236, 0
        %v1324 = vsel %vm506, %v1237, 0
        %v1327 = vsel %vm506, %v1238, 0
        %v1330 = vsel %vm506, %v1239, 0
        %v1333 = vsel %vm506, %v1240, 0
        %v1336 = vsel %vm506, %v1241, 0
        %v1339 = vsel %vm506, %v1242, 0
        %v1342 = vsel %vm506, %v1243, 0
        %v1345 = vsel %vm506, %v1244, 0
        %v1348 = vsel %vm506, %v1245, 0
        %v1351 = vsel %vm506, %v1246, 0
        %v1354 = vsel %vm506, %v1247, 0
        %v1357 = vsel %vm506, %v1248, 0
        %1359 = vmatprep.subr.mxu0 0.0
        %1360 = vmatpush1.msra.mxu0 %v1250
        %1361 = vmatprep.subr.mxu0 0.0
        %1362 = vmatpush1.msra.mxu0 0.0
        %1363 = vmatprep.subr.mxu0 0.0
        %1364 = vmatpush1.msra.mxu0 0.0
        %1365 = vmatprep.subr.mxu0 0.0
        %1366 = vmatpush1.msra.mxu0 0.0
        %1367 = vmatprep.subr.mxu0 0.0
        %1368 = vmatpush1.msra.mxu0 0.0
        %1369 = vmatprep.subr.mxu0 0.0
        %1370 = vmatpush1.msra.mxu0 0.0
        %1371 = vmatprep.subr.mxu0 0.0
        %1372 = vmatpush1.msra.mxu0 0.0
        %1373 = vmatprep.subr.mxu0 0.0
        %1374 = vmatpush1.msra.mxu0 0.0
        %1375 = vmatprep.subr.mxu0 0.0
        %1376 = vmatpush1.msra.mxu0 0.0
        %1377 = vmatprep.subr.mxu0 0.0
        %1378 = vmatpush1.msra.mxu0 0.0
        %1379 = vmatprep.subr.mxu0 0.0
        %1380 = vmatpush1.msra.mxu0 0.0
        %1381 = vmatprep.subr.mxu0 0.0
        %1382 = vmatpush1.msra.mxu0 0.0
        %1383 = vmatprep.subr.mxu0 0.0
        %1384 = vmatpush1.msra.mxu0 0.0
        %1385 = vmatprep.subr.mxu0 0.0
        %1386 = vmatpush1.msra.mxu0 0.0
        %1387 = vmatprep.subr.mxu0 0.0
        %1388 = vmatpush1.msra.mxu0 0.0
        %1389 = vmatprep.subr.mxu0 0.0
        %1390 = vmatpush1.msra.mxu0 0.0
        %1391 = vmatprep.subr.mxu0 0.0
        %1392 = vmatpush1.msra.mxu0 0.0
        %1393 = vmatprep.subr.mxu0 0.0
        %1394 = vmatpush1.msra.mxu0 0.0
        %1395 = vmatprep.subr.mxu0 0.0
        %1396 = vmatpush1.msra.mxu0 0.0
        %1397 = vmatprep.subr.mxu0 0.0
        %1398 = vmatpush1.msra.mxu0 0.0
        %1399 = vmatprep.subr.mxu0 0.0
        %1400 = vmatpush1.msra.mxu0 0.0
        %1401 = vmatprep.subr.mxu0 0.0
        %1402 = vmatpush1.msra.mxu0 0.0
        %1403 = vmatprep.subr.mxu0 0.0
        %1404 = vmatpush1.msra.mxu0 0.0
        %1405 = vmatprep.subr.mxu0 0.0
        %1406 = vmatpush1.msra.mxu0 0.0
        %1407 = vmatprep.subr.mxu0 0.0
        %1408 = vmatpush1.msra.mxu0 0.0
        %1409 = vmatprep.subr.mxu0 0.0
        %1410 = vmatpush1.msra.mxu0 0.0
        %1411 = vmatprep.subr.mxu0 0.0
        %1412 = vmatpush1.msra.mxu0 0.0
        %1413 = vmatprep.subr.mxu0 0.0
        %1414 = vmatpush1.msra.mxu0 0.0
        %1415 = vmatprep.subr.mxu0 0.0
        %1416 = vmatpush1.msra.mxu0 0.0
        %1417 = vmatprep.subr.mxu0 0.0
        %1418 = vmatpush1.msra.mxu0 0.0
        %1419 = vmatprep.subr.mxu0 0.0
        %1420 = vmatpush1.msra.mxu0 0.0
        %1421 = vmatprep.subr.mxu0 0.0
        %1422 = vmatpush1.msra.mxu0 0.0
        %1423 = vmatprep.mubr.f32.mxu0 0.0
        %1424 = vmatmul.mubr.f32.gmra.mrb[0].mxu0 %v1252
        %v1425 = vpop.f32.mrb[0].mxu0
        %v1426 = vadd.f32 0.0, %v1425
        %v1427 = vpop.f32.mrb[0].mxu0
        %1428 = vmatprep.mubr.f32.mxu0 0.0
        %1429 = vmatmul.mubr.f32.gmra.mrb[0].mxu0 %v1255
        %v1430 = vpop.f32.mrb[0].mxu0
        %v1431 = vadd.f32 0.0, %v1430
        %v1432 = vpop.f32.mrb[0].mxu0
        %1433 = vmatprep.mubr.f32.mxu0 0.0
        %1434 = vmatmul.mubr.f32.gmra.mrb[0].mxu0 %v1258
        %v1435 = vpop.f32.mrb[0].mxu0
        %v1436 = vadd.f32 0.0, %v1435
        %v1437 = vpop.f32.mrb[0].mxu0
        %1438 = vmatprep.mubr.f32.mxu0 0.0
        %1439 = vmatmul.mubr.f32.gmra.mrb[0].mxu0 %v1261
        %v1440 = vpop.f32.mrb[0].mxu0
        %v1441 = vadd.f32 0.0, %v1440
        %v1442 = vpop.f32.mrb[0].mxu0
        %1443 = vmatprep.mubr.f32.mxu0 0.0
        %1444 = vmatmul.mubr.f32.gmra.mrb[0].mxu0 %v1264
        %v1445 = vpop.f32.mrb[0].mxu0
        %v1446 = vadd.f32 0.0, %v1445
        %v1447 = vpop.f32.mrb[0].mxu0
        %1448 = vmatprep.mubr.f32.mxu0 0.0
        %1449 = vmatmul.mubr.f32.gmra.mrb[0].mxu0 %v1267
        %v1450 = vpop.f32.mrb[0].mxu0
        %v1451 = vadd.f32 0.0, %v1450
        %v1452 = vpop.f32.mrb[0].mxu0
        %1453 = vmatprep.mubr.f32.mxu0 0.0
        %1454 = vmatmul.mubr.f32.gmra.mrb[0].mxu0 %v1270
        %v1455 = vpop.f32.mrb[0].mxu0
        %v1456 = vadd.f32 0.0, %v1455
        %v1457 = vpop.f32.mrb[0].mxu0
        %1458 = vmatprep.mubr.f32.mxu0 0.0
        %1459 = vmatmul.mubr.f32.gmra.mrb[0].mxu0 %v1273
        %v1460 = vpop.f32.mrb[0].mxu0
        %v1461 = vadd.f32 0.0, %v1460
        %v1462 = vpop.f32.mrb[0].mxu0
        %1463 = vmatprep.mubr.f32.mxu0 0.0
        %1464 = vmatmul.mubr.f32.gmra.mrb[0].mxu0 %v1276
        %v1465 = vpop.f32.mrb[0].mxu0
        %v1466 = vadd.f32 0.0, %v1465
        %v1467 = vpop.f32.mrb[0].mxu0
        %1468 = vmatprep.mubr.f32.mxu0 0.0
        %1469 = vmatmul.mubr.f32.gmra.mrb[0].mxu0 %v1279
        %v1470 = vpop.f32.mrb[0].mxu0
        %v1471 = vadd.f32 0.0, %v1470
        %v1472 = vpop.f32.mrb[0].mxu0
        %1473 = vmatprep.mubr.f32.mxu0 0.0
        %1474 = vmatmul.mubr.f32.gmra.mrb[0].mxu0 %v1282
        %v1475 = vpop.f32.mrb[0].mxu0
        %v1476 = vadd.f32 0.0, %v1475
        %v1477 = vpop.f32.mrb[0].mxu0
        %1478 = vmatprep.mubr.f32.mxu0 0.0
        %1479 = vmatmul.mubr.f32.gmra.mrb[0].mxu0 %v1285
        %v1480 = vpop.f32.mrb[0].mxu0
        %v1481 = vadd.f32 0.0, %v1480
        %v1482 = vpop.f32.mrb[0].mxu0
        %1483 = vmatprep.mubr.f32.mxu0 0.0
        %1484 = vmatmul.mubr.f32.gmra.mrb[0].mxu0 %v1288
        %v1485 = vpop.f32.mrb[0].mxu0
        %v1486 = vadd.f32 0.0, %v1485
        %v1487 = vpop.f32.mrb[0].mxu0
        %1488 = vmatprep.mubr.f32.mxu0 0.0
        %1489 = vmatmul.mubr.f32.gmra.mrb[0].mxu0 %v1291
        %v1490 = vpop.f32.mrb[0].mxu0
        %v1491 = vadd.f32 0.0, %v1490
        %v1492 = vpop.f32.mrb[0].mxu0
        %1493 = vmatprep.mubr.f32.mxu0 0.0
        %1494 = vmatmul.mubr.f32.gmra.mrb[0].mxu0 %v1294
        %v1495 = vpop.f32.mrb[0].mxu0
        %v1496 = vadd.f32 0.0, %v1495
        %v1497 = vpop.f32.mrb[0].mxu0
        %1498 = vmatprep.mubr.f32.mxu0 0.0
        %1499 = vmatmul.mubr.f32.gmra.mrb[0].mxu0 %v1297
        %v1500 = vpop.f32.mrb[0].mxu0
        %v1501 = vadd.f32 0.0, %v1500
        %v1502 = vpop.f32.mrb[0].mxu0
        %1503 = vmatprep.mubr.f32.mxu0 0.0
        %1504 = vmatmul.mubr.f32.gmra.mrb[0].mxu0 %v1300
        %v1505 = vpop.f32.mrb[0].mxu0
        %v1506 = vadd.f32 0.0, %v1505
        %v1507 = vpop.f32.mrb[0].mxu0
        %1508 = vmatprep.mubr.f32.mxu0 0.0
        %1509 = vmatmul.mubr.f32.gmra.mrb[0].mxu0 %v1303
        %v1510 = vpop.f32.mrb[0].mxu0
        %v1511 = vadd.f32 0.0, %v1510
        %v1512 = vpop.f32.mrb[0].mxu0
        %1513 = vmatprep.mubr.f32.mxu0 0.0
        %1514 = vmatmul.mubr.f32.gmra.mrb[0].mxu0 %v1306
        %v1515 = vpop.f32.mrb[0].mxu0
        %v1516 = vadd.f32 0.0, %v1515
        %v1517 = vpop.f32.mrb[0].mxu0
        %1518 = vmatprep.mubr.f32.mxu0 0.0
        %1519 = vmatmul.mubr.f32.gmra.mrb[0].mxu0 %v1309
        %v1520 = vpop.f32.mrb[0].mxu0
        %v1521 = vadd.f32 0.0, %v1520
        %v1522 = vpop.f32.mrb[0].mxu0
        %1523 = vmatprep.mubr.f32.mxu0 0.0
        %1524 = vmatmul.mubr.f32.gmra.mrb[0].mxu0 %v1312
        %v1525 = vpop.f32.mrb[0].mxu0
        %v1526 = vadd.f32 0.0, %v1525
        %v1527 = vpop.f32.mrb[0].mxu0
        %1528 = vmatprep.mubr.f32.mxu0 0.0
        %1529 = vmatmul.mubr.f32.gmra.mrb[0].mxu0 %v1315
        %v1530 = vpop.f32.mrb[0].mxu0
        %v1531 = vadd.f32 0.0, %v1530
        %v1532 = vpop.f32.mrb[0].mxu0
        %1533 = vmatprep.mubr.f32.mxu0 0.0
        %1534 = vmatmul.mubr.f32.gmra.mrb[0].mxu0 %v1318
        %v1535 = vpop.f32.mrb[0].mxu0
        %v1536 = vadd.f32 0.0, %v1535
        %v1537 = vpop.f32.mrb[0].mxu0
        %1538 = vmatprep.mubr.f32.mxu0 0.0
        %1539 = vmatmul.mubr.f32.gmra.mrb[0].mxu0 %v1321
        %v1540 = vpop.f32.mrb[0].mxu0
        %v1541 = vadd.f32 0.0, %v1540
        %v1542 = vpop.f32.mrb[0].mxu0
        %1543 = vmatprep.mubr.f32.mxu0 0.0
        %1544 = vmatmul.mubr.f32.gmra.mrb[0].mxu0 %v1324
        %v1545 = vpop.f32.mrb[0].mxu0
        %v1546 = vadd.f32 0.0, %v1545
        %v1547 = vpop.f32.mrb[0].mxu0
        %1548 = vmatprep.mubr.f32.mxu0 0.0
        %1549 = vmatmul.mubr.f32.gmra.mrb[0].mxu0 %v1327
        %v1550 = vpop.f32.mrb[0].mxu0
        %v1551 = vadd.f32 0.0, %v1550
        %v1552 = vpop.f32.mrb[0].mxu0
        %1553 = vmatprep.mubr.f32.mxu0 0.0
        %1554 = vmatmul.mubr.f32.gmra.mrb[0].mxu0 %v1330
        %v1555 = vpop.f32.mrb[0].mxu0
        %v1556 = vadd.f32 0.0, %v1555
        %v1557 = vpop.f32.mrb[0].mxu0
        %1558 = vmatprep.mubr.f32.mxu0 0.0
        %1559 = vmatmul.mubr.f32.gmra.mrb[0].mxu0 %v1333
        %v1560 = vpop.f32.mrb[0].mxu0
        %v1561 = vadd.f32 0.0, %v1560
        %v1562 = vpop.f32.mrb[0].mxu0
        %1563 = vmatprep.mubr.f32.mxu0 0.0
        %1564 = vmatmul.mubr.f32.gmra.mrb[0].mxu0 %v1336
        %v1565 = vpop.f32.mrb[0].mxu0
        %v1566 = vadd.f32 0.0, %v1565
        %v1567 = vpop.f32.mrb[0].mxu0
        %1568 = vmatprep.mubr.f32.mxu0 0.0
        %1569 = vmatmul.mubr.f32.gmra.mrb[0].mxu0 %v1339
        %v1570 = vpop.f32.mrb[0].mxu0
        %v1571 = vadd.f32 0.0, %v1570
        %v1572 = vpop.f32.mrb[0].mxu0
        %1573 = vmatprep.mubr.f32.mxu0 0.0
        %1574 = vmatmul.mubr.f32.gmra.mrb[0].mxu0 %v1342
        %v1575 = vpop.f32.mrb[0].mxu0
        %v1576 = vadd.f32 0.0, %v1575
        %v1577 = vpop.f32.mrb[0].mxu0
        %1578 = vmatprep.mubr.f32.mxu0 0.0
        %1579 = vmatmul.mubr.f32.gmra.mrb[0].mxu0 %v1345
        %v1580 = vpop.f32.mrb[0].mxu0
        %v1581 = vadd.f32 0.0, %v1580
        %v1582 = vpop.f32.mrb[0].mxu0
        %1583 = vmatprep.mubr.f32.mxu0 0.0
        %1584 = vmatmul.mubr.f32.gmra.mrb[0].mxu0 %v1348
        %v1585 = vpop.f32.mrb[0].mxu0
        %v1586 = vadd.f32 0.0, %v1585
        %v1587 = vpop.f32.mrb[0].mxu0
        %1588 = vmatprep.mubr.f32.mxu0 0.0
        %1589 = vmatmul.mubr.f32.gmra.mrb[0].mxu0 %v1351
        %v1590 = vpop.f32.mrb[0].mxu0
        %v1591 = vadd.f32 0.0, %v1590
        %v1592 = vpop.f32.mrb[0].mxu0
        %1593 = vmatprep.mubr.f32.mxu0 0.0
        %1594 = vmatmul.mubr.f32.gmra.mrb[0].mxu0 %v1354
        %v1595 = vpop.f32.mrb[0].mxu0
        %v1596 = vadd.f32 0.0, %v1595
        %v1597 = vpop.f32.mrb[0].mxu0
        %1598 = vmatprep.mubr.f32.mxu0 0.0
        %1599 = vmatmul.mubr.f32.gmra.mrb[0].mxu0 %v1357
        %v1600 = vpop.f32.mrb[0].mxu0
        %v1601 = vadd.f32 0.0, %v1600
        %v1602 = vpop.f32.mrb[0].mxu0
        %1603 = vdwg.mxu0
        %v1604 = vadd.f32 %v1035, %v1426
        %v1605 = vadd.f32 %v1040, %v1431
        %v1606 = vadd.f32 %v1045, %v1436
        %v1607 = vadd.f32 %v1050, %v1441
        %v1608 = vadd.f32 %v1055, %v1446
        %v1609 = vadd.f32 %v1060, %v1451
        %v1610 = vadd.f32 %v1065, %v1456
        %v1611 = vadd.f32 %v1070, %v1461
        %v1612 = vadd.f32 %v1075, %v1466
        %v1613 = vadd.f32 %v1080, %v1471
        %v1614 = vadd.f32 %v1085, %v1476
        %v1615 = vadd.f32 %v1090, %v1481
        %v1616 = vadd.f32 %v1095, %v1486
        %v1617 = vadd.f32 %v1100, %v1491
        %v1618 = vadd.f32 %v1105, %v1496
        %v1619 = vadd.f32 %v1110, %v1501
        %v1620 = vadd.f32 %v1115, %v1506
        %v1621 = vadd.f32 %v1120, %v1511
        %v1622 = vadd.f32 %v1125, %v1516
        %v1623 = vadd.f32 %v1130, %v1521
        %v1624 = vadd.f32 %v1135, %v1526
        %v1625 = vadd.f32 %v1140, %v1531
        %v1626 = vadd.f32 %v1145, %v1536
        %v1627 = vadd.f32 %v1150, %v1541
        %v1628 = vadd.f32 %v1155, %v1546
        %v1629 = vadd.f32 %v1160, %v1551
        %v1630 = vadd.f32 %v1165, %v1556
        %v1631 = vadd.f32 %v1170, %v1561
        %v1632 = vadd.f32 %v1175, %v1566
        %v1633 = vadd.f32 %v1180, %v1571
        %v1634 = vadd.f32 %v1185, %v1576
        %v1635 = vadd.f32 %v1190, %v1581
        %v1636 = vadd.f32 %v1195, %v1586
        %v1637 = vadd.f32 %v1200, %v1591
        %v1638 = vadd.f32 %v1205, %v1596
        %v1639 = vadd.f32 %v1210, %v1601
        %v1640 = vld [vmem:[%s390 + $0x12] sm:$0xff]
        %v1641 = vld [vmem:[%s390 + $0x1a] sm:$0xff]
        %v1642 = vld [vmem:[%s390 + $0x22] sm:$0xff]
        %v1643 = vld [vmem:[%s390 + $0x2a] sm:$0xff]
        %v1644 = vld [vmem:[%s390 + $0x32] sm:$0xff]
        %v1645 = vld [vmem:[%s390 + $0x3a] sm:$0xff]
        %v1646 = vld [vmem:[%s390 + $0x42] sm:$0xff]
        %v1647 = vld [vmem:[%s390 + $0x4a] sm:$0xff]
        %v1648 = vld [vmem:[%s390 + $0x52] sm:$0xff]
        %v1649 = vld [vmem:[%s390 + $0x5a] sm:$0xff]
        %v1650 = vld [vmem:[%s390 + $0x62] sm:$0xff]
        %v1651 = vld [vmem:[%s390 + $0x6a] sm:$0xff]
        %v1652 = vld [vmem:[%s390 + $0x72] sm:$0xff]
        %v1653 = vld [vmem:[%s390 + $0x7a] sm:$0xff]
        %v1654 = vld [vmem:[%s390 + $0x82] sm:$0xff]
        %v1655 = vld [vmem:[%s390 + $0x8a] sm:$0xff]
        %v1656 = vld [vmem:[%s390 + $0x92] sm:$0xff]
        %v1657 = vld [vmem:[%s390 + $0x9a] sm:$0xff]
        %v1658 = vld [vmem:[%s390 + $0xa2] sm:$0xff]
        %v1659 = vld [vmem:[%s390 + $0xaa] sm:$0xff]
        %v1660 = vld [vmem:[%s390 + $0xb2] sm:$0xff]
        %v1661 = vld [vmem:[%s390 + $0xba] sm:$0xff]
        %v1662 = vld [vmem:[%s390 + $0xc2] sm:$0xff]
        %v1663 = vld [vmem:[%s390 + $0xca] sm:$0xff]
        %v1664 = vld [vmem:[%s390 + $0xd2] sm:$0xff]
        %v1665 = vld [vmem:[%s390 + $0xda] sm:$0xff]
        %v1666 = vld [vmem:[%s390 + $0xe2] sm:$0xff]
        %v1667 = vld [vmem:[%s390 + $0xea] sm:$0xff]
        %v1668 = vld [vmem:[%s390 + $0xf2] sm:$0xff]
        %v1669 = vld [vmem:[%s390 + $0xfa] sm:$0xff]
        %v1670 = vld [vmem:[%s390 + $0x102] sm:$0xff]
        %v1671 = vld [vmem:[%s390 + $0x10a] sm:$0xff]
        %v1672 = vld [vmem:[%s390 + $0x112] sm:$0xff]
        %v1673 = vld [vmem:[%s390 + $0x11a] sm:$0xff]
        %v1674 = vld [vmem:[%s390 + $0x122] sm:$0xff]
        %v1675 = vld [vmem:[%s390 + $0x12a] sm:$0xff]
        %s1676 = scalar_lea.vmem %s2, 24
        %v1677 = vld [vmem:[%s1676] sm:$0xff]
        %v1679 = vsel %vm506, %v1640, 0
        %v1682 = vsel %vm506, %v1641, 0
        %v1685 = vsel %vm506, %v1642, 0
        %v1688 = vsel %vm506, %v1643, 0
        %v1691 = vsel %vm506, %v1644, 0
        %v1694 = vsel %vm506, %v1645, 0
        %v1697 = vsel %vm506, %v1646, 0
        %v1700 = vsel %vm506, %v1647, 0
        %v1703 = vsel %vm506, %v1648, 0
        %v1706 = vsel %vm506, %v1649, 0
        %v1709 = vsel %vm506, %v1650, 0
        %v1712 = vsel %vm506, %v1651, 0
        %v1715 = vsel %vm506, %v1652, 0
        %v1718 = vsel %vm506, %v1653, 0
        %v1721 = vsel %vm506, %v1654, 0
        %v1724 = vsel %vm506, %v1655, 0
        %v1727 = vsel %vm506, %v1656, 0
        %v1730 = vsel %vm506, %v1657, 0
        %v1733 = vsel %vm506, %v1658, 0
        %v1736 = vsel %vm506, %v1659, 0
        %v1739 = vsel %vm506, %v1660, 0
        %v1742 = vsel %vm506, %v1661, 0
        %v1745 = vsel %vm506, %v1662, 0
        %v1748 = vsel %vm506, %v1663, 0
        %v1751 = vsel %vm506, %v1664, 0
        %v1754 = vsel %vm506, %v1665, 0
        %v1757 = vsel %vm506, %v1666, 0
        %v1760 = vsel %vm506, %v1667, 0
        %v1763 = vsel %vm506, %v1668, 0
        %v1766 = vsel %vm506, %v1669, 0
        %v1769 = vsel %vm506, %v1670, 0
        %v1772 = vsel %vm506, %v1671, 0
        %v1775 = vsel %vm506, %v1672, 0
        %v1778 = vsel %vm506, %v1673, 0
        %v1781 = vsel %vm506, %v1674, 0
        %v1784 = vsel %vm506, %v1675, 0
        %1786 = vmatprep.subr.mxu0 0.0
        %1787 = vmatpush1.msra.mxu0 %v1677
        %1788 = vmatprep.subr.mxu0 0.0
        %1789 = vmatpush1.msra.mxu0 0.0
        %1790 = vmatprep.subr.mxu0 0.0
        %1791 = vmatpush1.msra.mxu0 0.0
        %1792 = vmatprep.subr.mxu0 0.0
        %1793 = vmatpush1.msra.mxu0 0.0
        %1794 = vmatprep.subr.mxu0 0.0
        %1795 = vmatpush1.msra.mxu0 0.0
        %1796 = vmatprep.subr.mxu0 0.0
        %1797 = vmatpush1.msra.mxu0 0.0
        %1798 = vmatprep.subr.mxu0 0.0
        %1799 = vmatpush1.msra.mxu0 0.0
        %1800 = vmatprep.subr.mxu0 0.0
        %1801 = vmatpush1.msra.mxu0 0.0
        %1802 = vmatprep.subr.mxu0 0.0
        %1803 = vmatpush1.msra.mxu0 0.0
        %1804 = vmatprep.subr.mxu0 0.0
        %1805 = vmatpush1.msra.mxu0 0.0
        %1806 = vmatprep.subr.mxu0 0.0
        %1807 = vmatpush1.msra.mxu0 0.0
        %1808 = vmatprep.subr.mxu0 0.0
        %1809 = vmatpush1.msra.mxu0 0.0
        %1810 = vmatprep.subr.mxu0 0.0
        %1811 = vmatpush1.msra.mxu0 0.0
        %1812 = vmatprep.subr.mxu0 0.0
        %1813 = vmatpush1.msra.mxu0 0.0
        %1814 = vmatprep.subr.mxu0 0.0
        %1815 = vmatpush1.msra.mxu0 0.0
        %1816 = vmatprep.subr.mxu0 0.0
        %1817 = vmatpush1.msra.mxu0 0.0
        %1818 = vmatprep.subr.mxu0 0.0
        %1819 = vmatpush1.msra.mxu0 0.0
        %1820 = vmatprep.subr.mxu0 0.0
        %1821 = vmatpush1.msra.mxu0 0.0
        %1822 = vmatprep.subr.mxu0 0.0
        %1823 = vmatpush1.msra.mxu0 0.0
        %1824 = vmatprep.subr.mxu0 0.0
        %1825 = vmatpush1.msra.mxu0 0.0
        %1826 = vmatprep.subr.mxu0 0.0
        %1827 = vmatpush1.msra.mxu0 0.0
        %1828 = vmatprep.subr.mxu0 0.0
        %1829 = vmatpush1.msra.mxu0 0.0
        %1830 = vmatprep.subr.mxu0 0.0
        %1831 = vmatpush1.msra.mxu0 0.0
        %1832 = vmatprep.subr.mxu0 0.0
        %1833 = vmatpush1.msra.mxu0 0.0
        %1834 = vmatprep.subr.mxu0 0.0
        %1835 = vmatpush1.msra.mxu0 0.0
        %1836 = vmatprep.subr.mxu0 0.0
        %1837 = vmatpush1.msra.mxu0 0.0
        %1838 = vmatprep.subr.mxu0 0.0
        %1839 = vmatpush1.msra.mxu0 0.0
        %1840 = vmatprep.subr.mxu0 0.0
        %1841 = vmatpush1.msra.mxu0 0.0
        %1842 = vmatprep.subr.mxu0 0.0
        %1843 = vmatpush1.msra.mxu0 0.0
        %1844 = vmatprep.subr.mxu0 0.0
        %1845 = vmatpush1.msra.mxu0 0.0
        %1846 = vmatprep.subr.mxu0 0.0
        %1847 = vmatpush1.msra.mxu0 0.0
        %1848 = vmatprep.subr.mxu0 0.0
        %1849 = vmatpush1.msra.mxu0 0.0
        %1850 = vmatprep.mubr.f32.mxu0 0.0
        %1851 = vmatmul.mubr.f32.gmra.mrb[0].mxu0 %v1679
        %v1852 = vpop.f32.mrb[0].mxu0
        %v1853 = vadd.f32 0.0, %v1852
        %v1854 = vpop.f32.mrb[0].mxu0
        %1855 = vmatprep.mubr.f32.mxu0 0.0
        %1856 = vmatmul.mubr.f32.gmra.mrb[0].mxu0 %v1682
        %v1857 = vpop.f32.mrb[0].mxu0
        %v1858 = vadd.f32 0.0, %v1857
        %v1859 = vpop.f32.mrb[0].mxu0
        %1860 = vmatprep.mubr.f32.mxu0 0.0
        %1861 = vmatmul.mubr.f32.gmra.mrb[0].mxu0 %v1685
        %v1862 = vpop.f32.mrb[0].mxu0
        %v1863 = vadd.f32 0.0, %v1862
        %v1864 = vpop.f32.mrb[0].mxu0
        %1865 = vmatprep.mubr.f32.mxu0 0.0
        %1866 = vmatmul.mubr.f32.gmra.mrb[0].mxu0 %v1688
        %v1867 = vpop.f32.mrb[0].mxu0
        %v1868 = vadd.f32 0.0, %v1867
        %v1869 = vpop.f32.mrb[0].mxu0
        %1870 = vmatprep.mubr.f32.mxu0 0.0
        %1871 = vmatmul.mubr.f32.gmra.mrb[0].mxu0 %v1691
        %v1872 = vpop.f32.mrb[0].mxu0
        %v1873 = vadd.f32 0.0, %v1872
        %v1874 = vpop.f32.mrb[0].mxu0
        %1875 = vmatprep.mubr.f32.mxu0 0.0
        %1876 = vmatmul.mubr.f32.gmra.mrb[0].mxu0 %v1694
        %v1877 = vpop.f32.mrb[0].mxu0
        %v1878 = vadd.f32 0.0, %v1877
        %v1879 = vpop.f32.mrb[0].mxu0
        %1880 = vmatprep.mubr.f32.mxu0 0.0
        %1881 = vmatmul.mubr.f32.gmra.mrb[0].mxu0 %v1697
        %v1882 = vpop.f32.mrb[0].mxu0
        %v1883 = vadd.f32 0.0, %v1882
        %v1884 = vpop.f32.mrb[0].mxu0
        %1885 = vmatprep.mubr.f32.mxu0 0.0
        %1886 = vmatmul.mubr.f32.gmra.mrb[0].mxu0 %v1700
        %v1887 = vpop.f32.mrb[0].mxu0
        %v1888 = vadd.f32 0.0, %v1887
        %v1889 = vpop.f32.mrb[0].mxu0
        %1890 = vmatprep.mubr.f32.mxu0 0.0
        %1891 = vmatmul.mubr.f32.gmra.mrb[0].mxu0 %v1703
        %v1892 = vpop.f32.mrb[0].mxu0
        %v1893 = vadd.f32 0.0, %v1892
        %v1894 = vpop.f32.mrb[0].mxu0
        %1895 = vmatprep.mubr.f32.mxu0 0.0
        %1896 = vmatmul.mubr.f32.gmra.mrb[0].mxu0 %v1706
        %v1897 = vpop.f32.mrb[0].mxu0
        %v1898 = vadd.f32 0.0, %v1897
        %v1899 = vpop.f32.mrb[0].mxu0
        %1900 = vmatprep.mubr.f32.mxu0 0.0
        %1901 = vmatmul.mubr.f32.gmra.mrb[0].mxu0 %v1709
        %v1902 = vpop.f32.mrb[0].mxu0
        %v1903 = vadd.f32 0.0, %v1902
        %v1904 = vpop.f32.mrb[0].mxu0
        %1905 = vmatprep.mubr.f32.mxu0 0.0
        %1906 = vmatmul.mubr.f32.gmra.mrb[0].mxu0 %v1712
        %v1907 = vpop.f32.mrb[0].mxu0
        %v1908 = vadd.f32 0.0, %v1907
        %v1909 = vpop.f32.mrb[0].mxu0
        %1910 = vmatprep.mubr.f32.mxu0 0.0
        %1911 = vmatmul.mubr.f32.gmra.mrb[0].mxu0 %v1715
        %v1912 = vpop.f32.mrb[0].mxu0
        %v1913 = vadd.f32 0.0, %v1912
        %v1914 = vpop.f32.mrb[0].mxu0
        %1915 = vmatprep.mubr.f32.mxu0 0.0
        %1916 = vmatmul.mubr.f32.gmra.mrb[0].mxu0 %v1718
        %v1917 = vpop.f32.mrb[0].mxu0
        %v1918 = vadd.f32 0.0, %v1917
        %v1919 = vpop.f32.mrb[0].mxu0
        %1920 = vmatprep.mubr.f32.mxu0 0.0
        %1921 = vmatmul.mubr.f32.gmra.mrb[0].mxu0 %v1721
        %v1922 = vpop.f32.mrb[0].mxu0
        %v1923 = vadd.f32 0.0, %v1922
        %v1924 = vpop.f32.mrb[0].mxu0
        %1925 = vmatprep.mubr.f32.mxu0 0.0
        %1926 = vmatmul.mubr.f32.gmra.mrb[0].mxu0 %v1724
        %v1927 = vpop.f32.mrb[0].mxu0
        %v1928 = vadd.f32 0.0, %v1927
        %v1929 = vpop.f32.mrb[0].mxu0
        %1930 = vmatprep.mubr.f32.mxu0 0.0
        %1931 = vmatmul.mubr.f32.gmra.mrb[0].mxu0 %v1727
        %v1932 = vpop.f32.mrb[0].mxu0
        %v1933 = vadd.f32 0.0, %v1932
        %v1934 = vpop.f32.mrb[0].mxu0
        %1935 = vmatprep.mubr.f32.mxu0 0.0
        %1936 = vmatmul.mubr.f32.gmra.mrb[0].mxu0 %v1730
        %v1937 = vpop.f32.mrb[0].mxu0
        %v1938 = vadd.f32 0.0, %v1937
        %v1939 = vpop.f32.mrb[0].mxu0
        %1940 = vmatprep.mubr.f32.mxu0 0.0
        %1941 = vmatmul.mubr.f32.gmra.mrb[0].mxu0 %v1733
        %v1942 = vpop.f32.mrb[0].mxu0
        %v1943 = vadd.f32 0.0, %v1942
        %v1944 = vpop.f32.mrb[0].mxu0
        %1945 = vmatprep.mubr.f32.mxu0 0.0
        %1946 = vmatmul.mubr.f32.gmra.mrb[0].mxu0 %v1736
        %v1947 = vpop.f32.mrb[0].mxu0
        %v1948 = vadd.f32 0.0, %v1947
        %v1949 = vpop.f32.mrb[0].mxu0
        %1950 = vmatprep.mubr.f32.mxu0 0.0
        %1951 = vmatmul.mubr.f32.gmra.mrb[0].mxu0 %v1739
        %v1952 = vpop.f32.mrb[0].mxu0
        %v1953 = vadd.f32 0.0, %v1952
        %v1954 = vpop.f32.mrb[0].mxu0
        %1955 = vmatprep.mubr.f32.mxu0 0.0
        %1956 = vmatmul.mubr.f32.gmra.mrb[0].mxu0 %v1742
        %v1957 = vpop.f32.mrb[0].mxu0
        %v1958 = vadd.f32 0.0, %v1957
        %v1959 = vpop.f32.mrb[0].mxu0
        %1960 = vmatprep.mubr.f32.mxu0 0.0
        %1961 = vmatmul.mubr.f32.gmra.mrb[0].mxu0 %v1745
        %v1962 = vpop.f32.mrb[0].mxu0
        %v1963 = vadd.f32 0.0, %v1962
        %v1964 = vpop.f32.mrb[0].mxu0
        %1965 = vmatprep.mubr.f32.mxu0 0.0
        %1966 = vmatmul.mubr.f32.gmra.mrb[0].mxu0 %v1748
        %v1967 = vpop.f32.mrb[0].mxu0
        %v1968 = vadd.f32 0.0, %v1967
        %v1969 = vpop.f32.mrb[0].mxu0
        %1970 = vmatprep.mubr.f32.mxu0 0.0
        %1971 = vmatmul.mubr.f32.gmra.mrb[0].mxu0 %v1751
        %v1972 = vpop.f32.mrb[0].mxu0
        %v1973 = vadd.f32 0.0, %v1972
        %v1974 = vpop.f32.mrb[0].mxu0
        %1975 = vmatprep.mubr.f32.mxu0 0.0
        %1976 = vmatmul.mubr.f32.gmra.mrb[0].mxu0 %v1754
        %v1977 = vpop.f32.mrb[0].mxu0
        %v1978 = vadd.f32 0.0, %v1977
        %v1979 = vpop.f32.mrb[0].mxu0
        %1980 = vmatprep.mubr.f32.mxu0 0.0
        %1981 = vmatmul.mubr.f32.gmra.mrb[0].mxu0 %v1757
        %v1982 = vpop.f32.mrb[0].mxu0
        %v1983 = vadd.f32 0.0, %v1982
        %v1984 = vpop.f32.mrb[0].mxu0
        %1985 = vmatprep.mubr.f32.mxu0 0.0
        %1986 = vmatmul.mubr.f32.gmra.mrb[0].mxu0 %v1760
        %v1987 = vpop.f32.mrb[0].mxu0
        %v1988 = vadd.f32 0.0, %v1987
        %v1989 = vpop.f32.mrb[0].mxu0
        %1990 = vmatprep.mubr.f32.mxu0 0.0
        %1991 = vmatmul.mubr.f32.gmra.mrb[0].mxu0 %v1763
        %v1992 = vpop.f32.mrb[0].mxu0
        %v1993 = vadd.f32 0.0, %v1992
        %v1994 = vpop.f32.mrb[0].mxu0
        %1995 = vmatprep.mubr.f32.mxu0 0.0
        %1996 = vmatmul.mubr.f32.gmra.mrb[0].mxu0 %v1766
        %v1997 = vpop.f32.mrb[0].mxu0
        %v1998 = vadd.f32 0.0, %v1997
        %v1999 = vpop.f32.mrb[0].mxu0
        %2000 = vmatprep.mubr.f32.mxu0 0.0
        %2001 = vmatmul.mubr.f32.gmra.mrb[0].mxu0 %v1769
        %v2002 = vpop.f32.mrb[0].mxu0
        %v2003 = vadd.f32 0.0, %v2002
        %v2004 = vpop.f32.mrb[0].mxu0
        %2005 = vmatprep.mubr.f32.mxu0 0.0
        %2006 = vmatmul.mubr.f32.gmra.mrb[0].mxu0 %v1772
        %v2007 = vpop.f32.mrb[0].mxu0
        %v2008 = vadd.f32 0.0, %v2007
        %v2009 = vpop.f32.mrb[0].mxu0
        %2010 = vmatprep.mubr.f32.mxu0 0.0
        %2011 = vmatmul.mubr.f32.gmra.mrb[0].mxu0 %v1775
        %v2012 = vpop.f32.mrb[0].mxu0
        %v2013 = vadd.f32 0.0, %v2012
        %v2014 = vpop.f32.mrb[0].mxu0
        %2015 = vmatprep.mubr.f32.mxu0 0.0
        %2016 = vmatmul.mubr.f32.gmra.mrb[0].mxu0 %v1778
        %v2017 = vpop.f32.mrb[0].mxu0
        %v2018 = vadd.f32 0.0, %v2017
        %v2019 = vpop.f32.mrb[0].mxu0
        %2020 = vmatprep.mubr.f32.mxu0 0.0
        %2021 = vmatmul.mubr.f32.gmra.mrb[0].mxu0 %v1781
        %v2022 = vpop.f32.mrb[0].mxu0
        %v2023 = vadd.f32 0.0, %v2022
        %v2024 = vpop.f32.mrb[0].mxu0
        %2025 = vmatprep.mubr.f32.mxu0 0.0
        %2026 = vmatmul.mubr.f32.gmra.mrb[0].mxu0 %v1784
        %v2027 = vpop.f32.mrb[0].mxu0
        %v2028 = vadd.f32 0.0, %v2027
        %v2029 = vpop.f32.mrb[0].mxu0
        %2030 = vdwg.mxu0
        %v2031 = vadd.f32 %v1604, %v1853
        %v2032 = vadd.f32 %v1605, %v1858
        %v2033 = vadd.f32 %v1606, %v1863
        %v2034 = vadd.f32 %v1607, %v1868
        %v2035 = vadd.f32 %v1608, %v1873
        %v2036 = vadd.f32 %v1609, %v1878
        %v2037 = vadd.f32 %v1610, %v1883
        %v2038 = vadd.f32 %v1611, %v1888
        %v2039 = vadd.f32 %v1612, %v1893
        %v2040 = vadd.f32 %v1613, %v1898
        %v2041 = vadd.f32 %v1614, %v1903
        %v2042 = vadd.f32 %v1615, %v1908
        %v2043 = vadd.f32 %v1616, %v1913
        %v2044 = vadd.f32 %v1617, %v1918
        %v2045 = vadd.f32 %v1618, %v1923
        %v2046 = vadd.f32 %v1619, %v1928
        %v2047 = vadd.f32 %v1620, %v1933
        %v2048 = vadd.f32 %v1621, %v1938
        %v2049 = vadd.f32 %v1622, %v1943
        %v2050 = vadd.f32 %v1623, %v1948
        %v2051 = vadd.f32 %v1624, %v1953
        %v2052 = vadd.f32 %v1625, %v1958
        %v2053 = vadd.f32 %v1626, %v1963
        %v2054 = vadd.f32 %v1627, %v1968
        %v2055 = vadd.f32 %v1628, %v1973
        %v2056 = vadd.f32 %v1629, %v1978
        %v2057 = vadd.f32 %v1630, %v1983
        %v2058 = vadd.f32 %v1631, %v1988
        %v2059 = vadd.f32 %v1632, %v1993
        %v2060 = vadd.f32 %v1633, %v1998
        %v2061 = vadd.f32 %v1634, %v2003
        %v2062 = vadd.f32 %v1635, %v2008
        %v2063 = vadd.f32 %v1636, %v2013
        %v2064 = vadd.f32 %v1637, %v2018
        %v2065 = vadd.f32 %v1638, %v2023
        %v2066 = vadd.f32 %v1639, %v2028
        %v2067 = vld [vmem:[%s390 + $0x13] sm:$0xff]
        %v2068 = vld [vmem:[%s390 + $0x1b] sm:$0xff]
        %v2069 = vld [vmem:[%s390 + $0x23] sm:$0xff]
        %v2070 = vld [vmem:[%s390 + $0x2b] sm:$0xff]
        %v2071 = vld [vmem:[%s390 + $0x33] sm:$0xff]
        %v2072 = vld [vmem:[%s390 + $0x3b] sm:$0xff]
        %v2073 = vld [vmem:[%s390 + $0x43] sm:$0xff]
        %v2074 = vld [vmem:[%s390 + $0x4b] sm:$0xff]
        %v2075 = vld [vmem:[%s390 + $0x53] sm:$0xff]
        %v2076 = vld [vmem:[%s390 + $0x5b] sm:$0xff]
        %v2077 = vld [vmem:[%s390 + $0x63] sm:$0xff]
        %v2078 = vld [vmem:[%s390 + $0x6b] sm:$0xff]
        %v2079 = vld [vmem:[%s390 + $0x73] sm:$0xff]
        %v2080 = vld [vmem:[%s390 + $0x7b] sm:$0xff]
        %v2081 = vld [vmem:[%s390 + $0x83] sm:$0xff]
        %v2082 = vld [vmem:[%s390 + $0x8b] sm:$0xff]
        %v2083 = vld [vmem:[%s390 + $0x93] sm:$0xff]
        %v2084 = vld [vmem:[%s390 + $0x9b] sm:$0xff]
        %v2085 = vld [vmem:[%s390 + $0xa3] sm:$0xff]
        %v2086 = vld [vmem:[%s390 + $0xab] sm:$0xff]
        %v2087 = vld [vmem:[%s390 + $0xb3] sm:$0xff]
        %v2088 = vld [vmem:[%s390 + $0xbb] sm:$0xff]
        %v2089 = vld [vmem:[%s390 + $0xc3] sm:$0xff]
        %v2090 = vld [vmem:[%s390 + $0xcb] sm:$0xff]
        %v2091 = vld [vmem:[%s390 + $0xd3] sm:$0xff]
        %v2092 = vld [vmem:[%s390 + $0xdb] sm:$0xff]
        %v2093 = vld [vmem:[%s390 + $0xe3] sm:$0xff]
        %v2094 = vld [vmem:[%s390 + $0xeb] sm:$0xff]
        %v2095 = vld [vmem:[%s390 + $0xf3] sm:$0xff]
        %v2096 = vld [vmem:[%s390 + $0xfb] sm:$0xff]
        %v2097 = vld [vmem:[%s390 + $0x103] sm:$0xff]
        %v2098 = vld [vmem:[%s390 + $0x10b] sm:$0xff]
        %v2099 = vld [vmem:[%s390 + $0x113] sm:$0xff]
        %v2100 = vld [vmem:[%s390 + $0x11b] sm:$0xff]
        %v2101 = vld [vmem:[%s390 + $0x123] sm:$0xff]
        %v2102 = vld [vmem:[%s390 + $0x12b] sm:$0xff]
        %s2103 = scalar_lea.vmem %s2, 32
        %v2104 = vld [vmem:[%s2103] sm:$0xff]
        %v2106 = vsel %vm506, %v2067, 0
        %v2109 = vsel %vm506, %v2068, 0
        %v2112 = vsel %vm506, %v2069, 0
        %v2115 = vsel %vm506, %v2070, 0
        %v2118 = vsel %vm506, %v2071, 0
        %v2121 = vsel %vm506, %v2072, 0
        %v2124 = vsel %vm506, %v2073, 0
        %v2127 = vsel %vm506, %v2074, 0
        %v2130 = vsel %vm506, %v2075, 0
        %v2133 = vsel %vm506, %v2076, 0
        %v2136 = vsel %vm506, %v2077, 0
        %v2139 = vsel %vm506, %v2078, 0
        %v2142 = vsel %vm506, %v2079, 0
        %v2145 = vsel %vm506, %v2080, 0
        %v2148 = vsel %vm506, %v2081, 0
        %v2151 = vsel %vm506, %v2082, 0
        %v2154 = vsel %vm506, %v2083, 0
        %v2157 = vsel %vm506, %v2084, 0
        %v2160 = vsel %vm506, %v2085, 0
        %v2163 = vsel %vm506, %v2086, 0
        %v2166 = vsel %vm506, %v2087, 0
        %v2169 = vsel %vm506, %v2088, 0
        %v2172 = vsel %vm506, %v2089, 0
        %v2175 = vsel %vm506, %v2090, 0
        %v2178 = vsel %vm506, %v2091, 0
        %v2181 = vsel %vm506, %v2092, 0
        %v2184 = vsel %vm506, %v2093, 0
        %v2187 = vsel %vm506, %v2094, 0
        %v2190 = vsel %vm506, %v2095, 0
        %v2193 = vsel %vm506, %v2096, 0
        %v2196 = vsel %vm506, %v2097, 0
        %v2199 = vsel %vm506, %v2098, 0
        %v2202 = vsel %vm506, %v2099, 0
        %v2205 = vsel %vm506, %v2100, 0
        %v2208 = vsel %vm506, %v2101, 0
        %v2211 = vsel %vm506, %v2102, 0
        %2213 = vmatprep.subr.mxu0 0.0
        %2214 = vmatpush1.msra.mxu0 %v2104
        %2215 = vmatprep.subr.mxu0 0.0
        %2216 = vmatpush1.msra.mxu0 0.0
        %2217 = vmatprep.subr.mxu0 0.0
        %2218 = vmatpush1.msra.mxu0 0.0
        %2219 = vmatprep.subr.mxu0 0.0
        %2220 = vmatpush1.msra.mxu0 0.0
        %2221 = vmatprep.subr.mxu0 0.0
        %2222 = vmatpush1.msra.mxu0 0.0
        %2223 = vmatprep.subr.mxu0 0.0
        %2224 = vmatpush1.msra.mxu0 0.0
        %2225 = vmatprep.subr.mxu0 0.0
        %2226 = vmatpush1.msra.mxu0 0.0
        %2227 = vmatprep.subr.mxu0 0.0
        %2228 = vmatpush1.msra.mxu0 0.0
        %2229 = vmatprep.subr.mxu0 0.0
        %2230 = vmatpush1.msra.mxu0 0.0
        %2231 = vmatprep.subr.mxu0 0.0
        %2232 = vmatpush1.msra.mxu0 0.0
        %2233 = vmatprep.subr.mxu0 0.0
        %2234 = vmatpush1.msra.mxu0 0.0
        %2235 = vmatprep.subr.mxu0 0.0
        %2236 = vmatpush1.msra.mxu0 0.0
        %2237 = vmatprep.subr.mxu0 0.0
        %2238 = vmatpush1.msra.mxu0 0.0
        %2239 = vmatprep.subr.mxu0 0.0
        %2240 = vmatpush1.msra.mxu0 0.0
        %2241 = vmatprep.subr.mxu0 0.0
        %2242 = vmatpush1.msra.mxu0 0.0
        %2243 = vmatprep.subr.mxu0 0.0
        %2244 = vmatpush1.msra.mxu0 0.0
        %2245 = vmatprep.subr.mxu0 0.0
        %2246 = vmatpush1.msra.mxu0 0.0
        %2247 = vmatprep.subr.mxu0 0.0
        %2248 = vmatpush1.msra.mxu0 0.0
        %2249 = vmatprep.subr.mxu0 0.0
        %2250 = vmatpush1.msra.mxu0 0.0
        %2251 = vmatprep.subr.mxu0 0.0
        %2252 = vmatpush1.msra.mxu0 0.0
        %2253 = vmatprep.subr.mxu0 0.0
        %2254 = vmatpush1.msra.mxu0 0.0
        %2255 = vmatprep.subr.mxu0 0.0
        %2256 = vmatpush1.msra.mxu0 0.0
        %2257 = vmatprep.subr.mxu0 0.0
        %2258 = vmatpush1.msra.mxu0 0.0
        %2259 = vmatprep.subr.mxu0 0.0
        %2260 = vmatpush1.msra.mxu0 0.0
        %2261 = vmatprep.subr.mxu0 0.0
        %2262 = vmatpush1.msra.mxu0 0.0
        %2263 = vmatprep.subr.mxu0 0.0
        %2264 = vmatpush1.msra.mxu0 0.0
        %2265 = vmatprep.subr.mxu0 0.0
        %2266 = vmatpush1.msra.mxu0 0.0
        %2267 = vmatprep.subr.mxu0 0.0
        %2268 = vmatpush1.msra.mxu0 0.0
        %2269 = vmatprep.subr.mxu0 0.0
        %2270 = vmatpush1.msra.mxu0 0.0
        %2271 = vmatprep.subr.mxu0 0.0
        %2272 = vmatpush1.msra.mxu0 0.0
        %2273 = vmatprep.subr.mxu0 0.0
        %2274 = vmatpush1.msra.mxu0 0.0
        %2275 = vmatprep.subr.mxu0 0.0
        %2276 = vmatpush1.msra.mxu0 0.0
        %2277 = vmatprep.mubr.f32.mxu0 0.0
        %2278 = vmatmul.mubr.f32.gmra.mrb[0].mxu0 %v2106
        %v2279 = vpop.f32.mrb[0].mxu0
        %v2280 = vadd.f32 0.0, %v2279
        %v2281 = vpop.f32.mrb[0].mxu0
        %2282 = vmatprep.mubr.f32.mxu0 0.0
        %2283 = vmatmul.mubr.f32.gmra.mrb[0].mxu0 %v2109
        %v2284 = vpop.f32.mrb[0].mxu0
        %v2285 = vadd.f32 0.0, %v2284
        %v2286 = vpop.f32.mrb[0].mxu0
        %2287 = vmatprep.mubr.f32.mxu0 0.0
        %2288 = vmatmul.mubr.f32.gmra.mrb[0].mxu0 %v2112
        %v2289 = vpop.f32.mrb[0].mxu0
        %v2290 = vadd.f32 0.0, %v2289
        %v2291 = vpop.f32.mrb[0].mxu0
        %2292 = vmatprep.mubr.f32.mxu0 0.0
        %2293 = vmatmul.mubr.f32.gmra.mrb[0].mxu0 %v2115
        %v2294 = vpop.f32.mrb[0].mxu0
        %v2295 = vadd.f32 0.0, %v2294
        %v2296 = vpop.f32.mrb[0].mxu0
        %2297 = vmatprep.mubr.f32.mxu0 0.0
        %2298 = vmatmul.mubr.f32.gmra.mrb[0].mxu0 %v2118
        %v2299 = vpop.f32.mrb[0].mxu0
        %v2300 = vadd.f32 0.0, %v2299
        %v2301 = vpop.f32.mrb[0].mxu0
        %2302 = vmatprep.mubr.f32.mxu0 0.0
        %2303 = vmatmul.mubr.f32.gmra.mrb[0].mxu0 %v2121
        %v2304 = vpop.f32.mrb[0].mxu0
        %v2305 = vadd.f32 0.0, %v2304
        %v2306 = vpop.f32.mrb[0].mxu0
        %2307 = vmatprep.mubr.f32.mxu0 0.0
        %2308 = vmatmul.mubr.f32.gmra.mrb[0].mxu0 %v2124
        %v2309 = vpop.f32.mrb[0].mxu0
        %v2310 = vadd.f32 0.0, %v2309
        %v2311 = vpop.f32.mrb[0].mxu0
        %2312 = vmatprep.mubr.f32.mxu0 0.0
        %2313 = vmatmul.mubr.f32.gmra.mrb[0].mxu0 %v2127
        %v2314 = vpop.f32.mrb[0].mxu0
        %v2315 = vadd.f32 0.0, %v2314
        %v2316 = vpop.f32.mrb[0].mxu0
        %2317 = vmatprep.mubr.f32.mxu0 0.0
        %2318 = vmatmul.mubr.f32.gmra.mrb[0].mxu0 %v2130
        %v2319 = vpop.f32.mrb[0].mxu0
        %v2320 = vadd.f32 0.0, %v2319
        %v2321 = vpop.f32.mrb[0].mxu0
        %2322 = vmatprep.mubr.f32.mxu0 0.0
        %2323 = vmatmul.mubr.f32.gmra.mrb[0].mxu0 %v2133
        %v2324 = vpop.f32.mrb[0].mxu0
        %v2325 = vadd.f32 0.0, %v2324
        %v2326 = vpop.f32.mrb[0].mxu0
        %2327 = vmatprep.mubr.f32.mxu0 0.0
        %2328 = vmatmul.mubr.f32.gmra.mrb[0].mxu0 %v2136
        %v2329 = vpop.f32.mrb[0].mxu0
        %v2330 = vadd.f32 0.0, %v2329
        %v2331 = vpop.f32.mrb[0].mxu0
        %2332 = vmatprep.mubr.f32.mxu0 0.0
        %2333 = vmatmul.mubr.f32.gmra.mrb[0].mxu0 %v2139
        %v2334 = vpop.f32.mrb[0].mxu0
        %v2335 = vadd.f32 0.0, %v2334
        %v2336 = vpop.f32.mrb[0].mxu0
        %2337 = vmatprep.mubr.f32.mxu0 0.0
        %2338 = vmatmul.mubr.f32.gmra.mrb[0].mxu0 %v2142
        %v2339 = vpop.f32.mrb[0].mxu0
        %v2340 = vadd.f32 0.0, %v2339
        %v2341 = vpop.f32.mrb[0].mxu0
        %2342 = vmatprep.mubr.f32.mxu0 0.0
        %2343 = vmatmul.mubr.f32.gmra.mrb[0].mxu0 %v2145
        %v2344 = vpop.f32.mrb[0].mxu0
        %v2345 = vadd.f32 0.0, %v2344
        %v2346 = vpop.f32.mrb[0].mxu0
        %2347 = vmatprep.mubr.f32.mxu0 0.0
        %2348 = vmatmul.mubr.f32.gmra.mrb[0].mxu0 %v2148
        %v2349 = vpop.f32.mrb[0].mxu0
        %v2350 = vadd.f32 0.0, %v2349
        %v2351 = vpop.f32.mrb[0].mxu0
        %2352 = vmatprep.mubr.f32.mxu0 0.0
        %2353 = vmatmul.mubr.f32.gmra.mrb[0].mxu0 %v2151
        %v2354 = vpop.f32.mrb[0].mxu0
        %v2355 = vadd.f32 0.0, %v2354
        %v2356 = vpop.f32.mrb[0].mxu0
        %2357 = vmatprep.mubr.f32.mxu0 0.0
        %2358 = vmatmul.mubr.f32.gmra.mrb[0].mxu0 %v2154
        %v2359 = vpop.f32.mrb[0].mxu0
        %v2360 = vadd.f32 0.0, %v2359
        %v2361 = vpop.f32.mrb[0].mxu0
        %2362 = vmatprep.mubr.f32.mxu0 0.0
        %2363 = vmatmul.mubr.f32.gmra.mrb[0].mxu0 %v2157
        %v2364 = vpop.f32.mrb[0].mxu0
        %v2365 = vadd.f32 0.0, %v2364
        %v2366 = vpop.f32.mrb[0].mxu0
        %2367 = vmatprep.mubr.f32.mxu0 0.0
        %2368 = vmatmul.mubr.f32.gmra.mrb[0].mxu0 %v2160
        %v2369 = vpop.f32.mrb[0].mxu0
        %v2370 = vadd.f32 0.0, %v2369
        %v2371 = vpop.f32.mrb[0].mxu0
        %2372 = vmatprep.mubr.f32.mxu0 0.0
        %2373 = vmatmul.mubr.f32.gmra.mrb[0].mxu0 %v2163
        %v2374 = vpop.f32.mrb[0].mxu0
        %v2375 = vadd.f32 0.0, %v2374
        %v2376 = vpop.f32.mrb[0].mxu0
        %2377 = vmatprep.mubr.f32.mxu0 0.0
        %2378 = vmatmul.mubr.f32.gmra.mrb[0].mxu0 %v2166
        %v2379 = vpop.f32.mrb[0].mxu0
        %v2380 = vadd.f32 0.0, %v2379
        %v2381 = vpop.f32.mrb[0].mxu0
        %2382 = vmatprep.mubr.f32.mxu0 0.0
        %2383 = vmatmul.mubr.f32.gmra.mrb[0].mxu0 %v2169
        %v2384 = vpop.f32.mrb[0].mxu0
        %v2385 = vadd.f32 0.0, %v2384
        %v2386 = vpop.f32.mrb[0].mxu0
        %2387 = vmatprep.mubr.f32.mxu0 0.0
        %2388 = vmatmul.mubr.f32.gmra.mrb[0].mxu0 %v2172
        %v2389 = vpop.f32.mrb[0].mxu0
        %v2390 = vadd.f32 0.0, %v2389
        %v2391 = vpop.f32.mrb[0].mxu0
        %2392 = vmatprep.mubr.f32.mxu0 0.0
        %2393 = vmatmul.mubr.f32.gmra.mrb[0].mxu0 %v2175
        %v2394 = vpop.f32.mrb[0].mxu0
        %v2395 = vadd.f32 0.0, %v2394
        %v2396 = vpop.f32.mrb[0].mxu0
        %2397 = vmatprep.mubr.f32.mxu0 0.0
        %2398 = vmatmul.mubr.f32.gmra.mrb[0].mxu0 %v2178
        %v2399 = vpop.f32.mrb[0].mxu0
        %v2400 = vadd.f32 0.0, %v2399
        %v2401 = vpop.f32.mrb[0].mxu0
        %2402 = vmatprep.mubr.f32.mxu0 0.0
        %2403 = vmatmul.mubr.f32.gmra.mrb[0].mxu0 %v2181
        %v2404 = vpop.f32.mrb[0].mxu0
        %v2405 = vadd.f32 0.0, %v2404
        %v2406 = vpop.f32.mrb[0].mxu0
        %2407 = vmatprep.mubr.f32.mxu0 0.0
        %2408 = vmatmul.mubr.f32.gmra.mrb[0].mxu0 %v2184
        %v2409 = vpop.f32.mrb[0].mxu0
        %v2410 = vadd.f32 0.0, %v2409
        %v2411 = vpop.f32.mrb[0].mxu0
        %2412 = vmatprep.mubr.f32.mxu0 0.0
        %2413 = vmatmul.mubr.f32.gmra.mrb[0].mxu0 %v2187
        %v2414 = vpop.f32.mrb[0].mxu0
        %v2415 = vadd.f32 0.0, %v2414
        %v2416 = vpop.f32.mrb[0].mxu0
        %2417 = vmatprep.mubr.f32.mxu0 0.0
        %2418 = vmatmul.mubr.f32.gmra.mrb[0].mxu0 %v2190
        %v2419 = vpop.f32.mrb[0].mxu0
        %v2420 = vadd.f32 0.0, %v2419
        %v2421 = vpop.f32.mrb[0].mxu0
        %2422 = vmatprep.mubr.f32.mxu0 0.0
        %2423 = vmatmul.mubr.f32.gmra.mrb[0].mxu0 %v2193
        %v2424 = vpop.f32.mrb[0].mxu0
        %v2425 = vadd.f32 0.0, %v2424
        %v2426 = vpop.f32.mrb[0].mxu0
        %2427 = vmatprep.mubr.f32.mxu0 0.0
        %2428 = vmatmul.mubr.f32.gmra.mrb[0].mxu0 %v2196
        %v2429 = vpop.f32.mrb[0].mxu0
        %v2430 = vadd.f32 0.0, %v2429
        %v2431 = vpop.f32.mrb[0].mxu0
        %2432 = vmatprep.mubr.f32.mxu0 0.0
        %2433 = vmatmul.mubr.f32.gmra.mrb[0].mxu0 %v2199
        %v2434 = vpop.f32.mrb[0].mxu0
        %v2435 = vadd.f32 0.0, %v2434
        %v2436 = vpop.f32.mrb[0].mxu0
        %2437 = vmatprep.mubr.f32.mxu0 0.0
        %2438 = vmatmul.mubr.f32.gmra.mrb[0].mxu0 %v2202
        %v2439 = vpop.f32.mrb[0].mxu0
        %v2440 = vadd.f32 0.0, %v2439
        %v2441 = vpop.f32.mrb[0].mxu0
        %2442 = vmatprep.mubr.f32.mxu0 0.0
        %2443 = vmatmul.mubr.f32.gmra.mrb[0].mxu0 %v2205
        %v2444 = vpop.f32.mrb[0].mxu0
        %v2445 = vadd.f32 0.0, %v2444
        %v2446 = vpop.f32.mrb[0].mxu0
        %2447 = vmatprep.mubr.f32.mxu0 0.0
        %2448 = vmatmul.mubr.f32.gmra.mrb[0].mxu0 %v2208
        %v2449 = vpop.f32.mrb[0].mxu0
        %v2450 = vadd.f32 0.0, %v2449
        %v2451 = vpop.f32.mrb[0].mxu0
        %2452 = vmatprep.mubr.f32.mxu0 0.0
        %2453 = vmatmul.mubr.f32.gmra.mrb[0].mxu0 %v2211
        %v2454 = vpop.f32.mrb[0].mxu0
        %v2455 = vadd.f32 0.0, %v2454
        %v2456 = vpop.f32.mrb[0].mxu0
        %2457 = vdwg.mxu0
        %v2458 = vadd.f32 %v2031, %v2280
        %v2459 = vadd.f32 %v2032, %v2285
        %v2460 = vadd.f32 %v2033, %v2290
        %v2461 = vadd.f32 %v2034, %v2295
        %v2462 = vadd.f32 %v2035, %v2300
        %v2463 = vadd.f32 %v2036, %v2305
        %v2464 = vadd.f32 %v2037, %v2310
        %v2465 = vadd.f32 %v2038, %v2315
        %v2466 = vadd.f32 %v2039, %v2320
        %v2467 = vadd.f32 %v2040, %v2325
        %v2468 = vadd.f32 %v2041, %v2330
        %v2469 = vadd.f32 %v2042, %v2335
        %v2470 = vadd.f32 %v2043, %v2340
        %v2471 = vadd.f32 %v2044, %v2345
        %v2472 = vadd.f32 %v2045, %v2350
        %v2473 = vadd.f32 %v2046, %v2355
        %v2474 = vadd.f32 %v2047, %v2360
        %v2475 = vadd.f32 %v2048, %v2365
        %v2476 = vadd.f32 %v2049, %v2370
        %v2477 = vadd.f32 %v2050, %v2375
        %v2478 = vadd.f32 %v2051, %v2380
        %v2479 = vadd.f32 %v2052, %v2385
        %v2480 = vadd.f32 %v2053, %v2390
        %v2481 = vadd.f32 %v2054, %v2395
        %v2482 = vadd.f32 %v2055, %v2400
        %v2483 = vadd.f32 %v2056, %v2405
        %v2484 = vadd.f32 %v2057, %v2410
        %v2485 = vadd.f32 %v2058, %v2415
        %v2486 = vadd.f32 %v2059, %v2420
        %v2487 = vadd.f32 %v2060, %v2425
        %v2488 = vadd.f32 %v2061, %v2430
        %v2489 = vadd.f32 %v2062, %v2435
        %v2490 = vadd.f32 %v2063, %v2440
        %v2491 = vadd.f32 %v2064, %v2445
        %v2492 = vadd.f32 %v2065, %v2450
        %v2493 = vadd.f32 %v2066, %v2455
        %v2494 = vld [vmem:[%s390 + $0x14] sm:$0xff]
        %v2495 = vld [vmem:[%s390 + $0x1c] sm:$0xff]
        %v2496 = vld [vmem:[%s390 + $0x24] sm:$0xff]
        %v2497 = vld [vmem:[%s390 + $0x2c] sm:$0xff]
        %v2498 = vld [vmem:[%s390 + $0x34] sm:$0xff]
        %v2499 = vld [vmem:[%s390 + $0x3c] sm:$0xff]
        %v2500 = vld [vmem:[%s390 + $0x44] sm:$0xff]
        %v2501 = vld [vmem:[%s390 + $0x4c] sm:$0xff]
        %v2502 = vld [vmem:[%s390 + $0x54] sm:$0xff]
        %v2503 = vld [vmem:[%s390 + $0x5c] sm:$0xff]
        %v2504 = vld [vmem:[%s390 + $0x64] sm:$0xff]
        %v2505 = vld [vmem:[%s390 + $0x6c] sm:$0xff]
        %v2506 = vld [vmem:[%s390 + $0x74] sm:$0xff]
        %v2507 = vld [vmem:[%s390 + $0x7c] sm:$0xff]
        %v2508 = vld [vmem:[%s390 + $0x84] sm:$0xff]
        %v2509 = vld [vmem:[%s390 + $0x8c] sm:$0xff]
        %v2510 = vld [vmem:[%s390 + $0x94] sm:$0xff]
        %v2511 = vld [vmem:[%s390 + $0x9c] sm:$0xff]
        %v2512 = vld [vmem:[%s390 + $0xa4] sm:$0xff]
        %v2513 = vld [vmem:[%s390 + $0xac] sm:$0xff]
        %v2514 = vld [vmem:[%s390 + $0xb4] sm:$0xff]
        %v2515 = vld [vmem:[%s390 + $0xbc] sm:$0xff]
        %v2516 = vld [vmem:[%s390 + $0xc4] sm:$0xff]
        %v2517 = vld [vmem:[%s390 + $0xcc] sm:$0xff]
        %v2518 = vld [vmem:[%s390 + $0xd4] sm:$0xff]
        %v2519 = vld [vmem:[%s390 + $0xdc] sm:$0xff]
        %v2520 = vld [vmem:[%s390 + $0xe4] sm:$0xff]
        %v2521 = vld [vmem:[%s390 + $0xec] sm:$0xff]
        %v2522 = vld [vmem:[%s390 + $0xf4] sm:$0xff]
        %v2523 = vld [vmem:[%s390 + $0xfc] sm:$0xff]
        %v2524 = vld [vmem:[%s390 + $0x104] sm:$0xff]
        %v2525 = vld [vmem:[%s390 + $0x10c] sm:$0xff]
        %v2526 = vld [vmem:[%s390 + $0x114] sm:$0xff]
        %v2527 = vld [vmem:[%s390 + $0x11c] sm:$0xff]
        %v2528 = vld [vmem:[%s390 + $0x124] sm:$0xff]
        %v2529 = vld [vmem:[%s390 + $0x12c] sm:$0xff]
        %s2530 = scalar_lea.vmem %s2, 40
        %v2531 = vld [vmem:[%s2530] sm:$0xff]
        %v2533 = vsel %vm506, %v2494, 0
        %v2536 = vsel %vm506, %v2495, 0
        %v2539 = vsel %vm506, %v2496, 0
        %v2542 = vsel %vm506, %v2497, 0
        %v2545 = vsel %vm506, %v2498, 0
        %v2548 = vsel %vm506, %v2499, 0
        %v2551 = vsel %vm506, %v2500, 0
        %v2554 = vsel %vm506, %v2501, 0
        %v2557 = vsel %vm506, %v2502, 0
        %v2560 = vsel %vm506, %v2503, 0
        %v2563 = vsel %vm506, %v2504, 0
        %v2566 = vsel %vm506, %v2505, 0
        %v2569 = vsel %vm506, %v2506, 0
        %v2572 = vsel %vm506, %v2507, 0
        %v2575 = vsel %vm506, %v2508, 0
        %v2578 = vsel %vm506, %v2509, 0
        %v2581 = vsel %vm506, %v2510, 0
        %v2584 = vsel %vm506, %v2511, 0
        %v2587 = vsel %vm506, %v2512, 0
        %v2590 = vsel %vm506, %v2513, 0
        %v2593 = vsel %vm506, %v2514, 0
        %v2596 = vsel %vm506, %v2515, 0
        %v2599 = vsel %vm506, %v2516, 0
        %v2602 = vsel %vm506, %v2517, 0
        %v2605 = vsel %vm506, %v2518, 0
        %v2608 = vsel %vm506, %v2519, 0
        %v2611 = vsel %vm506, %v2520, 0
        %v2614 = vsel %vm506, %v2521, 0
        %v2617 = vsel %vm506, %v2522, 0
        %v2620 = vsel %vm506, %v2523, 0
        %v2623 = vsel %vm506, %v2524, 0
        %v2626 = vsel %vm506, %v2525, 0
        %v2629 = vsel %vm506, %v2526, 0
        %v2632 = vsel %vm506, %v2527, 0
        %v2635 = vsel %vm506, %v2528, 0
        %v2638 = vsel %vm506, %v2529, 0
        %2640 = vmatprep.subr.mxu0 0.0
        %2641 = vmatpush1.msra.mxu0 %v2531
        %2642 = vmatprep.subr.mxu0 0.0
        %2643 = vmatpush1.msra.mxu0 0.0
        %2644 = vmatprep.subr.mxu0 0.0
        %2645 = vmatpush1.msra.mxu0 0.0
        %2646 = vmatprep.subr.mxu0 0.0
        %2647 = vmatpush1.msra.mxu0 0.0
        %2648 = vmatprep.subr.mxu0 0.0
        %2649 = vmatpush1.msra.mxu0 0.0
        %2650 = vmatprep.subr.mxu0 0.0
        %2651 = vmatpush1.msra.mxu0 0.0
        %2652 = vmatprep.subr.mxu0 0.0
        %2653 = vmatpush1.msra.mxu0 0.0
        %2654 = vmatprep.subr.mxu0 0.0
        %2655 = vmatpush1.msra.mxu0 0.0
        %2656 = vmatprep.subr.mxu0 0.0
        %2657 = vmatpush1.msra.mxu0 0.0
        %2658 = vmatprep.subr.mxu0 0.0
        %2659 = vmatpush1.msra.mxu0 0.0
        %2660 = vmatprep.subr.mxu0 0.0
        %2661 = vmatpush1.msra.mxu0 0.0
        %2662 = vmatprep.subr.mxu0 0.0
        %2663 = vmatpush1.msra.mxu0 0.0
        %2664 = vmatprep.subr.mxu0 0.0
        %2665 = vmatpush1.msra.mxu0 0.0
        %2666 = vmatprep.subr.mxu0 0.0
        %2667 = vmatpush1.msra.mxu0 0.0
        %2668 = vmatprep.subr.mxu0 0.0
        %2669 = vmatpush1.msra.mxu0 0.0
        %2670 = vmatprep.subr.mxu0 0.0
        %2671 = vmatpush1.msra.mxu0 0.0
        %2672 = vmatprep.subr.mxu0 0.0
        %2673 = vmatpush1.msra.mxu0 0.0
        %2674 = vmatprep.subr.mxu0 0.0
        %2675 = vmatpush1.msra.mxu0 0.0
        %2676 = vmatprep.subr.mxu0 0.0
        %2677 = vmatpush1.msra.mxu0 0.0
        %2678 = vmatprep.subr.mxu0 0.0
        %2679 = vmatpush1.msra.mxu0 0.0
        %2680 = vmatprep.subr.mxu0 0.0
        %2681 = vmatpush1.msra.mxu0 0.0
        %2682 = vmatprep.subr.mxu0 0.0
        %2683 = vmatpush1.msra.mxu0 0.0
        %2684 = vmatprep.subr.mxu0 0.0
        %2685 = vmatpush1.msra.mxu0 0.0
        %2686 = vmatprep.subr.mxu0 0.0
        %2687 = vmatpush1.msra.mxu0 0.0
        %2688 = vmatprep.subr.mxu0 0.0
        %2689 = vmatpush1.msra.mxu0 0.0
        %2690 = vmatprep.subr.mxu0 0.0
        %2691 = vmatpush1.msra.mxu0 0.0
        %2692 = vmatprep.subr.mxu0 0.0
        %2693 = vmatpush1.msra.mxu0 0.0
        %2694 = vmatprep.subr.mxu0 0.0
        %2695 = vmatpush1.msra.mxu0 0.0
        %2696 = vmatprep.subr.mxu0 0.0
        %2697 = vmatpush1.msra.mxu0 0.0
        %2698 = vmatprep.subr.mxu0 0.0
        %2699 = vmatpush1.msra.mxu0 0.0
        %2700 = vmatprep.subr.mxu0 0.0
        %2701 = vmatpush1.msra.mxu0 0.0
        %2702 = vmatprep.subr.mxu0 0.0
        %2703 = vmatpush1.msra.mxu0 0.0
        %2704 = vmatprep.mubr.f32.mxu0 0.0
        %2705 = vmatmul.mubr.f32.gmra.mrb[0].mxu0 %v2533
        %v2706 = vpop.f32.mrb[0].mxu0
        %v2707 = vadd.f32 0.0, %v2706
        %v2708 = vpop.f32.mrb[0].mxu0
        %2709 = vmatprep.mubr.f32.mxu0 0.0
        %2710 = vmatmul.mubr.f32.gmra.mrb[0].mxu0 %v2536
        %v2711 = vpop.f32.mrb[0].mxu0
        %v2712 = vadd.f32 0.0, %v2711
        %v2713 = vpop.f32.mrb[0].mxu0
        %2714 = vmatprep.mubr.f32.mxu0 0.0
        %2715 = vmatmul.mubr.f32.gmra.mrb[0].mxu0 %v2539
        %v2716 = vpop.f32.mrb[0].mxu0
        %v2717 = vadd.f32 0.0, %v2716
        %v2718 = vpop.f32.mrb[0].mxu0
        %2719 = vmatprep.mubr.f32.mxu0 0.0
        %2720 = vmatmul.mubr.f32.gmra.mrb[0].mxu0 %v2542
        %v2721 = vpop.f32.mrb[0].mxu0
        %v2722 = vadd.f32 0.0, %v2721
        %v2723 = vpop.f32.mrb[0].mxu0
        %2724 = vmatprep.mubr.f32.mxu0 0.0
        %2725 = vmatmul.mubr.f32.gmra.mrb[0].mxu0 %v2545
        %v2726 = vpop.f32.mrb[0].mxu0
        %v2727 = vadd.f32 0.0, %v2726
        %v2728 = vpop.f32.mrb[0].mxu0
        %2729 = vmatprep.mubr.f32.mxu0 0.0
        %2730 = vmatmul.mubr.f32.gmra.mrb[0].mxu0 %v2548
        %v2731 = vpop.f32.mrb[0].mxu0
        %v2732 = vadd.f32 0.0, %v2731
        %v2733 = vpop.f32.mrb[0].mxu0
        %2734 = vmatprep.mubr.f32.mxu0 0.0
        %2735 = vmatmul.mubr.f32.gmra.mrb[0].mxu0 %v2551
        %v2736 = vpop.f32.mrb[0].mxu0
        %v2737 = vadd.f32 0.0, %v2736
        %v2738 = vpop.f32.mrb[0].mxu0
        %2739 = vmatprep.mubr.f32.mxu0 0.0
        %2740 = vmatmul.mubr.f32.gmra.mrb[0].mxu0 %v2554
        %v2741 = vpop.f32.mrb[0].mxu0
        %v2742 = vadd.f32 0.0, %v2741
        %v2743 = vpop.f32.mrb[0].mxu0
        %2744 = vmatprep.mubr.f32.mxu0 0.0
        %2745 = vmatmul.mubr.f32.gmra.mrb[0].mxu0 %v2557
        %v2746 = vpop.f32.mrb[0].mxu0
        %v2747 = vadd.f32 0.0, %v2746
        %v2748 = vpop.f32.mrb[0].mxu0
        %2749 = vmatprep.mubr.f32.mxu0 0.0
        %2750 = vmatmul.mubr.f32.gmra.mrb[0].mxu0 %v2560
        %v2751 = vpop.f32.mrb[0].mxu0
        %v2752 = vadd.f32 0.0, %v2751
        %v2753 = vpop.f32.mrb[0].mxu0
        %2754 = vmatprep.mubr.f32.mxu0 0.0
        %2755 = vmatmul.mubr.f32.gmra.mrb[0].mxu0 %v2563
        %v2756 = vpop.f32.mrb[0].mxu0
        %v2757 = vadd.f32 0.0, %v2756
        %v2758 = vpop.f32.mrb[0].mxu0
        %2759 = vmatprep.mubr.f32.mxu0 0.0
        %2760 = vmatmul.mubr.f32.gmra.mrb[0].mxu0 %v2566
        %v2761 = vpop.f32.mrb[0].mxu0
        %v2762 = vadd.f32 0.0, %v2761
        %v2763 = vpop.f32.mrb[0].mxu0
        %2764 = vmatprep.mubr.f32.mxu0 0.0
        %2765 = vmatmul.mubr.f32.gmra.mrb[0].mxu0 %v2569
        %v2766 = vpop.f32.mrb[0].mxu0
        %v2767 = vadd.f32 0.0, %v2766
        %v2768 = vpop.f32.mrb[0].mxu0
        %2769 = vmatprep.mubr.f32.mxu0 0.0
        %2770 = vmatmul.mubr.f32.gmra.mrb[0].mxu0 %v2572
        %v2771 = vpop.f32.mrb[0].mxu0
        %v2772 = vadd.f32 0.0, %v2771
        %v2773 = vpop.f32.mrb[0].mxu0
        %2774 = vmatprep.mubr.f32.mxu0 0.0
        %2775 = vmatmul.mubr.f32.gmra.mrb[0].mxu0 %v2575
        %v2776 = vpop.f32.mrb[0].mxu0
        %v2777 = vadd.f32 0.0, %v2776
        %v2778 = vpop.f32.mrb[0].mxu0
        %2779 = vmatprep.mubr.f32.mxu0 0.0
        %2780 = vmatmul.mubr.f32.gmra.mrb[0].mxu0 %v2578
        %v2781 = vpop.f32.mrb[0].mxu0
        %v2782 = vadd.f32 0.0, %v2781
        %v2783 = vpop.f32.mrb[0].mxu0
        %2784 = vmatprep.mubr.f32.mxu0 0.0
        %2785 = vmatmul.mubr.f32.gmra.mrb[0].mxu0 %v2581
        %v2786 = vpop.f32.mrb[0].mxu0
        %v2787 = vadd.f32 0.0, %v2786
        %v2788 = vpop.f32.mrb[0].mxu0
        %2789 = vmatprep.mubr.f32.mxu0 0.0
        %2790 = vmatmul.mubr.f32.gmra.mrb[0].mxu0 %v2584
        %v2791 = vpop.f32.mrb[0].mxu0
        %v2792 = vadd.f32 0.0, %v2791
        %v2793 = vpop.f32.mrb[0].mxu0
        %2794 = vmatprep.mubr.f32.mxu0 0.0
        %2795 = vmatmul.mubr.f32.gmra.mrb[0].mxu0 %v2587
        %v2796 = vpop.f32.mrb[0].mxu0
        %v2797 = vadd.f32 0.0, %v2796
        %v2798 = vpop.f32.mrb[0].mxu0
        %2799 = vmatprep.mubr.f32.mxu0 0.0
        %2800 = vmatmul.mubr.f32.gmra.mrb[0].mxu0 %v2590
        %v2801 = vpop.f32.mrb[0].mxu0
        %v2802 = vadd.f32 0.0, %v2801
        %v2803 = vpop.f32.mrb[0].mxu0
        %2804 = vmatprep.mubr.f32.mxu0 0.0
        %2805 = vmatmul.mubr.f32.gmra.mrb[0].mxu0 %v2593
        %v2806 = vpop.f32.mrb[0].mxu0
        %v2807 = vadd.f32 0.0, %v2806
        %v2808 = vpop.f32.mrb[0].mxu0
        %2809 = vmatprep.mubr.f32.mxu0 0.0
        %2810 = vmatmul.mubr.f32.gmra.mrb[0].mxu0 %v2596
        %v2811 = vpop.f32.mrb[0].mxu0
        %v2812 = vadd.f32 0.0, %v2811
        %v2813 = vpop.f32.mrb[0].mxu0
        %2814 = vmatprep.mubr.f32.mxu0 0.0
        %2815 = vmatmul.mubr.f32.gmra.mrb[0].mxu0 %v2599
        %v2816 = vpop.f32.mrb[0].mxu0
        %v2817 = vadd.f32 0.0, %v2816
        %v2818 = vpop.f32.mrb[0].mxu0
        %2819 = vmatprep.mubr.f32.mxu0 0.0
        %2820 = vmatmul.mubr.f32.gmra.mrb[0].mxu0 %v2602
        %v2821 = vpop.f32.mrb[0].mxu0
        %v2822 = vadd.f32 0.0, %v2821
        %v2823 = vpop.f32.mrb[0].mxu0
        %2824 = vmatprep.mubr.f32.mxu0 0.0
        %2825 = vmatmul.mubr.f32.gmra.mrb[0].mxu0 %v2605
        %v2826 = vpop.f32.mrb[0].mxu0
        %v2827 = vadd.f32 0.0, %v2826
        %v2828 = vpop.f32.mrb[0].mxu0
        %2829 = vmatprep.mubr.f32.mxu0 0.0
        %2830 = vmatmul.mubr.f32.gmra.mrb[0].mxu0 %v2608
        %v2831 = vpop.f32.mrb[0].mxu0
        %v2832 = vadd.f32 0.0, %v2831
        %v2833 = vpop.f32.mrb[0].mxu0
        %2834 = vmatprep.mubr.f32.mxu0 0.0
        %2835 = vmatmul.mubr.f32.gmra.mrb[0].mxu0 %v2611
        %v2836 = vpop.f32.mrb[0].mxu0
        %v2837 = vadd.f32 0.0, %v2836
        %v2838 = vpop.f32.mrb[0].mxu0
        %2839 = vmatprep.mubr.f32.mxu0 0.0
        %2840 = vmatmul.mubr.f32.gmra.mrb[0].mxu0 %v2614
        %v2841 = vpop.f32.mrb[0].mxu0
        %v2842 = vadd.f32 0.0, %v2841
        %v2843 = vpop.f32.mrb[0].mxu0
        %2844 = vmatprep.mubr.f32.mxu0 0.0
        %2845 = vmatmul.mubr.f32.gmra.mrb[0].mxu0 %v2617
        %v2846 = vpop.f32.mrb[0].mxu0
        %v2847 = vadd.f32 0.0, %v2846
        %v2848 = vpop.f32.mrb[0].mxu0
        %2849 = vmatprep.mubr.f32.mxu0 0.0
        %2850 = vmatmul.mubr.f32.gmra.mrb[0].mxu0 %v2620
        %v2851 = vpop.f32.mrb[0].mxu0
        %v2852 = vadd.f32 0.0, %v2851
        %v2853 = vpop.f32.mrb[0].mxu0
        %2854 = vmatprep.mubr.f32.mxu0 0.0
        %2855 = vmatmul.mubr.f32.gmra.mrb[0].mxu0 %v2623
        %v2856 = vpop.f32.mrb[0].mxu0
        %v2857 = vadd.f32 0.0, %v2856
        %v2858 = vpop.f32.mrb[0].mxu0
        %2859 = vmatprep.mubr.f32.mxu0 0.0
        %2860 = vmatmul.mubr.f32.gmra.mrb[0].mxu0 %v2626
        %v2861 = vpop.f32.mrb[0].mxu0
        %v2862 = vadd.f32 0.0, %v2861
        %v2863 = vpop.f32.mrb[0].mxu0
        %2864 = vmatprep.mubr.f32.mxu0 0.0
        %2865 = vmatmul.mubr.f32.gmra.mrb[0].mxu0 %v2629
        %v2866 = vpop.f32.mrb[0].mxu0
        %v2867 = vadd.f32 0.0, %v2866
        %v2868 = vpop.f32.mrb[0].mxu0
        %2869 = vmatprep.mubr.f32.mxu0 0.0
        %2870 = vmatmul.mubr.f32.gmra.mrb[0].mxu0 %v2632
        %v2871 = vpop.f32.mrb[0].mxu0
        %v2872 = vadd.f32 0.0, %v2871
        %v2873 = vpop.f32.mrb[0].mxu0
        %2874 = vmatprep.mubr.f32.mxu0 0.0
        %2875 = vmatmul.mubr.f32.gmra.mrb[0].mxu0 %v2635
        %v2876 = vpop.f32.mrb[0].mxu0
        %v2877 = vadd.f32 0.0, %v2876
        %v2878 = vpop.f32.mrb[0].mxu0
        %2879 = vmatprep.mubr.f32.mxu0 0.0
        %2880 = vmatmul.mubr.f32.gmra.mrb[0].mxu0 %v2638
        %v2881 = vpop.f32.mrb[0].mxu0
        %v2882 = vadd.f32 0.0, %v2881
        %v2883 = vpop.f32.mrb[0].mxu0
        %2884 = vdwg.mxu0
        %v2885 = vadd.f32 %v2458, %v2707
        %v2886 = vadd.f32 %v2459, %v2712
        %v2887 = vadd.f32 %v2460, %v2717
        %v2888 = vadd.f32 %v2461, %v2722
        %v2889 = vadd.f32 %v2462, %v2727
        %v2890 = vadd.f32 %v2463, %v2732
        %v2891 = vadd.f32 %v2464, %v2737
        %v2892 = vadd.f32 %v2465, %v2742
        %v2893 = vadd.f32 %v2466, %v2747
        %v2894 = vadd.f32 %v2467, %v2752
        %v2895 = vadd.f32 %v2468, %v2757
        %v2896 = vadd.f32 %v2469, %v2762
        %v2897 = vadd.f32 %v2470, %v2767
        %v2898 = vadd.f32 %v2471, %v2772
        %v2899 = vadd.f32 %v2472, %v2777
        %v2900 = vadd.f32 %v2473, %v2782
        %v2901 = vadd.f32 %v2474, %v2787
        %v2902 = vadd.f32 %v2475, %v2792
        %v2903 = vadd.f32 %v2476, %v2797
        %v2904 = vadd.f32 %v2477, %v2802
        %v2905 = vadd.f32 %v2478, %v2807
        %v2906 = vadd.f32 %v2479, %v2812
        %v2907 = vadd.f32 %v2480, %v2817
        %v2908 = vadd.f32 %v2481, %v2822
        %v2909 = vadd.f32 %v2482, %v2827
        %v2910 = vadd.f32 %v2483, %v2832
        %v2911 = vadd.f32 %v2484, %v2837
        %v2912 = vadd.f32 %v2485, %v2842
        %v2913 = vadd.f32 %v2486, %v2847
        %v2914 = vadd.f32 %v2487, %v2852
        %v2915 = vadd.f32 %v2488, %v2857
        %v2916 = vadd.f32 %v2489, %v2862
        %v2917 = vadd.f32 %v2490, %v2867
        %v2918 = vadd.f32 %v2491, %v2872
        %v2919 = vadd.f32 %v2492, %v2877
        %v2920 = vadd.f32 %v2493, %v2882
        %v2921 = vld [vmem:[%s390 + $0x24] sm:$0xff]
        %v2922 = vld [vmem:[%s390 + $0x2c] sm:$0xff]
        %v2923 = vld [vmem:[%s390 + $0x34] sm:$0xff]
        %v2924 = vld [vmem:[%s390 + $0x3c] sm:$0xff]
        %v2925 = vld [vmem:[%s390 + $0x44] sm:$0xff]
        %v2926 = vld [vmem:[%s390 + $0x4c] sm:$0xff]
        %v2927 = vld [vmem:[%s390 + $0x54] sm:$0xff]
        %v2928 = vld [vmem:[%s390 + $0x5c] sm:$0xff]
        %v2929 = vld [vmem:[%s390 + $0x64] sm:$0xff]
        %v2930 = vld [vmem:[%s390 + $0x6c] sm:$0xff]
        %v2931 = vld [vmem:[%s390 + $0x74] sm:$0xff]
        %v2932 = vld [vmem:[%s390 + $0x7c] sm:$0xff]
        %v2933 = vld [vmem:[%s390 + $0x84] sm:$0xff]
        %v2934 = vld [vmem:[%s390 + $0x8c] sm:$0xff]
        %v2935 = vld [vmem:[%s390 + $0x94] sm:$0xff]
        %v2936 = vld [vmem:[%s390 + $0x9c] sm:$0xff]
        %v2937 = vld [vmem:[%s390 + $0xa4] sm:$0xff]
        %v2938 = vld [vmem:[%s390 + $0xac] sm:$0xff]
        %v2939 = vld [vmem:[%s390 + $0xb4] sm:$0xff]
        %v2940 = vld [vmem:[%s390 + $0xbc] sm:$0xff]
        %v2941 = vld [vmem:[%s390 + $0xc4] sm:$0xff]
        %v2942 = vld [vmem:[%s390 + $0xcc] sm:$0xff]
        %v2943 = vld [vmem:[%s390 + $0xd4] sm:$0xff]
        %v2944 = vld [vmem:[%s390 + $0xdc] sm:$0xff]
        %v2945 = vld [vmem:[%s390 + $0xe4] sm:$0xff]
        %v2946 = vld [vmem:[%s390 + $0xec] sm:$0xff]
        %v2947 = vld [vmem:[%s390 + $0xf4] sm:$0xff]
        %v2948 = vld [vmem:[%s390 + $0xfc] sm:$0xff]
        %v2949 = vld [vmem:[%s390 + $0x104] sm:$0xff]
        %v2950 = vld [vmem:[%s390 + $0x10c] sm:$0xff]
        %v2951 = vld [vmem:[%s390 + $0x114] sm:$0xff]
        %v2952 = vld [vmem:[%s390 + $0x11c] sm:$0xff]
        %v2953 = vld [vmem:[%s390 + $0x124] sm:$0xff]
        %v2954 = vld [vmem:[%s390 + $0x12c] sm:$0xff]
        %v2955 = vld [vmem:[%s390 + $0x134] sm:$0xff]
        %v2956 = vld [vmem:[%s390 + $0x13c] sm:$0xff]
        %s2957 = scalar_lea.vmem %s2, 48
        %v2958 = vld [vmem:[%s2957] sm:$0xff]
        %v2960 = vsel %vm506, %v2921, 0
        %v2963 = vsel %vm506, %v2922, 0
        %v2966 = vsel %vm506, %v2923, 0
        %v2969 = vsel %vm506, %v2924, 0
        %v2972 = vsel %vm506, %v2925, 0
        %v2975 = vsel %vm506, %v2926, 0
        %v2978 = vsel %vm506, %v2927, 0
        %v2981 = vsel %vm506, %v2928, 0
        %v2984 = vsel %vm506, %v2929, 0
        %v2987 = vsel %vm506, %v2930, 0
        %v2990 = vsel %vm506, %v2931, 0
        %v2993 = vsel %vm506, %v2932, 0
        %v2996 = vsel %vm506, %v2933, 0
        %v2999 = vsel %vm506, %v2934, 0
        %v3002 = vsel %vm506, %v2935, 0
        %v3005 = vsel %vm506, %v2936, 0
        %v3008 = vsel %vm506, %v2937, 0
        %v3011 = vsel %vm506, %v2938, 0
        %v3014 = vsel %vm506, %v2939, 0
        %v3017 = vsel %vm506, %v2940, 0
        %v3020 = vsel %vm506, %v2941, 0
        %v3023 = vsel %vm506, %v2942, 0
        %v3026 = vsel %vm506, %v2943, 0
        %v3029 = vsel %vm506, %v2944, 0
        %v3032 = vsel %vm506, %v2945, 0
        %v3035 = vsel %vm506, %v2946, 0
        %v3038 = vsel %vm506, %v2947, 0
        %v3041 = vsel %vm506, %v2948, 0
        %v3044 = vsel %vm506, %v2949, 0
        %v3047 = vsel %vm506, %v2950, 0
        %v3050 = vsel %vm506, %v2951, 0
        %v3053 = vsel %vm506, %v2952, 0
        %v3056 = vsel %vm506, %v2953, 0
        %v3059 = vsel %vm506, %v2954, 0
        %v3062 = vsel %vm506, %v2955, 0
        %v3065 = vsel %vm506, %v2956, 0
        %3067 = vmatprep.subr.mxu0 0.0
        %3068 = vmatpush1.msra.mxu0 %v2958
        %3069 = vmatprep.subr.mxu0 0.0
        %3070 = vmatpush1.msra.mxu0 0.0
        %3071 = vmatprep.subr.mxu0 0.0
        %3072 = vmatpush1.msra.mxu0 0.0
        %3073 = vmatprep.subr.mxu0 0.0
        %3074 = vmatpush1.msra.mxu0 0.0
        %3075 = vmatprep.subr.mxu0 0.0
        %3076 = vmatpush1.msra.mxu0 0.0
        %3077 = vmatprep.subr.mxu0 0.0
        %3078 = vmatpush1.msra.mxu0 0.0
        %3079 = vmatprep.subr.mxu0 0.0
        %3080 = vmatpush1.msra.mxu0 0.0
        %3081 = vmatprep.subr.mxu0 0.0
        %3082 = vmatpush1.msra.mxu0 0.0
        %3083 = vmatprep.subr.mxu0 0.0
        %3084 = vmatpush1.msra.mxu0 0.0
        %3085 = vmatprep.subr.mxu0 0.0
        %3086 = vmatpush1.msra.mxu0 0.0
        %3087 = vmatprep.subr.mxu0 0.0
        %3088 = vmatpush1.msra.mxu0 0.0
        %3089 = vmatprep.subr.mxu0 0.0
        %3090 = vmatpush1.msra.mxu0 0.0
        %3091 = vmatprep.subr.mxu0 0.0
        %3092 = vmatpush1.msra.mxu0 0.0
        %3093 = vmatprep.subr.mxu0 0.0
        %3094 = vmatpush1.msra.mxu0 0.0
        %3095 = vmatprep.subr.mxu0 0.0
        %3096 = vmatpush1.msra.mxu0 0.0
        %3097 = vmatprep.subr.mxu0 0.0
        %3098 = vmatpush1.msra.mxu0 0.0
        %3099 = vmatprep.subr.mxu0 0.0
        %3100 = vmatpush1.msra.mxu0 0.0
        %3101 = vmatprep.subr.mxu0 0.0
        %3102 = vmatpush1.msra.mxu0 0.0
        %3103 = vmatprep.subr.mxu0 0.0
        %3104 = vmatpush1.msra.mxu0 0.0
        %3105 = vmatprep.subr.mxu0 0.0
        %3106 = vmatpush1.msra.mxu0 0.0
        %3107 = vmatprep.subr.mxu0 0.0
        %3108 = vmatpush1.msra.mxu0 0.0
        %3109 = vmatprep.subr.mxu0 0.0
        %3110 = vmatpush1.msra.mxu0 0.0
        %3111 = vmatprep.subr.mxu0 0.0
        %3112 = vmatpush1.msra.mxu0 0.0
        %3113 = vmatprep.subr.mxu0 0.0
        %3114 = vmatpush1.msra.mxu0 0.0
        %3115 = vmatprep.subr.mxu0 0.0
        %3116 = vmatpush1.msra.mxu0 0.0
        %3117 = vmatprep.subr.mxu0 0.0
        %3118 = vmatpush1.msra.mxu0 0.0
        %3119 = vmatprep.subr.mxu0 0.0
        %3120 = vmatpush1.msra.mxu0 0.0
        %3121 = vmatprep.subr.mxu0 0.0
        %3122 = vmatpush1.msra.mxu0 0.0
        %3123 = vmatprep.subr.mxu0 0.0
        %3124 = vmatpush1.msra.mxu0 0.0
        %3125 = vmatprep.subr.mxu0 0.0
        %3126 = vmatpush1.msra.mxu0 0.0
        %3127 = vmatprep.subr.mxu0 0.0
        %3128 = vmatpush1.msra.mxu0 0.0
        %3129 = vmatprep.subr.mxu0 0.0
        %3130 = vmatpush1.msra.mxu0 0.0
        %3131 = vmatprep.mubr.f32.mxu0 0.0
        %3132 = vmatmul.mubr.f32.gmra.mrb[0].mxu0 %v2960
        %v3133 = vpop.f32.mrb[0].mxu0
        %v3134 = vadd.f32 0.0, %v3133
        %v3135 = vpop.f32.mrb[0].mxu0
        %3136 = vmatprep.mubr.f32.mxu0 0.0
        %3137 = vmatmul.mubr.f32.gmra.mrb[0].mxu0 %v2963
        %v3138 = vpop.f32.mrb[0].mxu0
        %v3139 = vadd.f32 0.0, %v3138
        %v3140 = vpop.f32.mrb[0].mxu0
        %3141 = vmatprep.mubr.f32.mxu0 0.0
        %3142 = vmatmul.mubr.f32.gmra.mrb[0].mxu0 %v2966
        %v3143 = vpop.f32.mrb[0].mxu0
        %v3144 = vadd.f32 0.0, %v3143
        %v3145 = vpop.f32.mrb[0].mxu0
        %3146 = vmatprep.mubr.f32.mxu0 0.0
        %3147 = vmatmul.mubr.f32.gmra.mrb[0].mxu0 %v2969
        %v3148 = vpop.f32.mrb[0].mxu0
        %v3149 = vadd.f32 0.0, %v3148
        %v3150 = vpop.f32.mrb[0].mxu0
        %3151 = vmatprep.mubr.f32.mxu0 0.0
        %3152 = vmatmul.mubr.f32.gmra.mrb[0].mxu0 %v2972
        %v3153 = vpop.f32.mrb[0].mxu0
        %v3154 = vadd.f32 0.0, %v3153
        %v3155 = vpop.f32.mrb[0].mxu0
        %3156 = vmatprep.mubr.f32.mxu0 0.0
        %3157 = vmatmul.mubr.f32.gmra.mrb[0].mxu0 %v2975
        %v3158 = vpop.f32.mrb[0].mxu0
        %v3159 = vadd.f32 0.0, %v3158
        %v3160 = vpop.f32.mrb[0].mxu0
        %3161 = vmatprep.mubr.f32.mxu0 0.0
        %3162 = vmatmul.mubr.f32.gmra.mrb[0].mxu0 %v2978
        %v3163 = vpop.f32.mrb[0].mxu0
        %v3164 = vadd.f32 0.0, %v3163
        %v3165 = vpop.f32.mrb[0].mxu0
        %3166 = vmatprep.mubr.f32.mxu0 0.0
        %3167 = vmatmul.mubr.f32.gmra.mrb[0].mxu0 %v2981
        %v3168 = vpop.f32.mrb[0].mxu0
        %v3169 = vadd.f32 0.0, %v3168
        %v3170 = vpop.f32.mrb[0].mxu0
        %3171 = vmatprep.mubr.f32.mxu0 0.0
        %3172 = vmatmul.mubr.f32.gmra.mrb[0].mxu0 %v2984
        %v3173 = vpop.f32.mrb[0].mxu0
        %v3174 = vadd.f32 0.0, %v3173
        %v3175 = vpop.f32.mrb[0].mxu0
        %3176 = vmatprep.mubr.f32.mxu0 0.0
        %3177 = vmatmul.mubr.f32.gmra.mrb[0].mxu0 %v2987
        %v3178 = vpop.f32.mrb[0].mxu0
        %v3179 = vadd.f32 0.0, %v3178
        %v3180 = vpop.f32.mrb[0].mxu0
        %3181 = vmatprep.mubr.f32.mxu0 0.0
        %3182 = vmatmul.mubr.f32.gmra.mrb[0].mxu0 %v2990
        %v3183 = vpop.f32.mrb[0].mxu0
        %v3184 = vadd.f32 0.0, %v3183
        %v3185 = vpop.f32.mrb[0].mxu0
        %3186 = vmatprep.mubr.f32.mxu0 0.0
        %3187 = vmatmul.mubr.f32.gmra.mrb[0].mxu0 %v2993
        %v3188 = vpop.f32.mrb[0].mxu0
        %v3189 = vadd.f32 0.0, %v3188
        %v3190 = vpop.f32.mrb[0].mxu0
        %3191 = vmatprep.mubr.f32.mxu0 0.0
        %3192 = vmatmul.mubr.f32.gmra.mrb[0].mxu0 %v2996
        %v3193 = vpop.f32.mrb[0].mxu0
        %v3194 = vadd.f32 0.0, %v3193
        %v3195 = vpop.f32.mrb[0].mxu0
        %3196 = vmatprep.mubr.f32.mxu0 0.0
        %3197 = vmatmul.mubr.f32.gmra.mrb[0].mxu0 %v2999
        %v3198 = vpop.f32.mrb[0].mxu0
        %v3199 = vadd.f32 0.0, %v3198
        %v3200 = vpop.f32.mrb[0].mxu0
        %3201 = vmatprep.mubr.f32.mxu0 0.0
        %3202 = vmatmul.mubr.f32.gmra.mrb[0].mxu0 %v3002
        %v3203 = vpop.f32.mrb[0].mxu0
        %v3204 = vadd.f32 0.0, %v3203
        %v3205 = vpop.f32.mrb[0].mxu0
        %3206 = vmatprep.mubr.f32.mxu0 0.0
        %3207 = vmatmul.mubr.f32.gmra.mrb[0].mxu0 %v3005
        %v3208 = vpop.f32.mrb[0].mxu0
        %v3209 = vadd.f32 0.0, %v3208
        %v3210 = vpop.f32.mrb[0].mxu0
        %3211 = vmatprep.mubr.f32.mxu0 0.0
        %3212 = vmatmul.mubr.f32.gmra.mrb[0].mxu0 %v3008
        %v3213 = vpop.f32.mrb[0].mxu0
        %v3214 = vadd.f32 0.0, %v3213
        %v3215 = vpop.f32.mrb[0].mxu0
        %3216 = vmatprep.mubr.f32.mxu0 0.0
        %3217 = vmatmul.mubr.f32.gmra.mrb[0].mxu0 %v3011
        %v3218 = vpop.f32.mrb[0].mxu0
        %v3219 = vadd.f32 0.0, %v3218
        %v3220 = vpop.f32.mrb[0].mxu0
        %3221 = vmatprep.mubr.f32.mxu0 0.0
        %3222 = vmatmul.mubr.f32.gmra.mrb[0].mxu0 %v3014
        %v3223 = vpop.f32.mrb[0].mxu0
        %v3224 = vadd.f32 0.0, %v3223
        %v3225 = vpop.f32.mrb[0].mxu0
        %3226 = vmatprep.mubr.f32.mxu0 0.0
        %3227 = vmatmul.mubr.f32.gmra.mrb[0].mxu0 %v3017
        %v3228 = vpop.f32.mrb[0].mxu0
        %v3229 = vadd.f32 0.0, %v3228
        %v3230 = vpop.f32.mrb[0].mxu0
        %3231 = vmatprep.mubr.f32.mxu0 0.0
        %3232 = vmatmul.mubr.f32.gmra.mrb[0].mxu0 %v3020
        %v3233 = vpop.f32.mrb[0].mxu0
        %v3234 = vadd.f32 0.0, %v3233
        %v3235 = vpop.f32.mrb[0].mxu0
        %3236 = vmatprep.mubr.f32.mxu0 0.0
        %3237 = vmatmul.mubr.f32.gmra.mrb[0].mxu0 %v3023
        %v3238 = vpop.f32.mrb[0].mxu0
        %v3239 = vadd.f32 0.0, %v3238
        %v3240 = vpop.f32.mrb[0].mxu0
        %3241 = vmatprep.mubr.f32.mxu0 0.0
        %3242 = vmatmul.mubr.f32.gmra.mrb[0].mxu0 %v3026
        %v3243 = vpop.f32.mrb[0].mxu0
        %v3244 = vadd.f32 0.0, %v3243
        %v3245 = vpop.f32.mrb[0].mxu0
        %3246 = vmatprep.mubr.f32.mxu0 0.0
        %3247 = vmatmul.mubr.f32.gmra.mrb[0].mxu0 %v3029
        %v3248 = vpop.f32.mrb[0].mxu0
        %v3249 = vadd.f32 0.0, %v3248
        %v3250 = vpop.f32.mrb[0].mxu0
        %3251 = vmatprep.mubr.f32.mxu0 0.0
        %3252 = vmatmul.mubr.f32.gmra.mrb[0].mxu0 %v3032
        %v3253 = vpop.f32.mrb[0].mxu0
        %v3254 = vadd.f32 0.0, %v3253
        %v3255 = vpop.f32.mrb[0].mxu0
        %3256 = vmatprep.mubr.f32.mxu0 0.0
        %3257 = vmatmul.mubr.f32.gmra.mrb[0].mxu0 %v3035
        %v3258 = vpop.f32.mrb[0].mxu0
        %v3259 = vadd.f32 0.0, %v3258
        %v3260 = vpop.f32.mrb[0].mxu0
        %3261 = vmatprep.mubr.f32.mxu0 0.0
        %3262 = vmatmul.mubr.f32.gmra.mrb[0].mxu0 %v3038
        %v3263 = vpop.f32.mrb[0].mxu0
        %v3264 = vadd.f32 0.0, %v3263
        %v3265 = vpop.f32.mrb[0].mxu0
        %3266 = vmatprep.mubr.f32.mxu0 0.0
        %3267 = vmatmul.mubr.f32.gmra.mrb[0].mxu0 %v3041
        %v3268 = vpop.f32.mrb[0].mxu0
        %v3269 = vadd.f32 0.0, %v3268
        %v3270 = vpop.f32.mrb[0].mxu0
        %3271 = vmatprep.mubr.f32.mxu0 0.0
        %3272 = vmatmul.mubr.f32.gmra.mrb[0].mxu0 %v3044
        %v3273 = vpop.f32.mrb[0].mxu0
        %v3274 = vadd.f32 0.0, %v3273
        %v3275 = vpop.f32.mrb[0].mxu0
        %3276 = vmatprep.mubr.f32.mxu0 0.0
        %3277 = vmatmul.mubr.f32.gmra.mrb[0].mxu0 %v3047
        %v3278 = vpop.f32.mrb[0].mxu0
        %v3279 = vadd.f32 0.0, %v3278
        %v3280 = vpop.f32.mrb[0].mxu0
        %3281 = vmatprep.mubr.f32.mxu0 0.0
        %3282 = vmatmul.mubr.f32.gmra.mrb[0].mxu0 %v3050
        %v3283 = vpop.f32.mrb[0].mxu0
        %v3284 = vadd.f32 0.0, %v3283
        %v3285 = vpop.f32.mrb[0].mxu0
        %3286 = vmatprep.mubr.f32.mxu0 0.0
        %3287 = vmatmul.mubr.f32.gmra.mrb[0].mxu0 %v3053
        %v3288 = vpop.f32.mrb[0].mxu0
        %v3289 = vadd.f32 0.0, %v3288
        %v3290 = vpop.f32.mrb[0].mxu0
        %3291 = vmatprep.mubr.f32.mxu0 0.0
        %3292 = vmatmul.mubr.f32.gmra.mrb[0].mxu0 %v3056
        %v3293 = vpop.f32.mrb[0].mxu0
        %v3294 = vadd.f32 0.0, %v3293
        %v3295 = vpop.f32.mrb[0].mxu0
        %3296 = vmatprep.mubr.f32.mxu0 0.0
        %3297 = vmatmul.mubr.f32.gmra.mrb[0].mxu0 %v3059
        %v3298 = vpop.f32.mrb[0].mxu0
        %v3299 = vadd.f32 0.0, %v3298
        %v3300 = vpop.f32.mrb[0].mxu0
        %3301 = vmatprep.mubr.f32.mxu0 0.0
        %3302 = vmatmul.mubr.f32.gmra.mrb[0].mxu0 %v3062
        %v3303 = vpop.f32.mrb[0].mxu0
        %v3304 = vadd.f32 0.0, %v3303
        %v3305 = vpop.f32.mrb[0].mxu0
        %3306 = vmatprep.mubr.f32.mxu0 0.0
        %3307 = vmatmul.mubr.f32.gmra.mrb[0].mxu0 %v3065
        %v3308 = vpop.f32.mrb[0].mxu0
        %v3309 = vadd.f32 0.0, %v3308
        %v3310 = vpop.f32.mrb[0].mxu0
        %3311 = vdwg.mxu0
        %v3312 = vadd.f32 %v2885, %v3134
        %v3313 = vadd.f32 %v2886, %v3139
        %v3314 = vadd.f32 %v2887, %v3144
        %v3315 = vadd.f32 %v2888, %v3149
        %v3316 = vadd.f32 %v2889, %v3154
        %v3317 = vadd.f32 %v2890, %v3159
        %v3318 = vadd.f32 %v2891, %v3164
        %v3319 = vadd.f32 %v2892, %v3169
        %v3320 = vadd.f32 %v2893, %v3174
        %v3321 = vadd.f32 %v2894, %v3179
        %v3322 = vadd.f32 %v2895, %v3184
        %v3323 = vadd.f32 %v2896, %v3189
        %v3324 = vadd.f32 %v2897, %v3194
        %v3325 = vadd.f32 %v2898, %v3199
        %v3326 = vadd.f32 %v2899, %v3204
        %v3327 = vadd.f32 %v2900, %v3209
        %v3328 = vadd.f32 %v2901, %v3214
        %v3329 = vadd.f32 %v2902, %v3219
        %v3330 = vadd.f32 %v2903, %v3224
        %v3331 = vadd.f32 %v2904, %v3229
        %v3332 = vadd.f32 %v2905, %v3234
        %v3333 = vadd.f32 %v2906, %v3239
        %v3334 = vadd.f32 %v2907, %v3244
        %v3335 = vadd.f32 %v2908, %v3249
        %v3336 = vadd.f32 %v2909, %v3254
        %v3337 = vadd.f32 %v2910, %v3259
        %v3338 = vadd.f32 %v2911, %v3264
        %v3339 = vadd.f32 %v2912, %v3269
        %v3340 = vadd.f32 %v2913, %v3274
        %v3341 = vadd.f32 %v2914, %v3279
        %v3342 = vadd.f32 %v2915, %v3284
        %v3343 = vadd.f32 %v2916, %v3289
        %v3344 = vadd.f32 %v2917, %v3294
        %v3345 = vadd.f32 %v2918, %v3299
        %v3346 = vadd.f32 %v2919, %v3304
        %v3347 = vadd.f32 %v2920, %v3309
        %v3348 = vld [vmem:[%s390 + $0x25] sm:$0xff]
        %v3349 = vld [vmem:[%s390 + $0x2d] sm:$0xff]
        %v3350 = vld [vmem:[%s390 + $0x35] sm:$0xff]
        %v3351 = vld [vmem:[%s390 + $0x3d] sm:$0xff]
        %v3352 = vld [vmem:[%s390 + $0x45] sm:$0xff]
        %v3353 = vld [vmem:[%s390 + $0x4d] sm:$0xff]
        %v3354 = vld [vmem:[%s390 + $0x55] sm:$0xff]
        %v3355 = vld [vmem:[%s390 + $0x5d] sm:$0xff]
        %v3356 = vld [vmem:[%s390 + $0x65] sm:$0xff]
        %v3357 = vld [vmem:[%s390 + $0x6d] sm:$0xff]
        %v3358 = vld [vmem:[%s390 + $0x75] sm:$0xff]
        %v3359 = vld [vmem:[%s390 + $0x7d] sm:$0xff]
        %v3360 = vld [vmem:[%s390 + $0x85] sm:$0xff]
        %v3361 = vld [vmem:[%s390 + $0x8d] sm:$0xff]
        %v3362 = vld [vmem:[%s390 + $0x95] sm:$0xff]
        %v3363 = vld [vmem:[%s390 + $0x9d] sm:$0xff]
        %v3364 = vld [vmem:[%s390 + $0xa5] sm:$0xff]
        %v3365 = vld [vmem:[%s390 + $0xad] sm:$0xff]
        %v3366 = vld [vmem:[%s390 + $0xb5] sm:$0xff]
        %v3367 = vld [vmem:[%s390 + $0xbd] sm:$0xff]
        %v3368 = vld [vmem:[%s390 + $0xc5] sm:$0xff]
        %v3369 = vld [vmem:[%s390 + $0xcd] sm:$0xff]
        %v3370 = vld [vmem:[%s390 + $0xd5] sm:$0xff]
        %v3371 = vld [vmem:[%s390 + $0xdd] sm:$0xff]
        %v3372 = vld [vmem:[%s390 + $0xe5] sm:$0xff]
        %v3373 = vld [vmem:[%s390 + $0xed] sm:$0xff]
        %v3374 = vld [vmem:[%s390 + $0xf5] sm:$0xff]
        %v3375 = vld [vmem:[%s390 + $0xfd] sm:$0xff]
        %v3376 = vld [vmem:[%s390 + $0x105] sm:$0xff]
        %v3377 = vld [vmem:[%s390 + $0x10d] sm:$0xff]
        %v3378 = vld [vmem:[%s390 + $0x115] sm:$0xff]
        %v3379 = vld [vmem:[%s390 + $0x11d] sm:$0xff]
        %v3380 = vld [vmem:[%s390 + $0x125] sm:$0xff]
        %v3381 = vld [vmem:[%s390 + $0x12d] sm:$0xff]
        %v3382 = vld [vmem:[%s390 + $0x135] sm:$0xff]
        %v3383 = vld [vmem:[%s390 + $0x13d] sm:$0xff]
        %s3384 = scalar_lea.vmem %s2, 56
        %v3385 = vld [vmem:[%s3384] sm:$0xff]
        %v3387 = vsel %vm506, %v3348, 0
        %v3390 = vsel %vm506, %v3349, 0
        %v3393 = vsel %vm506, %v3350, 0
        %v3396 = vsel %vm506, %v3351, 0
        %v3399 = vsel %vm506, %v3352, 0
        %v3402 = vsel %vm506, %v3353, 0
        %v3405 = vsel %vm506, %v3354, 0
        %v3408 = vsel %vm506, %v3355, 0
        %v3411 = vsel %vm506, %v3356, 0
        %v3414 = vsel %vm506, %v3357, 0
        %v3417 = vsel %vm506, %v3358, 0
        %v3420 = vsel %vm506, %v3359, 0
        %v3423 = vsel %vm506, %v3360, 0
        %v3426 = vsel %vm506, %v3361, 0
        %v3429 = vsel %vm506, %v3362, 0
        %v3432 = vsel %vm506, %v3363, 0
        %v3435 = vsel %vm506, %v3364, 0
        %v3438 = vsel %vm506, %v3365, 0
        %v3441 = vsel %vm506, %v3366, 0
        %v3444 = vsel %vm506, %v3367, 0
        %v3447 = vsel %vm506, %v3368, 0
        %v3450 = vsel %vm506, %v3369, 0
        %v3453 = vsel %vm506, %v3370, 0
        %v3456 = vsel %vm506, %v3371, 0
        %v3459 = vsel %vm506, %v3372, 0
        %v3462 = vsel %vm506, %v3373, 0
        %v3465 = vsel %vm506, %v3374, 0
        %v3468 = vsel %vm506, %v3375, 0
        %v3471 = vsel %vm506, %v3376, 0
        %v3474 = vsel %vm506, %v3377, 0
        %v3477 = vsel %vm506, %v3378, 0
        %v3480 = vsel %vm506, %v3379, 0
        %v3483 = vsel %vm506, %v3380, 0
        %v3486 = vsel %vm506, %v3381, 0
        %v3489 = vsel %vm506, %v3382, 0
        %v3492 = vsel %vm506, %v3383, 0
        %3494 = vmatprep.subr.mxu0 0.0
        %3495 = vmatpush1.msra.mxu0 %v3385
        %3496 = vmatprep.subr.mxu0 0.0
        %3497 = vmatpush1.msra.mxu0 0.0
        %3498 = vmatprep.subr.mxu0 0.0
        %3499 = vmatpush1.msra.mxu0 0.0
        %3500 = vmatprep.subr.mxu0 0.0
        %3501 = vmatpush1.msra.mxu0 0.0
        %3502 = vmatprep.subr.mxu0 0.0
        %3503 = vmatpush1.msra.mxu0 0.0
        %3504 = vmatprep.subr.mxu0 0.0
        %3505 = vmatpush1.msra.mxu0 0.0
        %3506 = vmatprep.subr.mxu0 0.0
        %3507 = vmatpush1.msra.mxu0 0.0
        %3508 = vmatprep.subr.mxu0 0.0
        %3509 = vmatpush1.msra.mxu0 0.0
        %3510 = vmatprep.subr.mxu0 0.0
        %3511 = vmatpush1.msra.mxu0 0.0
        %3512 = vmatprep.subr.mxu0 0.0
        %3513 = vmatpush1.msra.mxu0 0.0
        %3514 = vmatprep.subr.mxu0 0.0
        %3515 = vmatpush1.msra.mxu0 0.0
        %3516 = vmatprep.subr.mxu0 0.0
        %3517 = vmatpush1.msra.mxu0 0.0
        %3518 = vmatprep.subr.mxu0 0.0
        %3519 = vmatpush1.msra.mxu0 0.0
        %3520 = vmatprep.subr.mxu0 0.0
        %3521 = vmatpush1.msra.mxu0 0.0
        %3522 = vmatprep.subr.mxu0 0.0
        %3523 = vmatpush1.msra.mxu0 0.0
        %3524 = vmatprep.subr.mxu0 0.0
        %3525 = vmatpush1.msra.mxu0 0.0
        %3526 = vmatprep.subr.mxu0 0.0
        %3527 = vmatpush1.msra.mxu0 0.0
        %3528 = vmatprep.subr.mxu0 0.0
        %3529 = vmatpush1.msra.mxu0 0.0
        %3530 = vmatprep.subr.mxu0 0.0
        %3531 = vmatpush1.msra.mxu0 0.0
        %3532 = vmatprep.subr.mxu0 0.0
        %3533 = vmatpush1.msra.mxu0 0.0
        %3534 = vmatprep.subr.mxu0 0.0
        %3535 = vmatpush1.msra.mxu0 0.0
        %3536 = vmatprep.subr.mxu0 0.0
        %3537 = vmatpush1.msra.mxu0 0.0
        %3538 = vmatprep.subr.mxu0 0.0
        %3539 = vmatpush1.msra.mxu0 0.0
        %3540 = vmatprep.subr.mxu0 0.0
        %3541 = vmatpush1.msra.mxu0 0.0
        %3542 = vmatprep.subr.mxu0 0.0
        %3543 = vmatpush1.msra.mxu0 0.0
        %3544 = vmatprep.subr.mxu0 0.0
        %3545 = vmatpush1.msra.mxu0 0.0
        %3546 = vmatprep.subr.mxu0 0.0
        %3547 = vmatpush1.msra.mxu0 0.0
        %3548 = vmatprep.subr.mxu0 0.0
        %3549 = vmatpush1.msra.mxu0 0.0
        %3550 = vmatprep.subr.mxu0 0.0
        %3551 = vmatpush1.msra.mxu0 0.0
        %3552 = vmatprep.subr.mxu0 0.0
        %3553 = vmatpush1.msra.mxu0 0.0
        %3554 = vmatprep.subr.mxu0 0.0
        %3555 = vmatpush1.msra.mxu0 0.0
        %3556 = vmatprep.subr.mxu0 0.0
        %3557 = vmatpush1.msra.mxu0 0.0
        %3558 = vmatprep.mubr.f32.mxu0 0.0
        %3559 = vmatmul.mubr.f32.gmra.mrb[0].mxu0 %v3387
        %v3560 = vpop.f32.mrb[0].mxu0
        %v3561 = vadd.f32 0.0, %v3560
        %v3562 = vpop.f32.mrb[0].mxu0
        %3563 = vmatprep.mubr.f32.mxu0 0.0
        %3564 = vmatmul.mubr.f32.gmra.mrb[0].mxu0 %v3390
        %v3565 = vpop.f32.mrb[0].mxu0
        %v3566 = vadd.f32 0.0, %v3565
        %v3567 = vpop.f32.mrb[0].mxu0
        %3568 = vmatprep.mubr.f32.mxu0 0.0
        %3569 = vmatmul.mubr.f32.gmra.mrb[0].mxu0 %v3393
        %v3570 = vpop.f32.mrb[0].mxu0
        %v3571 = vadd.f32 0.0, %v3570
        %v3572 = vpop.f32.mrb[0].mxu0
        %3573 = vmatprep.mubr.f32.mxu0 0.0
        %3574 = vmatmul.mubr.f32.gmra.mrb[0].mxu0 %v3396
        %v3575 = vpop.f32.mrb[0].mxu0
        %v3576 = vadd.f32 0.0, %v3575
        %v3577 = vpop.f32.mrb[0].mxu0
        %3578 = vmatprep.mubr.f32.mxu0 0.0
        %3579 = vmatmul.mubr.f32.gmra.mrb[0].mxu0 %v3399
        %v3580 = vpop.f32.mrb[0].mxu0
        %v3581 = vadd.f32 0.0, %v3580
        %v3582 = vpop.f32.mrb[0].mxu0
        %3583 = vmatprep.mubr.f32.mxu0 0.0
        %3584 = vmatmul.mubr.f32.gmra.mrb[0].mxu0 %v3402
        %v3585 = vpop.f32.mrb[0].mxu0
        %v3586 = vadd.f32 0.0, %v3585
        %v3587 = vpop.f32.mrb[0].mxu0
        %3588 = vmatprep.mubr.f32.mxu0 0.0
        %3589 = vmatmul.mubr.f32.gmra.mrb[0].mxu0 %v3405
        %v3590 = vpop.f32.mrb[0].mxu0
        %v3591 = vadd.f32 0.0, %v3590
        %v3592 = vpop.f32.mrb[0].mxu0
        %3593 = vmatprep.mubr.f32.mxu0 0.0
        %3594 = vmatmul.mubr.f32.gmra.mrb[0].mxu0 %v3408
        %v3595 = vpop.f32.mrb[0].mxu0
        %v3596 = vadd.f32 0.0, %v3595
        %v3597 = vpop.f32.mrb[0].mxu0
        %3598 = vmatprep.mubr.f32.mxu0 0.0
        %3599 = vmatmul.mubr.f32.gmra.mrb[0].mxu0 %v3411
        %v3600 = vpop.f32.mrb[0].mxu0
        %v3601 = vadd.f32 0.0, %v3600
        %v3602 = vpop.f32.mrb[0].mxu0
        %3603 = vmatprep.mubr.f32.mxu0 0.0
        %3604 = vmatmul.mubr.f32.gmra.mrb[0].mxu0 %v3414
        %v3605 = vpop.f32.mrb[0].mxu0
        %v3606 = vadd.f32 0.0, %v3605
        %v3607 = vpop.f32.mrb[0].mxu0
        %3608 = vmatprep.mubr.f32.mxu0 0.0
        %3609 = vmatmul.mubr.f32.gmra.mrb[0].mxu0 %v3417
        %v3610 = vpop.f32.mrb[0].mxu0
        %v3611 = vadd.f32 0.0, %v3610
        %v3612 = vpop.f32.mrb[0].mxu0
        %3613 = vmatprep.mubr.f32.mxu0 0.0
        %3614 = vmatmul.mubr.f32.gmra.mrb[0].mxu0 %v3420
        %v3615 = vpop.f32.mrb[0].mxu0
        %v3616 = vadd.f32 0.0, %v3615
        %v3617 = vpop.f32.mrb[0].mxu0
        %3618 = vmatprep.mubr.f32.mxu0 0.0
        %3619 = vmatmul.mubr.f32.gmra.mrb[0].mxu0 %v3423
        %v3620 = vpop.f32.mrb[0].mxu0
        %v3621 = vadd.f32 0.0, %v3620
        %v3622 = vpop.f32.mrb[0].mxu0
        %3623 = vmatprep.mubr.f32.mxu0 0.0
        %3624 = vmatmul.mubr.f32.gmra.mrb[0].mxu0 %v3426
        %v3625 = vpop.f32.mrb[0].mxu0
        %v3626 = vadd.f32 0.0, %v3625
        %v3627 = vpop.f32.mrb[0].mxu0
        %3628 = vmatprep.mubr.f32.mxu0 0.0
        %3629 = vmatmul.mubr.f32.gmra.mrb[0].mxu0 %v3429
        %v3630 = vpop.f32.mrb[0].mxu0
        %v3631 = vadd.f32 0.0, %v3630
        %v3632 = vpop.f32.mrb[0].mxu0
        %3633 = vmatprep.mubr.f32.mxu0 0.0
        %3634 = vmatmul.mubr.f32.gmra.mrb[0].mxu0 %v3432
        %v3635 = vpop.f32.mrb[0].mxu0
        %v3636 = vadd.f32 0.0, %v3635
        %v3637 = vpop.f32.mrb[0].mxu0
        %3638 = vmatprep.mubr.f32.mxu0 0.0
        %3639 = vmatmul.mubr.f32.gmra.mrb[0].mxu0 %v3435
        %v3640 = vpop.f32.mrb[0].mxu0
        %v3641 = vadd.f32 0.0, %v3640
        %v3642 = vpop.f32.mrb[0].mxu0
        %3643 = vmatprep.mubr.f32.mxu0 0.0
        %3644 = vmatmul.mubr.f32.gmra.mrb[0].mxu0 %v3438
        %v3645 = vpop.f32.mrb[0].mxu0
        %v3646 = vadd.f32 0.0, %v3645
        %v3647 = vpop.f32.mrb[0].mxu0
        %3648 = vmatprep.mubr.f32.mxu0 0.0
        %3649 = vmatmul.mubr.f32.gmra.mrb[0].mxu0 %v3441
        %v3650 = vpop.f32.mrb[0].mxu0
        %v3651 = vadd.f32 0.0, %v3650
        %v3652 = vpop.f32.mrb[0].mxu0
        %3653 = vmatprep.mubr.f32.mxu0 0.0
        %3654 = vmatmul.mubr.f32.gmra.mrb[0].mxu0 %v3444
        %v3655 = vpop.f32.mrb[0].mxu0
        %v3656 = vadd.f32 0.0, %v3655
        %v3657 = vpop.f32.mrb[0].mxu0
        %3658 = vmatprep.mubr.f32.mxu0 0.0
        %3659 = vmatmul.mubr.f32.gmra.mrb[0].mxu0 %v3447
        %v3660 = vpop.f32.mrb[0].mxu0
        %v3661 = vadd.f32 0.0, %v3660
        %v3662 = vpop.f32.mrb[0].mxu0
        %3663 = vmatprep.mubr.f32.mxu0 0.0
        %3664 = vmatmul.mubr.f32.gmra.mrb[0].mxu0 %v3450
        %v3665 = vpop.f32.mrb[0].mxu0
        %v3666 = vadd.f32 0.0, %v3665
        %v3667 = vpop.f32.mrb[0].mxu0
        %3668 = vmatprep.mubr.f32.mxu0 0.0
        %3669 = vmatmul.mubr.f32.gmra.mrb[0].mxu0 %v3453
        %v3670 = vpop.f32.mrb[0].mxu0
        %v3671 = vadd.f32 0.0, %v3670
        %v3672 = vpop.f32.mrb[0].mxu0
        %3673 = vmatprep.mubr.f32.mxu0 0.0
        %3674 = vmatmul.mubr.f32.gmra.mrb[0].mxu0 %v3456
        %v3675 = vpop.f32.mrb[0].mxu0
        %v3676 = vadd.f32 0.0, %v3675
        %v3677 = vpop.f32.mrb[0].mxu0
        %3678 = vmatprep.mubr.f32.mxu0 0.0
        %3679 = vmatmul.mubr.f32.gmra.mrb[0].mxu0 %v3459
        %v3680 = vpop.f32.mrb[0].mxu0
        %v3681 = vadd.f32 0.0, %v3680
        %v3682 = vpop.f32.mrb[0].mxu0
        %3683 = vmatprep.mubr.f32.mxu0 0.0
        %3684 = vmatmul.mubr.f32.gmra.mrb[0].mxu0 %v3462
        %v3685 = vpop.f32.mrb[0].mxu0
        %v3686 = vadd.f32 0.0, %v3685
        %v3687 = vpop.f32.mrb[0].mxu0
        %3688 = vmatprep.mubr.f32.mxu0 0.0
        %3689 = vmatmul.mubr.f32.gmra.mrb[0].mxu0 %v3465
        %v3690 = vpop.f32.mrb[0].mxu0
        %v3691 = vadd.f32 0.0, %v3690
        %v3692 = vpop.f32.mrb[0].mxu0
        %3693 = vmatprep.mubr.f32.mxu0 0.0
        %3694 = vmatmul.mubr.f32.gmra.mrb[0].mxu0 %v3468
        %v3695 = vpop.f32.mrb[0].mxu0
        %v3696 = vadd.f32 0.0, %v3695
        %v3697 = vpop.f32.mrb[0].mxu0
        %3698 = vmatprep.mubr.f32.mxu0 0.0
        %3699 = vmatmul.mubr.f32.gmra.mrb[0].mxu0 %v3471
        %v3700 = vpop.f32.mrb[0].mxu0
        %v3701 = vadd.f32 0.0, %v3700
        %v3702 = vpop.f32.mrb[0].mxu0
        %3703 = vmatprep.mubr.f32.mxu0 0.0
        %3704 = vmatmul.mubr.f32.gmra.mrb[0].mxu0 %v3474
        %v3705 = vpop.f32.mrb[0].mxu0
        %v3706 = vadd.f32 0.0, %v3705
        %v3707 = vpop.f32.mrb[0].mxu0
        %3708 = vmatprep.mubr.f32.mxu0 0.0
        %3709 = vmatmul.mubr.f32.gmra.mrb[0].mxu0 %v3477
        %v3710 = vpop.f32.mrb[0].mxu0
        %v3711 = vadd.f32 0.0, %v3710
        %v3712 = vpop.f32.mrb[0].mxu0
        %3713 = vmatprep.mubr.f32.mxu0 0.0
        %3714 = vmatmul.mubr.f32.gmra.mrb[0].mxu0 %v3480
        %v3715 = vpop.f32.mrb[0].mxu0
        %v3716 = vadd.f32 0.0, %v3715
        %v3717 = vpop.f32.mrb[0].mxu0
        %3718 = vmatprep.mubr.f32.mxu0 0.0
        %3719 = vmatmul.mubr.f32.gmra.mrb[0].mxu0 %v3483
        %v3720 = vpop.f32.mrb[0].mxu0
        %v3721 = vadd.f32 0.0, %v3720
        %v3722 = vpop.f32.mrb[0].mxu0
        %3723 = vmatprep.mubr.f32.mxu0 0.0
        %3724 = vmatmul.mubr.f32.gmra.mrb[0].mxu0 %v3486
        %v3725 = vpop.f32.mrb[0].mxu0
        %v3726 = vadd.f32 0.0, %v3725
        %v3727 = vpop.f32.mrb[0].mxu0
        %3728 = vmatprep.mubr.f32.mxu0 0.0
        %3729 = vmatmul.mubr.f32.gmra.mrb[0].mxu0 %v3489
        %v3730 = vpop.f32.mrb[0].mxu0
        %v3731 = vadd.f32 0.0, %v3730
        %v3732 = vpop.f32.mrb[0].mxu0
        %3733 = vmatprep.mubr.f32.mxu0 0.0
        %3734 = vmatmul.mubr.f32.gmra.mrb[0].mxu0 %v3492
        %v3735 = vpop.f32.mrb[0].mxu0
        %v3736 = vadd.f32 0.0, %v3735
        %v3737 = vpop.f32.mrb[0].mxu0
        %3738 = vdwg.mxu0
        %v3739 = vadd.f32 %v3312, %v3561
        %v3740 = vadd.f32 %v3313, %v3566
        %v3741 = vadd.f32 %v3314, %v3571
        %v3742 = vadd.f32 %v3315, %v3576
        %v3743 = vadd.f32 %v3316, %v3581
        %v3744 = vadd.f32 %v3317, %v3586
        %v3745 = vadd.f32 %v3318, %v3591
        %v3746 = vadd.f32 %v3319, %v3596
        %v3747 = vadd.f32 %v3320, %v3601
        %v3748 = vadd.f32 %v3321, %v3606
        %v3749 = vadd.f32 %v3322, %v3611
        %v3750 = vadd.f32 %v3323, %v3616
        %v3751 = vadd.f32 %v3324, %v3621
        %v3752 = vadd.f32 %v3325, %v3626
        %v3753 = vadd.f32 %v3326, %v3631
        %v3754 = vadd.f32 %v3327, %v3636
        %v3755 = vadd.f32 %v3328, %v3641
        %v3756 = vadd.f32 %v3329, %v3646
        %v3757 = vadd.f32 %v3330, %v3651
        %v3758 = vadd.f32 %v3331, %v3656
        %v3759 = vadd.f32 %v3332, %v3661
        %v3760 = vadd.f32 %v3333, %v3666
        %v3761 = vadd.f32 %v3334, %v3671
        %v3762 = vadd.f32 %v3335, %v3676
        %v3763 = vadd.f32 %v3336, %v3681
        %v3764 = vadd.f32 %v3337, %v3686
        %v3765 = vadd.f32 %v3338, %v3691
        %v3766 = vadd.f32 %v3339, %v3696
        %v3767 = vadd.f32 %v3340, %v3701
        %v3768 = vadd.f32 %v3341, %v3706
        %v3769 = vadd.f32 %v3342, %v3711
        %v3770 = vadd.f32 %v3343, %v3716
        %v3771 = vadd.f32 %v3344, %v3721
        %v3772 = vadd.f32 %v3345, %v3726
        %v3773 = vadd.f32 %v3346, %v3731
        %v3774 = vadd.f32 %v3347, %v3736
        %v3775 = vld [vmem:[%s390 + $0x26] sm:$0xff]
        %v3776 = vld [vmem:[%s390 + $0x2e] sm:$0xff]
        %v3777 = vld [vmem:[%s390 + $0x36] sm:$0xff]
        %v3778 = vld [vmem:[%s390 + $0x3e] sm:$0xff]
        %v3779 = vld [vmem:[%s390 + $0x46] sm:$0xff]
        %v3780 = vld [vmem:[%s390 + $0x4e] sm:$0xff]
        %v3781 = vld [vmem:[%s390 + $0x56] sm:$0xff]
        %v3782 = vld [vmem:[%s390 + $0x5e] sm:$0xff]
        %v3783 = vld [vmem:[%s390 + $0x66] sm:$0xff]
        %v3784 = vld [vmem:[%s390 + $0x6e] sm:$0xff]
        %v3785 = vld [vmem:[%s390 + $0x76] sm:$0xff]
        %v3786 = vld [vmem:[%s390 + $0x7e] sm:$0xff]
        %v3787 = vld [vmem:[%s390 + $0x86] sm:$0xff]
        %v3788 = vld [vmem:[%s390 + $0x8e] sm:$0xff]
        %v3789 = vld [vmem:[%s390 + $0x96] sm:$0xff]
        %v3790 = vld [vmem:[%s390 + $0x9e] sm:$0xff]
        %v3791 = vld [vmem:[%s390 + $0xa6] sm:$0xff]
        %v3792 = vld [vmem:[%s390 + $0xae] sm:$0xff]
        %v3793 = vld [vmem:[%s390 + $0xb6] sm:$0xff]
        %v3794 = vld [vmem:[%s390 + $0xbe] sm:$0xff]
        %v3795 = vld [vmem:[%s390 + $0xc6] sm:$0xff]
        %v3796 = vld [vmem:[%s390 + $0xce] sm:$0xff]
        %v3797 = vld [vmem:[%s390 + $0xd6] sm:$0xff]
        %v3798 = vld [vmem:[%s390 + $0xde] sm:$0xff]
        %v3799 = vld [vmem:[%s390 + $0xe6] sm:$0xff]
        %v3800 = vld [vmem:[%s390 + $0xee] sm:$0xff]
        %v3801 = vld [vmem:[%s390 + $0xf6] sm:$0xff]
        %v3802 = vld [vmem:[%s390 + $0xfe] sm:$0xff]
        %v3803 = vld [vmem:[%s390 + $0x106] sm:$0xff]
        %v3804 = vld [vmem:[%s390 + $0x10e] sm:$0xff]
        %v3805 = vld [vmem:[%s390 + $0x116] sm:$0xff]
        %v3806 = vld [vmem:[%s390 + $0x11e] sm:$0xff]
        %v3807 = vld [vmem:[%s390 + $0x126] sm:$0xff]
        %v3808 = vld [vmem:[%s390 + $0x12e] sm:$0xff]
        %v3809 = vld [vmem:[%s390 + $0x136] sm:$0xff]
        %v3810 = vld [vmem:[%s390 + $0x13e] sm:$0xff]
        %s3811 = scalar_lea.vmem %s2, 64
        %v3812 = vld [vmem:[%s3811] sm:$0xff]
        %v3814 = vsel %vm506, %v3775, 0
        %v3817 = vsel %vm506, %v3776, 0
        %v3820 = vsel %vm506, %v3777, 0
        %v3823 = vsel %vm506, %v3778, 0
        %v3826 = vsel %vm506, %v3779, 0
        %v3829 = vsel %vm506, %v3780, 0
        %v3832 = vsel %vm506, %v3781, 0
        %v3835 = vsel %vm506, %v3782, 0
        %v3838 = vsel %vm506, %v3783, 0
        %v3841 = vsel %vm506, %v3784, 0
        %v3844 = vsel %vm506, %v3785, 0
        %v3847 = vsel %vm506, %v3786, 0
        %v3850 = vsel %vm506, %v3787, 0
        %v3853 = vsel %vm506, %v3788, 0
        %v3856 = vsel %vm506, %v3789, 0
        %v3859 = vsel %vm506, %v3790, 0
        %v3862 = vsel %vm506, %v3791, 0
        %v3865 = vsel %vm506, %v3792, 0
        %v3868 = vsel %vm506, %v3793, 0
        %v3871 = vsel %vm506, %v3794, 0
        %v3874 = vsel %vm506, %v3795, 0
        %v3877 = vsel %vm506, %v3796, 0
        %v3880 = vsel %vm506, %v3797, 0
        %v3883 = vsel %vm506, %v3798, 0
        %v3886 = vsel %vm506, %v3799, 0
        %v3889 = vsel %vm506, %v3800, 0
        %v3892 = vsel %vm506, %v3801, 0
        %v3895 = vsel %vm506, %v3802, 0
        %v3898 = vsel %vm506, %v3803, 0
        %v3901 = vsel %vm506, %v3804, 0
        %v3904 = vsel %vm506, %v3805, 0
        %v3907 = vsel %vm506, %v3806, 0
        %v3910 = vsel %vm506, %v3807, 0
        %v3913 = vsel %vm506, %v3808, 0
        %v3916 = vsel %vm506, %v3809, 0
        %v3919 = vsel %vm506, %v3810, 0
        %3921 = vmatprep.subr.mxu0 0.0
        %3922 = vmatpush1.msra.mxu0 %v3812
        %3923 = vmatprep.subr.mxu0 0.0
        %3924 = vmatpush1.msra.mxu0 0.0
        %3925 = vmatprep.subr.mxu0 0.0
        %3926 = vmatpush1.msra.mxu0 0.0
        %3927 = vmatprep.subr.mxu0 0.0
        %3928 = vmatpush1.msra.mxu0 0.0
        %3929 = vmatprep.subr.mxu0 0.0
        %3930 = vmatpush1.msra.mxu0 0.0
        %3931 = vmatprep.subr.mxu0 0.0
        %3932 = vmatpush1.msra.mxu0 0.0
        %3933 = vmatprep.subr.mxu0 0.0
        %3934 = vmatpush1.msra.mxu0 0.0
        %3935 = vmatprep.subr.mxu0 0.0
        %3936 = vmatpush1.msra.mxu0 0.0
        %3937 = vmatprep.subr.mxu0 0.0
        %3938 = vmatpush1.msra.mxu0 0.0
        %3939 = vmatprep.subr.mxu0 0.0
        %3940 = vmatpush1.msra.mxu0 0.0
        %3941 = vmatprep.subr.mxu0 0.0
        %3942 = vmatpush1.msra.mxu0 0.0
        %3943 = vmatprep.subr.mxu0 0.0
        %3944 = vmatpush1.msra.mxu0 0.0
        %3945 = vmatprep.subr.mxu0 0.0
        %3946 = vmatpush1.msra.mxu0 0.0
        %3947 = vmatprep.subr.mxu0 0.0
        %3948 = vmatpush1.msra.mxu0 0.0
        %3949 = vmatprep.subr.mxu0 0.0
        %3950 = vmatpush1.msra.mxu0 0.0
        %3951 = vmatprep.subr.mxu0 0.0
        %3952 = vmatpush1.msra.mxu0 0.0
        %3953 = vmatprep.subr.mxu0 0.0
        %3954 = vmatpush1.msra.mxu0 0.0
        %3955 = vmatprep.subr.mxu0 0.0
        %3956 = vmatpush1.msra.mxu0 0.0
        %3957 = vmatprep.subr.mxu0 0.0
        %3958 = vmatpush1.msra.mxu0 0.0
        %3959 = vmatprep.subr.mxu0 0.0
        %3960 = vmatpush1.msra.mxu0 0.0
        %3961 = vmatprep.subr.mxu0 0.0
        %3962 = vmatpush1.msra.mxu0 0.0
        %3963 = vmatprep.subr.mxu0 0.0
        %3964 = vmatpush1.msra.mxu0 0.0
        %3965 = vmatprep.subr.mxu0 0.0
        %3966 = vmatpush1.msra.mxu0 0.0
        %3967 = vmatprep.subr.mxu0 0.0
        %3968 = vmatpush1.msra.mxu0 0.0
        %3969 = vmatprep.subr.mxu0 0.0
        %3970 = vmatpush1.msra.mxu0 0.0
        %3971 = vmatprep.subr.mxu0 0.0
        %3972 = vmatpush1.msra.mxu0 0.0
        %3973 = vmatprep.subr.mxu0 0.0
        %3974 = vmatpush1.msra.mxu0 0.0
        %3975 = vmatprep.subr.mxu0 0.0
        %3976 = vmatpush1.msra.mxu0 0.0
        %3977 = vmatprep.subr.mxu0 0.0
        %3978 = vmatpush1.msra.mxu0 0.0
        %3979 = vmatprep.subr.mxu0 0.0
        %3980 = vmatpush1.msra.mxu0 0.0
        %3981 = vmatprep.subr.mxu0 0.0
        %3982 = vmatpush1.msra.mxu0 0.0
        %3983 = vmatprep.subr.mxu0 0.0
        %3984 = vmatpush1.msra.mxu0 0.0
        %3985 = vmatprep.mubr.f32.mxu0 0.0
        %3986 = vmatmul.mubr.f32.gmra.mrb[0].mxu0 %v3814
        %v3987 = vpop.f32.mrb[0].mxu0
        %v3988 = vadd.f32 0.0, %v3987
        %v3989 = vpop.f32.mrb[0].mxu0
        %3990 = vmatprep.mubr.f32.mxu0 0.0
        %3991 = vmatmul.mubr.f32.gmra.mrb[0].mxu0 %v3817
        %v3992 = vpop.f32.mrb[0].mxu0
        %v3993 = vadd.f32 0.0, %v3992
        %v3994 = vpop.f32.mrb[0].mxu0
        %3995 = vmatprep.mubr.f32.mxu0 0.0
        %3996 = vmatmul.mubr.f32.gmra.mrb[0].mxu0 %v3820
        %v3997 = vpop.f32.mrb[0].mxu0
        %v3998 = vadd.f32 0.0, %v3997
        %v3999 = vpop.f32.mrb[0].mxu0
        %4000 = vmatprep.mubr.f32.mxu0 0.0
        %4001 = vmatmul.mubr.f32.gmra.mrb[0].mxu0 %v3823
        %v4002 = vpop.f32.mrb[0].mxu0
        %v4003 = vadd.f32 0.0, %v4002
        %v4004 = vpop.f32.mrb[0].mxu0
        %4005 = vmatprep.mubr.f32.mxu0 0.0
        %4006 = vmatmul.mubr.f32.gmra.mrb[0].mxu0 %v3826
        %v4007 = vpop.f32.mrb[0].mxu0
        %v4008 = vadd.f32 0.0, %v4007
        %v4009 = vpop.f32.mrb[0].mxu0
        %4010 = vmatprep.mubr.f32.mxu0 0.0
        %4011 = vmatmul.mubr.f32.gmra.mrb[0].mxu0 %v3829
        %v4012 = vpop.f32.mrb[0].mxu0
        %v4013 = vadd.f32 0.0, %v4012
        %v4014 = vpop.f32.mrb[0].mxu0
        %4015 = vmatprep.mubr.f32.mxu0 0.0
        %4016 = vmatmul.mubr.f32.gmra.mrb[0].mxu0 %v3832
        %v4017 = vpop.f32.mrb[0].mxu0
        %v4018 = vadd.f32 0.0, %v4017
        %v4019 = vpop.f32.mrb[0].mxu0
        %4020 = vmatprep.mubr.f32.mxu0 0.0
        %4021 = vmatmul.mubr.f32.gmra.mrb[0].mxu0 %v3835
        %v4022 = vpop.f32.mrb[0].mxu0
        %v4023 = vadd.f32 0.0, %v4022
        %v4024 = vpop.f32.mrb[0].mxu0
        %4025 = vmatprep.mubr.f32.mxu0 0.0
        %4026 = vmatmul.mubr.f32.gmra.mrb[0].mxu0 %v3838
        %v4027 = vpop.f32.mrb[0].mxu0
        %v4028 = vadd.f32 0.0, %v4027
        %v4029 = vpop.f32.mrb[0].mxu0
        %4030 = vmatprep.mubr.f32.mxu0 0.0
        %4031 = vmatmul.mubr.f32.gmra.mrb[0].mxu0 %v3841
        %v4032 = vpop.f32.mrb[0].mxu0
        %v4033 = vadd.f32 0.0, %v4032
        %v4034 = vpop.f32.mrb[0].mxu0
        %4035 = vmatprep.mubr.f32.mxu0 0.0
        %4036 = vmatmul.mubr.f32.gmra.mrb[0].mxu0 %v3844
        %v4037 = vpop.f32.mrb[0].mxu0
        %v4038 = vadd.f32 0.0, %v4037
        %v4039 = vpop.f32.mrb[0].mxu0
        %4040 = vmatprep.mubr.f32.mxu0 0.0
        %4041 = vmatmul.mubr.f32.gmra.mrb[0].mxu0 %v3847
        %v4042 = vpop.f32.mrb[0].mxu0
        %v4043 = vadd.f32 0.0, %v4042
        %v4044 = vpop.f32.mrb[0].mxu0
        %4045 = vmatprep.mubr.f32.mxu0 0.0
        %4046 = vmatmul.mubr.f32.gmra.mrb[0].mxu0 %v3850
        %v4047 = vpop.f32.mrb[0].mxu0
        %v4048 = vadd.f32 0.0, %v4047
        %v4049 = vpop.f32.mrb[0].mxu0
        %4050 = vmatprep.mubr.f32.mxu0 0.0
        %4051 = vmatmul.mubr.f32.gmra.mrb[0].mxu0 %v3853
        %v4052 = vpop.f32.mrb[0].mxu0
        %v4053 = vadd.f32 0.0, %v4052
        %v4054 = vpop.f32.mrb[0].mxu0
        %4055 = vmatprep.mubr.f32.mxu0 0.0
        %4056 = vmatmul.mubr.f32.gmra.mrb[0].mxu0 %v3856
        %v4057 = vpop.f32.mrb[0].mxu0
        %v4058 = vadd.f32 0.0, %v4057
        %v4059 = vpop.f32.mrb[0].mxu0
        %4060 = vmatprep.mubr.f32.mxu0 0.0
        %4061 = vmatmul.mubr.f32.gmra.mrb[0].mxu0 %v3859
        %v4062 = vpop.f32.mrb[0].mxu0
        %v4063 = vadd.f32 0.0, %v4062
        %v4064 = vpop.f32.mrb[0].mxu0
        %4065 = vmatprep.mubr.f32.mxu0 0.0
        %4066 = vmatmul.mubr.f32.gmra.mrb[0].mxu0 %v3862
        %v4067 = vpop.f32.mrb[0].mxu0
        %v4068 = vadd.f32 0.0, %v4067
        %v4069 = vpop.f32.mrb[0].mxu0
        %4070 = vmatprep.mubr.f32.mxu0 0.0
        %4071 = vmatmul.mubr.f32.gmra.mrb[0].mxu0 %v3865
        %v4072 = vpop.f32.mrb[0].mxu0
        %v4073 = vadd.f32 0.0, %v4072
        %v4074 = vpop.f32.mrb[0].mxu0
        %4075 = vmatprep.mubr.f32.mxu0 0.0
        %4076 = vmatmul.mubr.f32.gmra.mrb[0].mxu0 %v3868
        %v4077 = vpop.f32.mrb[0].mxu0
        %v4078 = vadd.f32 0.0, %v4077
        %v4079 = vpop.f32.mrb[0].mxu0
        %4080 = vmatprep.mubr.f32.mxu0 0.0
        %4081 = vmatmul.mubr.f32.gmra.mrb[0].mxu0 %v3871
        %v4082 = vpop.f32.mrb[0].mxu0
        %v4083 = vadd.f32 0.0, %v4082
        %v4084 = vpop.f32.mrb[0].mxu0
        %4085 = vmatprep.mubr.f32.mxu0 0.0
        %4086 = vmatmul.mubr.f32.gmra.mrb[0].mxu0 %v3874
        %v4087 = vpop.f32.mrb[0].mxu0
        %v4088 = vadd.f32 0.0, %v4087
        %v4089 = vpop.f32.mrb[0].mxu0
        %4090 = vmatprep.mubr.f32.mxu0 0.0
        %4091 = vmatmul.mubr.f32.gmra.mrb[0].mxu0 %v3877
        %v4092 = vpop.f32.mrb[0].mxu0
        %v4093 = vadd.f32 0.0, %v4092
        %v4094 = vpop.f32.mrb[0].mxu0
        %4095 = vmatprep.mubr.f32.mxu0 0.0
        %4096 = vmatmul.mubr.f32.gmra.mrb[0].mxu0 %v3880
        %v4097 = vpop.f32.mrb[0].mxu0
        %v4098 = vadd.f32 0.0, %v4097
        %v4099 = vpop.f32.mrb[0].mxu0
        %4100 = vmatprep.mubr.f32.mxu0 0.0
        %4101 = vmatmul.mubr.f32.gmra.mrb[0].mxu0 %v3883
        %v4102 = vpop.f32.mrb[0].mxu0
        %v4103 = vadd.f32 0.0, %v4102
        %v4104 = vpop.f32.mrb[0].mxu0
        %4105 = vmatprep.mubr.f32.mxu0 0.0
        %4106 = vmatmul.mubr.f32.gmra.mrb[0].mxu0 %v3886
        %v4107 = vpop.f32.mrb[0].mxu0
        %v4108 = vadd.f32 0.0, %v4107
        %v4109 = vpop.f32.mrb[0].mxu0
        %4110 = vmatprep.mubr.f32.mxu0 0.0
        %4111 = vmatmul.mubr.f32.gmra.mrb[0].mxu0 %v3889
        %v4112 = vpop.f32.mrb[0].mxu0
        %v4113 = vadd.f32 0.0, %v4112
        %v4114 = vpop.f32.mrb[0].mxu0
        %4115 = vmatprep.mubr.f32.mxu0 0.0
        %4116 = vmatmul.mubr.f32.gmra.mrb[0].mxu0 %v3892
        %v4117 = vpop.f32.mrb[0].mxu0
        %v4118 = vadd.f32 0.0, %v4117
        %v4119 = vpop.f32.mrb[0].mxu0
        %4120 = vmatprep.mubr.f32.mxu0 0.0
        %4121 = vmatmul.mubr.f32.gmra.mrb[0].mxu0 %v3895
        %v4122 = vpop.f32.mrb[0].mxu0
        %v4123 = vadd.f32 0.0, %v4122
        %v4124 = vpop.f32.mrb[0].mxu0
        %4125 = vmatprep.mubr.f32.mxu0 0.0
        %4126 = vmatmul.mubr.f32.gmra.mrb[0].mxu0 %v3898
        %v4127 = vpop.f32.mrb[0].mxu0
        %v4128 = vadd.f32 0.0, %v4127
        %v4129 = vpop.f32.mrb[0].mxu0
        %4130 = vmatprep.mubr.f32.mxu0 0.0
        %4131 = vmatmul.mubr.f32.gmra.mrb[0].mxu0 %v3901
        %v4132 = vpop.f32.mrb[0].mxu0
        %v4133 = vadd.f32 0.0, %v4132
        %v4134 = vpop.f32.mrb[0].mxu0
        %4135 = vmatprep.mubr.f32.mxu0 0.0
        %4136 = vmatmul.mubr.f32.gmra.mrb[0].mxu0 %v3904
        %v4137 = vpop.f32.mrb[0].mxu0
        %v4138 = vadd.f32 0.0, %v4137
        %v4139 = vpop.f32.mrb[0].mxu0
        %4140 = vmatprep.mubr.f32.mxu0 0.0
        %4141 = vmatmul.mubr.f32.gmra.mrb[0].mxu0 %v3907
        %v4142 = vpop.f32.mrb[0].mxu0
        %v4143 = vadd.f32 0.0, %v4142
        %v4144 = vpop.f32.mrb[0].mxu0
        %4145 = vmatprep.mubr.f32.mxu0 0.0
        %4146 = vmatmul.mubr.f32.gmra.mrb[0].mxu0 %v3910
        %v4147 = vpop.f32.mrb[0].mxu0
        %v4148 = vadd.f32 0.0, %v4147
        %v4149 = vpop.f32.mrb[0].mxu0
        %4150 = vmatprep.mubr.f32.mxu0 0.0
        %4151 = vmatmul.mubr.f32.gmra.mrb[0].mxu0 %v3913
        %v4152 = vpop.f32.mrb[0].mxu0
        %v4153 = vadd.f32 0.0, %v4152
        %v4154 = vpop.f32.mrb[0].mxu0
        %4155 = vmatprep.mubr.f32.mxu0 0.0
        %4156 = vmatmul.mubr.f32.gmra.mrb[0].mxu0 %v3916
        %v4157 = vpop.f32.mrb[0].mxu0
        %v4158 = vadd.f32 0.0, %v4157
        %v4159 = vpop.f32.mrb[0].mxu0
        %4160 = vmatprep.mubr.f32.mxu0 0.0
        %4161 = vmatmul.mubr.f32.gmra.mrb[0].mxu0 %v3919
        %v4162 = vpop.f32.mrb[0].mxu0
        %v4163 = vadd.f32 0.0, %v4162
        %v4164 = vpop.f32.mrb[0].mxu0
        %4165 = vdwg.mxu0
        %v4166 = vadd.f32 %v3739, %v3988
        %v4167 = vadd.f32 %v3740, %v3993
        %v4168 = vadd.f32 %v3741, %v3998
        %v4169 = vadd.f32 %v3742, %v4003
        %v4170 = vadd.f32 %v3743, %v4008
        %v4171 = vadd.f32 %v3744, %v4013
        %v4172 = vadd.f32 %v3745, %v4018
        %v4173 = vadd.f32 %v3746, %v4023
        %v4174 = vadd.f32 %v3747, %v4028
        %v4175 = vadd.f32 %v3748, %v4033
        %v4176 = vadd.f32 %v3749, %v4038
        %v4177 = vadd.f32 %v3750, %v4043
        %v4178 = vadd.f32 %v3751, %v4048
        %v4179 = vadd.f32 %v3752, %v4053
        %v4180 = vadd.f32 %v3753, %v4058
        %v4181 = vadd.f32 %v3754, %v4063
        %v4182 = vadd.f32 %v3755, %v4068
        %v4183 = vadd.f32 %v3756, %v4073
        %v4184 = vadd.f32 %v3757, %v4078
        %v4185 = vadd.f32 %v3758, %v4083
        %v4186 = vadd.f32 %v3759, %v4088
        %v4187 = vadd.f32 %v3760, %v4093
        %v4188 = vadd.f32 %v3761, %v4098
        %v4189 = vadd.f32 %v3762, %v4103
        %v4190 = vadd.f32 %v3763, %v4108
        %v4191 = vadd.f32 %v3764, %v4113
        %v4192 = vadd.f32 %v3765, %v4118
        %v4193 = vadd.f32 %v3766, %v4123
        %v4194 = vadd.f32 %v3767, %v4128
        %v4195 = vadd.f32 %v3768, %v4133
        %v4196 = vadd.f32 %v3769, %v4138
        %v4197 = vadd.f32 %v3770, %v4143
        %v4198 = vadd.f32 %v3771, %v4148
        %v4199 = vadd.f32 %v3772, %v4153
        %v4200 = vadd.f32 %v3773, %v4158
        %v4201 = vadd.f32 %v3774, %v4163
        %v4202 = vld [vmem:[%s3] sm:$0x1]
        %v4204 = vlaneseq
        %v4205 = vshrl.u32 %v4204, 7
        %v4206 = vsub.s32 0, %v4205
        %v4207 = vrot.slane %v4202, %v4206
        %v4209 = vadd.f32 %v4166, %v4207
        %v4210 = vadd.f32 %v4167, %v4207
        %v4211 = vadd.f32 %v4168, %v4207
        %v4212 = vadd.f32 %v4169, %v4207
        %v4213 = vadd.f32 %v4170, %v4207
        %v4214 = vadd.f32 %v4171, %v4207
        %v4215 = vadd.f32 %v4172, %v4207
        %v4216 = vadd.f32 %v4173, %v4207
        %v4217 = vadd.f32 %v4174, %v4207
        %v4218 = vadd.f32 %v4175, %v4207
        %v4219 = vadd.f32 %v4176, %v4207
        %v4220 = vadd.f32 %v4177, %v4207
        %v4221 = vadd.f32 %v4178, %v4207
        %v4222 = vadd.f32 %v4179, %v4207
        %v4223 = vadd.f32 %v4180, %v4207
        %v4224 = vadd.f32 %v4181, %v4207
        %v4225 = vadd.f32 %v4182, %v4207
        %v4226 = vadd.f32 %v4183, %v4207
        %v4227 = vadd.f32 %v4184, %v4207
        %v4228 = vadd.f32 %v4185, %v4207
        %v4229 = vadd.f32 %v4186, %v4207
        %v4230 = vadd.f32 %v4187, %v4207
        %v4231 = vadd.f32 %v4188, %v4207
        %v4232 = vadd.f32 %v4189, %v4207
        %v4233 = vadd.f32 %v4190, %v4207
        %v4234 = vadd.f32 %v4191, %v4207
        %v4235 = vadd.f32 %v4192, %v4207
        %v4236 = vadd.f32 %v4193, %v4207
        %v4237 = vadd.f32 %v4194, %v4207
        %v4238 = vadd.f32 %v4195, %v4207
        %v4239 = vadd.f32 %v4196, %v4207
        %v4240 = vadd.f32 %v4197, %v4207
        %v4241 = vadd.f32 %v4198, %v4207
        %v4242 = vadd.f32 %v4199, %v4207
        %v4243 = vadd.f32 %v4200, %v4207
        %v4244 = vadd.f32 %v4201, %v4207
        %v4245 = vmax.f32 %v4209, 0.0
        %v4246 = vmax.f32 %v4210, 0.0
        %v4247 = vmax.f32 %v4211, 0.0
        %v4248 = vmax.f32 %v4212, 0.0
        %v4249 = vmax.f32 %v4213, 0.0
        %v4250 = vmax.f32 %v4214, 0.0
        %v4251 = vmax.f32 %v4215, 0.0
        %v4252 = vmax.f32 %v4216, 0.0
        %v4253 = vmax.f32 %v4217, 0.0
        %v4254 = vmax.f32 %v4218, 0.0
        %v4255 = vmax.f32 %v4219, 0.0
        %v4256 = vmax.f32 %v4220, 0.0
        %v4257 = vmax.f32 %v4221, 0.0
        %v4258 = vmax.f32 %v4222, 0.0
        %v4259 = vmax.f32 %v4223, 0.0
        %v4260 = vmax.f32 %v4224, 0.0
        %v4261 = vmax.f32 %v4225, 0.0
        %v4262 = vmax.f32 %v4226, 0.0
        %v4263 = vmax.f32 %v4227, 0.0
        %v4264 = vmax.f32 %v4228, 0.0
        %v4265 = vmax.f32 %v4229, 0.0
        %v4266 = vmax.f32 %v4230, 0.0
        %v4267 = vmax.f32 %v4231, 0.0
        %v4268 = vmax.f32 %v4232, 0.0
        %v4269 = vmax.f32 %v4233, 0.0
        %v4270 = vmax.f32 %v4234, 0.0
        %v4271 = vmax.f32 %v4235, 0.0
        %v4272 = vmax.f32 %v4236, 0.0
        %v4273 = vmax.f32 %v4237, 0.0
        %v4274 = vmax.f32 %v4238, 0.0
        %v4275 = vmax.f32 %v4239, 0.0
        %v4276 = vmax.f32 %v4240, 0.0
        %v4277 = vmax.f32 %v4241, 0.0
        %v4278 = vmax.f32 %v4242, 0.0
        %v4279 = vmax.f32 %v4243, 0.0
        %v4280 = vmax.f32 %v4244, 0.0
        %4282 = vset.pattern.permute.xlu0 0
        %4283 = vperm.xlu0 %4282, %v395
        %v4284 = vpop.permute.xlu0 %4283
        %4287 = vset.pattern.permute.xlu0 0
        %4288 = vperm.xlu0 %4287, %v396
        %v4289 = vpop.permute.xlu0 %4288
        %4292 = vset.pattern.permute.xlu0 0
        %4293 = vperm.xlu0 %4292, %v397
        %v4294 = vpop.permute.xlu0 %4293
        %4297 = vset.pattern.permute.xlu0 0
        %4298 = vperm.xlu0 %4297, %v398
        %v4299 = vpop.permute.xlu0 %4298
        %4302 = vset.pattern.permute.xlu0 0
        %4303 = vperm.xlu0 %4302, %v399
        %v4304 = vpop.permute.xlu0 %4303
        %4307 = vset.pattern.permute.xlu0 0
        %4308 = vperm.xlu0 %4307, %v400
        %v4309 = vpop.permute.xlu0 %4308
        %4312 = vset.pattern.permute.xlu0 0
        %4313 = vperm.xlu0 %4312, %v401
        %v4314 = vpop.permute.xlu0 %4313
        %4317 = vset.pattern.permute.xlu0 0
        %4318 = vperm.xlu0 %4317, %v402
        %v4319 = vpop.permute.xlu0 %4318
        %4322 = vset.pattern.permute.xlu0 0
        %4323 = vperm.xlu0 %4322, %v403
        %v4324 = vpop.permute.xlu0 %4323
        %4327 = vset.pattern.permute.xlu0 0
        %4328 = vperm.xlu0 %4327, %v404
        %v4329 = vpop.permute.xlu0 %4328
        %4332 = vset.pattern.permute.xlu0 0
        %4333 = vperm.xlu0 %4332, %v405
        %v4334 = vpop.permute.xlu0 %4333
        %4337 = vset.pattern.permute.xlu0 0
        %4338 = vperm.xlu0 %4337, %v406
        %v4339 = vpop.permute.xlu0 %4338
        %4342 = vset.pattern.permute.xlu0 0
        %4343 = vperm.xlu0 %4342, %v407
        %v4344 = vpop.permute.xlu0 %4343
        %4347 = vset.pattern.permute.xlu0 0
        %4348 = vperm.xlu0 %4347, %v408
        %v4349 = vpop.permute.xlu0 %4348
        %4352 = vset.pattern.permute.xlu0 0
        %4353 = vperm.xlu0 %4352, %v409
        %v4354 = vpop.permute.xlu0 %4353
        %4357 = vset.pattern.permute.xlu0 0
        %4358 = vperm.xlu0 %4357, %v410
        %v4359 = vpop.permute.xlu0 %4358
        %4362 = vset.pattern.permute.xlu0 0
        %4363 = vperm.xlu0 %4362, %v411
        %v4364 = vpop.permute.xlu0 %4363
        %4367 = vset.pattern.permute.xlu0 0
        %4368 = vperm.xlu0 %4367, %v412
        %v4369 = vpop.permute.xlu0 %4368
        %4372 = vset.pattern.permute.xlu0 0
        %4373 = vperm.xlu0 %4372, %v413
        %v4374 = vpop.permute.xlu0 %4373
        %4377 = vset.pattern.permute.xlu0 0
        %4378 = vperm.xlu0 %4377, %v414
        %v4379 = vpop.permute.xlu0 %4378
        %4382 = vset.pattern.permute.xlu0 0
        %4383 = vperm.xlu0 %4382, %v415
        %v4384 = vpop.permute.xlu0 %4383
        %4387 = vset.pattern.permute.xlu0 0
        %4388 = vperm.xlu0 %4387, %v416
        %v4389 = vpop.permute.xlu0 %4388
        %4392 = vset.pattern.permute.xlu0 0
        %4393 = vperm.xlu0 %4392, %v417
        %v4394 = vpop.permute.xlu0 %4393
        %4397 = vset.pattern.permute.xlu0 0
        %4398 = vperm.xlu0 %4397, %v418
        %v4399 = vpop.permute.xlu0 %4398
        %4402 = vset.pattern.permute.xlu0 0
        %4403 = vperm.xlu0 %4402, %v419
        %v4404 = vpop.permute.xlu0 %4403
        %4407 = vset.pattern.permute.xlu0 0
        %4408 = vperm.xlu0 %4407, %v420
        %v4409 = vpop.permute.xlu0 %4408
        %4412 = vset.pattern.permute.xlu0 0
        %4413 = vperm.xlu0 %4412, %v421
        %v4414 = vpop.permute.xlu0 %4413
        %4417 = vset.pattern.permute.xlu0 0
        %4418 = vperm.xlu0 %4417, %v422
        %v4419 = vpop.permute.xlu0 %4418
        %4422 = vset.pattern.permute.xlu0 0
        %4423 = vperm.xlu0 %4422, %v423
        %v4424 = vpop.permute.xlu0 %4423
        %4427 = vset.pattern.permute.xlu0 0
        %4428 = vperm.xlu0 %4427, %v424
        %v4429 = vpop.permute.xlu0 %4428
        %4432 = vset.pattern.permute.xlu0 0
        %4433 = vperm.xlu0 %4432, %v425
        %v4434 = vpop.permute.xlu0 %4433
        %4437 = vset.pattern.permute.xlu0 0
        %4438 = vperm.xlu0 %4437, %v426
        %v4439 = vpop.permute.xlu0 %4438
        %4442 = vset.pattern.permute.xlu0 0
        %4443 = vperm.xlu0 %4442, %v427
        %v4444 = vpop.permute.xlu0 %4443
        %4447 = vset.pattern.permute.xlu0 0
        %4448 = vperm.xlu0 %4447, %v428
        %v4449 = vpop.permute.xlu0 %4448
        %4452 = vset.pattern.permute.xlu0 0
        %4453 = vperm.xlu0 %4452, %v429
        %v4454 = vpop.permute.xlu0 %4453
        %4457 = vset.pattern.permute.xlu0 0
        %4458 = vperm.xlu0 %4457, %v430
        %v4459 = vpop.permute.xlu0 %4458
        %v4461 = vmul.f32 %v4245, %v4284
        %v4462 = vmul.f32 %v4246, %v4289
        %v4463 = vmul.f32 %v4247, %v4294
        %v4464 = vmul.f32 %v4248, %v4299
        %v4465 = vmul.f32 %v4249, %v4304
        %v4466 = vmul.f32 %v4250, %v4309
        %v4467 = vmul.f32 %v4251, %v4314
        %v4468 = vmul.f32 %v4252, %v4319
        %v4469 = vmul.f32 %v4253, %v4324
        %v4470 = vmul.f32 %v4254, %v4329
        %v4471 = vmul.f32 %v4255, %v4334
        %v4472 = vmul.f32 %v4256, %v4339
        %v4473 = vmul.f32 %v4257, %v4344
        %v4474 = vmul.f32 %v4258, %v4349
        %v4475 = vmul.f32 %v4259, %v4354
        %v4476 = vmul.f32 %v4260, %v4359
        %v4477 = vmul.f32 %v4261, %v4364
        %v4478 = vmul.f32 %v4262, %v4369
        %v4479 = vmul.f32 %v4263, %v4374
        %v4480 = vmul.f32 %v4264, %v4379
        %v4481 = vmul.f32 %v4265, %v4384
        %v4482 = vmul.f32 %v4266, %v4389
        %v4483 = vmul.f32 %v4267, %v4394
        %v4484 = vmul.f32 %v4268, %v4399
        %v4485 = vmul.f32 %v4269, %v4404
        %v4486 = vmul.f32 %v4270, %v4409
        %v4487 = vmul.f32 %v4271, %v4414
        %v4488 = vmul.f32 %v4272, %v4419
        %v4489 = vmul.f32 %v4273, %v4424
        %v4490 = vmul.f32 %v4274, %v4429
        %v4491 = vmul.f32 %v4275, %v4434
        %v4492 = vmul.f32 %v4276, %v4439
        %v4493 = vmul.f32 %v4277, %v4444
        %v4494 = vmul.f32 %v4278, %v4449
        %v4495 = vmul.f32 %v4279, %v4454
        %v4496 = vmul.f32 %v4280, %v4459
        %vm4497 = vcmask 261120
        %v4499 = vsel %vm4497, 1.0, 0
        %4501 = vmatprep.subr.mxu0 0.0
        %4502 = vmatpush1.msra.mxu0 %v4461
        %4503 = vmatprep.subr.mxu0 0.0
        %4504 = vmatpush1.msra.mxu0 %v4462
        %4505 = vmatprep.subr.mxu0 0.0
        %4506 = vmatpush1.msra.mxu0 %v4463
        %4507 = vmatprep.subr.mxu0 0.0
        %4508 = vmatpush1.msra.mxu0 %v4464
        %4509 = vmatprep.subr.mxu0 0.0
        %4510 = vmatpush1.msra.mxu0 %v4465
        %4511 = vmatprep.subr.mxu0 0.0
        %4512 = vmatpush1.msra.mxu0 %v4466
        %4513 = vmatprep.subr.mxu0 0.0
        %4514 = vmatpush1.msra.mxu0 %v4467
        %4515 = vmatprep.subr.mxu0 0.0
        %4516 = vmatpush1.msra.mxu0 %v4468
        %4517 = vmatprep.subr.mxu0 0.0
        %4518 = vmatpush1.msra.mxu0 %v4469
        %4519 = vmatprep.subr.mxu0 0.0
        %4520 = vmatpush1.msra.mxu0 %v4470
        %4521 = vmatprep.subr.mxu0 0.0
        %4522 = vmatpush1.msra.mxu0 %v4471
        %4523 = vmatprep.subr.mxu0 0.0
        %4524 = vmatpush1.msra.mxu0 %v4472
        %4525 = vmatprep.subr.mxu0 0.0
        %4526 = vmatpush1.msra.mxu0 %v4473
        %4527 = vmatprep.subr.mxu0 0.0
        %4528 = vmatpush1.msra.mxu0 %v4474
        %4529 = vmatprep.subr.mxu0 0.0
        %4530 = vmatpush1.msra.mxu0 %v4475
        %4531 = vmatprep.subr.mxu0 0.0
        %4532 = vmatpush1.msra.mxu0 %v4476
        %4533 = vmatprep.subr.mxu0 0.0
        %4534 = vmatpush1.msra.mxu0 %v4477
        %4535 = vmatprep.subr.mxu0 0.0
        %4536 = vmatpush1.msra.mxu0 %v4478
        %4537 = vmatprep.subr.mxu0 0.0
        %4538 = vmatpush1.msra.mxu0 %v4479
        %4539 = vmatprep.subr.mxu0 0.0
        %4540 = vmatpush1.msra.mxu0 %v4480
        %4541 = vmatprep.subr.mxu0 0.0
        %4542 = vmatpush1.msra.mxu0 %v4481
        %4543 = vmatprep.subr.mxu0 0.0
        %4544 = vmatpush1.msra.mxu0 %v4482
        %4545 = vmatprep.subr.mxu0 0.0
        %4546 = vmatpush1.msra.mxu0 %v4483
        %4547 = vmatprep.subr.mxu0 0.0
        %4548 = vmatpush1.msra.mxu0 %v4484
        %4549 = vmatprep.subr.mxu0 0.0
        %4550 = vmatpush1.msra.mxu0 %v4485
        %4551 = vmatprep.subr.mxu0 0.0
        %4552 = vmatpush1.msra.mxu0 %v4486
        %4553 = vmatprep.subr.mxu0 0.0
        %4554 = vmatpush1.msra.mxu0 %v4487
        %4555 = vmatprep.subr.mxu0 0.0
        %4556 = vmatpush1.msra.mxu0 %v4488
        %4557 = vmatprep.subr.mxu0 0.0
        %4558 = vmatpush1.msra.mxu0 %v4489
        %4559 = vmatprep.subr.mxu0 0.0
        %4560 = vmatpush1.msra.mxu0 %v4490
        %4561 = vmatprep.subr.mxu0 0.0
        %4562 = vmatpush1.msra.mxu0 %v4491
        %4563 = vmatprep.subr.mxu0 0.0
        %4564 = vmatpush1.msra.mxu0 %v4492
        %4565 = vmatprep.mubr.f32.mxu0 1.0
        %4566 = vmatmul.mubr.f32.gmra.mrb[0].mxu0 1.0
        %v4567 = vpop.f32.mrb[0].mxu0
        %v4568 = vadd.f32 0.0, %v4567
        %v4569 = vpop.f32.mrb[0].mxu0
        %4570 = vdwg.mxu0
        %4571 = vmatprep.subr.mxu0 0.0
        %4572 = vmatpush1.msra.mxu0 %v4493
        %4573 = vmatprep.subr.mxu0 0.0
        %4574 = vmatpush1.msra.mxu0 %v4494
        %4575 = vmatprep.subr.mxu0 0.0
        %4576 = vmatpush1.msra.mxu0 %v4495
        %4577 = vmatprep.subr.mxu0 0.0
        %4578 = vmatpush1.msra.mxu0 %v4496
        %4579 = vmatprep.subr.mxu0 0.0
        %4580 = vmatpush1.msra.mxu0 0.0
        %4581 = vmatprep.subr.mxu0 0.0
        %4582 = vmatpush1.msra.mxu0 0.0
        %4583 = vmatprep.subr.mxu0 0.0
        %4584 = vmatpush1.msra.mxu0 0.0
        %4585 = vmatprep.subr.mxu0 0.0
        %4586 = vmatpush1.msra.mxu0 0.0
        %4587 = vmatprep.subr.mxu0 0.0
        %4588 = vmatpush1.msra.mxu0 0.0
        %4589 = vmatprep.subr.mxu0 0.0
        %4590 = vmatpush1.msra.mxu0 0.0
        %4591 = vmatprep.subr.mxu0 0.0
        %4592 = vmatpush1.msra.mxu0 0.0
        %4593 = vmatprep.subr.mxu0 0.0
        %4594 = vmatpush1.msra.mxu0 0.0
        %4595 = vmatprep.subr.mxu0 0.0
        %4596 = vmatpush1.msra.mxu0 0.0
        %4597 = vmatprep.subr.mxu0 0.0
        %4598 = vmatpush1.msra.mxu0 0.0
        %4599 = vmatprep.subr.mxu0 0.0
        %4600 = vmatpush1.msra.mxu0 0.0
        %4601 = vmatprep.subr.mxu0 0.0
        %4602 = vmatpush1.msra.mxu0 0.0
        %4603 = vmatprep.subr.mxu0 0.0
        %4604 = vmatpush1.msra.mxu0 0.0
        %4605 = vmatprep.subr.mxu0 0.0
        %4606 = vmatpush1.msra.mxu0 0.0
        %4607 = vmatprep.subr.mxu0 0.0
        %4608 = vmatpush1.msra.mxu0 0.0
        %4609 = vmatprep.subr.mxu0 0.0
        %4610 = vmatpush1.msra.mxu0 0.0
        %4611 = vmatprep.subr.mxu0 0.0
        %4612 = vmatpush1.msra.mxu0 0.0
        %4613 = vmatprep.subr.mxu0 0.0
        %4614 = vmatpush1.msra.mxu0 0.0
        %4615 = vmatprep.subr.mxu0 0.0
        %4616 = vmatpush1.msra.mxu0 0.0
        %4617 = vmatprep.subr.mxu0 0.0
        %4618 = vmatpush1.msra.mxu0 0.0
        %4619 = vmatprep.subr.mxu0 0.0
        %4620 = vmatpush1.msra.mxu0 0.0
        %4621 = vmatprep.subr.mxu0 0.0
        %4622 = vmatpush1.msra.mxu0 0.0
        %4623 = vmatprep.subr.mxu0 0.0
        %4624 = vmatpush1.msra.mxu0 0.0
        %4625 = vmatprep.subr.mxu0 0.0
        %4626 = vmatpush1.msra.mxu0 0.0
        %4627 = vmatprep.subr.mxu0 0.0
        %4628 = vmatpush1.msra.mxu0 0.0
        %4629 = vmatprep.subr.mxu0 0.0
        %4630 = vmatpush1.msra.mxu0 0.0
        %4631 = vmatprep.subr.mxu0 0.0
        %4632 = vmatpush1.msra.mxu0 0.0
        %4633 = vmatprep.subr.mxu0 0.0
        %4634 = vmatpush1.msra.mxu0 0.0
        %4635 = vmatprep.mubr.f32.mxu0 0.0
        %4636 = vmatmul.mubr.f32.gmra.mrb[0].mxu0 %v4499
        %v4637 = vpop.f32.mrb[0].mxu0
        %v4638 = vadd.f32 %v4568, %v4637
        %v4639 = vpop.f32.mrb[0].mxu0
        %4640 = vdwg.mxu0
        %v4641 = vmul.f32 %v4638, 0.00390625
        %4642 = vst.msk [vmem:[#allocation2] sm:$0xff] %vm506, 0.0
        %4643 = vst.msk [vmem:[#allocation2 + $0x8] sm:$0xff] %vm506, 0.0
        %4644 = vst.msk [vmem:[#allocation2 + $0x10] sm:$0xff] %vm506, 0.0
        %4645 = vst.msk [vmem:[#allocation2 + $0x18] sm:$0xff] %vm506, 0.0
        %4646 = vst.msk [vmem:[#allocation2 + $0x20] sm:$0xff] %vm506, 0.0
        %4647 = vst.msk [vmem:[#allocation2 + $0x28] sm:$0xff] %vm506, 0.0
        %4648 = vst.msk [vmem:[#allocation2 + $0x30] sm:$0xff] %vm506, 0.0
        %4649 = vst.msk [vmem:[#allocation2 + $0x38] sm:$0xff] %vm506, 0.0
        %4650 = vst.msk [vmem:[#allocation2 + $0x40] sm:$0xff] %vm506, 0.0
        %4651 = vst.msk [vmem:[#allocation2 + $0x48] sm:$0xff] %vm506, 0.0
        %4652 = vst.msk [vmem:[#allocation2 + $0x50] sm:$0xff] %vm506, 0.0
        %4653 = vst.msk [vmem:[#allocation2 + $0x58] sm:$0xff] %vm506, 0.0
        %4654 = vst.msk [vmem:[#allocation2 + $0x60] sm:$0xff] %vm506, 0.0
        %4655 = vst.msk [vmem:[#allocation2 + $0x68] sm:$0xff] %vm506, 0.0
        %4656 = vst.msk [vmem:[#allocation2 + $0x70] sm:$0xff] %vm506, 0.0
        %4657 = vst.msk [vmem:[#allocation2 + $0x78] sm:$0xff] %vm506, 0.0
        %4658 = vst.msk [vmem:[#allocation2 + $0x80] sm:$0xff] %vm506, 0.0
        %4659 = vst.msk [vmem:[#allocation2 + $0x88] sm:$0xff] %vm506, 0.0
        %4660 = vst.msk [vmem:[#allocation2 + $0x90] sm:$0xff] %vm506, 0.0
        %4661 = vst.msk [vmem:[#allocation2 + $0x98] sm:$0xff] %vm506, 0.0
        %4662 = vst.msk [vmem:[#allocation2 + $0xa0] sm:$0xff] %vm506, 0.0
        %4663 = vst.msk [vmem:[#allocation2 + $0xa8] sm:$0xff] %vm506, 0.0
        %4664 = vst.msk [vmem:[#allocation2 + $0xb0] sm:$0xff] %vm506, 0.0
        %4665 = vst.msk [vmem:[#allocation2 + $0xb8] sm:$0xff] %vm506, 0.0
        %4666 = vst.msk [vmem:[#allocation2 + $0xc0] sm:$0xff] %vm506, 0.0
        %4667 = vst.msk [vmem:[#allocation2 + $0xc8] sm:$0xff] %vm506, 0.0
        %4668 = vst.msk [vmem:[#allocation2 + $0xd0] sm:$0xff] %vm506, 0.0
        %4669 = vst.msk [vmem:[#allocation2 + $0xd8] sm:$0xff] %vm506, 0.0
        %4670 = vst.msk [vmem:[#allocation2 + $0xe0] sm:$0xff] %vm506, 0.0
        %4671 = vst.msk [vmem:[#allocation2 + $0xe8] sm:$0xff] %vm506, 0.0
        %4672 = vst.msk [vmem:[#allocation2 + $0xf0] sm:$0xff] %vm506, 0.0
        %4673 = vst.msk [vmem:[#allocation2 + $0xf8] sm:$0xff] %vm506, 0.0
        %4674 = vst.msk [vmem:[#allocation2 + $0x100] sm:$0xff] %vm506, 0.0
        %4675 = vst.msk [vmem:[#allocation2 + $0x108] sm:$0xff] %vm506, 0.0
        %4676 = vst.msk [vmem:[#allocation2 + $0x110] sm:$0xff] %vm506, 0.0
        %4677 = vst.msk [vmem:[#allocation2 + $0x118] sm:$0xff] %vm506, 0.0
        %4678 = vst.msk [vmem:[#allocation2 + $0x120] sm:$0xff] %vm506, 0.0
        %4679 = vst.msk [vmem:[#allocation2 + $0x128] sm:$0xff] %vm506, 0.0
        %4680 = vst.msk [vmem:[#allocation2 + $0x130] sm:$0xff] %vm506, 0.0
        %4681 = vst.msk [vmem:[#allocation2 + $0x138] sm:$0xff] %vm506, 0.0
        %4682 = vst.msk [vmem:[#allocation2 + $0x140] sm:$0xff] %vm506, 0.0
        %4683 = vst.msk [vmem:[#allocation2 + $0x148] sm:$0xff] %vm506, 0.0
        %4684 = vst.msk [vmem:[#allocation2 + $0x18] sm:$0xff] %vm506, %v4461
        %4685 = vst.msk [vmem:[#allocation2 + $0x20] sm:$0xff] %vm506, %v4462
        %4686 = vst.msk [vmem:[#allocation2 + $0x28] sm:$0xff] %vm506, %v4463
        %4687 = vst.msk [vmem:[#allocation2 + $0x30] sm:$0xff] %vm506, %v4464
        %4688 = vst.msk [vmem:[#allocation2 + $0x38] sm:$0xff] %vm506, %v4465
        %4689 = vst.msk [vmem:[#allocation2 + $0x40] sm:$0xff] %vm506, %v4466
        %4690 = vst.msk [vmem:[#allocation2 + $0x48] sm:$0xff] %vm506, %v4467
        %4691 = vst.msk [vmem:[#allocation2 + $0x50] sm:$0xff] %vm506, %v4468
        %4692 = vst.msk [vmem:[#allocation2 + $0x58] sm:$0xff] %vm506, %v4469
        %4693 = vst.msk [vmem:[#allocation2 + $0x60] sm:$0xff] %vm506, %v4470
        %4694 = vst.msk [vmem:[#allocation2 + $0x68] sm:$0xff] %vm506, %v4471
        %4695 = vst.msk [vmem:[#allocation2 + $0x70] sm:$0xff] %vm506, %v4472
        %4696 = vst.msk [vmem:[#allocation2 + $0x78] sm:$0xff] %vm506, %v4473
        %4697 = vst.msk [vmem:[#allocation2 + $0x80] sm:$0xff] %vm506, %v4474
        %4698 = vst.msk [vmem:[#allocation2 + $0x88] sm:$0xff] %vm506, %v4475
        %4699 = vst.msk [vmem:[#allocation2 + $0x90] sm:$0xff] %vm506, %v4476
        %4700 = vst.msk [vmem:[#allocation2 + $0x98] sm:$0xff] %vm506, %v4477
        %4701 = vst.msk [vmem:[#allocation2 + $0xa0] sm:$0xff] %vm506, %v4478
        %4702 = vst.msk [vmem:[#allocation2 + $0xa8] sm:$0xff] %vm506, %v4479
        %4703 = vst.msk [vmem:[#allocation2 + $0xb0] sm:$0xff] %vm506, %v4480
        %4704 = vst.msk [vmem:[#allocation2 + $0xb8] sm:$0xff] %vm506, %v4481
        %4705 = vst.msk [vmem:[#allocation2 + $0xc0] sm:$0xff] %vm506, %v4482
        %4706 = vst.msk [vmem:[#allocation2 + $0xc8] sm:$0xff] %vm506, %v4483
        %4707 = vst.msk [vmem:[#allocation2 + $0xd0] sm:$0xff] %vm506, %v4484
        %4708 = vst.msk [vmem:[#allocation2 + $0xd8] sm:$0xff] %vm506, %v4485
        %4709 = vst.msk [vmem:[#allocation2 + $0xe0] sm:$0xff] %vm506, %v4486
        %4710 = vst.msk [vmem:[#allocation2 + $0xe8] sm:$0xff] %vm506, %v4487
        %4711 = vst.msk [vmem:[#allocation2 + $0xf0] sm:$0xff] %vm506, %v4488
        %4712 = vst.msk [vmem:[#allocation2 + $0xf8] sm:$0xff] %vm506, %v4489
        %4713 = vst.msk [vmem:[#allocation2 + $0x100] sm:$0xff] %vm506, %v4490
        %4714 = vst.msk [vmem:[#allocation2 + $0x108] sm:$0xff] %vm506, %v4491
        %4715 = vst.msk [vmem:[#allocation2 + $0x110] sm:$0xff] %vm506, %v4492
        %4716 = vst.msk [vmem:[#allocation2 + $0x118] sm:$0xff] %vm506, %v4493
        %4717 = vst.msk [vmem:[#allocation2 + $0x120] sm:$0xff] %vm506, %v4494
        %4718 = vst.msk [vmem:[#allocation2 + $0x128] sm:$0xff] %vm506, %v4495
        %4719 = vst.msk [vmem:[#allocation2 + $0x130] sm:$0xff] %vm506, %v4496
        %v4720 = vld [vmem:[#allocation2 + $0x5] sm:$0xff]
        %v4721 = vld [vmem:[#allocation2 + $0xd] sm:$0xff]
        %v4722 = vld [vmem:[#allocation2 + $0x15] sm:$0xff]
        %v4723 = vld [vmem:[#allocation2 + $0x1d] sm:$0xff]
        %v4724 = vld [vmem:[#allocation2 + $0x25] sm:$0xff]
        %v4725 = vld [vmem:[#allocation2 + $0x2d] sm:$0xff]
        %v4726 = vld [vmem:[#allocation2 + $0x35] sm:$0xff]
        %v4727 = vld [vmem:[#allocation2 + $0x3d] sm:$0xff]
        %v4728 = vld [vmem:[#allocation2 + $0x45] sm:$0xff]
        %v4729 = vld [vmem:[#allocation2 + $0x4d] sm:$0xff]
        %v4730 = vld [vmem:[#allocation2 + $0x55] sm:$0xff]
        %v4731 = vld [vmem:[#allocation2 + $0x5d] sm:$0xff]
        %v4732 = vld [vmem:[#allocation2 + $0x65] sm:$0xff]
        %v4733 = vld [vmem:[#allocation2 + $0x6d] sm:$0xff]
        %v4734 = vld [vmem:[#allocation2 + $0x75] sm:$0xff]
        %v4735 = vld [vmem:[#allocation2 + $0x7d] sm:$0xff]
        %v4736 = vld [vmem:[#allocation2 + $0x85] sm:$0xff]
        %v4737 = vld [vmem:[#allocation2 + $0x8d] sm:$0xff]
        %v4738 = vld [vmem:[#allocation2 + $0x95] sm:$0xff]
        %v4739 = vld [vmem:[#allocation2 + $0x9d] sm:$0xff]
        %v4740 = vld [vmem:[#allocation2 + $0xa5] sm:$0xff]
        %v4741 = vld [vmem:[#allocation2 + $0xad] sm:$0xff]
        %v4742 = vld [vmem:[#allocation2 + $0xb5] sm:$0xff]
        %v4743 = vld [vmem:[#allocation2 + $0xbd] sm:$0xff]
        %v4744 = vld [vmem:[#allocation2 + $0xc5] sm:$0xff]
        %v4745 = vld [vmem:[#allocation2 + $0xcd] sm:$0xff]
        %v4746 = vld [vmem:[#allocation2 + $0xd5] sm:$0xff]
        %v4747 = vld [vmem:[#allocation2 + $0xdd] sm:$0xff]
        %v4748 = vld [vmem:[#allocation2 + $0xe5] sm:$0xff]
        %v4749 = vld [vmem:[#allocation2 + $0xed] sm:$0xff]
        %v4750 = vld [vmem:[#allocation2 + $0xf5] sm:$0xff]
        %v4751 = vld [vmem:[#allocation2 + $0xfd] sm:$0xff]
        %v4752 = vld [vmem:[#allocation2 + $0x105] sm:$0xff]
        %v4753 = vld [vmem:[#allocation2 + $0x10d] sm:$0xff]
        %v4754 = vld [vmem:[#allocation2 + $0x115] sm:$0xff]
        %v4755 = vld [vmem:[#allocation2 + $0x11d] sm:$0xff]
        %v4756 = vld [vmem:[%s4] sm:$0xff]
        %v4757 = vld [vmem:[#allocation2 + $0x6] sm:$0xff]
        %v4758 = vld [vmem:[#allocation2 + $0xe] sm:$0xff]
        %v4759 = vld [vmem:[#allocation2 + $0x16] sm:$0xff]
        %v4760 = vld [vmem:[#allocation2 + $0x1e] sm:$0xff]
        %v4761 = vld [vmem:[#allocation2 + $0x26] sm:$0xff]
        %v4762 = vld [vmem:[#allocation2 + $0x2e] sm:$0xff]
        %v4763 = vld [vmem:[#allocation2 + $0x36] sm:$0xff]
        %v4764 = vld [vmem:[#allocation2 + $0x3e] sm:$0xff]
        %v4765 = vld [vmem:[#allocation2 + $0x46] sm:$0xff]
        %v4766 = vld [vmem:[#allocation2 + $0x4e] sm:$0xff]
        %v4767 = vld [vmem:[#allocation2 + $0x56] sm:$0xff]
        %v4768 = vld [vmem:[#allocation2 + $0x5e] sm:$0xff]
        %v4769 = vld [vmem:[#allocation2 + $0x66] sm:$0xff]
        %v4770 = vld [vmem:[#allocation2 + $0x6e] sm:$0xff]
        %v4771 = vld [vmem:[#allocation2 + $0x76] sm:$0xff]
        %v4772 = vld [vmem:[#allocation2 + $0x7e] sm:$0xff]
        %v4773 = vld [vmem:[#allocation2 + $0x86] sm:$0xff]
        %v4774 = vld [vmem:[#allocation2 + $0x8e] sm:$0xff]
        %v4775 = vld [vmem:[#allocation2 + $0x96] sm:$0xff]
        %v4776 = vld [vmem:[#allocation2 + $0x9e] sm:$0xff]
        %v4777 = vld [vmem:[#allocation2 + $0xa6] sm:$0xff]
        %v4778 = vld [vmem:[#allocation2 + $0xae] sm:$0xff]
        %v4779 = vld [vmem:[#allocation2 + $0xb6] sm:$0xff]
        %v4780 = vld [vmem:[#allocation2 + $0xbe] sm:$0xff]
        %v4781 = vld [vmem:[#allocation2 + $0xc6] sm:$0xff]
        %v4782 = vld [vmem:[#allocation2 + $0xce] sm:$0xff]
        %v4783 = vld [vmem:[#allocation2 + $0xd6] sm:$0xff]
        %v4784 = vld [vmem:[#allocation2 + $0xde] sm:$0xff]
        %v4785 = vld [vmem:[#allocation2 + $0xe6] sm:$0xff]
        %v4786 = vld [vmem:[#allocation2 + $0xee] sm:$0xff]
        %v4787 = vld [vmem:[#allocation2 + $0xf6] sm:$0xff]
        %v4788 = vld [vmem:[#allocation2 + $0xfe] sm:$0xff]
        %v4789 = vld [vmem:[#allocation2 + $0x106] sm:$0xff]
        %v4790 = vld [vmem:[#allocation2 + $0x10e] sm:$0xff]
        %v4791 = vld [vmem:[#allocation2 + $0x116] sm:$0xff]
        %v4792 = vld [vmem:[#allocation2 + $0x11e] sm:$0xff]
        %s4793 = scalar_lea.vmem %s4, 8
        %v4794 = vld [vmem:[%s4793] sm:$0xff]
        %v4796 = vsel %vm506, %v4757, 0
        %v4799 = vsel %vm506, %v4758, 0
        %v4802 = vsel %vm506, %v4759, 0
        %v4805 = vsel %vm506, %v4760, 0
        %v4808 = vsel %vm506, %v4761, 0
        %v4811 = vsel %vm506, %v4762, 0
        %v4814 = vsel %vm506, %v4763, 0
        %v4817 = vsel %vm506, %v4764, 0
        %v4820 = vsel %vm506, %v4765, 0
        %v4823 = vsel %vm506, %v4766, 0
        %v4826 = vsel %vm506, %v4767, 0
        %v4829 = vsel %vm506, %v4768, 0
        %v4832 = vsel %vm506, %v4769, 0
        %v4835 = vsel %vm506, %v4770, 0
        %v4838 = vsel %vm506, %v4771, 0
        %v4841 = vsel %vm506, %v4772, 0
        %v4844 = vsel %vm506, %v4773, 0
        %v4847 = vsel %vm506, %v4774, 0
        %v4850 = vsel %vm506, %v4775, 0
        %v4853 = vsel %vm506, %v4776, 0
        %v4856 = vsel %vm506, %v4777, 0
        %v4859 = vsel %vm506, %v4778, 0
        %v4862 = vsel %vm506, %v4779, 0
        %v4865 = vsel %vm506, %v4780, 0
        %v4868 = vsel %vm506, %v4781, 0
        %v4871 = vsel %vm506, %v4782, 0
        %v4874 = vsel %vm506, %v4783, 0
        %v4877 = vsel %vm506, %v4784, 0
        %v4880 = vsel %vm506, %v4785, 0
        %v4883 = vsel %vm506, %v4786, 0
        %v4886 = vsel %vm506, %v4787, 0
        %v4889 = vsel %vm506, %v4788, 0
        %v4892 = vsel %vm506, %v4789, 0
        %v4895 = vsel %vm506, %v4790, 0
        %v4898 = vsel %vm506, %v4791, 0
        %v4901 = vsel %vm506, %v4792, 0
        %4903 = vmatprep.subr.mxu0 0.0
        %4904 = vmatpush1.msra.mxu0 %v4794
        %4905 = vmatprep.subr.mxu0 0.0
        %4906 = vmatpush1.msra.mxu0 0.0
        %4907 = vmatprep.subr.mxu0 0.0
        %4908 = vmatpush1.msra.mxu0 0.0
        %4909 = vmatprep.subr.mxu0 0.0
        %4910 = vmatpush1.msra.mxu0 0.0
        %4911 = vmatprep.subr.mxu0 0.0
        %4912 = vmatpush1.msra.mxu0 0.0
        %4913 = vmatprep.subr.mxu0 0.0
        %4914 = vmatpush1.msra.mxu0 0.0
        %4915 = vmatprep.subr.mxu0 0.0
        %4916 = vmatpush1.msra.mxu0 0.0
        %4917 = vmatprep.subr.mxu0 0.0
        %4918 = vmatpush1.msra.mxu0 0.0
        %4919 = vmatprep.subr.mxu0 0.0
        %4920 = vmatpush1.msra.mxu0 0.0
        %4921 = vmatprep.subr.mxu0 0.0
        %4922 = vmatpush1.msra.mxu0 0.0
        %4923 = vmatprep.subr.mxu0 0.0
        %4924 = vmatpush1.msra.mxu0 0.0
        %4925 = vmatprep.subr.mxu0 0.0
        %4926 = vmatpush1.msra.mxu0 0.0
        %4927 = vmatprep.subr.mxu0 0.0
        %4928 = vmatpush1.msra.mxu0 0.0
        %4929 = vmatprep.subr.mxu0 0.0
        %4930 = vmatpush1.msra.mxu0 0.0
        %4931 = vmatprep.subr.mxu0 0.0
        %4932 = vmatpush1.msra.mxu0 0.0
        %4933 = vmatprep.subr.mxu0 0.0
        %4934 = vmatpush1.msra.mxu0 0.0
        %4935 = vmatprep.subr.mxu0 0.0
        %4936 = vmatpush1.msra.mxu0 0.0
        %4937 = vmatprep.subr.mxu0 0.0
        %4938 = vmatpush1.msra.mxu0 0.0
        %4939 = vmatprep.subr.mxu0 0.0
        %4940 = vmatpush1.msra.mxu0 0.0
        %4941 = vmatprep.subr.mxu0 0.0
        %4942 = vmatpush1.msra.mxu0 0.0
        %4943 = vmatprep.subr.mxu0 0.0
        %4944 = vmatpush1.msra.mxu0 0.0
        %4945 = vmatprep.subr.mxu0 0.0
        %4946 = vmatpush1.msra.mxu0 0.0
        %4947 = vmatprep.subr.mxu0 0.0
        %4948 = vmatpush1.msra.mxu0 0.0
        %4949 = vmatprep.subr.mxu0 0.0
        %4950 = vmatpush1.msra.mxu0 0.0
        %4951 = vmatprep.subr.mxu0 0.0
        %4952 = vmatpush1.msra.mxu0 0.0
        %4953 = vmatprep.subr.mxu0 0.0
        %4954 = vmatpush1.msra.mxu0 0.0
        %4955 = vmatprep.subr.mxu0 0.0
        %4956 = vmatpush1.msra.mxu0 0.0
        %4957 = vmatprep.subr.mxu0 0.0
        %4958 = vmatpush1.msra.mxu0 0.0
        %4959 = vmatprep.subr.mxu0 0.0
        %4960 = vmatpush1.msra.mxu0 0.0
        %4961 = vmatprep.subr.mxu0 0.0
        %4962 = vmatpush1.msra.mxu0 0.0
        %4963 = vmatprep.subr.mxu0 0.0
        %4964 = vmatpush1.msra.mxu0 0.0
        %4965 = vmatprep.subr.mxu0 0.0
        %4966 = vmatpush1.msra.mxu0 0.0
        %4967 = vmatprep.mubr.f32.mxu0 0.0
        %4968 = vmatmul.mubr.f32.gmra.mrb[0].mxu0 %v4796
        %v4969 = vpop.f32.mrb[0].mxu0
        %v4970 = vadd.f32 0.0, %v4969
        %v4971 = vpop.f32.mrb[0].mxu0
        %4972 = vmatprep.mubr.f32.mxu0 0.0
        %4973 = vmatmul.mubr.f32.gmra.mrb[0].mxu0 %v4799
        %v4974 = vpop.f32.mrb[0].mxu0
        %v4975 = vadd.f32 0.0, %v4974
        %v4976 = vpop.f32.mrb[0].mxu0
        %4977 = vmatprep.mubr.f32.mxu0 0.0
        %4978 = vmatmul.mubr.f32.gmra.mrb[0].mxu0 %v4802
        %v4979 = vpop.f32.mrb[0].mxu0
        %v4980 = vadd.f32 0.0, %v4979
        %v4981 = vpop.f32.mrb[0].mxu0
        %4982 = vmatprep.mubr.f32.mxu0 0.0
        %4983 = vmatmul.mubr.f32.gmra.mrb[0].mxu0 %v4805
        %v4984 = vpop.f32.mrb[0].mxu0
        %v4985 = vadd.f32 0.0, %v4984
        %v4986 = vpop.f32.mrb[0].mxu0
        %4987 = vmatprep.mubr.f32.mxu0 0.0
        %4988 = vmatmul.mubr.f32.gmra.mrb[0].mxu0 %v4808
        %v4989 = vpop.f32.mrb[0].mxu0
        %v4990 = vadd.f32 0.0, %v4989
        %v4991 = vpop.f32.mrb[0].mxu0
        %4992 = vmatprep.mubr.f32.mxu0 0.0
        %4993 = vmatmul.mubr.f32.gmra.mrb[0].mxu0 %v4811
        %v4994 = vpop.f32.mrb[0].mxu0
        %v4995 = vadd.f32 0.0, %v4994
        %v4996 = vpop.f32.mrb[0].mxu0
        %4997 = vmatprep.mubr.f32.mxu0 0.0
        %4998 = vmatmul.mubr.f32.gmra.mrb[0].mxu0 %v4814
        %v4999 = vpop.f32.mrb[0].mxu0
        %v5000 = vadd.f32 0.0, %v4999
        %v5001 = vpop.f32.mrb[0].mxu0
        %5002 = vmatprep.mubr.f32.mxu0 0.0
        %5003 = vmatmul.mubr.f32.gmra.mrb[0].mxu0 %v4817
        %v5004 = vpop.f32.mrb[0].mxu0
        %v5005 = vadd.f32 0.0, %v5004
        %v5006 = vpop.f32.mrb[0].mxu0
        %5007 = vmatprep.mubr.f32.mxu0 0.0
        %5008 = vmatmul.mubr.f32.gmra.mrb[0].mxu0 %v4820
        %v5009 = vpop.f32.mrb[0].mxu0
        %v5010 = vadd.f32 0.0, %v5009
        %v5011 = vpop.f32.mrb[0].mxu0
        %5012 = vmatprep.mubr.f32.mxu0 0.0
        %5013 = vmatmul.mubr.f32.gmra.mrb[0].mxu0 %v4823
        %v5014 = vpop.f32.mrb[0].mxu0
        %v5015 = vadd.f32 0.0, %v5014
        %v5016 = vpop.f32.mrb[0].mxu0
        %5017 = vmatprep.mubr.f32.mxu0 0.0
        %5018 = vmatmul.mubr.f32.gmra.mrb[0].mxu0 %v4826
        %v5019 = vpop.f32.mrb[0].mxu0
        %v5020 = vadd.f32 0.0, %v5019
        %v5021 = vpop.f32.mrb[0].mxu0
        %5022 = vmatprep.mubr.f32.mxu0 0.0
        %5023 = vmatmul.mubr.f32.gmra.mrb[0].mxu0 %v4829
        %v5024 = vpop.f32.mrb[0].mxu0
        %v5025 = vadd.f32 0.0, %v5024
        %v5026 = vpop.f32.mrb[0].mxu0
        %5027 = vmatprep.mubr.f32.mxu0 0.0
        %5028 = vmatmul.mubr.f32.gmra.mrb[0].mxu0 %v4832
        %v5029 = vpop.f32.mrb[0].mxu0
        %v5030 = vadd.f32 0.0, %v5029
        %v5031 = vpop.f32.mrb[0].mxu0
        %5032 = vmatprep.mubr.f32.mxu0 0.0
        %5033 = vmatmul.mubr.f32.gmra.mrb[0].mxu0 %v4835
        %v5034 = vpop.f32.mrb[0].mxu0
        %v5035 = vadd.f32 0.0, %v5034
        %v5036 = vpop.f32.mrb[0].mxu0
        %5037 = vmatprep.mubr.f32.mxu0 0.0
        %5038 = vmatmul.mubr.f32.gmra.mrb[0].mxu0 %v4838
        %v5039 = vpop.f32.mrb[0].mxu0
        %v5040 = vadd.f32 0.0, %v5039
        %v5041 = vpop.f32.mrb[0].mxu0
        %5042 = vmatprep.mubr.f32.mxu0 0.0
        %5043 = vmatmul.mubr.f32.gmra.mrb[0].mxu0 %v4841
        %v5044 = vpop.f32.mrb[0].mxu0
        %v5045 = vadd.f32 0.0, %v5044
        %v5046 = vpop.f32.mrb[0].mxu0
        %5047 = vmatprep.mubr.f32.mxu0 0.0
        %5048 = vmatmul.mubr.f32.gmra.mrb[0].mxu0 %v4844
        %v5049 = vpop.f32.mrb[0].mxu0
        %v5050 = vadd.f32 0.0, %v5049
        %v5051 = vpop.f32.mrb[0].mxu0
        %5052 = vmatprep.mubr.f32.mxu0 0.0
        %5053 = vmatmul.mubr.f32.gmra.mrb[0].mxu0 %v4847
        %v5054 = vpop.f32.mrb[0].mxu0
        %v5055 = vadd.f32 0.0, %v5054
        %v5056 = vpop.f32.mrb[0].mxu0
        %5057 = vmatprep.mubr.f32.mxu0 0.0
        %5058 = vmatmul.mubr.f32.gmra.mrb[0].mxu0 %v4850
        %v5059 = vpop.f32.mrb[0].mxu0
        %v5060 = vadd.f32 0.0, %v5059
        %v5061 = vpop.f32.mrb[0].mxu0
        %5062 = vmatprep.mubr.f32.mxu0 0.0
        %5063 = vmatmul.mubr.f32.gmra.mrb[0].mxu0 %v4853
        %v5064 = vpop.f32.mrb[0].mxu0
        %v5065 = vadd.f32 0.0, %v5064
        %v5066 = vpop.f32.mrb[0].mxu0
        %5067 = vmatprep.mubr.f32.mxu0 0.0
        %5068 = vmatmul.mubr.f32.gmra.mrb[0].mxu0 %v4856
        %v5069 = vpop.f32.mrb[0].mxu0
        %v5070 = vadd.f32 0.0, %v5069
        %v5071 = vpop.f32.mrb[0].mxu0
        %5072 = vmatprep.mubr.f32.mxu0 0.0
        %5073 = vmatmul.mubr.f32.gmra.mrb[0].mxu0 %v4859
        %v5074 = vpop.f32.mrb[0].mxu0
        %v5075 = vadd.f32 0.0, %v5074
        %v5076 = vpop.f32.mrb[0].mxu0
        %5077 = vmatprep.mubr.f32.mxu0 0.0
        %5078 = vmatmul.mubr.f32.gmra.mrb[0].mxu0 %v4862
        %v5079 = vpop.f32.mrb[0].mxu0
        %v5080 = vadd.f32 0.0, %v5079
        %v5081 = vpop.f32.mrb[0].mxu0
        %5082 = vmatprep.mubr.f32.mxu0 0.0
        %5083 = vmatmul.mubr.f32.gmra.mrb[0].mxu0 %v4865
        %v5084 = vpop.f32.mrb[0].mxu0
        %v5085 = vadd.f32 0.0, %v5084
        %v5086 = vpop.f32.mrb[0].mxu0
        %5087 = vmatprep.mubr.f32.mxu0 0.0
        %5088 = vmatmul.mubr.f32.gmra.mrb[0].mxu0 %v4868
        %v5089 = vpop.f32.mrb[0].mxu0
        %v5090 = vadd.f32 0.0, %v5089
        %v5091 = vpop.f32.mrb[0].mxu0
        %5092 = vmatprep.mubr.f32.mxu0 0.0
        %5093 = vmatmul.mubr.f32.gmra.mrb[0].mxu0 %v4871
        %v5094 = vpop.f32.mrb[0].mxu0
        %v5095 = vadd.f32 0.0, %v5094
        %v5096 = vpop.f32.mrb[0].mxu0
        %5097 = vmatprep.mubr.f32.mxu0 0.0
        %5098 = vmatmul.mubr.f32.gmra.mrb[0].mxu0 %v4874
        %v5099 = vpop.f32.mrb[0].mxu0
        %v5100 = vadd.f32 0.0, %v5099
        %v5101 = vpop.f32.mrb[0].mxu0
        %5102 = vmatprep.mubr.f32.mxu0 0.0
        %5103 = vmatmul.mubr.f32.gmra.mrb[0].mxu0 %v4877
        %v5104 = vpop.f32.mrb[0].mxu0
        %v5105 = vadd.f32 0.0, %v5104
        %v5106 = vpop.f32.mrb[0].mxu0
        %5107 = vmatprep.mubr.f32.mxu0 0.0
        %5108 = vmatmul.mubr.f32.gmra.mrb[0].mxu0 %v4880
        %v5109 = vpop.f32.mrb[0].mxu0
        %v5110 = vadd.f32 0.0, %v5109
        %v5111 = vpop.f32.mrb[0].mxu0
        %5112 = vmatprep.mubr.f32.mxu0 0.0
        %5113 = vmatmul.mubr.f32.gmra.mrb[0].mxu0 %v4883
        %v5114 = vpop.f32.mrb[0].mxu0
        %v5115 = vadd.f32 0.0, %v5114
        %v5116 = vpop.f32.mrb[0].mxu0
        %5117 = vmatprep.mubr.f32.mxu0 0.0
        %5118 = vmatmul.mubr.f32.gmra.mrb[0].mxu0 %v4886
        %v5119 = vpop.f32.mrb[0].mxu0
        %v5120 = vadd.f32 0.0, %v5119
        %v5121 = vpop.f32.mrb[0].mxu0
        %5122 = vmatprep.mubr.f32.mxu0 0.0
        %5123 = vmatmul.mubr.f32.gmra.mrb[0].mxu0 %v4889
        %v5124 = vpop.f32.mrb[0].mxu0
        %v5125 = vadd.f32 0.0, %v5124
        %v5126 = vpop.f32.mrb[0].mxu0
        %5127 = vmatprep.mubr.f32.mxu0 0.0
        %5128 = vmatmul.mubr.f32.gmra.mrb[0].mxu0 %v4892
        %v5129 = vpop.f32.mrb[0].mxu0
        %v5130 = vadd.f32 0.0, %v5129
        %v5131 = vpop.f32.mrb[0].mxu0
        %5132 = vmatprep.mubr.f32.mxu0 0.0
        %5133 = vmatmul.mubr.f32.gmra.mrb[0].mxu0 %v4895
        %v5134 = vpop.f32.mrb[0].mxu0
        %v5135 = vadd.f32 0.0, %v5134
        %v5136 = vpop.f32.mrb[0].mxu0
        %5137 = vmatprep.mubr.f32.mxu0 0.0
        %5138 = vmatmul.mubr.f32.gmra.mrb[0].mxu0 %v4898
        %v5139 = vpop.f32.mrb[0].mxu0
        %v5140 = vadd.f32 0.0, %v5139
        %v5141 = vpop.f32.mrb[0].mxu0
        %5142 = vmatprep.mubr.f32.mxu0 0.0
        %5143 = vmatmul.mubr.f32.gmra.mrb[0].mxu0 %v4901
        %v5144 = vpop.f32.mrb[0].mxu0
        %v5145 = vadd.f32 0.0, %v5144
        %v5146 = vpop.f32.mrb[0].mxu0
        %5147 = vdwg.mxu0
        %v5149 = vsel %vm506, %v4720, 0
        %v5152 = vsel %vm506, %v4721, 0
        %v5155 = vsel %vm506, %v4722, 0
        %v5158 = vsel %vm506, %v4723, 0
        %v5161 = vsel %vm506, %v4724, 0
        %v5164 = vsel %vm506, %v4725, 0
        %v5167 = vsel %vm506, %v4726, 0
        %v5170 = vsel %vm506, %v4727, 0
        %v5173 = vsel %vm506, %v4728, 0
        %v5176 = vsel %vm506, %v4729, 0
        %v5179 = vsel %vm506, %v4730, 0
        %v5182 = vsel %vm506, %v4731, 0
        %v5185 = vsel %vm506, %v4732, 0
        %v5188 = vsel %vm506, %v4733, 0
        %v5191 = vsel %vm506, %v4734, 0
        %v5194 = vsel %vm506, %v4735, 0
        %v5197 = vsel %vm506, %v4736, 0
        %v5200 = vsel %vm506, %v4737, 0
        %v5203 = vsel %vm506, %v4738, 0
        %v5206 = vsel %vm506, %v4739, 0
        %v5209 = vsel %vm506, %v4740, 0
        %v5212 = vsel %vm506, %v4741, 0
        %v5215 = vsel %vm506, %v4742, 0
        %v5218 = vsel %vm506, %v4743, 0
        %v5221 = vsel %vm506, %v4744, 0
        %v5224 = vsel %vm506, %v4745, 0
        %v5227 = vsel %vm506, %v4746, 0
        %v5230 = vsel %vm506, %v4747, 0
        %v5233 = vsel %vm506, %v4748, 0
        %v5236 = vsel %vm506, %v4749, 0
        %v5239 = vsel %vm506, %v4750, 0
        %v5242 = vsel %vm506, %v4751, 0
        %v5245 = vsel %vm506, %v4752, 0
        %v5248 = vsel %vm506, %v4753, 0
        %v5251 = vsel %vm506, %v4754, 0
        %v5254 = vsel %vm506, %v4755, 0
        %5256 = vmatprep.subr.mxu0 0.0
        %5257 = vmatpush1.msra.mxu0 %v4756
        %5258 = vmatprep.subr.mxu0 0.0
        %5259 = vmatpush1.msra.mxu0 0.0
        %5260 = vmatprep.subr.mxu0 0.0
        %5261 = vmatpush1.msra.mxu0 0.0
        %5262 = vmatprep.subr.mxu0 0.0
        %5263 = vmatpush1.msra.mxu0 0.0
        %5264 = vmatprep.subr.mxu0 0.0
        %5265 = vmatpush1.msra.mxu0 0.0
        %5266 = vmatprep.subr.mxu0 0.0
        %5267 = vmatpush1.msra.mxu0 0.0
        %5268 = vmatprep.subr.mxu0 0.0
        %5269 = vmatpush1.msra.mxu0 0.0
        %5270 = vmatprep.subr.mxu0 0.0
        %5271 = vmatpush1.msra.mxu0 0.0
        %5272 = vmatprep.subr.mxu0 0.0
        %5273 = vmatpush1.msra.mxu0 0.0
        %5274 = vmatprep.subr.mxu0 0.0
        %5275 = vmatpush1.msra.mxu0 0.0
        %5276 = vmatprep.subr.mxu0 0.0
        %5277 = vmatpush1.msra.mxu0 0.0
        %5278 = vmatprep.subr.mxu0 0.0
        %5279 = vmatpush1.msra.mxu0 0.0
        %5280 = vmatprep.subr.mxu0 0.0
        %5281 = vmatpush1.msra.mxu0 0.0
        %5282 = vmatprep.subr.mxu0 0.0
        %5283 = vmatpush1.msra.mxu0 0.0
        %5284 = vmatprep.subr.mxu0 0.0
        %5285 = vmatpush1.msra.mxu0 0.0
        %5286 = vmatprep.subr.mxu0 0.0
        %5287 = vmatpush1.msra.mxu0 0.0
        %5288 = vmatprep.subr.mxu0 0.0
        %5289 = vmatpush1.msra.mxu0 0.0
        %5290 = vmatprep.subr.mxu0 0.0
        %5291 = vmatpush1.msra.mxu0 0.0
        %5292 = vmatprep.subr.mxu0 0.0
        %5293 = vmatpush1.msra.mxu0 0.0
        %5294 = vmatprep.subr.mxu0 0.0
        %5295 = vmatpush1.msra.mxu0 0.0
        %5296 = vmatprep.subr.mxu0 0.0
        %5297 = vmatpush1.msra.mxu0 0.0
        %5298 = vmatprep.subr.mxu0 0.0
        %5299 = vmatpush1.msra.mxu0 0.0
        %5300 = vmatprep.subr.mxu0 0.0
        %5301 = vmatpush1.msra.mxu0 0.0
        %5302 = vmatprep.subr.mxu0 0.0
        %5303 = vmatpush1.msra.mxu0 0.0
        %5304 = vmatprep.subr.mxu0 0.0
        %5305 = vmatpush1.msra.mxu0 0.0
        %5306 = vmatprep.subr.mxu0 0.0
        %5307 = vmatpush1.msra.mxu0 0.0
        %5308 = vmatprep.subr.mxu0 0.0
        %5309 = vmatpush1.msra.mxu0 0.0
        %5310 = vmatprep.subr.mxu0 0.0
        %5311 = vmatpush1.msra.mxu0 0.0
        %5312 = vmatprep.subr.mxu0 0.0
        %5313 = vmatpush1.msra.mxu0 0.0
        %5314 = vmatprep.subr.mxu0 0.0
        %5315 = vmatpush1.msra.mxu0 0.0
        %5316 = vmatprep.subr.mxu0 0.0
        %5317 = vmatpush1.msra.mxu0 0.0
        %5318 = vmatprep.subr.mxu0 0.0
        %5319 = vmatpush1.msra.mxu0 0.0
        %5320 = vmatprep.mubr.f32.mxu0 0.0
        %5321 = vmatmul.mubr.f32.gmra.mrb[0].mxu0 %v5149
        %v5322 = vpop.f32.mrb[0].mxu0
        %v5323 = vadd.f32 %v4970, %v5322
        %v5324 = vpop.f32.mrb[0].mxu0
        %5325 = vmatprep.mubr.f32.mxu0 0.0
        %5326 = vmatmul.mubr.f32.gmra.mrb[0].mxu0 %v5152
        %v5327 = vpop.f32.mrb[0].mxu0
        %v5328 = vadd.f32 %v4975, %v5327
        %v5329 = vpop.f32.mrb[0].mxu0
        %5330 = vmatprep.mubr.f32.mxu0 0.0
        %5331 = vmatmul.mubr.f32.gmra.mrb[0].mxu0 %v5155
        %v5332 = vpop.f32.mrb[0].mxu0
        %v5333 = vadd.f32 %v4980, %v5332
        %v5334 = vpop.f32.mrb[0].mxu0
        %5335 = vmatprep.mubr.f32.mxu0 0.0
        %5336 = vmatmul.mubr.f32.gmra.mrb[0].mxu0 %v5158
        %v5337 = vpop.f32.mrb[0].mxu0
        %v5338 = vadd.f32 %v4985, %v5337
        %v5339 = vpop.f32.mrb[0].mxu0
        %5340 = vmatprep.mubr.f32.mxu0 0.0
        %5341 = vmatmul.mubr.f32.gmra.mrb[0].mxu0 %v5161
        %v5342 = vpop.f32.mrb[0].mxu0
        %v5343 = vadd.f32 %v4990, %v5342
        %v5344 = vpop.f32.mrb[0].mxu0
        %5345 = vmatprep.mubr.f32.mxu0 0.0
        %5346 = vmatmul.mubr.f32.gmra.mrb[0].mxu0 %v5164
        %v5347 = vpop.f32.mrb[0].mxu0
        %v5348 = vadd.f32 %v4995, %v5347
        %v5349 = vpop.f32.mrb[0].mxu0
        %5350 = vmatprep.mubr.f32.mxu0 0.0
        %5351 = vmatmul.mubr.f32.gmra.mrb[0].mxu0 %v5167
        %v5352 = vpop.f32.mrb[0].mxu0
        %v5353 = vadd.f32 %v5000, %v5352
        %v5354 = vpop.f32.mrb[0].mxu0
        %5355 = vmatprep.mubr.f32.mxu0 0.0
        %5356 = vmatmul.mubr.f32.gmra.mrb[0].mxu0 %v5170
        %v5357 = vpop.f32.mrb[0].mxu0
        %v5358 = vadd.f32 %v5005, %v5357
        %v5359 = vpop.f32.mrb[0].mxu0
        %5360 = vmatprep.mubr.f32.mxu0 0.0
        %5361 = vmatmul.mubr.f32.gmra.mrb[0].mxu0 %v5173
        %v5362 = vpop.f32.mrb[0].mxu0
        %v5363 = vadd.f32 %v5010, %v5362
        %v5364 = vpop.f32.mrb[0].mxu0
        %5365 = vmatprep.mubr.f32.mxu0 0.0
        %5366 = vmatmul.mubr.f32.gmra.mrb[0].mxu0 %v5176
        %v5367 = vpop.f32.mrb[0].mxu0
        %v5368 = vadd.f32 %v5015, %v5367
        %v5369 = vpop.f32.mrb[0].mxu0
        %5370 = vmatprep.mubr.f32.mxu0 0.0
        %5371 = vmatmul.mubr.f32.gmra.mrb[0].mxu0 %v5179
        %v5372 = vpop.f32.mrb[0].mxu0
        %v5373 = vadd.f32 %v5020, %v5372
        %v5374 = vpop.f32.mrb[0].mxu0
        %5375 = vmatprep.mubr.f32.mxu0 0.0
        %5376 = vmatmul.mubr.f32.gmra.mrb[0].mxu0 %v5182
        %v5377 = vpop.f32.mrb[0].mxu0
        %v5378 = vadd.f32 %v5025, %v5377
        %v5379 = vpop.f32.mrb[0].mxu0
        %5380 = vmatprep.mubr.f32.mxu0 0.0
        %5381 = vmatmul.mubr.f32.gmra.mrb[0].mxu0 %v5185
        %v5382 = vpop.f32.mrb[0].mxu0
        %v5383 = vadd.f32 %v5030, %v5382
        %v5384 = vpop.f32.mrb[0].mxu0
        %5385 = vmatprep.mubr.f32.mxu0 0.0
        %5386 = vmatmul.mubr.f32.gmra.mrb[0].mxu0 %v5188
        %v5387 = vpop.f32.mrb[0].mxu0
        %v5388 = vadd.f32 %v5035, %v5387
        %v5389 = vpop.f32.mrb[0].mxu0
        %5390 = vmatprep.mubr.f32.mxu0 0.0
        %5391 = vmatmul.mubr.f32.gmra.mrb[0].mxu0 %v5191
        %v5392 = vpop.f32.mrb[0].mxu0
        %v5393 = vadd.f32 %v5040, %v5392
        %v5394 = vpop.f32.mrb[0].mxu0
        %5395 = vmatprep.mubr.f32.mxu0 0.0
        %5396 = vmatmul.mubr.f32.gmra.mrb[0].mxu0 %v5194
        %v5397 = vpop.f32.mrb[0].mxu0
        %v5398 = vadd.f32 %v5045, %v5397
        %v5399 = vpop.f32.mrb[0].mxu0
        %5400 = vmatprep.mubr.f32.mxu0 0.0
        %5401 = vmatmul.mubr.f32.gmra.mrb[0].mxu0 %v5197
        %v5402 = vpop.f32.mrb[0].mxu0
        %v5403 = vadd.f32 %v5050, %v5402
        %v5404 = vpop.f32.mrb[0].mxu0
        %5405 = vmatprep.mubr.f32.mxu0 0.0
        %5406 = vmatmul.mubr.f32.gmra.mrb[0].mxu0 %v5200
        %v5407 = vpop.f32.mrb[0].mxu0
        %v5408 = vadd.f32 %v5055, %v5407
        %v5409 = vpop.f32.mrb[0].mxu0
        %5410 = vmatprep.mubr.f32.mxu0 0.0
        %5411 = vmatmul.mubr.f32.gmra.mrb[0].mxu0 %v5203
        %v5412 = vpop.f32.mrb[0].mxu0
        %v5413 = vadd.f32 %v5060, %v5412
        %v5414 = vpop.f32.mrb[0].mxu0
        %5415 = vmatprep.mubr.f32.mxu0 0.0
        %5416 = vmatmul.mubr.f32.gmra.mrb[0].mxu0 %v5206
        %v5417 = vpop.f32.mrb[0].mxu0
        %v5418 = vadd.f32 %v5065, %v5417
        %v5419 = vpop.f32.mrb[0].mxu0
        %5420 = vmatprep.mubr.f32.mxu0 0.0
        %5421 = vmatmul.mubr.f32.gmra.mrb[0].mxu0 %v5209
        %v5422 = vpop.f32.mrb[0].mxu0
        %v5423 = vadd.f32 %v5070, %v5422
        %v5424 = vpop.f32.mrb[0].mxu0
        %5425 = vmatprep.mubr.f32.mxu0 0.0
        %5426 = vmatmul.mubr.f32.gmra.mrb[0].mxu0 %v5212
        %v5427 = vpop.f32.mrb[0].mxu0
        %v5428 = vadd.f32 %v5075, %v5427
        %v5429 = vpop.f32.mrb[0].mxu0
        %5430 = vmatprep.mubr.f32.mxu0 0.0
        %5431 = vmatmul.mubr.f32.gmra.mrb[0].mxu0 %v5215
        %v5432 = vpop.f32.mrb[0].mxu0
        %v5433 = vadd.f32 %v5080, %v5432
        %v5434 = vpop.f32.mrb[0].mxu0
        %5435 = vmatprep.mubr.f32.mxu0 0.0
        %5436 = vmatmul.mubr.f32.gmra.mrb[0].mxu0 %v5218
        %v5437 = vpop.f32.mrb[0].mxu0
        %v5438 = vadd.f32 %v5085, %v5437
        %v5439 = vpop.f32.mrb[0].mxu0
        %5440 = vmatprep.mubr.f32.mxu0 0.0
        %5441 = vmatmul.mubr.f32.gmra.mrb[0].mxu0 %v5221
        %v5442 = vpop.f32.mrb[0].mxu0
        %v5443 = vadd.f32 %v5090, %v5442
        %v5444 = vpop.f32.mrb[0].mxu0
        %5445 = vmatprep.mubr.f32.mxu0 0.0
        %5446 = vmatmul.mubr.f32.gmra.mrb[0].mxu0 %v5224
        %v5447 = vpop.f32.mrb[0].mxu0
        %v5448 = vadd.f32 %v5095, %v5447
        %v5449 = vpop.f32.mrb[0].mxu0
        %5450 = vmatprep.mubr.f32.mxu0 0.0
        %5451 = vmatmul.mubr.f32.gmra.mrb[0].mxu0 %v5227
        %v5452 = vpop.f32.mrb[0].mxu0
        %v5453 = vadd.f32 %v5100, %v5452
        %v5454 = vpop.f32.mrb[0].mxu0
        %5455 = vmatprep.mubr.f32.mxu0 0.0
        %5456 = vmatmul.mubr.f32.gmra.mrb[0].mxu0 %v5230
        %v5457 = vpop.f32.mrb[0].mxu0
        %v5458 = vadd.f32 %v5105, %v5457
        %v5459 = vpop.f32.mrb[0].mxu0
        %5460 = vmatprep.mubr.f32.mxu0 0.0
        %5461 = vmatmul.mubr.f32.gmra.mrb[0].mxu0 %v5233
        %v5462 = vpop.f32.mrb[0].mxu0
        %v5463 = vadd.f32 %v5110, %v5462
        %v5464 = vpop.f32.mrb[0].mxu0
        %5465 = vmatprep.mubr.f32.mxu0 0.0
        %5466 = vmatmul.mubr.f32.gmra.mrb[0].mxu0 %v5236
        %v5467 = vpop.f32.mrb[0].mxu0
        %v5468 = vadd.f32 %v5115, %v5467
        %v5469 = vpop.f32.mrb[0].mxu0
        %5470 = vmatprep.mubr.f32.mxu0 0.0
        %5471 = vmatmul.mubr.f32.gmra.mrb[0].mxu0 %v5239
        %v5472 = vpop.f32.mrb[0].mxu0
        %v5473 = vadd.f32 %v5120, %v5472
        %v5474 = vpop.f32.mrb[0].mxu0
        %5475 = vmatprep.mubr.f32.mxu0 0.0
        %5476 = vmatmul.mubr.f32.gmra.mrb[0].mxu0 %v5242
        %v5477 = vpop.f32.mrb[0].mxu0
        %v5478 = vadd.f32 %v5125, %v5477
        %v5479 = vpop.f32.mrb[0].mxu0
        %5480 = vmatprep.mubr.f32.mxu0 0.0
        %5481 = vmatmul.mubr.f32.gmra.mrb[0].mxu0 %v5245
        %v5482 = vpop.f32.mrb[0].mxu0
        %v5483 = vadd.f32 %v5130, %v5482
        %v5484 = vpop.f32.mrb[0].mxu0
        %5485 = vmatprep.mubr.f32.mxu0 0.0
        %5486 = vmatmul.mubr.f32.gmra.mrb[0].mxu0 %v5248
        %v5487 = vpop.f32.mrb[0].mxu0
        %v5488 = vadd.f32 %v5135, %v5487
        %v5489 = vpop.f32.mrb[0].mxu0
        %5490 = vmatprep.mubr.f32.mxu0 0.0
        %5491 = vmatmul.mubr.f32.gmra.mrb[0].mxu0 %v5251
        %v5492 = vpop.f32.mrb[0].mxu0
        %v5493 = vadd.f32 %v5140, %v5492
        %v5494 = vpop.f32.mrb[0].mxu0
        %5495 = vmatprep.mubr.f32.mxu0 0.0
        %5496 = vmatmul.mubr.f32.gmra.mrb[0].mxu0 %v5254
        %v5497 = vpop.f32.mrb[0].mxu0
        %v5498 = vadd.f32 %v5145, %v5497
        %v5499 = vpop.f32.mrb[0].mxu0
        %5500 = vdwg.mxu0
        %v5501 = vld [vmem:[#allocation2 + $0x7] sm:$0xff]
        %v5502 = vld [vmem:[#allocation2 + $0xf] sm:$0xff]
        %v5503 = vld [vmem:[#allocation2 + $0x17] sm:$0xff]
        %v5504 = vld [vmem:[#allocation2 + $0x1f] sm:$0xff]
        %v5505 = vld [vmem:[#allocation2 + $0x27] sm:$0xff]
        %v5506 = vld [vmem:[#allocation2 + $0x2f] sm:$0xff]
        %v5507 = vld [vmem:[#allocation2 + $0x37] sm:$0xff]
        %v5508 = vld [vmem:[#allocation2 + $0x3f] sm:$0xff]
        %v5509 = vld [vmem:[#allocation2 + $0x47] sm:$0xff]
        %v5510 = vld [vmem:[#allocation2 + $0x4f] sm:$0xff]
        %v5511 = vld [vmem:[#allocation2 + $0x57] sm:$0xff]
        %v5512 = vld [vmem:[#allocation2 + $0x5f] sm:$0xff]
        %v5513 = vld [vmem:[#allocation2 + $0x67] sm:$0xff]
        %v5514 = vld [vmem:[#allocation2 + $0x6f] sm:$0xff]
        %v5515 = vld [vmem:[#allocation2 + $0x77] sm:$0xff]
        %v5516 = vld [vmem:[#allocation2 + $0x7f] sm:$0xff]
        %v5517 = vld [vmem:[#allocation2 + $0x87] sm:$0xff]
        %v5518 = vld [vmem:[#allocation2 + $0x8f] sm:$0xff]
        %v5519 = vld [vmem:[#allocation2 + $0x97] sm:$0xff]
        %v5520 = vld [vmem:[#allocation2 + $0x9f] sm:$0xff]
        %v5521 = vld [vmem:[#allocation2 + $0xa7] sm:$0xff]
        %v5522 = vld [vmem:[#allocation2 + $0xaf] sm:$0xff]
        %v5523 = vld [vmem:[#allocation2 + $0xb7] sm:$0xff]
        %v5524 = vld [vmem:[#allocation2 + $0xbf] sm:$0xff]
        %v5525 = vld [vmem:[#allocation2 + $0xc7] sm:$0xff]
        %v5526 = vld [vmem:[#allocation2 + $0xcf] sm:$0xff]
        %v5527 = vld [vmem:[#allocation2 + $0xd7] sm:$0xff]
        %v5528 = vld [vmem:[#allocation2 + $0xdf] sm:$0xff]
        %v5529 = vld [vmem:[#allocation2 + $0xe7] sm:$0xff]
        %v5530 = vld [vmem:[#allocation2 + $0xef] sm:$0xff]
        %v5531 = vld [vmem:[#allocation2 + $0xf7] sm:$0xff]
        %v5532 = vld [vmem:[#allocation2 + $0xff] sm:$0xff]
        %v5533 = vld [vmem:[#allocation2 + $0x107] sm:$0xff]
        %v5534 = vld [vmem:[#allocation2 + $0x10f] sm:$0xff]
        %v5535 = vld [vmem:[#allocation2 + $0x117] sm:$0xff]
        %v5536 = vld [vmem:[#allocation2 + $0x11f] sm:$0xff]
        %s5537 = scalar_lea.vmem %s4, 16
        %v5538 = vld [vmem:[%s5537] sm:$0xff]
        %v5540 = vsel %vm506, %v5501, 0
        %v5543 = vsel %vm506, %v5502, 0
        %v5546 = vsel %vm506, %v5503, 0
        %v5549 = vsel %vm506, %v5504, 0
        %v5552 = vsel %vm506, %v5505, 0
        %v5555 = vsel %vm506, %v5506, 0
        %v5558 = vsel %vm506, %v5507, 0
        %v5561 = vsel %vm506, %v5508, 0
        %v5564 = vsel %vm506, %v5509, 0
        %v5567 = vsel %vm506, %v5510, 0
        %v5570 = vsel %vm506, %v5511, 0
        %v5573 = vsel %vm506, %v5512, 0
        %v5576 = vsel %vm506, %v5513, 0
        %v5579 = vsel %vm506, %v5514, 0
        %v5582 = vsel %vm506, %v5515, 0
        %v5585 = vsel %vm506, %v5516, 0
        %v5588 = vsel %vm506, %v5517, 0
        %v5591 = vsel %vm506, %v5518, 0
        %v5594 = vsel %vm506, %v5519, 0
        %v5597 = vsel %vm506, %v5520, 0
        %v5600 = vsel %vm506, %v5521, 0
        %v5603 = vsel %vm506, %v5522, 0
        %v5606 = vsel %vm506, %v5523, 0
        %v5609 = vsel %vm506, %v5524, 0
        %v5612 = vsel %vm506, %v5525, 0
        %v5615 = vsel %vm506, %v5526, 0
        %v5618 = vsel %vm506, %v5527, 0
        %v5621 = vsel %vm506, %v5528, 0
        %v5624 = vsel %vm506, %v5529, 0
        %v5627 = vsel %vm506, %v5530, 0
        %v5630 = vsel %vm506, %v5531, 0
        %v5633 = vsel %vm506, %v5532, 0
        %v5636 = vsel %vm506, %v5533, 0
        %v5639 = vsel %vm506, %v5534, 0
        %v5642 = vsel %vm506, %v5535, 0
        %v5645 = vsel %vm506, %v5536, 0
        %5647 = vmatprep.subr.mxu0 0.0
        %5648 = vmatpush1.msra.mxu0 %v5538
        %5649 = vmatprep.subr.mxu0 0.0
        %5650 = vmatpush1.msra.mxu0 0.0
        %5651 = vmatprep.subr.mxu0 0.0
        %5652 = vmatpush1.msra.mxu0 0.0
        %5653 = vmatprep.subr.mxu0 0.0
        %5654 = vmatpush1.msra.mxu0 0.0
        %5655 = vmatprep.subr.mxu0 0.0
        %5656 = vmatpush1.msra.mxu0 0.0
        %5657 = vmatprep.subr.mxu0 0.0
        %5658 = vmatpush1.msra.mxu0 0.0
        %5659 = vmatprep.subr.mxu0 0.0
        %5660 = vmatpush1.msra.mxu0 0.0
        %5661 = vmatprep.subr.mxu0 0.0
        %5662 = vmatpush1.msra.mxu0 0.0
        %5663 = vmatprep.subr.mxu0 0.0
        %5664 = vmatpush1.msra.mxu0 0.0
        %5665 = vmatprep.subr.mxu0 0.0
        %5666 = vmatpush1.msra.mxu0 0.0
        %5667 = vmatprep.subr.mxu0 0.0
        %5668 = vmatpush1.msra.mxu0 0.0
        %5669 = vmatprep.subr.mxu0 0.0
        %5670 = vmatpush1.msra.mxu0 0.0
        %5671 = vmatprep.subr.mxu0 0.0
        %5672 = vmatpush1.msra.mxu0 0.0
        %5673 = vmatprep.subr.mxu0 0.0
        %5674 = vmatpush1.msra.mxu0 0.0
        %5675 = vmatprep.subr.mxu0 0.0
        %5676 = vmatpush1.msra.mxu0 0.0
        %5677 = vmatprep.subr.mxu0 0.0
        %5678 = vmatpush1.msra.mxu0 0.0
        %5679 = vmatprep.subr.mxu0 0.0
        %5680 = vmatpush1.msra.mxu0 0.0
        %5681 = vmatprep.subr.mxu0 0.0
        %5682 = vmatpush1.msra.mxu0 0.0
        %5683 = vmatprep.subr.mxu0 0.0
        %5684 = vmatpush1.msra.mxu0 0.0
        %5685 = vmatprep.subr.mxu0 0.0
        %5686 = vmatpush1.msra.mxu0 0.0
        %5687 = vmatprep.subr.mxu0 0.0
        %5688 = vmatpush1.msra.mxu0 0.0
        %5689 = vmatprep.subr.mxu0 0.0
        %5690 = vmatpush1.msra.mxu0 0.0
        %5691 = vmatprep.subr.mxu0 0.0
        %5692 = vmatpush1.msra.mxu0 0.0
        %5693 = vmatprep.subr.mxu0 0.0
        %5694 = vmatpush1.msra.mxu0 0.0
        %5695 = vmatprep.subr.mxu0 0.0
        %5696 = vmatpush1.msra.mxu0 0.0
        %5697 = vmatprep.subr.mxu0 0.0
        %5698 = vmatpush1.msra.mxu0 0.0
        %5699 = vmatprep.subr.mxu0 0.0
        %5700 = vmatpush1.msra.mxu0 0.0
        %5701 = vmatprep.subr.mxu0 0.0
        %5702 = vmatpush1.msra.mxu0 0.0
        %5703 = vmatprep.subr.mxu0 0.0
        %5704 = vmatpush1.msra.mxu0 0.0
        %5705 = vmatprep.subr.mxu0 0.0
        %5706 = vmatpush1.msra.mxu0 0.0
        %5707 = vmatprep.subr.mxu0 0.0
        %5708 = vmatpush1.msra.mxu0 0.0
        %5709 = vmatprep.subr.mxu0 0.0
        %5710 = vmatpush1.msra.mxu0 0.0
        %5711 = vmatprep.mubr.f32.mxu0 0.0
        %5712 = vmatmul.mubr.f32.gmra.mrb[0].mxu0 %v5540
        %v5713 = vpop.f32.mrb[0].mxu0
        %v5714 = vadd.f32 0.0, %v5713
        %v5715 = vpop.f32.mrb[0].mxu0
        %5716 = vmatprep.mubr.f32.mxu0 0.0
        %5717 = vmatmul.mubr.f32.gmra.mrb[0].mxu0 %v5543
        %v5718 = vpop.f32.mrb[0].mxu0
        %v5719 = vadd.f32 0.0, %v5718
        %v5720 = vpop.f32.mrb[0].mxu0
        %5721 = vmatprep.mubr.f32.mxu0 0.0
        %5722 = vmatmul.mubr.f32.gmra.mrb[0].mxu0 %v5546
        %v5723 = vpop.f32.mrb[0].mxu0
        %v5724 = vadd.f32 0.0, %v5723
        %v5725 = vpop.f32.mrb[0].mxu0
        %5726 = vmatprep.mubr.f32.mxu0 0.0
        %5727 = vmatmul.mubr.f32.gmra.mrb[0].mxu0 %v5549
        %v5728 = vpop.f32.mrb[0].mxu0
        %v5729 = vadd.f32 0.0, %v5728
        %v5730 = vpop.f32.mrb[0].mxu0
        %5731 = vmatprep.mubr.f32.mxu0 0.0
        %5732 = vmatmul.mubr.f32.gmra.mrb[0].mxu0 %v5552
        %v5733 = vpop.f32.mrb[0].mxu0
        %v5734 = vadd.f32 0.0, %v5733
        %v5735 = vpop.f32.mrb[0].mxu0
        %5736 = vmatprep.mubr.f32.mxu0 0.0
        %5737 = vmatmul.mubr.f32.gmra.mrb[0].mxu0 %v5555
        %v5738 = vpop.f32.mrb[0].mxu0
        %v5739 = vadd.f32 0.0, %v5738
        %v5740 = vpop.f32.mrb[0].mxu0
        %5741 = vmatprep.mubr.f32.mxu0 0.0
        %5742 = vmatmul.mubr.f32.gmra.mrb[0].mxu0 %v5558
        %v5743 = vpop.f32.mrb[0].mxu0
        %v5744 = vadd.f32 0.0, %v5743
        %v5745 = vpop.f32.mrb[0].mxu0
        %5746 = vmatprep.mubr.f32.mxu0 0.0
        %5747 = vmatmul.mubr.f32.gmra.mrb[0].mxu0 %v5561
        %v5748 = vpop.f32.mrb[0].mxu0
        %v5749 = vadd.f32 0.0, %v5748
        %v5750 = vpop.f32.mrb[0].mxu0
        %5751 = vmatprep.mubr.f32.mxu0 0.0
        %5752 = vmatmul.mubr.f32.gmra.mrb[0].mxu0 %v5564
        %v5753 = vpop.f32.mrb[0].mxu0
        %v5754 = vadd.f32 0.0, %v5753
        %v5755 = vpop.f32.mrb[0].mxu0
        %5756 = vmatprep.mubr.f32.mxu0 0.0
        %5757 = vmatmul.mubr.f32.gmra.mrb[0].mxu0 %v5567
        %v5758 = vpop.f32.mrb[0].mxu0
        %v5759 = vadd.f32 0.0, %v5758
        %v5760 = vpop.f32.mrb[0].mxu0
        %5761 = vmatprep.mubr.f32.mxu0 0.0
        %5762 = vmatmul.mubr.f32.gmra.mrb[0].mxu0 %v5570
        %v5763 = vpop.f32.mrb[0].mxu0
        %v5764 = vadd.f32 0.0, %v5763
        %v5765 = vpop.f32.mrb[0].mxu0
        %5766 = vmatprep.mubr.f32.mxu0 0.0
        %5767 = vmatmul.mubr.f32.gmra.mrb[0].mxu0 %v5573
        %v5768 = vpop.f32.mrb[0].mxu0
        %v5769 = vadd.f32 0.0, %v5768
        %v5770 = vpop.f32.mrb[0].mxu0
        %5771 = vmatprep.mubr.f32.mxu0 0.0
        %5772 = vmatmul.mubr.f32.gmra.mrb[0].mxu0 %v5576
        %v5773 = vpop.f32.mrb[0].mxu0
        %v5774 = vadd.f32 0.0, %v5773
        %v5775 = vpop.f32.mrb[0].mxu0
        %5776 = vmatprep.mubr.f32.mxu0 0.0
        %5777 = vmatmul.mubr.f32.gmra.mrb[0].mxu0 %v5579
        %v5778 = vpop.f32.mrb[0].mxu0
        %v5779 = vadd.f32 0.0, %v5778
        %v5780 = vpop.f32.mrb[0].mxu0
        %5781 = vmatprep.mubr.f32.mxu0 0.0
        %5782 = vmatmul.mubr.f32.gmra.mrb[0].mxu0 %v5582
        %v5783 = vpop.f32.mrb[0].mxu0
        %v5784 = vadd.f32 0.0, %v5783
        %v5785 = vpop.f32.mrb[0].mxu0
        %5786 = vmatprep.mubr.f32.mxu0 0.0
        %5787 = vmatmul.mubr.f32.gmra.mrb[0].mxu0 %v5585
        %v5788 = vpop.f32.mrb[0].mxu0
        %v5789 = vadd.f32 0.0, %v5788
        %v5790 = vpop.f32.mrb[0].mxu0
        %5791 = vmatprep.mubr.f32.mxu0 0.0
        %5792 = vmatmul.mubr.f32.gmra.mrb[0].mxu0 %v5588
        %v5793 = vpop.f32.mrb[0].mxu0
        %v5794 = vadd.f32 0.0, %v5793
        %v5795 = vpop.f32.mrb[0].mxu0
        %5796 = vmatprep.mubr.f32.mxu0 0.0
        %5797 = vmatmul.mubr.f32.gmra.mrb[0].mxu0 %v5591
        %v5798 = vpop.f32.mrb[0].mxu0
        %v5799 = vadd.f32 0.0, %v5798
        %v5800 = vpop.f32.mrb[0].mxu0
        %5801 = vmatprep.mubr.f32.mxu0 0.0
        %5802 = vmatmul.mubr.f32.gmra.mrb[0].mxu0 %v5594
        %v5803 = vpop.f32.mrb[0].mxu0
        %v5804 = vadd.f32 0.0, %v5803
        %v5805 = vpop.f32.mrb[0].mxu0
        %5806 = vmatprep.mubr.f32.mxu0 0.0
        %5807 = vmatmul.mubr.f32.gmra.mrb[0].mxu0 %v5597
        %v5808 = vpop.f32.mrb[0].mxu0
        %v5809 = vadd.f32 0.0, %v5808
        %v5810 = vpop.f32.mrb[0].mxu0
        %5811 = vmatprep.mubr.f32.mxu0 0.0
        %5812 = vmatmul.mubr.f32.gmra.mrb[0].mxu0 %v5600
        %v5813 = vpop.f32.mrb[0].mxu0
        %v5814 = vadd.f32 0.0, %v5813
        %v5815 = vpop.f32.mrb[0].mxu0
        %5816 = vmatprep.mubr.f32.mxu0 0.0
        %5817 = vmatmul.mubr.f32.gmra.mrb[0].mxu0 %v5603
        %v5818 = vpop.f32.mrb[0].mxu0
        %v5819 = vadd.f32 0.0, %v5818
        %v5820 = vpop.f32.mrb[0].mxu0
        %5821 = vmatprep.mubr.f32.mxu0 0.0
        %5822 = vmatmul.mubr.f32.gmra.mrb[0].mxu0 %v5606
        %v5823 = vpop.f32.mrb[0].mxu0
        %v5824 = vadd.f32 0.0, %v5823
        %v5825 = vpop.f32.mrb[0].mxu0
        %5826 = vmatprep.mubr.f32.mxu0 0.0
        %5827 = vmatmul.mubr.f32.gmra.mrb[0].mxu0 %v5609
        %v5828 = vpop.f32.mrb[0].mxu0
        %v5829 = vadd.f32 0.0, %v5828
        %v5830 = vpop.f32.mrb[0].mxu0
        %5831 = vmatprep.mubr.f32.mxu0 0.0
        %5832 = vmatmul.mubr.f32.gmra.mrb[0].mxu0 %v5612
        %v5833 = vpop.f32.mrb[0].mxu0
        %v5834 = vadd.f32 0.0, %v5833
        %v5835 = vpop.f32.mrb[0].mxu0
        %5836 = vmatprep.mubr.f32.mxu0 0.0
        %5837 = vmatmul.mubr.f32.gmra.mrb[0].mxu0 %v5615
        %v5838 = vpop.f32.mrb[0].mxu0
        %v5839 = vadd.f32 0.0, %v5838
        %v5840 = vpop.f32.mrb[0].mxu0
        %5841 = vmatprep.mubr.f32.mxu0 0.0
        %5842 = vmatmul.mubr.f32.gmra.mrb[0].mxu0 %v5618
        %v5843 = vpop.f32.mrb[0].mxu0
        %v5844 = vadd.f32 0.0, %v5843
        %v5845 = vpop.f32.mrb[0].mxu0
        %5846 = vmatprep.mubr.f32.mxu0 0.0
        %5847 = vmatmul.mubr.f32.gmra.mrb[0].mxu0 %v5621
        %v5848 = vpop.f32.mrb[0].mxu0
        %v5849 = vadd.f32 0.0, %v5848
        %v5850 = vpop.f32.mrb[0].mxu0
        %5851 = vmatprep.mubr.f32.mxu0 0.0
        %5852 = vmatmul.mubr.f32.gmra.mrb[0].mxu0 %v5624
        %v5853 = vpop.f32.mrb[0].mxu0
        %v5854 = vadd.f32 0.0, %v5853
        %v5855 = vpop.f32.mrb[0].mxu0
        %5856 = vmatprep.mubr.f32.mxu0 0.0
        %5857 = vmatmul.mubr.f32.gmra.mrb[0].mxu0 %v5627
        %v5858 = vpop.f32.mrb[0].mxu0
        %v5859 = vadd.f32 0.0, %v5858
        %v5860 = vpop.f32.mrb[0].mxu0
        %5861 = vmatprep.mubr.f32.mxu0 0.0
        %5862 = vmatmul.mubr.f32.gmra.mrb[0].mxu0 %v5630
        %v5863 = vpop.f32.mrb[0].mxu0
        %v5864 = vadd.f32 0.0, %v5863
        %v5865 = vpop.f32.mrb[0].mxu0
        %5866 = vmatprep.mubr.f32.mxu0 0.0
        %5867 = vmatmul.mubr.f32.gmra.mrb[0].mxu0 %v5633
        %v5868 = vpop.f32.mrb[0].mxu0
        %v5869 = vadd.f32 0.0, %v5868
        %v5870 = vpop.f32.mrb[0].mxu0
        %5871 = vmatprep.mubr.f32.mxu0 0.0
        %5872 = vmatmul.mubr.f32.gmra.mrb[0].mxu0 %v5636
        %v5873 = vpop.f32.mrb[0].mxu0
        %v5874 = vadd.f32 0.0, %v5873
        %v5875 = vpop.f32.mrb[0].mxu0
        %5876 = vmatprep.mubr.f32.mxu0 0.0
        %5877 = vmatmul.mubr.f32.gmra.mrb[0].mxu0 %v5639
        %v5878 = vpop.f32.mrb[0].mxu0
        %v5879 = vadd.f32 0.0, %v5878
        %v5880 = vpop.f32.mrb[0].mxu0
        %5881 = vmatprep.mubr.f32.mxu0 0.0
        %5882 = vmatmul.mubr.f32.gmra.mrb[0].mxu0 %v5642
        %v5883 = vpop.f32.mrb[0].mxu0
        %v5884 = vadd.f32 0.0, %v5883
        %v5885 = vpop.f32.mrb[0].mxu0
        %5886 = vmatprep.mubr.f32.mxu0 0.0
        %5887 = vmatmul.mubr.f32.gmra.mrb[0].mxu0 %v5645
        %v5888 = vpop.f32.mrb[0].mxu0
        %v5889 = vadd.f32 0.0, %v5888
        %v5890 = vpop.f32.mrb[0].mxu0
        %5891 = vdwg.mxu0
        %v5892 = vadd.f32 %v5323, %v5714
        %v5893 = vadd.f32 %v5328, %v5719
        %v5894 = vadd.f32 %v5333, %v5724
        %v5895 = vadd.f32 %v5338, %v5729
        %v5896 = vadd.f32 %v5343, %v5734
        %v5897 = vadd.f32 %v5348, %v5739
        %v5898 = vadd.f32 %v5353, %v5744
        %v5899 = vadd.f32 %v5358, %v5749
        %v5900 = vadd.f32 %v5363, %v5754
        %v5901 = vadd.f32 %v5368, %v5759
        %v5902 = vadd.f32 %v5373, %v5764
        %v5903 = vadd.f32 %v5378, %v5769
        %v5904 = vadd.f32 %v5383, %v5774
        %v5905 = vadd.f32 %v5388, %v5779
        %v5906 = vadd.f32 %v5393, %v5784
        %v5907 = vadd.f32 %v5398, %v5789
        %v5908 = vadd.f32 %v5403, %v5794
        %v5909 = vadd.f32 %v5408, %v5799
        %v5910 = vadd.f32 %v5413, %v5804
        %v5911 = vadd.f32 %v5418, %v5809
        %v5912 = vadd.f32 %v5423, %v5814
        %v5913 = vadd.f32 %v5428, %v5819
        %v5914 = vadd.f32 %v5433, %v5824
        %v5915 = vadd.f32 %v5438, %v5829
        %v5916 = vadd.f32 %v5443, %v5834
        %v5917 = vadd.f32 %v5448, %v5839
        %v5918 = vadd.f32 %v5453, %v5844
        %v5919 = vadd.f32 %v5458, %v5849
        %v5920 = vadd.f32 %v5463, %v5854
        %v5921 = vadd.f32 %v5468, %v5859
        %v5922 = vadd.f32 %v5473, %v5864
        %v5923 = vadd.f32 %v5478, %v5869
        %v5924 = vadd.f32 %v5483, %v5874
        %v5925 = vadd.f32 %v5488, %v5879
        %v5926 = vadd.f32 %v5493, %v5884
        %v5927 = vadd.f32 %v5498, %v5889
        %v5928 = vld [vmem:[#allocation2 + $0x17] sm:$0xff]
        %v5929 = vld [vmem:[#allocation2 + $0x1f] sm:$0xff]
        %v5930 = vld [vmem:[#allocation2 + $0x27] sm:$0xff]
        %v5931 = vld [vmem:[#allocation2 + $0x2f] sm:$0xff]
        %v5932 = vld [vmem:[#allocation2 + $0x37] sm:$0xff]
        %v5933 = vld [vmem:[#allocation2 + $0x3f] sm:$0xff]
        %v5934 = vld [vmem:[#allocation2 + $0x47] sm:$0xff]
        %v5935 = vld [vmem:[#allocation2 + $0x4f] sm:$0xff]
        %v5936 = vld [vmem:[#allocation2 + $0x57] sm:$0xff]
        %v5937 = vld [vmem:[#allocation2 + $0x5f] sm:$0xff]
        %v5938 = vld [vmem:[#allocation2 + $0x67] sm:$0xff]
        %v5939 = vld [vmem:[#allocation2 + $0x6f] sm:$0xff]
        %v5940 = vld [vmem:[#allocation2 + $0x77] sm:$0xff]
        %v5941 = vld [vmem:[#allocation2 + $0x7f] sm:$0xff]
        %v5942 = vld [vmem:[#allocation2 + $0x87] sm:$0xff]
        %v5943 = vld [vmem:[#allocation2 + $0x8f] sm:$0xff]
        %v5944 = vld [vmem:[#allocation2 + $0x97] sm:$0xff]
        %v5945 = vld [vmem:[#allocation2 + $0x9f] sm:$0xff]
        %v5946 = vld [vmem:[#allocation2 + $0xa7] sm:$0xff]
        %v5947 = vld [vmem:[#allocation2 + $0xaf] sm:$0xff]
        %v5948 = vld [vmem:[#allocation2 + $0xb7] sm:$0xff]
        %v5949 = vld [vmem:[#allocation2 + $0xbf] sm:$0xff]
        %v5950 = vld [vmem:[#allocation2 + $0xc7] sm:$0xff]
        %v5951 = vld [vmem:[#allocation2 + $0xcf] sm:$0xff]
        %v5952 = vld [vmem:[#allocation2 + $0xd7] sm:$0xff]
        %v5953 = vld [vmem:[#allocation2 + $0xdf] sm:$0xff]
        %v5954 = vld [vmem:[#allocation2 + $0xe7] sm:$0xff]
        %v5955 = vld [vmem:[#allocation2 + $0xef] sm:$0xff]
        %v5956 = vld [vmem:[#allocation2 + $0xf7] sm:$0xff]
        %v5957 = vld [vmem:[#allocation2 + $0xff] sm:$0xff]
        %v5958 = vld [vmem:[#allocation2 + $0x107] sm:$0xff]
        %v5959 = vld [vmem:[#allocation2 + $0x10f] sm:$0xff]
        %v5960 = vld [vmem:[#allocation2 + $0x117] sm:$0xff]
        %v5961 = vld [vmem:[#allocation2 + $0x11f] sm:$0xff]
        %v5962 = vld [vmem:[#allocation2 + $0x127] sm:$0xff]
        %v5963 = vld [vmem:[#allocation2 + $0x12f] sm:$0xff]
        %s5964 = scalar_lea.vmem %s4, 24
        %v5965 = vld [vmem:[%s5964] sm:$0xff]
        %v5967 = vsel %vm506, %v5928, 0
        %v5970 = vsel %vm506, %v5929, 0
        %v5973 = vsel %vm506, %v5930, 0
        %v5976 = vsel %vm506, %v5931, 0
        %v5979 = vsel %vm506, %v5932, 0
        %v5982 = vsel %vm506, %v5933, 0
        %v5985 = vsel %vm506, %v5934, 0
        %v5988 = vsel %vm506, %v5935, 0
        %v5991 = vsel %vm506, %v5936, 0
        %v5994 = vsel %vm506, %v5937, 0
        %v5997 = vsel %vm506, %v5938, 0
        %v6000 = vsel %vm506, %v5939, 0
        %v6003 = vsel %vm506, %v5940, 0
        %v6006 = vsel %vm506, %v5941, 0
        %v6009 = vsel %vm506, %v5942, 0
        %v6012 = vsel %vm506, %v5943, 0
        %v6015 = vsel %vm506, %v5944, 0
        %v6018 = vsel %vm506, %v5945, 0
        %v6021 = vsel %vm506, %v5946, 0
        %v6024 = vsel %vm506, %v5947, 0
        %v6027 = vsel %vm506, %v5948, 0
        %v6030 = vsel %vm506, %v5949, 0
        %v6033 = vsel %vm506, %v5950, 0
        %v6036 = vsel %vm506, %v5951, 0
        %v6039 = vsel %vm506, %v5952, 0
        %v6042 = vsel %vm506, %v5953, 0
        %v6045 = vsel %vm506, %v5954, 0
        %v6048 = vsel %vm506, %v5955, 0
        %v6051 = vsel %vm506, %v5956, 0
        %v6054 = vsel %vm506, %v5957, 0
        %v6057 = vsel %vm506, %v5958, 0
        %v6060 = vsel %vm506, %v5959, 0
        %v6063 = vsel %vm506, %v5960, 0
        %v6066 = vsel %vm506, %v5961, 0
        %v6069 = vsel %vm506, %v5962, 0
        %v6072 = vsel %vm506, %v5963, 0
        %6074 = vmatprep.subr.mxu0 0.0
        %6075 = vmatpush1.msra.mxu0 %v5965
        %6076 = vmatprep.subr.mxu0 0.0
        %6077 = vmatpush1.msra.mxu0 0.0
        %6078 = vmatprep.subr.mxu0 0.0
        %6079 = vmatpush1.msra.mxu0 0.0
        %6080 = vmatprep.subr.mxu0 0.0
        %6081 = vmatpush1.msra.mxu0 0.0
        %6082 = vmatprep.subr.mxu0 0.0
        %6083 = vmatpush1.msra.mxu0 0.0
        %6084 = vmatprep.subr.mxu0 0.0
        %6085 = vmatpush1.msra.mxu0 0.0
        %6086 = vmatprep.subr.mxu0 0.0
        %6087 = vmatpush1.msra.mxu0 0.0
        %6088 = vmatprep.subr.mxu0 0.0
        %6089 = vmatpush1.msra.mxu0 0.0
        %6090 = vmatprep.subr.mxu0 0.0
        %6091 = vmatpush1.msra.mxu0 0.0
        %6092 = vmatprep.subr.mxu0 0.0
        %6093 = vmatpush1.msra.mxu0 0.0
        %6094 = vmatprep.subr.mxu0 0.0
        %6095 = vmatpush1.msra.mxu0 0.0
        %6096 = vmatprep.subr.mxu0 0.0
        %6097 = vmatpush1.msra.mxu0 0.0
        %6098 = vmatprep.subr.mxu0 0.0
        %6099 = vmatpush1.msra.mxu0 0.0
        %6100 = vmatprep.subr.mxu0 0.0
        %6101 = vmatpush1.msra.mxu0 0.0
        %6102 = vmatprep.subr.mxu0 0.0
        %6103 = vmatpush1.msra.mxu0 0.0
        %6104 = vmatprep.subr.mxu0 0.0
        %6105 = vmatpush1.msra.mxu0 0.0
        %6106 = vmatprep.subr.mxu0 0.0
        %6107 = vmatpush1.msra.mxu0 0.0
        %6108 = vmatprep.subr.mxu0 0.0
        %6109 = vmatpush1.msra.mxu0 0.0
        %6110 = vmatprep.subr.mxu0 0.0
        %6111 = vmatpush1.msra.mxu0 0.0
        %6112 = vmatprep.subr.mxu0 0.0
        %6113 = vmatpush1.msra.mxu0 0.0
        %6114 = vmatprep.subr.mxu0 0.0
        %6115 = vmatpush1.msra.mxu0 0.0
        %6116 = vmatprep.subr.mxu0 0.0
        %6117 = vmatpush1.msra.mxu0 0.0
        %6118 = vmatprep.subr.mxu0 0.0
        %6119 = vmatpush1.msra.mxu0 0.0
        %6120 = vmatprep.subr.mxu0 0.0
        %6121 = vmatpush1.msra.mxu0 0.0
        %6122 = vmatprep.subr.mxu0 0.0
        %6123 = vmatpush1.msra.mxu0 0.0
        %6124 = vmatprep.subr.mxu0 0.0
        %6125 = vmatpush1.msra.mxu0 0.0
        %6126 = vmatprep.subr.mxu0 0.0
        %6127 = vmatpush1.msra.mxu0 0.0
        %6128 = vmatprep.subr.mxu0 0.0
        %6129 = vmatpush1.msra.mxu0 0.0
        %6130 = vmatprep.subr.mxu0 0.0
        %6131 = vmatpush1.msra.mxu0 0.0
        %6132 = vmatprep.subr.mxu0 0.0
        %6133 = vmatpush1.msra.mxu0 0.0
        %6134 = vmatprep.subr.mxu0 0.0
        %6135 = vmatpush1.msra.mxu0 0.0
        %6136 = vmatprep.subr.mxu0 0.0
        %6137 = vmatpush1.msra.mxu0 0.0
        %6138 = vmatprep.mubr.f32.mxu0 0.0
        %6139 = vmatmul.mubr.f32.gmra.mrb[0].mxu0 %v5967
        %v6140 = vpop.f32.mrb[0].mxu0
        %v6141 = vadd.f32 0.0, %v6140
        %v6142 = vpop.f32.mrb[0].mxu0
        %6143 = vmatprep.mubr.f32.mxu0 0.0
        %6144 = vmatmul.mubr.f32.gmra.mrb[0].mxu0 %v5970
        %v6145 = vpop.f32.mrb[0].mxu0
        %v6146 = vadd.f32 0.0, %v6145
        %v6147 = vpop.f32.mrb[0].mxu0
        %6148 = vmatprep.mubr.f32.mxu0 0.0
        %6149 = vmatmul.mubr.f32.gmra.mrb[0].mxu0 %v5973
        %v6150 = vpop.f32.mrb[0].mxu0
        %v6151 = vadd.f32 0.0, %v6150
        %v6152 = vpop.f32.mrb[0].mxu0
        %6153 = vmatprep.mubr.f32.mxu0 0.0
        %6154 = vmatmul.mubr.f32.gmra.mrb[0].mxu0 %v5976
        %v6155 = vpop.f32.mrb[0].mxu0
        %v6156 = vadd.f32 0.0, %v6155
        %v6157 = vpop.f32.mrb[0].mxu0
        %6158 = vmatprep.mubr.f32.mxu0 0.0
        %6159 = vmatmul.mubr.f32.gmra.mrb[0].mxu0 %v5979
        %v6160 = vpop.f32.mrb[0].mxu0
        %v6161 = vadd.f32 0.0, %v6160
        %v6162 = vpop.f32.mrb[0].mxu0
        %6163 = vmatprep.mubr.f32.mxu0 0.0
        %6164 = vmatmul.mubr.f32.gmra.mrb[0].mxu0 %v5982
        %v6165 = vpop.f32.mrb[0].mxu0
        %v6166 = vadd.f32 0.0, %v6165
        %v6167 = vpop.f32.mrb[0].mxu0
        %6168 = vmatprep.mubr.f32.mxu0 0.0
        %6169 = vmatmul.mubr.f32.gmra.mrb[0].mxu0 %v5985
        %v6170 = vpop.f32.mrb[0].mxu0
        %v6171 = vadd.f32 0.0, %v6170
        %v6172 = vpop.f32.mrb[0].mxu0
        %6173 = vmatprep.mubr.f32.mxu0 0.0
        %6174 = vmatmul.mubr.f32.gmra.mrb[0].mxu0 %v5988
        %v6175 = vpop.f32.mrb[0].mxu0
        %v6176 = vadd.f32 0.0, %v6175
        %v6177 = vpop.f32.mrb[0].mxu0
        %6178 = vmatprep.mubr.f32.mxu0 0.0
        %6179 = vmatmul.mubr.f32.gmra.mrb[0].mxu0 %v5991
        %v6180 = vpop.f32.mrb[0].mxu0
        %v6181 = vadd.f32 0.0, %v6180
        %v6182 = vpop.f32.mrb[0].mxu0
        %6183 = vmatprep.mubr.f32.mxu0 0.0
        %6184 = vmatmul.mubr.f32.gmra.mrb[0].mxu0 %v5994
        %v6185 = vpop.f32.mrb[0].mxu0
        %v6186 = vadd.f32 0.0, %v6185
        %v6187 = vpop.f32.mrb[0].mxu0
        %6188 = vmatprep.mubr.f32.mxu0 0.0
        %6189 = vmatmul.mubr.f32.gmra.mrb[0].mxu0 %v5997
        %v6190 = vpop.f32.mrb[0].mxu0
        %v6191 = vadd.f32 0.0, %v6190
        %v6192 = vpop.f32.mrb[0].mxu0
        %6193 = vmatprep.mubr.f32.mxu0 0.0
        %6194 = vmatmul.mubr.f32.gmra.mrb[0].mxu0 %v6000
        %v6195 = vpop.f32.mrb[0].mxu0
        %v6196 = vadd.f32 0.0, %v6195
        %v6197 = vpop.f32.mrb[0].mxu0
        %6198 = vmatprep.mubr.f32.mxu0 0.0
        %6199 = vmatmul.mubr.f32.gmra.mrb[0].mxu0 %v6003
        %v6200 = vpop.f32.mrb[0].mxu0
        %v6201 = vadd.f32 0.0, %v6200
        %v6202 = vpop.f32.mrb[0].mxu0
        %6203 = vmatprep.mubr.f32.mxu0 0.0
        %6204 = vmatmul.mubr.f32.gmra.mrb[0].mxu0 %v6006
        %v6205 = vpop.f32.mrb[0].mxu0
        %v6206 = vadd.f32 0.0, %v6205
        %v6207 = vpop.f32.mrb[0].mxu0
        %6208 = vmatprep.mubr.f32.mxu0 0.0
        %6209 = vmatmul.mubr.f32.gmra.mrb[0].mxu0 %v6009
        %v6210 = vpop.f32.mrb[0].mxu0
        %v6211 = vadd.f32 0.0, %v6210
        %v6212 = vpop.f32.mrb[0].mxu0
        %6213 = vmatprep.mubr.f32.mxu0 0.0
        %6214 = vmatmul.mubr.f32.gmra.mrb[0].mxu0 %v6012
        %v6215 = vpop.f32.mrb[0].mxu0
        %v6216 = vadd.f32 0.0, %v6215
        %v6217 = vpop.f32.mrb[0].mxu0
        %6218 = vmatprep.mubr.f32.mxu0 0.0
        %6219 = vmatmul.mubr.f32.gmra.mrb[0].mxu0 %v6015
        %v6220 = vpop.f32.mrb[0].mxu0
        %v6221 = vadd.f32 0.0, %v6220
        %v6222 = vpop.f32.mrb[0].mxu0
        %6223 = vmatprep.mubr.f32.mxu0 0.0
        %6224 = vmatmul.mubr.f32.gmra.mrb[0].mxu0 %v6018
        %v6225 = vpop.f32.mrb[0].mxu0
        %v6226 = vadd.f32 0.0, %v6225
        %v6227 = vpop.f32.mrb[0].mxu0
        %6228 = vmatprep.mubr.f32.mxu0 0.0
        %6229 = vmatmul.mubr.f32.gmra.mrb[0].mxu0 %v6021
        %v6230 = vpop.f32.mrb[0].mxu0
        %v6231 = vadd.f32 0.0, %v6230
        %v6232 = vpop.f32.mrb[0].mxu0
        %6233 = vmatprep.mubr.f32.mxu0 0.0
        %6234 = vmatmul.mubr.f32.gmra.mrb[0].mxu0 %v6024
        %v6235 = vpop.f32.mrb[0].mxu0
        %v6236 = vadd.f32 0.0, %v6235
        %v6237 = vpop.f32.mrb[0].mxu0
        %6238 = vmatprep.mubr.f32.mxu0 0.0
        %6239 = vmatmul.mubr.f32.gmra.mrb[0].mxu0 %v6027
        %v6240 = vpop.f32.mrb[0].mxu0
        %v6241 = vadd.f32 0.0, %v6240
        %v6242 = vpop.f32.mrb[0].mxu0
        %6243 = vmatprep.mubr.f32.mxu0 0.0
        %6244 = vmatmul.mubr.f32.gmra.mrb[0].mxu0 %v6030
        %v6245 = vpop.f32.mrb[0].mxu0
        %v6246 = vadd.f32 0.0, %v6245
        %v6247 = vpop.f32.mrb[0].mxu0
        %6248 = vmatprep.mubr.f32.mxu0 0.0
        %6249 = vmatmul.mubr.f32.gmra.mrb[0].mxu0 %v6033
        %v6250 = vpop.f32.mrb[0].mxu0
        %v6251 = vadd.f32 0.0, %v6250
        %v6252 = vpop.f32.mrb[0].mxu0
        %6253 = vmatprep.mubr.f32.mxu0 0.0
        %6254 = vmatmul.mubr.f32.gmra.mrb[0].mxu0 %v6036
        %v6255 = vpop.f32.mrb[0].mxu0
        %v6256 = vadd.f32 0.0, %v6255
        %v6257 = vpop.f32.mrb[0].mxu0
        %6258 = vmatprep.mubr.f32.mxu0 0.0
        %6259 = vmatmul.mubr.f32.gmra.mrb[0].mxu0 %v6039
        %v6260 = vpop.f32.mrb[0].mxu0
        %v6261 = vadd.f32 0.0, %v6260
        %v6262 = vpop.f32.mrb[0].mxu0
        %6263 = vmatprep.mubr.f32.mxu0 0.0
        %6264 = vmatmul.mubr.f32.gmra.mrb[0].mxu0 %v6042
        %v6265 = vpop.f32.mrb[0].mxu0
        %v6266 = vadd.f32 0.0, %v6265
        %v6267 = vpop.f32.mrb[0].mxu0
        %6268 = vmatprep.mubr.f32.mxu0 0.0
        %6269 = vmatmul.mubr.f32.gmra.mrb[0].mxu0 %v6045
        %v6270 = vpop.f32.mrb[0].mxu0
        %v6271 = vadd.f32 0.0, %v6270
        %v6272 = vpop.f32.mrb[0].mxu0
        %6273 = vmatprep.mubr.f32.mxu0 0.0
        %6274 = vmatmul.mubr.f32.gmra.mrb[0].mxu0 %v6048
        %v6275 = vpop.f32.mrb[0].mxu0
        %v6276 = vadd.f32 0.0, %v6275
        %v6277 = vpop.f32.mrb[0].mxu0
        %6278 = vmatprep.mubr.f32.mxu0 0.0
        %6279 = vmatmul.mubr.f32.gmra.mrb[0].mxu0 %v6051
        %v6280 = vpop.f32.mrb[0].mxu0
        %v6281 = vadd.f32 0.0, %v6280
        %v6282 = vpop.f32.mrb[0].mxu0
        %6283 = vmatprep.mubr.f32.mxu0 0.0
        %6284 = vmatmul.mubr.f32.gmra.mrb[0].mxu0 %v6054
        %v6285 = vpop.f32.mrb[0].mxu0
        %v6286 = vadd.f32 0.0, %v6285
        %v6287 = vpop.f32.mrb[0].mxu0
        %6288 = vmatprep.mubr.f32.mxu0 0.0
        %6289 = vmatmul.mubr.f32.gmra.mrb[0].mxu0 %v6057
        %v6290 = vpop.f32.mrb[0].mxu0
        %v6291 = vadd.f32 0.0, %v6290
        %v6292 = vpop.f32.mrb[0].mxu0
        %6293 = vmatprep.mubr.f32.mxu0 0.0
        %6294 = vmatmul.mubr.f32.gmra.mrb[0].mxu0 %v6060
        %v6295 = vpop.f32.mrb[0].mxu0
        %v6296 = vadd.f32 0.0, %v6295
        %v6297 = vpop.f32.mrb[0].mxu0
        %6298 = vmatprep.mubr.f32.mxu0 0.0
        %6299 = vmatmul.mubr.f32.gmra.mrb[0].mxu0 %v6063
        %v6300 = vpop.f32.mrb[0].mxu0
        %v6301 = vadd.f32 0.0, %v6300
        %v6302 = vpop.f32.mrb[0].mxu0
        %6303 = vmatprep.mubr.f32.mxu0 0.0
        %6304 = vmatmul.mubr.f32.gmra.mrb[0].mxu0 %v6066
        %v6305 = vpop.f32.mrb[0].mxu0
        %v6306 = vadd.f32 0.0, %v6305
        %v6307 = vpop.f32.mrb[0].mxu0
        %6308 = vmatprep.mubr.f32.mxu0 0.0
        %6309 = vmatmul.mubr.f32.gmra.mrb[0].mxu0 %v6069
        %v6310 = vpop.f32.mrb[0].mxu0
        %v6311 = vadd.f32 0.0, %v6310
        %v6312 = vpop.f32.mrb[0].mxu0
        %6313 = vmatprep.mubr.f32.mxu0 0.0
        %6314 = vmatmul.mubr.f32.gmra.mrb[0].mxu0 %v6072
        %v6315 = vpop.f32.mrb[0].mxu0
        %v6316 = vadd.f32 0.0, %v6315
        %v6317 = vpop.f32.mrb[0].mxu0
        %6318 = vdwg.mxu0
        %v6319 = vadd.f32 %v5892, %v6141
        %v6320 = vadd.f32 %v5893, %v6146
        %v6321 = vadd.f32 %v5894, %v6151
        %v6322 = vadd.f32 %v5895, %v6156
        %v6323 = vadd.f32 %v5896, %v6161
        %v6324 = vadd.f32 %v5897, %v6166
        %v6325 = vadd.f32 %v5898, %v6171
        %v6326 = vadd.f32 %v5899, %v6176
        %v6327 = vadd.f32 %v5900, %v6181
        %v6328 = vadd.f32 %v5901, %v6186
        %v6329 = vadd.f32 %v5902, %v6191
        %v6330 = vadd.f32 %v5903, %v6196
        %v6331 = vadd.f32 %v5904, %v6201
        %v6332 = vadd.f32 %v5905, %v6206
        %v6333 = vadd.f32 %v5906, %v6211
        %v6334 = vadd.f32 %v5907, %v6216
        %v6335 = vadd.f32 %v5908, %v6221
        %v6336 = vadd.f32 %v5909, %v6226
        %v6337 = vadd.f32 %v5910, %v6231
        %v6338 = vadd.f32 %v5911, %v6236
        %v6339 = vadd.f32 %v5912, %v6241
        %v6340 = vadd.f32 %v5913, %v6246
        %v6341 = vadd.f32 %v5914, %v6251
        %v6342 = vadd.f32 %v5915, %v6256
        %v6343 = vadd.f32 %v5916, %v6261
        %v6344 = vadd.f32 %v5917, %v6266
        %v6345 = vadd.f32 %v5918, %v6271
        %v6346 = vadd.f32 %v5919, %v6276
        %v6347 = vadd.f32 %v5920, %v6281
        %v6348 = vadd.f32 %v5921, %v6286
        %v6349 = vadd.f32 %v5922, %v6291
        %v6350 = vadd.f32 %v5923, %v6296
        %v6351 = vadd.f32 %v5924, %v6301
        %v6352 = vadd.f32 %v5925, %v6306
        %v6353 = vadd.f32 %v5926, %v6311
        %v6354 = vadd.f32 %v5927, %v6316
        %v6355 = vld [vmem:[#allocation2 + $0x18] sm:$0xff]
        %v6356 = vld [vmem:[#allocation2 + $0x20] sm:$0xff]
        %v6357 = vld [vmem:[#allocation2 + $0x28] sm:$0xff]
        %v6358 = vld [vmem:[#allocation2 + $0x30] sm:$0xff]
        %v6359 = vld [vmem:[#allocation2 + $0x38] sm:$0xff]
        %v6360 = vld [vmem:[#allocation2 + $0x40] sm:$0xff]
        %v6361 = vld [vmem:[#allocation2 + $0x48] sm:$0xff]
        %v6362 = vld [vmem:[#allocation2 + $0x50] sm:$0xff]
        %v6363 = vld [vmem:[#allocation2 + $0x58] sm:$0xff]
        %v6364 = vld [vmem:[#allocation2 + $0x60] sm:$0xff]
        %v6365 = vld [vmem:[#allocation2 + $0x68] sm:$0xff]
        %v6366 = vld [vmem:[#allocation2 + $0x70] sm:$0xff]
        %v6367 = vld [vmem:[#allocation2 + $0x78] sm:$0xff]
        %v6368 = vld [vmem:[#allocation2 + $0x80] sm:$0xff]
        %v6369 = vld [vmem:[#allocation2 + $0x88] sm:$0xff]
        %v6370 = vld [vmem:[#allocation2 + $0x90] sm:$0xff]
        %v6371 = vld [vmem:[#allocation2 + $0x98] sm:$0xff]
        %v6372 = vld [vmem:[#allocation2 + $0xa0] sm:$0xff]
        %v6373 = vld [vmem:[#allocation2 + $0xa8] sm:$0xff]
        %v6374 = vld [vmem:[#allocation2 + $0xb0] sm:$0xff]
        %v6375 = vld [vmem:[#allocation2 + $0xb8] sm:$0xff]
        %v6376 = vld [vmem:[#allocation2 + $0xc0] sm:$0xff]
        %v6377 = vld [vmem:[#allocation2 + $0xc8] sm:$0xff]
        %v6378 = vld [vmem:[#allocation2 + $0xd0] sm:$0xff]
        %v6379 = vld [vmem:[#allocation2 + $0xd8] sm:$0xff]
        %v6380 = vld [vmem:[#allocation2 + $0xe0] sm:$0xff]
        %v6381 = vld [vmem:[#allocation2 + $0xe8] sm:$0xff]
        %v6382 = vld [vmem:[#allocation2 + $0xf0] sm:$0xff]
        %v6383 = vld [vmem:[#allocation2 + $0xf8] sm:$0xff]
        %v6384 = vld [vmem:[#allocation2 + $0x100] sm:$0xff]
        %v6385 = vld [vmem:[#allocation2 + $0x108] sm:$0xff]
        %v6386 = vld [vmem:[#allocation2 + $0x110] sm:$0xff]
        %v6387 = vld [vmem:[#allocation2 + $0x118] sm:$0xff]
        %v6388 = vld [vmem:[#allocation2 + $0x120] sm:$0xff]
        %v6389 = vld [vmem:[#allocation2 + $0x128] sm:$0xff]
        %v6390 = vld [vmem:[#allocation2 + $0x130] sm:$0xff]
        %s6391 = scalar_lea.vmem %s4, 32
        %v6392 = vld [vmem:[%s6391] sm:$0xff]
        %v6394 = vsel %vm506, %v6355, 0
        %v6397 = vsel %vm506, %v6356, 0
        %v6400 = vsel %vm506, %v6357, 0
        %v6403 = vsel %vm506, %v6358, 0
        %v6406 = vsel %vm506, %v6359, 0
        %v6409 = vsel %vm506, %v6360, 0
        %v6412 = vsel %vm506, %v6361, 0
        %v6415 = vsel %vm506, %v6362, 0
        %v6418 = vsel %vm506, %v6363, 0
        %v6421 = vsel %vm506, %v6364, 0
        %v6424 = vsel %vm506, %v6365, 0
        %v6427 = vsel %vm506, %v6366, 0
        %v6430 = vsel %vm506, %v6367, 0
        %v6433 = vsel %vm506, %v6368, 0
        %v6436 = vsel %vm506, %v6369, 0
        %v6439 = vsel %vm506, %v6370, 0
        %v6442 = vsel %vm506, %v6371, 0
        %v6445 = vsel %vm506, %v6372, 0
        %v6448 = vsel %vm506, %v6373, 0
        %v6451 = vsel %vm506, %v6374, 0
        %v6454 = vsel %vm506, %v6375, 0
        %v6457 = vsel %vm506, %v6376, 0
        %v6460 = vsel %vm506, %v6377, 0
        %v6463 = vsel %vm506, %v6378, 0
        %v6466 = vsel %vm506, %v6379, 0
        %v6469 = vsel %vm506, %v6380, 0
        %v6472 = vsel %vm506, %v6381, 0
        %v6475 = vsel %vm506, %v6382, 0
        %v6478 = vsel %vm506, %v6383, 0
        %v6481 = vsel %vm506, %v6384, 0
        %v6484 = vsel %vm506, %v6385, 0
        %v6487 = vsel %vm506, %v6386, 0
        %v6490 = vsel %vm506, %v6387, 0
        %v6493 = vsel %vm506, %v6388, 0
        %v6496 = vsel %vm506, %v6389, 0
        %v6499 = vsel %vm506, %v6390, 0
        %6501 = vmatprep.subr.mxu0 0.0
        %6502 = vmatpush1.msra.mxu0 %v6392
        %6503 = vmatprep.subr.mxu0 0.0
        %6504 = vmatpush1.msra.mxu0 0.0
        %6505 = vmatprep.subr.mxu0 0.0
        %6506 = vmatpush1.msra.mxu0 0.0
        %6507 = vmatprep.subr.mxu0 0.0
        %6508 = vmatpush1.msra.mxu0 0.0
        %6509 = vmatprep.subr.mxu0 0.0
        %6510 = vmatpush1.msra.mxu0 0.0
        %6511 = vmatprep.subr.mxu0 0.0
        %6512 = vmatpush1.msra.mxu0 0.0
        %6513 = vmatprep.subr.mxu0 0.0
        %6514 = vmatpush1.msra.mxu0 0.0
        %6515 = vmatprep.subr.mxu0 0.0
        %6516 = vmatpush1.msra.mxu0 0.0
        %6517 = vmatprep.subr.mxu0 0.0
        %6518 = vmatpush1.msra.mxu0 0.0
        %6519 = vmatprep.subr.mxu0 0.0
        %6520 = vmatpush1.msra.mxu0 0.0
        %6521 = vmatprep.subr.mxu0 0.0
        %6522 = vmatpush1.msra.mxu0 0.0
        %6523 = vmatprep.subr.mxu0 0.0
        %6524 = vmatpush1.msra.mxu0 0.0
        %6525 = vmatprep.subr.mxu0 0.0
        %6526 = vmatpush1.msra.mxu0 0.0
        %6527 = vmatprep.subr.mxu0 0.0
        %6528 = vmatpush1.msra.mxu0 0.0
        %6529 = vmatprep.subr.mxu0 0.0
        %6530 = vmatpush1.msra.mxu0 0.0
        %6531 = vmatprep.subr.mxu0 0.0
        %6532 = vmatpush1.msra.mxu0 0.0
        %6533 = vmatprep.subr.mxu0 0.0
        %6534 = vmatpush1.msra.mxu0 0.0
        %6535 = vmatprep.subr.mxu0 0.0
        %6536 = vmatpush1.msra.mxu0 0.0
        %6537 = vmatprep.subr.mxu0 0.0
        %6538 = vmatpush1.msra.mxu0 0.0
        %6539 = vmatprep.subr.mxu0 0.0
        %6540 = vmatpush1.msra.mxu0 0.0
        %6541 = vmatprep.subr.mxu0 0.0
        %6542 = vmatpush1.msra.mxu0 0.0
        %6543 = vmatprep.subr.mxu0 0.0
        %6544 = vmatpush1.msra.mxu0 0.0
        %6545 = vmatprep.subr.mxu0 0.0
        %6546 = vmatpush1.msra.mxu0 0.0
        %6547 = vmatprep.subr.mxu0 0.0
        %6548 = vmatpush1.msra.mxu0 0.0
        %6549 = vmatprep.subr.mxu0 0.0
        %6550 = vmatpush1.msra.mxu0 0.0
        %6551 = vmatprep.subr.mxu0 0.0
        %6552 = vmatpush1.msra.mxu0 0.0
        %6553 = vmatprep.subr.mxu0 0.0
        %6554 = vmatpush1.msra.mxu0 0.0
        %6555 = vmatprep.subr.mxu0 0.0
        %6556 = vmatpush1.msra.mxu0 0.0
        %6557 = vmatprep.subr.mxu0 0.0
        %6558 = vmatpush1.msra.mxu0 0.0
        %6559 = vmatprep.subr.mxu0 0.0
        %6560 = vmatpush1.msra.mxu0 0.0
        %6561 = vmatprep.subr.mxu0 0.0
        %6562 = vmatpush1.msra.mxu0 0.0
        %6563 = vmatprep.subr.mxu0 0.0
        %6564 = vmatpush1.msra.mxu0 0.0
        %6565 = vmatprep.mubr.f32.mxu0 0.0
        %6566 = vmatmul.mubr.f32.gmra.mrb[0].mxu0 %v6394
        %v6567 = vpop.f32.mrb[0].mxu0
        %v6568 = vadd.f32 0.0, %v6567
        %v6569 = vpop.f32.mrb[0].mxu0
        %6570 = vmatprep.mubr.f32.mxu0 0.0
        %6571 = vmatmul.mubr.f32.gmra.mrb[0].mxu0 %v6397
        %v6572 = vpop.f32.mrb[0].mxu0
        %v6573 = vadd.f32 0.0, %v6572
        %v6574 = vpop.f32.mrb[0].mxu0
        %6575 = vmatprep.mubr.f32.mxu0 0.0
        %6576 = vmatmul.mubr.f32.gmra.mrb[0].mxu0 %v6400
        %v6577 = vpop.f32.mrb[0].mxu0
        %v6578 = vadd.f32 0.0, %v6577
        %v6579 = vpop.f32.mrb[0].mxu0
        %6580 = vmatprep.mubr.f32.mxu0 0.0
        %6581 = vmatmul.mubr.f32.gmra.mrb[0].mxu0 %v6403
        %v6582 = vpop.f32.mrb[0].mxu0
        %v6583 = vadd.f32 0.0, %v6582
        %v6584 = vpop.f32.mrb[0].mxu0
        %6585 = vmatprep.mubr.f32.mxu0 0.0
        %6586 = vmatmul.mubr.f32.gmra.mrb[0].mxu0 %v6406
        %v6587 = vpop.f32.mrb[0].mxu0
        %v6588 = vadd.f32 0.0, %v6587
        %v6589 = vpop.f32.mrb[0].mxu0
        %6590 = vmatprep.mubr.f32.mxu0 0.0
        %6591 = vmatmul.mubr.f32.gmra.mrb[0].mxu0 %v6409
        %v6592 = vpop.f32.mrb[0].mxu0
        %v6593 = vadd.f32 0.0, %v6592
        %v6594 = vpop.f32.mrb[0].mxu0
        %6595 = vmatprep.mubr.f32.mxu0 0.0
        %6596 = vmatmul.mubr.f32.gmra.mrb[0].mxu0 %v6412
        %v6597 = vpop.f32.mrb[0].mxu0
        %v6598 = vadd.f32 0.0, %v6597
        %v6599 = vpop.f32.mrb[0].mxu0
        %6600 = vmatprep.mubr.f32.mxu0 0.0
        %6601 = vmatmul.mubr.f32.gmra.mrb[0].mxu0 %v6415
        %v6602 = vpop.f32.mrb[0].mxu0
        %v6603 = vadd.f32 0.0, %v6602
        %v6604 = vpop.f32.mrb[0].mxu0
        %6605 = vmatprep.mubr.f32.mxu0 0.0
        %6606 = vmatmul.mubr.f32.gmra.mrb[0].mxu0 %v6418
        %v6607 = vpop.f32.mrb[0].mxu0
        %v6608 = vadd.f32 0.0, %v6607
        %v6609 = vpop.f32.mrb[0].mxu0
        %6610 = vmatprep.mubr.f32.mxu0 0.0
        %6611 = vmatmul.mubr.f32.gmra.mrb[0].mxu0 %v6421
        %v6612 = vpop.f32.mrb[0].mxu0
        %v6613 = vadd.f32 0.0, %v6612
        %v6614 = vpop.f32.mrb[0].mxu0
        %6615 = vmatprep.mubr.f32.mxu0 0.0
        %6616 = vmatmul.mubr.f32.gmra.mrb[0].mxu0 %v6424
        %v6617 = vpop.f32.mrb[0].mxu0
        %v6618 = vadd.f32 0.0, %v6617
        %v6619 = vpop.f32.mrb[0].mxu0
        %6620 = vmatprep.mubr.f32.mxu0 0.0
        %6621 = vmatmul.mubr.f32.gmra.mrb[0].mxu0 %v6427
        %v6622 = vpop.f32.mrb[0].mxu0
        %v6623 = vadd.f32 0.0, %v6622
        %v6624 = vpop.f32.mrb[0].mxu0
        %6625 = vmatprep.mubr.f32.mxu0 0.0
        %6626 = vmatmul.mubr.f32.gmra.mrb[0].mxu0 %v6430
        %v6627 = vpop.f32.mrb[0].mxu0
        %v6628 = vadd.f32 0.0, %v6627
        %v6629 = vpop.f32.mrb[0].mxu0
        %6630 = vmatprep.mubr.f32.mxu0 0.0
        %6631 = vmatmul.mubr.f32.gmra.mrb[0].mxu0 %v6433
        %v6632 = vpop.f32.mrb[0].mxu0
        %v6633 = vadd.f32 0.0, %v6632
        %v6634 = vpop.f32.mrb[0].mxu0
        %6635 = vmatprep.mubr.f32.mxu0 0.0
        %6636 = vmatmul.mubr.f32.gmra.mrb[0].mxu0 %v6436
        %v6637 = vpop.f32.mrb[0].mxu0
        %v6638 = vadd.f32 0.0, %v6637
        %v6639 = vpop.f32.mrb[0].mxu0
        %6640 = vmatprep.mubr.f32.mxu0 0.0
        %6641 = vmatmul.mubr.f32.gmra.mrb[0].mxu0 %v6439
        %v6642 = vpop.f32.mrb[0].mxu0
        %v6643 = vadd.f32 0.0, %v6642
        %v6644 = vpop.f32.mrb[0].mxu0
        %6645 = vmatprep.mubr.f32.mxu0 0.0
        %6646 = vmatmul.mubr.f32.gmra.mrb[0].mxu0 %v6442
        %v6647 = vpop.f32.mrb[0].mxu0
        %v6648 = vadd.f32 0.0, %v6647
        %v6649 = vpop.f32.mrb[0].mxu0
        %6650 = vmatprep.mubr.f32.mxu0 0.0
        %6651 = vmatmul.mubr.f32.gmra.mrb[0].mxu0 %v6445
        %v6652 = vpop.f32.mrb[0].mxu0
        %v6653 = vadd.f32 0.0, %v6652
        %v6654 = vpop.f32.mrb[0].mxu0
        %6655 = vmatprep.mubr.f32.mxu0 0.0
        %6656 = vmatmul.mubr.f32.gmra.mrb[0].mxu0 %v6448
        %v6657 = vpop.f32.mrb[0].mxu0
        %v6658 = vadd.f32 0.0, %v6657
        %v6659 = vpop.f32.mrb[0].mxu0
        %6660 = vmatprep.mubr.f32.mxu0 0.0
        %6661 = vmatmul.mubr.f32.gmra.mrb[0].mxu0 %v6451
        %v6662 = vpop.f32.mrb[0].mxu0
        %v6663 = vadd.f32 0.0, %v6662
        %v6664 = vpop.f32.mrb[0].mxu0
        %6665 = vmatprep.mubr.f32.mxu0 0.0
        %6666 = vmatmul.mubr.f32.gmra.mrb[0].mxu0 %v6454
        %v6667 = vpop.f32.mrb[0].mxu0
        %v6668 = vadd.f32 0.0, %v6667
        %v6669 = vpop.f32.mrb[0].mxu0
        %6670 = vmatprep.mubr.f32.mxu0 0.0
        %6671 = vmatmul.mubr.f32.gmra.mrb[0].mxu0 %v6457
        %v6672 = vpop.f32.mrb[0].mxu0
        %v6673 = vadd.f32 0.0, %v6672
        %v6674 = vpop.f32.mrb[0].mxu0
        %6675 = vmatprep.mubr.f32.mxu0 0.0
        %6676 = vmatmul.mubr.f32.gmra.mrb[0].mxu0 %v6460
        %v6677 = vpop.f32.mrb[0].mxu0
        %v6678 = vadd.f32 0.0, %v6677
        %v6679 = vpop.f32.mrb[0].mxu0
        %6680 = vmatprep.mubr.f32.mxu0 0.0
        %6681 = vmatmul.mubr.f32.gmra.mrb[0].mxu0 %v6463
        %v6682 = vpop.f32.mrb[0].mxu0
        %v6683 = vadd.f32 0.0, %v6682
        %v6684 = vpop.f32.mrb[0].mxu0
        %6685 = vmatprep.mubr.f32.mxu0 0.0
        %6686 = vmatmul.mubr.f32.gmra.mrb[0].mxu0 %v6466
        %v6687 = vpop.f32.mrb[0].mxu0
        %v6688 = vadd.f32 0.0, %v6687
        %v6689 = vpop.f32.mrb[0].mxu0
        %6690 = vmatprep.mubr.f32.mxu0 0.0
        %6691 = vmatmul.mubr.f32.gmra.mrb[0].mxu0 %v6469
        %v6692 = vpop.f32.mrb[0].mxu0
        %v6693 = vadd.f32 0.0, %v6692
        %v6694 = vpop.f32.mrb[0].mxu0
        %6695 = vmatprep.mubr.f32.mxu0 0.0
        %6696 = vmatmul.mubr.f32.gmra.mrb[0].mxu0 %v6472
        %v6697 = vpop.f32.mrb[0].mxu0
        %v6698 = vadd.f32 0.0, %v6697
        %v6699 = vpop.f32.mrb[0].mxu0
        %6700 = vmatprep.mubr.f32.mxu0 0.0
        %6701 = vmatmul.mubr.f32.gmra.mrb[0].mxu0 %v6475
        %v6702 = vpop.f32.mrb[0].mxu0
        %v6703 = vadd.f32 0.0, %v6702
        %v6704 = vpop.f32.mrb[0].mxu0
        %6705 = vmatprep.mubr.f32.mxu0 0.0
        %6706 = vmatmul.mubr.f32.gmra.mrb[0].mxu0 %v6478
        %v6707 = vpop.f32.mrb[0].mxu0
        %v6708 = vadd.f32 0.0, %v6707
        %v6709 = vpop.f32.mrb[0].mxu0
        %6710 = vmatprep.mubr.f32.mxu0 0.0
        %6711 = vmatmul.mubr.f32.gmra.mrb[0].mxu0 %v6481
        %v6712 = vpop.f32.mrb[0].mxu0
        %v6713 = vadd.f32 0.0, %v6712
        %v6714 = vpop.f32.mrb[0].mxu0
        %6715 = vmatprep.mubr.f32.mxu0 0.0
        %6716 = vmatmul.mubr.f32.gmra.mrb[0].mxu0 %v6484
        %v6717 = vpop.f32.mrb[0].mxu0
        %v6718 = vadd.f32 0.0, %v6717
        %v6719 = vpop.f32.mrb[0].mxu0
        %6720 = vmatprep.mubr.f32.mxu0 0.0
        %6721 = vmatmul.mubr.f32.gmra.mrb[0].mxu0 %v6487
        %v6722 = vpop.f32.mrb[0].mxu0
        %v6723 = vadd.f32 0.0, %v6722
        %v6724 = vpop.f32.mrb[0].mxu0
        %6725 = vmatprep.mubr.f32.mxu0 0.0
        %6726 = vmatmul.mubr.f32.gmra.mrb[0].mxu0 %v6490
        %v6727 = vpop.f32.mrb[0].mxu0
        %v6728 = vadd.f32 0.0, %v6727
        %v6729 = vpop.f32.mrb[0].mxu0
        %6730 = vmatprep.mubr.f32.mxu0 0.0
        %6731 = vmatmul.mubr.f32.gmra.mrb[0].mxu0 %v6493
        %v6732 = vpop.f32.mrb[0].mxu0
        %v6733 = vadd.f32 0.0, %v6732
        %v6734 = vpop.f32.mrb[0].mxu0
        %6735 = vmatprep.mubr.f32.mxu0 0.0
        %6736 = vmatmul.mubr.f32.gmra.mrb[0].mxu0 %v6496
        %v6737 = vpop.f32.mrb[0].mxu0
        %v6738 = vadd.f32 0.0, %v6737
        %v6739 = vpop.f32.mrb[0].mxu0
        %6740 = vmatprep.mubr.f32.mxu0 0.0
        %6741 = vmatmul.mubr.f32.gmra.mrb[0].mxu0 %v6499
        %v6742 = vpop.f32.mrb[0].mxu0
        %v6743 = vadd.f32 0.0, %v6742
        %v6744 = vpop.f32.mrb[0].mxu0
        %6745 = vdwg.mxu0
        %v6746 = vadd.f32 %v6319, %v6568
        %v6747 = vadd.f32 %v6320, %v6573
        %v6748 = vadd.f32 %v6321, %v6578
        %v6749 = vadd.f32 %v6322, %v6583
        %v6750 = vadd.f32 %v6323, %v6588
        %v6751 = vadd.f32 %v6324, %v6593
        %v6752 = vadd.f32 %v6325, %v6598
        %v6753 = vadd.f32 %v6326, %v6603
        %v6754 = vadd.f32 %v6327, %v6608
        %v6755 = vadd.f32 %v6328, %v6613
        %v6756 = vadd.f32 %v6329, %v6618
        %v6757 = vadd.f32 %v6330, %v6623
        %v6758 = vadd.f32 %v6331, %v6628
        %v6759 = vadd.f32 %v6332, %v6633
        %v6760 = vadd.f32 %v6333, %v6638
        %v6761 = vadd.f32 %v6334, %v6643
        %v6762 = vadd.f32 %v6335, %v6648
        %v6763 = vadd.f32 %v6336, %v6653
        %v6764 = vadd.f32 %v6337, %v6658
        %v6765 = vadd.f32 %v6338, %v6663
        %v6766 = vadd.f32 %v6339, %v6668
        %v6767 = vadd.f32 %v6340, %v6673
        %v6768 = vadd.f32 %v6341, %v6678
        %v6769 = vadd.f32 %v6342, %v6683
        %v6770 = vadd.f32 %v6343, %v6688
        %v6771 = vadd.f32 %v6344, %v6693
        %v6772 = vadd.f32 %v6345, %v6698
        %v6773 = vadd.f32 %v6346, %v6703
        %v6774 = vadd.f32 %v6347, %v6708
        %v6775 = vadd.f32 %v6348, %v6713
        %v6776 = vadd.f32 %v6349, %v6718
        %v6777 = vadd.f32 %v6350, %v6723
        %v6778 = vadd.f32 %v6351, %v6728
        %v6779 = vadd.f32 %v6352, %v6733
        %v6780 = vadd.f32 %v6353, %v6738
        %v6781 = vadd.f32 %v6354, %v6743
        %v6782 = vld [vmem:[#allocation2 + $0x19] sm:$0xff]
        %v6783 = vld [vmem:[#allocation2 + $0x21] sm:$0xff]
        %v6784 = vld [vmem:[#allocation2 + $0x29] sm:$0xff]
        %v6785 = vld [vmem:[#allocation2 + $0x31] sm:$0xff]
        %v6786 = vld [vmem:[#allocation2 + $0x39] sm:$0xff]
        %v6787 = vld [vmem:[#allocation2 + $0x41] sm:$0xff]
        %v6788 = vld [vmem:[#allocation2 + $0x49] sm:$0xff]
        %v6789 = vld [vmem:[#allocation2 + $0x51] sm:$0xff]
        %v6790 = vld [vmem:[#allocation2 + $0x59] sm:$0xff]
        %v6791 = vld [vmem:[#allocation2 + $0x61] sm:$0xff]
        %v6792 = vld [vmem:[#allocation2 + $0x69] sm:$0xff]
        %v6793 = vld [vmem:[#allocation2 + $0x71] sm:$0xff]
        %v6794 = vld [vmem:[#allocation2 + $0x79] sm:$0xff]
        %v6795 = vld [vmem:[#allocation2 + $0x81] sm:$0xff]
        %v6796 = vld [vmem:[#allocation2 + $0x89] sm:$0xff]
        %v6797 = vld [vmem:[#allocation2 + $0x91] sm:$0xff]
        %v6798 = vld [vmem:[#allocation2 + $0x99] sm:$0xff]
        %v6799 = vld [vmem:[#allocation2 + $0xa1] sm:$0xff]
        %v6800 = vld [vmem:[#allocation2 + $0xa9] sm:$0xff]
        %v6801 = vld [vmem:[#allocation2 + $0xb1] sm:$0xff]
        %v6802 = vld [vmem:[#allocation2 + $0xb9] sm:$0xff]
        %v6803 = vld [vmem:[#allocation2 + $0xc1] sm:$0xff]
        %v6804 = vld [vmem:[#allocation2 + $0xc9] sm:$0xff]
        %v6805 = vld [vmem:[#allocation2 + $0xd1] sm:$0xff]
        %v6806 = vld [vmem:[#allocation2 + $0xd9] sm:$0xff]
        %v6807 = vld [vmem:[#allocation2 + $0xe1] sm:$0xff]
        %v6808 = vld [vmem:[#allocation2 + $0xe9] sm:$0xff]
        %v6809 = vld [vmem:[#allocation2 + $0xf1] sm:$0xff]
        %v6810 = vld [vmem:[#allocation2 + $0xf9] sm:$0xff]
        %v6811 = vld [vmem:[#allocation2 + $0x101] sm:$0xff]
        %v6812 = vld [vmem:[#allocation2 + $0x109] sm:$0xff]
        %v6813 = vld [vmem:[#allocation2 + $0x111] sm:$0xff]
        %v6814 = vld [vmem:[#allocation2 + $0x119] sm:$0xff]
        %v6815 = vld [vmem:[#allocation2 + $0x121] sm:$0xff]
        %v6816 = vld [vmem:[#allocation2 + $0x129] sm:$0xff]
        %v6817 = vld [vmem:[#allocation2 + $0x131] sm:$0xff]
        %s6818 = scalar_lea.vmem %s4, 40
        %v6819 = vld [vmem:[%s6818] sm:$0xff]
        %v6821 = vsel %vm506, %v6782, 0
        %v6824 = vsel %vm506, %v6783, 0
        %v6827 = vsel %vm506, %v6784, 0
        %v6830 = vsel %vm506, %v6785, 0
        %v6833 = vsel %vm506, %v6786, 0
        %v6836 = vsel %vm506, %v6787, 0
        %v6839 = vsel %vm506, %v6788, 0
        %v6842 = vsel %vm506, %v6789, 0
        %v6845 = vsel %vm506, %v6790, 0
        %v6848 = vsel %vm506, %v6791, 0
        %v6851 = vsel %vm506, %v6792, 0
        %v6854 = vsel %vm506, %v6793, 0
        %v6857 = vsel %vm506, %v6794, 0
        %v6860 = vsel %vm506, %v6795, 0
        %v6863 = vsel %vm506, %v6796, 0
        %v6866 = vsel %vm506, %v6797, 0
        %v6869 = vsel %vm506, %v6798, 0
        %v6872 = vsel %vm506, %v6799, 0
        %v6875 = vsel %vm506, %v6800, 0
        %v6878 = vsel %vm506, %v6801, 0
        %v6881 = vsel %vm506, %v6802, 0
        %v6884 = vsel %vm506, %v6803, 0
        %v6887 = vsel %vm506, %v6804, 0
        %v6890 = vsel %vm506, %v6805, 0
        %v6893 = vsel %vm506, %v6806, 0
        %v6896 = vsel %vm506, %v6807, 0
        %v6899 = vsel %vm506, %v6808, 0
        %v6902 = vsel %vm506, %v6809, 0
        %v6905 = vsel %vm506, %v6810, 0
        %v6908 = vsel %vm506, %v6811, 0
        %v6911 = vsel %vm506, %v6812, 0
        %v6914 = vsel %vm506, %v6813, 0
        %v6917 = vsel %vm506, %v6814, 0
        %v6920 = vsel %vm506, %v6815, 0
        %v6923 = vsel %vm506, %v6816, 0
        %v6926 = vsel %vm506, %v6817, 0
        %6928 = vmatprep.subr.mxu0 0.0
        %6929 = vmatpush1.msra.mxu0 %v6819
        %6930 = vmatprep.subr.mxu0 0.0
        %6931 = vmatpush1.msra.mxu0 0.0
        %6932 = vmatprep.subr.mxu0 0.0
        %6933 = vmatpush1.msra.mxu0 0.0
        %6934 = vmatprep.subr.mxu0 0.0
        %6935 = vmatpush1.msra.mxu0 0.0
        %6936 = vmatprep.subr.mxu0 0.0
        %6937 = vmatpush1.msra.mxu0 0.0
        %6938 = vmatprep.subr.mxu0 0.0
        %6939 = vmatpush1.msra.mxu0 0.0
        %6940 = vmatprep.subr.mxu0 0.0
        %6941 = vmatpush1.msra.mxu0 0.0
        %6942 = vmatprep.subr.mxu0 0.0
        %6943 = vmatpush1.msra.mxu0 0.0
        %6944 = vmatprep.subr.mxu0 0.0
        %6945 = vmatpush1.msra.mxu0 0.0
        %6946 = vmatprep.subr.mxu0 0.0
        %6947 = vmatpush1.msra.mxu0 0.0
        %6948 = vmatprep.subr.mxu0 0.0
        %6949 = vmatpush1.msra.mxu0 0.0
        %6950 = vmatprep.subr.mxu0 0.0
        %6951 = vmatpush1.msra.mxu0 0.0
        %6952 = vmatprep.subr.mxu0 0.0
        %6953 = vmatpush1.msra.mxu0 0.0
        %6954 = vmatprep.subr.mxu0 0.0
        %6955 = vmatpush1.msra.mxu0 0.0
        %6956 = vmatprep.subr.mxu0 0.0
        %6957 = vmatpush1.msra.mxu0 0.0
        %6958 = vmatprep.subr.mxu0 0.0
        %6959 = vmatpush1.msra.mxu0 0.0
        %6960 = vmatprep.subr.mxu0 0.0
        %6961 = vmatpush1.msra.mxu0 0.0
        %6962 = vmatprep.subr.mxu0 0.0
        %6963 = vmatpush1.msra.mxu0 0.0
        %6964 = vmatprep.subr.mxu0 0.0
        %6965 = vmatpush1.msra.mxu0 0.0
        %6966 = vmatprep.subr.mxu0 0.0
        %6967 = vmatpush1.msra.mxu0 0.0
        %6968 = vmatprep.subr.mxu0 0.0
        %6969 = vmatpush1.msra.mxu0 0.0
        %6970 = vmatprep.subr.mxu0 0.0
        %6971 = vmatpush1.msra.mxu0 0.0
        %6972 = vmatprep.subr.mxu0 0.0
        %6973 = vmatpush1.msra.mxu0 0.0
        %6974 = vmatprep.subr.mxu0 0.0
        %6975 = vmatpush1.msra.mxu0 0.0
        %6976 = vmatprep.subr.mxu0 0.0
        %6977 = vmatpush1.msra.mxu0 0.0
        %6978 = vmatprep.subr.mxu0 0.0
        %6979 = vmatpush1.msra.mxu0 0.0
        %6980 = vmatprep.subr.mxu0 0.0
        %6981 = vmatpush1.msra.mxu0 0.0
        %6982 = vmatprep.subr.mxu0 0.0
        %6983 = vmatpush1.msra.mxu0 0.0
        %6984 = vmatprep.subr.mxu0 0.0
        %6985 = vmatpush1.msra.mxu0 0.0
        %6986 = vmatprep.subr.mxu0 0.0
        %6987 = vmatpush1.msra.mxu0 0.0
        %6988 = vmatprep.subr.mxu0 0.0
        %6989 = vmatpush1.msra.mxu0 0.0
        %6990 = vmatprep.subr.mxu0 0.0
        %6991 = vmatpush1.msra.mxu0 0.0
        %6992 = vmatprep.mubr.f32.mxu0 0.0
        %6993 = vmatmul.mubr.f32.gmra.mrb[0].mxu0 %v6821
        %v6994 = vpop.f32.mrb[0].mxu0
        %v6995 = vadd.f32 0.0, %v6994
        %v6996 = vpop.f32.mrb[0].mxu0
        %6997 = vmatprep.mubr.f32.mxu0 0.0
        %6998 = vmatmul.mubr.f32.gmra.mrb[0].mxu0 %v6824
        %v6999 = vpop.f32.mrb[0].mxu0
        %v7000 = vadd.f32 0.0, %v6999
        %v7001 = vpop.f32.mrb[0].mxu0
        %7002 = vmatprep.mubr.f32.mxu0 0.0
        %7003 = vmatmul.mubr.f32.gmra.mrb[0].mxu0 %v6827
        %v7004 = vpop.f32.mrb[0].mxu0
        %v7005 = vadd.f32 0.0, %v7004
        %v7006 = vpop.f32.mrb[0].mxu0
        %7007 = vmatprep.mubr.f32.mxu0 0.0
        %7008 = vmatmul.mubr.f32.gmra.mrb[0].mxu0 %v6830
        %v7009 = vpop.f32.mrb[0].mxu0
        %v7010 = vadd.f32 0.0, %v7009
        %v7011 = vpop.f32.mrb[0].mxu0
        %7012 = vmatprep.mubr.f32.mxu0 0.0
        %7013 = vmatmul.mubr.f32.gmra.mrb[0].mxu0 %v6833
        %v7014 = vpop.f32.mrb[0].mxu0
        %v7015 = vadd.f32 0.0, %v7014
        %v7016 = vpop.f32.mrb[0].mxu0
        %7017 = vmatprep.mubr.f32.mxu0 0.0
        %7018 = vmatmul.mubr.f32.gmra.mrb[0].mxu0 %v6836
        %v7019 = vpop.f32.mrb[0].mxu0
        %v7020 = vadd.f32 0.0, %v7019
        %v7021 = vpop.f32.mrb[0].mxu0
        %7022 = vmatprep.mubr.f32.mxu0 0.0
        %7023 = vmatmul.mubr.f32.gmra.mrb[0].mxu0 %v6839
        %v7024 = vpop.f32.mrb[0].mxu0
        %v7025 = vadd.f32 0.0, %v7024
        %v7026 = vpop.f32.mrb[0].mxu0
        %7027 = vmatprep.mubr.f32.mxu0 0.0
        %7028 = vmatmul.mubr.f32.gmra.mrb[0].mxu0 %v6842
        %v7029 = vpop.f32.mrb[0].mxu0
        %v7030 = vadd.f32 0.0, %v7029
        %v7031 = vpop.f32.mrb[0].mxu0
        %7032 = vmatprep.mubr.f32.mxu0 0.0
        %7033 = vmatmul.mubr.f32.gmra.mrb[0].mxu0 %v6845
        %v7034 = vpop.f32.mrb[0].mxu0
        %v7035 = vadd.f32 0.0, %v7034
        %v7036 = vpop.f32.mrb[0].mxu0
        %7037 = vmatprep.mubr.f32.mxu0 0.0
        %7038 = vmatmul.mubr.f32.gmra.mrb[0].mxu0 %v6848
        %v7039 = vpop.f32.mrb[0].mxu0
        %v7040 = vadd.f32 0.0, %v7039
        %v7041 = vpop.f32.mrb[0].mxu0
        %7042 = vmatprep.mubr.f32.mxu0 0.0
        %7043 = vmatmul.mubr.f32.gmra.mrb[0].mxu0 %v6851
        %v7044 = vpop.f32.mrb[0].mxu0
        %v7045 = vadd.f32 0.0, %v7044
        %v7046 = vpop.f32.mrb[0].mxu0
        %7047 = vmatprep.mubr.f32.mxu0 0.0
        %7048 = vmatmul.mubr.f32.gmra.mrb[0].mxu0 %v6854
        %v7049 = vpop.f32.mrb[0].mxu0
        %v7050 = vadd.f32 0.0, %v7049
        %v7051 = vpop.f32.mrb[0].mxu0
        %7052 = vmatprep.mubr.f32.mxu0 0.0
        %7053 = vmatmul.mubr.f32.gmra.mrb[0].mxu0 %v6857
        %v7054 = vpop.f32.mrb[0].mxu0
        %v7055 = vadd.f32 0.0, %v7054
        %v7056 = vpop.f32.mrb[0].mxu0
        %7057 = vmatprep.mubr.f32.mxu0 0.0
        %7058 = vmatmul.mubr.f32.gmra.mrb[0].mxu0 %v6860
        %v7059 = vpop.f32.mrb[0].mxu0
        %v7060 = vadd.f32 0.0, %v7059
        %v7061 = vpop.f32.mrb[0].mxu0
        %7062 = vmatprep.mubr.f32.mxu0 0.0
        %7063 = vmatmul.mubr.f32.gmra.mrb[0].mxu0 %v6863
        %v7064 = vpop.f32.mrb[0].mxu0
        %v7065 = vadd.f32 0.0, %v7064
        %v7066 = vpop.f32.mrb[0].mxu0
        %7067 = vmatprep.mubr.f32.mxu0 0.0
        %7068 = vmatmul.mubr.f32.gmra.mrb[0].mxu0 %v6866
        %v7069 = vpop.f32.mrb[0].mxu0
        %v7070 = vadd.f32 0.0, %v7069
        %v7071 = vpop.f32.mrb[0].mxu0
        %7072 = vmatprep.mubr.f32.mxu0 0.0
        %7073 = vmatmul.mubr.f32.gmra.mrb[0].mxu0 %v6869
        %v7074 = vpop.f32.mrb[0].mxu0
        %v7075 = vadd.f32 0.0, %v7074
        %v7076 = vpop.f32.mrb[0].mxu0
        %7077 = vmatprep.mubr.f32.mxu0 0.0
        %7078 = vmatmul.mubr.f32.gmra.mrb[0].mxu0 %v6872
        %v7079 = vpop.f32.mrb[0].mxu0
        %v7080 = vadd.f32 0.0, %v7079
        %v7081 = vpop.f32.mrb[0].mxu0
        %7082 = vmatprep.mubr.f32.mxu0 0.0
        %7083 = vmatmul.mubr.f32.gmra.mrb[0].mxu0 %v6875
        %v7084 = vpop.f32.mrb[0].mxu0
        %v7085 = vadd.f32 0.0, %v7084
        %v7086 = vpop.f32.mrb[0].mxu0
        %7087 = vmatprep.mubr.f32.mxu0 0.0
        %7088 = vmatmul.mubr.f32.gmra.mrb[0].mxu0 %v6878
        %v7089 = vpop.f32.mrb[0].mxu0
        %v7090 = vadd.f32 0.0, %v7089
        %v7091 = vpop.f32.mrb[0].mxu0
        %7092 = vmatprep.mubr.f32.mxu0 0.0
        %7093 = vmatmul.mubr.f32.gmra.mrb[0].mxu0 %v6881
        %v7094 = vpop.f32.mrb[0].mxu0
        %v7095 = vadd.f32 0.0, %v7094
        %v7096 = vpop.f32.mrb[0].mxu0
        %7097 = vmatprep.mubr.f32.mxu0 0.0
        %7098 = vmatmul.mubr.f32.gmra.mrb[0].mxu0 %v6884
        %v7099 = vpop.f32.mrb[0].mxu0
        %v7100 = vadd.f32 0.0, %v7099
        %v7101 = vpop.f32.mrb[0].mxu0
        %7102 = vmatprep.mubr.f32.mxu0 0.0
        %7103 = vmatmul.mubr.f32.gmra.mrb[0].mxu0 %v6887
        %v7104 = vpop.f32.mrb[0].mxu0
        %v7105 = vadd.f32 0.0, %v7104
        %v7106 = vpop.f32.mrb[0].mxu0
        %7107 = vmatprep.mubr.f32.mxu0 0.0
        %7108 = vmatmul.mubr.f32.gmra.mrb[0].mxu0 %v6890
        %v7109 = vpop.f32.mrb[0].mxu0
        %v7110 = vadd.f32 0.0, %v7109
        %v7111 = vpop.f32.mrb[0].mxu0
        %7112 = vmatprep.mubr.f32.mxu0 0.0
        %7113 = vmatmul.mubr.f32.gmra.mrb[0].mxu0 %v6893
        %v7114 = vpop.f32.mrb[0].mxu0
        %v7115 = vadd.f32 0.0, %v7114
        %v7116 = vpop.f32.mrb[0].mxu0
        %7117 = vmatprep.mubr.f32.mxu0 0.0
        %7118 = vmatmul.mubr.f32.gmra.mrb[0].mxu0 %v6896
        %v7119 = vpop.f32.mrb[0].mxu0
        %v7120 = vadd.f32 0.0, %v7119
        %v7121 = vpop.f32.mrb[0].mxu0
        %7122 = vmatprep.mubr.f32.mxu0 0.0
        %7123 = vmatmul.mubr.f32.gmra.mrb[0].mxu0 %v6899
        %v7124 = vpop.f32.mrb[0].mxu0
        %v7125 = vadd.f32 0.0, %v7124
        %v7126 = vpop.f32.mrb[0].mxu0
        %7127 = vmatprep.mubr.f32.mxu0 0.0
        %7128 = vmatmul.mubr.f32.gmra.mrb[0].mxu0 %v6902
        %v7129 = vpop.f32.mrb[0].mxu0
        %v7130 = vadd.f32 0.0, %v7129
        %v7131 = vpop.f32.mrb[0].mxu0
        %7132 = vmatprep.mubr.f32.mxu0 0.0
        %7133 = vmatmul.mubr.f32.gmra.mrb[0].mxu0 %v6905
        %v7134 = vpop.f32.mrb[0].mxu0
        %v7135 = vadd.f32 0.0, %v7134
        %v7136 = vpop.f32.mrb[0].mxu0
        %7137 = vmatprep.mubr.f32.mxu0 0.0
        %7138 = vmatmul.mubr.f32.gmra.mrb[0].mxu0 %v6908
        %v7139 = vpop.f32.mrb[0].mxu0
        %v7140 = vadd.f32 0.0, %v7139
        %v7141 = vpop.f32.mrb[0].mxu0
        %7142 = vmatprep.mubr.f32.mxu0 0.0
        %7143 = vmatmul.mubr.f32.gmra.mrb[0].mxu0 %v6911
        %v7144 = vpop.f32.mrb[0].mxu0
        %v7145 = vadd.f32 0.0, %v7144
        %v7146 = vpop.f32.mrb[0].mxu0
        %7147 = vmatprep.mubr.f32.mxu0 0.0
        %7148 = vmatmul.mubr.f32.gmra.mrb[0].mxu0 %v6914
        %v7149 = vpop.f32.mrb[0].mxu0
        %v7150 = vadd.f32 0.0, %v7149
        %v7151 = vpop.f32.mrb[0].mxu0
        %7152 = vmatprep.mubr.f32.mxu0 0.0
        %7153 = vmatmul.mubr.f32.gmra.mrb[0].mxu0 %v6917
        %v7154 = vpop.f32.mrb[0].mxu0
        %v7155 = vadd.f32 0.0, %v7154
        %v7156 = vpop.f32.mrb[0].mxu0
        %7157 = vmatprep.mubr.f32.mxu0 0.0
        %7158 = vmatmul.mubr.f32.gmra.mrb[0].mxu0 %v6920
        %v7159 = vpop.f32.mrb[0].mxu0
        %v7160 = vadd.f32 0.0, %v7159
        %v7161 = vpop.f32.mrb[0].mxu0
        %7162 = vmatprep.mubr.f32.mxu0 0.0
        %7163 = vmatmul.mubr.f32.gmra.mrb[0].mxu0 %v6923
        %v7164 = vpop.f32.mrb[0].mxu0
        %v7165 = vadd.f32 0.0, %v7164
        %v7166 = vpop.f32.mrb[0].mxu0
        %7167 = vmatprep.mubr.f32.mxu0 0.0
        %7168 = vmatmul.mubr.f32.gmra.mrb[0].mxu0 %v6926
        %v7169 = vpop.f32.mrb[0].mxu0
        %v7170 = vadd.f32 0.0, %v7169
        %v7171 = vpop.f32.mrb[0].mxu0
        %7172 = vdwg.mxu0
        %v7173 = vadd.f32 %v6746, %v6995
        %v7174 = vadd.f32 %v6747, %v7000
        %v7175 = vadd.f32 %v6748, %v7005
        %v7176 = vadd.f32 %v6749, %v7010
        %v7177 = vadd.f32 %v6750, %v7015
        %v7178 = vadd.f32 %v6751, %v7020
        %v7179 = vadd.f32 %v6752, %v7025
        %v7180 = vadd.f32 %v6753, %v7030
        %v7181 = vadd.f32 %v6754, %v7035
        %v7182 = vadd.f32 %v6755, %v7040
        %v7183 = vadd.f32 %v6756, %v7045
        %v7184 = vadd.f32 %v6757, %v7050
        %v7185 = vadd.f32 %v6758, %v7055
        %v7186 = vadd.f32 %v6759, %v7060
        %v7187 = vadd.f32 %v6760, %v7065
        %v7188 = vadd.f32 %v6761, %v7070
        %v7189 = vadd.f32 %v6762, %v7075
        %v7190 = vadd.f32 %v6763, %v7080
        %v7191 = vadd.f32 %v6764, %v7085
        %v7192 = vadd.f32 %v6765, %v7090
        %v7193 = vadd.f32 %v6766, %v7095
        %v7194 = vadd.f32 %v6767, %v7100
        %v7195 = vadd.f32 %v6768, %v7105
        %v7196 = vadd.f32 %v6769, %v7110
        %v7197 = vadd.f32 %v6770, %v7115
        %v7198 = vadd.f32 %v6771, %v7120
        %v7199 = vadd.f32 %v6772, %v7125
        %v7200 = vadd.f32 %v6773, %v7130
        %v7201 = vadd.f32 %v6774, %v7135
        %v7202 = vadd.f32 %v6775, %v7140
        %v7203 = vadd.f32 %v6776, %v7145
        %v7204 = vadd.f32 %v6777, %v7150
        %v7205 = vadd.f32 %v6778, %v7155
        %v7206 = vadd.f32 %v6779, %v7160
        %v7207 = vadd.f32 %v6780, %v7165
        %v7208 = vadd.f32 %v6781, %v7170
        %v7209 = vld [vmem:[#allocation2 + $0x29] sm:$0xff]
        %v7210 = vld [vmem:[#allocation2 + $0x31] sm:$0xff]
        %v7211 = vld [vmem:[#allocation2 + $0x39] sm:$0xff]
        %v7212 = vld [vmem:[#allocation2 + $0x41] sm:$0xff]
        %v7213 = vld [vmem:[#allocation2 + $0x49] sm:$0xff]
        %v7214 = vld [vmem:[#allocation2 + $0x51] sm:$0xff]
        %v7215 = vld [vmem:[#allocation2 + $0x59] sm:$0xff]
        %v7216 = vld [vmem:[#allocation2 + $0x61] sm:$0xff]
        %v7217 = vld [vmem:[#allocation2 + $0x69] sm:$0xff]
        %v7218 = vld [vmem:[#allocation2 + $0x71] sm:$0xff]
        %v7219 = vld [vmem:[#allocation2 + $0x79] sm:$0xff]
        %v7220 = vld [vmem:[#allocation2 + $0x81] sm:$0xff]
        %v7221 = vld [vmem:[#allocation2 + $0x89] sm:$0xff]
        %v7222 = vld [vmem:[#allocation2 + $0x91] sm:$0xff]
        %v7223 = vld [vmem:[#allocation2 + $0x99] sm:$0xff]
        %v7224 = vld [vmem:[#allocation2 + $0xa1] sm:$0xff]
        %v7225 = vld [vmem:[#allocation2 + $0xa9] sm:$0xff]
        %v7226 = vld [vmem:[#allocation2 + $0xb1] sm:$0xff]
        %v7227 = vld [vmem:[#allocation2 + $0xb9] sm:$0xff]
        %v7228 = vld [vmem:[#allocation2 + $0xc1] sm:$0xff]
        %v7229 = vld [vmem:[#allocation2 + $0xc9] sm:$0xff]
        %v7230 = vld [vmem:[#allocation2 + $0xd1] sm:$0xff]
        %v7231 = vld [vmem:[#allocation2 + $0xd9] sm:$0xff]
        %v7232 = vld [vmem:[#allocation2 + $0xe1] sm:$0xff]
        %v7233 = vld [vmem:[#allocation2 + $0xe9] sm:$0xff]
        %v7234 = vld [vmem:[#allocation2 + $0xf1] sm:$0xff]
        %v7235 = vld [vmem:[#allocation2 + $0xf9] sm:$0xff]
        %v7236 = vld [vmem:[#allocation2 + $0x101] sm:$0xff]
        %v7237 = vld [vmem:[#allocation2 + $0x109] sm:$0xff]
        %v7238 = vld [vmem:[#allocation2 + $0x111] sm:$0xff]
        %v7239 = vld [vmem:[#allocation2 + $0x119] sm:$0xff]
        %v7240 = vld [vmem:[#allocation2 + $0x121] sm:$0xff]
        %v7241 = vld [vmem:[#allocation2 + $0x129] sm:$0xff]
        %v7242 = vld [vmem:[#allocation2 + $0x131] sm:$0xff]
        %v7243 = vld [vmem:[#allocation2 + $0x139] sm:$0xff]
        %v7244 = vld [vmem:[#allocation2 + $0x141] sm:$0xff]
        %s7245 = scalar_lea.vmem %s4, 48
        %v7246 = vld [vmem:[%s7245] sm:$0xff]
        %v7248 = vsel %vm506, %v7209, 0
        %v7251 = vsel %vm506, %v7210, 0
        %v7254 = vsel %vm506, %v7211, 0
        %v7257 = vsel %vm506, %v7212, 0
        %v7260 = vsel %vm506, %v7213, 0
        %v7263 = vsel %vm506, %v7214, 0
        %v7266 = vsel %vm506, %v7215, 0
        %v7269 = vsel %vm506, %v7216, 0
        %v7272 = vsel %vm506, %v7217, 0
        %v7275 = vsel %vm506, %v7218, 0
        %v7278 = vsel %vm506, %v7219, 0
        %v7281 = vsel %vm506, %v7220, 0
        %v7284 = vsel %vm506, %v7221, 0
        %v7287 = vsel %vm506, %v7222, 0
        %v7290 = vsel %vm506, %v7223, 0
        %v7293 = vsel %vm506, %v7224, 0
        %v7296 = vsel %vm506, %v7225, 0
        %v7299 = vsel %vm506, %v7226, 0
        %v7302 = vsel %vm506, %v7227, 0
        %v7305 = vsel %vm506, %v7228, 0
        %v7308 = vsel %vm506, %v7229, 0
        %v7311 = vsel %vm506, %v7230, 0
        %v7314 = vsel %vm506, %v7231, 0
        %v7317 = vsel %vm506, %v7232, 0
        %v7320 = vsel %vm506, %v7233, 0
        %v7323 = vsel %vm506, %v7234, 0
        %v7326 = vsel %vm506, %v7235, 0
        %v7329 = vsel %vm506, %v7236, 0
        %v7332 = vsel %vm506, %v7237, 0
        %v7335 = vsel %vm506, %v7238, 0
        %v7338 = vsel %vm506, %v7239, 0
        %v7341 = vsel %vm506, %v7240, 0
        %v7344 = vsel %vm506, %v7241, 0
        %v7347 = vsel %vm506, %v7242, 0
        %v7350 = vsel %vm506, %v7243, 0
        %v7353 = vsel %vm506, %v7244, 0
        %7355 = vmatprep.subr.mxu0 0.0
        %7356 = vmatpush1.msra.mxu0 %v7246
        %7357 = vmatprep.subr.mxu0 0.0
        %7358 = vmatpush1.msra.mxu0 0.0
        %7359 = vmatprep.subr.mxu0 0.0
        %7360 = vmatpush1.msra.mxu0 0.0
        %7361 = vmatprep.subr.mxu0 0.0
        %7362 = vmatpush1.msra.mxu0 0.0
        %7363 = vmatprep.subr.mxu0 0.0
        %7364 = vmatpush1.msra.mxu0 0.0
        %7365 = vmatprep.subr.mxu0 0.0
        %7366 = vmatpush1.msra.mxu0 0.0
        %7367 = vmatprep.subr.mxu0 0.0
        %7368 = vmatpush1.msra.mxu0 0.0
        %7369 = vmatprep.subr.mxu0 0.0
        %7370 = vmatpush1.msra.mxu0 0.0
        %7371 = vmatprep.subr.mxu0 0.0
        %7372 = vmatpush1.msra.mxu0 0.0
        %7373 = vmatprep.subr.mxu0 0.0
        %7374 = vmatpush1.msra.mxu0 0.0
        %7375 = vmatprep.subr.mxu0 0.0
        %7376 = vmatpush1.msra.mxu0 0.0
        %7377 = vmatprep.subr.mxu0 0.0
        %7378 = vmatpush1.msra.mxu0 0.0
        %7379 = vmatprep.subr.mxu0 0.0
        %7380 = vmatpush1.msra.mxu0 0.0
        %7381 = vmatprep.subr.mxu0 0.0
        %7382 = vmatpush1.msra.mxu0 0.0
        %7383 = vmatprep.subr.mxu0 0.0
        %7384 = vmatpush1.msra.mxu0 0.0
        %7385 = vmatprep.subr.mxu0 0.0
        %7386 = vmatpush1.msra.mxu0 0.0
        %7387 = vmatprep.subr.mxu0 0.0
        %7388 = vmatpush1.msra.mxu0 0.0
        %7389 = vmatprep.subr.mxu0 0.0
        %7390 = vmatpush1.msra.mxu0 0.0
        %7391 = vmatprep.subr.mxu0 0.0
        %7392 = vmatpush1.msra.mxu0 0.0
        %7393 = vmatprep.subr.mxu0 0.0
        %7394 = vmatpush1.msra.mxu0 0.0
        %7395 = vmatprep.subr.mxu0 0.0
        %7396 = vmatpush1.msra.mxu0 0.0
        %7397 = vmatprep.subr.mxu0 0.0
        %7398 = vmatpush1.msra.mxu0 0.0
        %7399 = vmatprep.subr.mxu0 0.0
        %7400 = vmatpush1.msra.mxu0 0.0
        %7401 = vmatprep.subr.mxu0 0.0
        %7402 = vmatpush1.msra.mxu0 0.0
        %7403 = vmatprep.subr.mxu0 0.0
        %7404 = vmatpush1.msra.mxu0 0.0
        %7405 = vmatprep.subr.mxu0 0.0
        %7406 = vmatpush1.msra.mxu0 0.0
        %7407 = vmatprep.subr.mxu0 0.0
        %7408 = vmatpush1.msra.mxu0 0.0
        %7409 = vmatprep.subr.mxu0 0.0
        %7410 = vmatpush1.msra.mxu0 0.0
        %7411 = vmatprep.subr.mxu0 0.0
        %7412 = vmatpush1.msra.mxu0 0.0
        %7413 = vmatprep.subr.mxu0 0.0
        %7414 = vmatpush1.msra.mxu0 0.0
        %7415 = vmatprep.subr.mxu0 0.0
        %7416 = vmatpush1.msra.mxu0 0.0
        %7417 = vmatprep.subr.mxu0 0.0
        %7418 = vmatpush1.msra.mxu0 0.0
        %7419 = vmatprep.mubr.f32.mxu0 0.0
        %7420 = vmatmul.mubr.f32.gmra.mrb[0].mxu0 %v7248
        %v7421 = vpop.f32.mrb[0].mxu0
        %v7422 = vadd.f32 0.0, %v7421
        %v7423 = vpop.f32.mrb[0].mxu0
        %7424 = vmatprep.mubr.f32.mxu0 0.0
        %7425 = vmatmul.mubr.f32.gmra.mrb[0].mxu0 %v7251
        %v7426 = vpop.f32.mrb[0].mxu0
        %v7427 = vadd.f32 0.0, %v7426
        %v7428 = vpop.f32.mrb[0].mxu0
        %7429 = vmatprep.mubr.f32.mxu0 0.0
        %7430 = vmatmul.mubr.f32.gmra.mrb[0].mxu0 %v7254
        %v7431 = vpop.f32.mrb[0].mxu0
        %v7432 = vadd.f32 0.0, %v7431
        %v7433 = vpop.f32.mrb[0].mxu0
        %7434 = vmatprep.mubr.f32.mxu0 0.0
        %7435 = vmatmul.mubr.f32.gmra.mrb[0].mxu0 %v7257
        %v7436 = vpop.f32.mrb[0].mxu0
        %v7437 = vadd.f32 0.0, %v7436
        %v7438 = vpop.f32.mrb[0].mxu0
        %7439 = vmatprep.mubr.f32.mxu0 0.0
        %7440 = vmatmul.mubr.f32.gmra.mrb[0].mxu0 %v7260
        %v7441 = vpop.f32.mrb[0].mxu0
        %v7442 = vadd.f32 0.0, %v7441
        %v7443 = vpop.f32.mrb[0].mxu0
        %7444 = vmatprep.mubr.f32.mxu0 0.0
        %7445 = vmatmul.mubr.f32.gmra.mrb[0].mxu0 %v7263
        %v7446 = vpop.f32.mrb[0].mxu0
        %v7447 = vadd.f32 0.0, %v7446
        %v7448 = vpop.f32.mrb[0].mxu0
        %7449 = vmatprep.mubr.f32.mxu0 0.0
        %7450 = vmatmul.mubr.f32.gmra.mrb[0].mxu0 %v7266
        %v7451 = vpop.f32.mrb[0].mxu0
        %v7452 = vadd.f32 0.0, %v7451
        %v7453 = vpop.f32.mrb[0].mxu0
        %7454 = vmatprep.mubr.f32.mxu0 0.0
        %7455 = vmatmul.mubr.f32.gmra.mrb[0].mxu0 %v7269
        %v7456 = vpop.f32.mrb[0].mxu0
        %v7457 = vadd.f32 0.0, %v7456
        %v7458 = vpop.f32.mrb[0].mxu0
        %7459 = vmatprep.mubr.f32.mxu0 0.0
        %7460 = vmatmul.mubr.f32.gmra.mrb[0].mxu0 %v7272
        %v7461 = vpop.f32.mrb[0].mxu0
        %v7462 = vadd.f32 0.0, %v7461
        %v7463 = vpop.f32.mrb[0].mxu0
        %7464 = vmatprep.mubr.f32.mxu0 0.0
        %7465 = vmatmul.mubr.f32.gmra.mrb[0].mxu0 %v7275
        %v7466 = vpop.f32.mrb[0].mxu0
        %v7467 = vadd.f32 0.0, %v7466
        %v7468 = vpop.f32.mrb[0].mxu0
        %7469 = vmatprep.mubr.f32.mxu0 0.0
        %7470 = vmatmul.mubr.f32.gmra.mrb[0].mxu0 %v7278
        %v7471 = vpop.f32.mrb[0].mxu0
        %v7472 = vadd.f32 0.0, %v7471
        %v7473 = vpop.f32.mrb[0].mxu0
        %7474 = vmatprep.mubr.f32.mxu0 0.0
        %7475 = vmatmul.mubr.f32.gmra.mrb[0].mxu0 %v7281
        %v7476 = vpop.f32.mrb[0].mxu0
        %v7477 = vadd.f32 0.0, %v7476
        %v7478 = vpop.f32.mrb[0].mxu0
        %7479 = vmatprep.mubr.f32.mxu0 0.0
        %7480 = vmatmul.mubr.f32.gmra.mrb[0].mxu0 %v7284
        %v7481 = vpop.f32.mrb[0].mxu0
        %v7482 = vadd.f32 0.0, %v7481
        %v7483 = vpop.f32.mrb[0].mxu0
        %7484 = vmatprep.mubr.f32.mxu0 0.0
        %7485 = vmatmul.mubr.f32.gmra.mrb[0].mxu0 %v7287
        %v7486 = vpop.f32.mrb[0].mxu0
        %v7487 = vadd.f32 0.0, %v7486
        %v7488 = vpop.f32.mrb[0].mxu0
        %7489 = vmatprep.mubr.f32.mxu0 0.0
        %7490 = vmatmul.mubr.f32.gmra.mrb[0].mxu0 %v7290
        %v7491 = vpop.f32.mrb[0].mxu0
        %v7492 = vadd.f32 0.0, %v7491
        %v7493 = vpop.f32.mrb[0].mxu0
        %7494 = vmatprep.mubr.f32.mxu0 0.0
        %7495 = vmatmul.mubr.f32.gmra.mrb[0].mxu0 %v7293
        %v7496 = vpop.f32.mrb[0].mxu0
        %v7497 = vadd.f32 0.0, %v7496
        %v7498 = vpop.f32.mrb[0].mxu0
        %7499 = vmatprep.mubr.f32.mxu0 0.0
        %7500 = vmatmul.mubr.f32.gmra.mrb[0].mxu0 %v7296
        %v7501 = vpop.f32.mrb[0].mxu0
        %v7502 = vadd.f32 0.0, %v7501
        %v7503 = vpop.f32.mrb[0].mxu0
        %7504 = vmatprep.mubr.f32.mxu0 0.0
        %7505 = vmatmul.mubr.f32.gmra.mrb[0].mxu0 %v7299
        %v7506 = vpop.f32.mrb[0].mxu0
        %v7507 = vadd.f32 0.0, %v7506
        %v7508 = vpop.f32.mrb[0].mxu0
        %7509 = vmatprep.mubr.f32.mxu0 0.0
        %7510 = vmatmul.mubr.f32.gmra.mrb[0].mxu0 %v7302
        %v7511 = vpop.f32.mrb[0].mxu0
        %v7512 = vadd.f32 0.0, %v7511
        %v7513 = vpop.f32.mrb[0].mxu0
        %7514 = vmatprep.mubr.f32.mxu0 0.0
        %7515 = vmatmul.mubr.f32.gmra.mrb[0].mxu0 %v7305
        %v7516 = vpop.f32.mrb[0].mxu0
        %v7517 = vadd.f32 0.0, %v7516
        %v7518 = vpop.f32.mrb[0].mxu0
        %7519 = vmatprep.mubr.f32.mxu0 0.0
        %7520 = vmatmul.mubr.f32.gmra.mrb[0].mxu0 %v7308
        %v7521 = vpop.f32.mrb[0].mxu0
        %v7522 = vadd.f32 0.0, %v7521
        %v7523 = vpop.f32.mrb[0].mxu0
        %7524 = vmatprep.mubr.f32.mxu0 0.0
        %7525 = vmatmul.mubr.f32.gmra.mrb[0].mxu0 %v7311
        %v7526 = vpop.f32.mrb[0].mxu0
        %v7527 = vadd.f32 0.0, %v7526
        %v7528 = vpop.f32.mrb[0].mxu0
        %7529 = vmatprep.mubr.f32.mxu0 0.0
        %7530 = vmatmul.mubr.f32.gmra.mrb[0].mxu0 %v7314
        %v7531 = vpop.f32.mrb[0].mxu0
        %v7532 = vadd.f32 0.0, %v7531
        %v7533 = vpop.f32.mrb[0].mxu0
        %7534 = vmatprep.mubr.f32.mxu0 0.0
        %7535 = vmatmul.mubr.f32.gmra.mrb[0].mxu0 %v7317
        %v7536 = vpop.f32.mrb[0].mxu0
        %v7537 = vadd.f32 0.0, %v7536
        %v7538 = vpop.f32.mrb[0].mxu0
        %7539 = vmatprep.mubr.f32.mxu0 0.0
        %7540 = vmatmul.mubr.f32.gmra.mrb[0].mxu0 %v7320
        %v7541 = vpop.f32.mrb[0].mxu0
        %v7542 = vadd.f32 0.0, %v7541
        %v7543 = vpop.f32.mrb[0].mxu0
        %7544 = vmatprep.mubr.f32.mxu0 0.0
        %7545 = vmatmul.mubr.f32.gmra.mrb[0].mxu0 %v7323
        %v7546 = vpop.f32.mrb[0].mxu0
        %v7547 = vadd.f32 0.0, %v7546
        %v7548 = vpop.f32.mrb[0].mxu0
        %7549 = vmatprep.mubr.f32.mxu0 0.0
        %7550 = vmatmul.mubr.f32.gmra.mrb[0].mxu0 %v7326
        %v7551 = vpop.f32.mrb[0].mxu0
        %v7552 = vadd.f32 0.0, %v7551
        %v7553 = vpop.f32.mrb[0].mxu0
        %7554 = vmatprep.mubr.f32.mxu0 0.0
        %7555 = vmatmul.mubr.f32.gmra.mrb[0].mxu0 %v7329
        %v7556 = vpop.f32.mrb[0].mxu0
        %v7557 = vadd.f32 0.0, %v7556
        %v7558 = vpop.f32.mrb[0].mxu0
        %7559 = vmatprep.mubr.f32.mxu0 0.0
        %7560 = vmatmul.mubr.f32.gmra.mrb[0].mxu0 %v7332
        %v7561 = vpop.f32.mrb[0].mxu0
        %v7562 = vadd.f32 0.0, %v7561
        %v7563 = vpop.f32.mrb[0].mxu0
        %7564 = vmatprep.mubr.f32.mxu0 0.0
        %7565 = vmatmul.mubr.f32.gmra.mrb[0].mxu0 %v7335
        %v7566 = vpop.f32.mrb[0].mxu0
        %v7567 = vadd.f32 0.0, %v7566
        %v7568 = vpop.f32.mrb[0].mxu0
        %7569 = vmatprep.mubr.f32.mxu0 0.0
        %7570 = vmatmul.mubr.f32.gmra.mrb[0].mxu0 %v7338
        %v7571 = vpop.f32.mrb[0].mxu0
        %v7572 = vadd.f32 0.0, %v7571
        %v7573 = vpop.f32.mrb[0].mxu0
        %7574 = vmatprep.mubr.f32.mxu0 0.0
        %7575 = vmatmul.mubr.f32.gmra.mrb[0].mxu0 %v7341
        %v7576 = vpop.f32.mrb[0].mxu0
        %v7577 = vadd.f32 0.0, %v7576
        %v7578 = vpop.f32.mrb[0].mxu0
        %7579 = vmatprep.mubr.f32.mxu0 0.0
        %7580 = vmatmul.mubr.f32.gmra.mrb[0].mxu0 %v7344
        %v7581 = vpop.f32.mrb[0].mxu0
        %v7582 = vadd.f32 0.0, %v7581
        %v7583 = vpop.f32.mrb[0].mxu0
        %7584 = vmatprep.mubr.f32.mxu0 0.0
        %7585 = vmatmul.mubr.f32.gmra.mrb[0].mxu0 %v7347
        %v7586 = vpop.f32.mrb[0].mxu0
        %v7587 = vadd.f32 0.0, %v7586
        %v7588 = vpop.f32.mrb[0].mxu0
        %7589 = vmatprep.mubr.f32.mxu0 0.0
        %7590 = vmatmul.mubr.f32.gmra.mrb[0].mxu0 %v7350
        %v7591 = vpop.f32.mrb[0].mxu0
        %v7592 = vadd.f32 0.0, %v7591
        %v7593 = vpop.f32.mrb[0].mxu0
        %7594 = vmatprep.mubr.f32.mxu0 0.0
        %7595 = vmatmul.mubr.f32.gmra.mrb[0].mxu0 %v7353
        %v7596 = vpop.f32.mrb[0].mxu0
        %v7597 = vadd.f32 0.0, %v7596
        %v7598 = vpop.f32.mrb[0].mxu0
        %7599 = vdwg.mxu0
        %v7600 = vadd.f32 %v7173, %v7422
        %v7601 = vadd.f32 %v7174, %v7427
        %v7602 = vadd.f32 %v7175, %v7432
        %v7603 = vadd.f32 %v7176, %v7437
        %v7604 = vadd.f32 %v7177, %v7442
        %v7605 = vadd.f32 %v7178, %v7447
        %v7606 = vadd.f32 %v7179, %v7452
        %v7607 = vadd.f32 %v7180, %v7457
        %v7608 = vadd.f32 %v7181, %v7462
        %v7609 = vadd.f32 %v7182, %v7467
        %v7610 = vadd.f32 %v7183, %v7472
        %v7611 = vadd.f32 %v7184, %v7477
        %v7612 = vadd.f32 %v7185, %v7482
        %v7613 = vadd.f32 %v7186, %v7487
        %v7614 = vadd.f32 %v7187, %v7492
        %v7615 = vadd.f32 %v7188, %v7497
        %v7616 = vadd.f32 %v7189, %v7502
        %v7617 = vadd.f32 %v7190, %v7507
        %v7618 = vadd.f32 %v7191, %v7512
        %v7619 = vadd.f32 %v7192, %v7517
        %v7620 = vadd.f32 %v7193, %v7522
        %v7621 = vadd.f32 %v7194, %v7527
        %v7622 = vadd.f32 %v7195, %v7532
        %v7623 = vadd.f32 %v7196, %v7537
        %v7624 = vadd.f32 %v7197, %v7542
        %v7625 = vadd.f32 %v7198, %v7547
        %v7626 = vadd.f32 %v7199, %v7552
        %v7627 = vadd.f32 %v7200, %v7557
        %v7628 = vadd.f32 %v7201, %v7562
        %v7629 = vadd.f32 %v7202, %v7567
        %v7630 = vadd.f32 %v7203, %v7572
        %v7631 = vadd.f32 %v7204, %v7577
        %v7632 = vadd.f32 %v7205, %v7582
        %v7633 = vadd.f32 %v7206, %v7587
        %v7634 = vadd.f32 %v7207, %v7592
        %v7635 = vadd.f32 %v7208, %v7597
        %v7636 = vld [vmem:[#allocation2 + $0x2a] sm:$0xff]
        %v7637 = vld [vmem:[#allocation2 + $0x32] sm:$0xff]
        %v7638 = vld [vmem:[#allocation2 + $0x3a] sm:$0xff]
        %v7639 = vld [vmem:[#allocation2 + $0x42] sm:$0xff]
        %v7640 = vld [vmem:[#allocation2 + $0x4a] sm:$0xff]
        %v7641 = vld [vmem:[#allocation2 + $0x52] sm:$0xff]
        %v7642 = vld [vmem:[#allocation2 + $0x5a] sm:$0xff]
        %v7643 = vld [vmem:[#allocation2 + $0x62] sm:$0xff]
        %v7644 = vld [vmem:[#allocation2 + $0x6a] sm:$0xff]
        %v7645 = vld [vmem:[#allocation2 + $0x72] sm:$0xff]
        %v7646 = vld [vmem:[#allocation2 + $0x7a] sm:$0xff]
        %v7647 = vld [vmem:[#allocation2 + $0x82] sm:$0xff]
        %v7648 = vld [vmem:[#allocation2 + $0x8a] sm:$0xff]
        %v7649 = vld [vmem:[#allocation2 + $0x92] sm:$0xff]
        %v7650 = vld [vmem:[#allocation2 + $0x9a] sm:$0xff]
        %v7651 = vld [vmem:[#allocation2 + $0xa2] sm:$0xff]
        %v7652 = vld [vmem:[#allocation2 + $0xaa] sm:$0xff]
        %v7653 = vld [vmem:[#allocation2 + $0xb2] sm:$0xff]
        %v7654 = vld [vmem:[#allocation2 + $0xba] sm:$0xff]
        %v7655 = vld [vmem:[#allocation2 + $0xc2] sm:$0xff]
        %v7656 = vld [vmem:[#allocation2 + $0xca] sm:$0xff]
        %v7657 = vld [vmem:[#allocation2 + $0xd2] sm:$0xff]
        %v7658 = vld [vmem:[#allocation2 + $0xda] sm:$0xff]
        %v7659 = vld [vmem:[#allocation2 + $0xe2] sm:$0xff]
        %v7660 = vld [vmem:[#allocation2 + $0xea] sm:$0xff]
        %v7661 = vld [vmem:[#allocation2 + $0xf2] sm:$0xff]
        %v7662 = vld [vmem:[#allocation2 + $0xfa] sm:$0xff]
        %v7663 = vld [vmem:[#allocation2 + $0x102] sm:$0xff]
        %v7664 = vld [vmem:[#allocation2 + $0x10a] sm:$0xff]
        %v7665 = vld [vmem:[#allocation2 + $0x112] sm:$0xff]
        %v7666 = vld [vmem:[#allocation2 + $0x11a] sm:$0xff]
        %v7667 = vld [vmem:[#allocation2 + $0x122] sm:$0xff]
        %v7668 = vld [vmem:[#allocation2 + $0x12a] sm:$0xff]
        %v7669 = vld [vmem:[#allocation2 + $0x132] sm:$0xff]
        %v7670 = vld [vmem:[#allocation2 + $0x13a] sm:$0xff]
        %v7671 = vld [vmem:[#allocation2 + $0x142] sm:$0xff]
        %s7672 = scalar_lea.vmem %s4, 56
        %v7673 = vld [vmem:[%s7672] sm:$0xff]
        %v7675 = vsel %vm506, %v7636, 0
        %v7678 = vsel %vm506, %v7637, 0
        %v7681 = vsel %vm506, %v7638, 0
        %v7684 = vsel %vm506, %v7639, 0
        %v7687 = vsel %vm506, %v7640, 0
        %v7690 = vsel %vm506, %v7641, 0
        %v7693 = vsel %vm506, %v7642, 0
        %v7696 = vsel %vm506, %v7643, 0
        %v7699 = vsel %vm506, %v7644, 0
        %v7702 = vsel %vm506, %v7645, 0
        %v7705 = vsel %vm506, %v7646, 0
        %v7708 = vsel %vm506, %v7647, 0
        %v7711 = vsel %vm506, %v7648, 0
        %v7714 = vsel %vm506, %v7649, 0
        %v7717 = vsel %vm506, %v7650, 0
        %v7720 = vsel %vm506, %v7651, 0
        %v7723 = vsel %vm506, %v7652, 0
        %v7726 = vsel %vm506, %v7653, 0
        %v7729 = vsel %vm506, %v7654, 0
        %v7732 = vsel %vm506, %v7655, 0
        %v7735 = vsel %vm506, %v7656, 0
        %v7738 = vsel %vm506, %v7657, 0
        %v7741 = vsel %vm506, %v7658, 0
        %v7744 = vsel %vm506, %v7659, 0
        %v7747 = vsel %vm506, %v7660, 0
        %v7750 = vsel %vm506, %v7661, 0
        %v7753 = vsel %vm506, %v7662, 0
        %v7756 = vsel %vm506, %v7663, 0
        %v7759 = vsel %vm506, %v7664, 0
        %v7762 = vsel %vm506, %v7665, 0
        %v7765 = vsel %vm506, %v7666, 0
        %v7768 = vsel %vm506, %v7667, 0
        %v7771 = vsel %vm506, %v7668, 0
        %v7774 = vsel %vm506, %v7669, 0
        %v7777 = vsel %vm506, %v7670, 0
        %v7780 = vsel %vm506, %v7671, 0
        %7782 = vmatprep.subr.mxu0 0.0
        %7783 = vmatpush1.msra.mxu0 %v7673
        %7784 = vmatprep.subr.mxu0 0.0
        %7785 = vmatpush1.msra.mxu0 0.0
        %7786 = vmatprep.subr.mxu0 0.0
        %7787 = vmatpush1.msra.mxu0 0.0
        %7788 = vmatprep.subr.mxu0 0.0
        %7789 = vmatpush1.msra.mxu0 0.0
        %7790 = vmatprep.subr.mxu0 0.0
        %7791 = vmatpush1.msra.mxu0 0.0
        %7792 = vmatprep.subr.mxu0 0.0
        %7793 = vmatpush1.msra.mxu0 0.0
        %7794 = vmatprep.subr.mxu0 0.0
        %7795 = vmatpush1.msra.mxu0 0.0
        %7796 = vmatprep.subr.mxu0 0.0
        %7797 = vmatpush1.msra.mxu0 0.0
        %7798 = vmatprep.subr.mxu0 0.0
        %7799 = vmatpush1.msra.mxu0 0.0
        %7800 = vmatprep.subr.mxu0 0.0
        %7801 = vmatpush1.msra.mxu0 0.0
        %7802 = vmatprep.subr.mxu0 0.0
        %7803 = vmatpush1.msra.mxu0 0.0
        %7804 = vmatprep.subr.mxu0 0.0
        %7805 = vmatpush1.msra.mxu0 0.0
        %7806 = vmatprep.subr.mxu0 0.0
        %7807 = vmatpush1.msra.mxu0 0.0
        %7808 = vmatprep.subr.mxu0 0.0
        %7809 = vmatpush1.msra.mxu0 0.0
        %7810 = vmatprep.subr.mxu0 0.0
        %7811 = vmatpush1.msra.mxu0 0.0
        %7812 = vmatprep.subr.mxu0 0.0
        %7813 = vmatpush1.msra.mxu0 0.0
        %7814 = vmatprep.subr.mxu0 0.0
        %7815 = vmatpush1.msra.mxu0 0.0
        %7816 = vmatprep.subr.mxu0 0.0
        %7817 = vmatpush1.msra.mxu0 0.0
        %7818 = vmatprep.subr.mxu0 0.0
        %7819 = vmatpush1.msra.mxu0 0.0
        %7820 = vmatprep.subr.mxu0 0.0
        %7821 = vmatpush1.msra.mxu0 0.0
        %7822 = vmatprep.subr.mxu0 0.0
        %7823 = vmatpush1.msra.mxu0 0.0
        %7824 = vmatprep.subr.mxu0 0.0
        %7825 = vmatpush1.msra.mxu0 0.0
        %7826 = vmatprep.subr.mxu0 0.0
        %7827 = vmatpush1.msra.mxu0 0.0
        %7828 = vmatprep.subr.mxu0 0.0
        %7829 = vmatpush1.msra.mxu0 0.0
        %7830 = vmatprep.subr.mxu0 0.0
        %7831 = vmatpush1.msra.mxu0 0.0
        %7832 = vmatprep.subr.mxu0 0.0
        %7833 = vmatpush1.msra.mxu0 0.0
        %7834 = vmatprep.subr.mxu0 0.0
        %7835 = vmatpush1.msra.mxu0 0.0
        %7836 = vmatprep.subr.mxu0 0.0
        %7837 = vmatpush1.msra.mxu0 0.0
        %7838 = vmatprep.subr.mxu0 0.0
        %7839 = vmatpush1.msra.mxu0 0.0
        %7840 = vmatprep.subr.mxu0 0.0
        %7841 = vmatpush1.msra.mxu0 0.0
        %7842 = vmatprep.subr.mxu0 0.0
        %7843 = vmatpush1.msra.mxu0 0.0
        %7844 = vmatprep.subr.mxu0 0.0
        %7845 = vmatpush1.msra.mxu0 0.0
        %7846 = vmatprep.mubr.f32.mxu0 0.0
        %7847 = vmatmul.mubr.f32.gmra.mrb[0].mxu0 %v7675
        %v7848 = vpop.f32.mrb[0].mxu0
        %v7849 = vadd.f32 0.0, %v7848
        %v7850 = vpop.f32.mrb[0].mxu0
        %7851 = vmatprep.mubr.f32.mxu0 0.0
        %7852 = vmatmul.mubr.f32.gmra.mrb[0].mxu0 %v7678
        %v7853 = vpop.f32.mrb[0].mxu0
        %v7854 = vadd.f32 0.0, %v7853
        %v7855 = vpop.f32.mrb[0].mxu0
        %7856 = vmatprep.mubr.f32.mxu0 0.0
        %7857 = vmatmul.mubr.f32.gmra.mrb[0].mxu0 %v7681
        %v7858 = vpop.f32.mrb[0].mxu0
        %v7859 = vadd.f32 0.0, %v7858
        %v7860 = vpop.f32.mrb[0].mxu0
        %7861 = vmatprep.mubr.f32.mxu0 0.0
        %7862 = vmatmul.mubr.f32.gmra.mrb[0].mxu0 %v7684
        %v7863 = vpop.f32.mrb[0].mxu0
        %v7864 = vadd.f32 0.0, %v7863
        %v7865 = vpop.f32.mrb[0].mxu0
        %7866 = vmatprep.mubr.f32.mxu0 0.0
        %7867 = vmatmul.mubr.f32.gmra.mrb[0].mxu0 %v7687
        %v7868 = vpop.f32.mrb[0].mxu0
        %v7869 = vadd.f32 0.0, %v7868
        %v7870 = vpop.f32.mrb[0].mxu0
        %7871 = vmatprep.mubr.f32.mxu0 0.0
        %7872 = vmatmul.mubr.f32.gmra.mrb[0].mxu0 %v7690
        %v7873 = vpop.f32.mrb[0].mxu0
        %v7874 = vadd.f32 0.0, %v7873
        %v7875 = vpop.f32.mrb[0].mxu0
        %7876 = vmatprep.mubr.f32.mxu0 0.0
        %7877 = vmatmul.mubr.f32.gmra.mrb[0].mxu0 %v7693
        %v7878 = vpop.f32.mrb[0].mxu0
        %v7879 = vadd.f32 0.0, %v7878
        %v7880 = vpop.f32.mrb[0].mxu0
        %7881 = vmatprep.mubr.f32.mxu0 0.0
        %7882 = vmatmul.mubr.f32.gmra.mrb[0].mxu0 %v7696
        %v7883 = vpop.f32.mrb[0].mxu0
        %v7884 = vadd.f32 0.0, %v7883
        %v7885 = vpop.f32.mrb[0].mxu0
        %7886 = vmatprep.mubr.f32.mxu0 0.0
        %7887 = vmatmul.mubr.f32.gmra.mrb[0].mxu0 %v7699
        %v7888 = vpop.f32.mrb[0].mxu0
        %v7889 = vadd.f32 0.0, %v7888
        %v7890 = vpop.f32.mrb[0].mxu0
        %7891 = vmatprep.mubr.f32.mxu0 0.0
        %7892 = vmatmul.mubr.f32.gmra.mrb[0].mxu0 %v7702
        %v7893 = vpop.f32.mrb[0].mxu0
        %v7894 = vadd.f32 0.0, %v7893
        %v7895 = vpop.f32.mrb[0].mxu0
        %7896 = vmatprep.mubr.f32.mxu0 0.0
        %7897 = vmatmul.mubr.f32.gmra.mrb[0].mxu0 %v7705
        %v7898 = vpop.f32.mrb[0].mxu0
        %v7899 = vadd.f32 0.0, %v7898
        %v7900 = vpop.f32.mrb[0].mxu0
        %7901 = vmatprep.mubr.f32.mxu0 0.0
        %7902 = vmatmul.mubr.f32.gmra.mrb[0].mxu0 %v7708
        %v7903 = vpop.f32.mrb[0].mxu0
        %v7904 = vadd.f32 0.0, %v7903
        %v7905 = vpop.f32.mrb[0].mxu0
        %7906 = vmatprep.mubr.f32.mxu0 0.0
        %7907 = vmatmul.mubr.f32.gmra.mrb[0].mxu0 %v7711
        %v7908 = vpop.f32.mrb[0].mxu0
        %v7909 = vadd.f32 0.0, %v7908
        %v7910 = vpop.f32.mrb[0].mxu0
        %7911 = vmatprep.mubr.f32.mxu0 0.0
        %7912 = vmatmul.mubr.f32.gmra.mrb[0].mxu0 %v7714
        %v7913 = vpop.f32.mrb[0].mxu0
        %v7914 = vadd.f32 0.0, %v7913
        %v7915 = vpop.f32.mrb[0].mxu0
        %7916 = vmatprep.mubr.f32.mxu0 0.0
        %7917 = vmatmul.mubr.f32.gmra.mrb[0].mxu0 %v7717
        %v7918 = vpop.f32.mrb[0].mxu0
        %v7919 = vadd.f32 0.0, %v7918
        %v7920 = vpop.f32.mrb[0].mxu0
        %7921 = vmatprep.mubr.f32.mxu0 0.0
        %7922 = vmatmul.mubr.f32.gmra.mrb[0].mxu0 %v7720
        %v7923 = vpop.f32.mrb[0].mxu0
        %v7924 = vadd.f32 0.0, %v7923
        %v7925 = vpop.f32.mrb[0].mxu0
        %7926 = vmatprep.mubr.f32.mxu0 0.0
        %7927 = vmatmul.mubr.f32.gmra.mrb[0].mxu0 %v7723
        %v7928 = vpop.f32.mrb[0].mxu0
        %v7929 = vadd.f32 0.0, %v7928
        %v7930 = vpop.f32.mrb[0].mxu0
        %7931 = vmatprep.mubr.f32.mxu0 0.0
        %7932 = vmatmul.mubr.f32.gmra.mrb[0].mxu0 %v7726
        %v7933 = vpop.f32.mrb[0].mxu0
        %v7934 = vadd.f32 0.0, %v7933
        %v7935 = vpop.f32.mrb[0].mxu0
        %7936 = vmatprep.mubr.f32.mxu0 0.0
        %7937 = vmatmul.mubr.f32.gmra.mrb[0].mxu0 %v7729
        %v7938 = vpop.f32.mrb[0].mxu0
        %v7939 = vadd.f32 0.0, %v7938
        %v7940 = vpop.f32.mrb[0].mxu0
        %7941 = vmatprep.mubr.f32.mxu0 0.0
        %7942 = vmatmul.mubr.f32.gmra.mrb[0].mxu0 %v7732
        %v7943 = vpop.f32.mrb[0].mxu0
        %v7944 = vadd.f32 0.0, %v7943
        %v7945 = vpop.f32.mrb[0].mxu0
        %7946 = vmatprep.mubr.f32.mxu0 0.0
        %7947 = vmatmul.mubr.f32.gmra.mrb[0].mxu0 %v7735
        %v7948 = vpop.f32.mrb[0].mxu0
        %v7949 = vadd.f32 0.0, %v7948
        %v7950 = vpop.f32.mrb[0].mxu0
        %7951 = vmatprep.mubr.f32.mxu0 0.0
        %7952 = vmatmul.mubr.f32.gmra.mrb[0].mxu0 %v7738
        %v7953 = vpop.f32.mrb[0].mxu0
        %v7954 = vadd.f32 0.0, %v7953
        %v7955 = vpop.f32.mrb[0].mxu0
        %7956 = vmatprep.mubr.f32.mxu0 0.0
        %7957 = vmatmul.mubr.f32.gmra.mrb[0].mxu0 %v7741
        %v7958 = vpop.f32.mrb[0].mxu0
        %v7959 = vadd.f32 0.0, %v7958
        %v7960 = vpop.f32.mrb[0].mxu0
        %7961 = vmatprep.mubr.f32.mxu0 0.0
        %7962 = vmatmul.mubr.f32.gmra.mrb[0].mxu0 %v7744
        %v7963 = vpop.f32.mrb[0].mxu0
        %v7964 = vadd.f32 0.0, %v7963
        %v7965 = vpop.f32.mrb[0].mxu0
        %7966 = vmatprep.mubr.f32.mxu0 0.0
        %7967 = vmatmul.mubr.f32.gmra.mrb[0].mxu0 %v7747
        %v7968 = vpop.f32.mrb[0].mxu0
        %v7969 = vadd.f32 0.0, %v7968
        %v7970 = vpop.f32.mrb[0].mxu0
        %7971 = vmatprep.mubr.f32.mxu0 0.0
        %7972 = vmatmul.mubr.f32.gmra.mrb[0].mxu0 %v7750
        %v7973 = vpop.f32.mrb[0].mxu0
        %v7974 = vadd.f32 0.0, %v7973
        %v7975 = vpop.f32.mrb[0].mxu0
        %7976 = vmatprep.mubr.f32.mxu0 0.0
        %7977 = vmatmul.mubr.f32.gmra.mrb[0].mxu0 %v7753
        %v7978 = vpop.f32.mrb[0].mxu0
        %v7979 = vadd.f32 0.0, %v7978
        %v7980 = vpop.f32.mrb[0].mxu0
        %7981 = vmatprep.mubr.f32.mxu0 0.0
        %7982 = vmatmul.mubr.f32.gmra.mrb[0].mxu0 %v7756
        %v7983 = vpop.f32.mrb[0].mxu0
        %v7984 = vadd.f32 0.0, %v7983
        %v7985 = vpop.f32.mrb[0].mxu0
        %7986 = vmatprep.mubr.f32.mxu0 0.0
        %7987 = vmatmul.mubr.f32.gmra.mrb[0].mxu0 %v7759
        %v7988 = vpop.f32.mrb[0].mxu0
        %v7989 = vadd.f32 0.0, %v7988
        %v7990 = vpop.f32.mrb[0].mxu0
        %7991 = vmatprep.mubr.f32.mxu0 0.0
        %7992 = vmatmul.mubr.f32.gmra.mrb[0].mxu0 %v7762
        %v7993 = vpop.f32.mrb[0].mxu0
        %v7994 = vadd.f32 0.0, %v7993
        %v7995 = vpop.f32.mrb[0].mxu0
        %7996 = vmatprep.mubr.f32.mxu0 0.0
        %7997 = vmatmul.mubr.f32.gmra.mrb[0].mxu0 %v7765
        %v7998 = vpop.f32.mrb[0].mxu0
        %v7999 = vadd.f32 0.0, %v7998
        %v8000 = vpop.f32.mrb[0].mxu0
        %8001 = vmatprep.mubr.f32.mxu0 0.0
        %8002 = vmatmul.mubr.f32.gmra.mrb[0].mxu0 %v7768
        %v8003 = vpop.f32.mrb[0].mxu0
        %v8004 = vadd.f32 0.0, %v8003
        %v8005 = vpop.f32.mrb[0].mxu0
        %8006 = vmatprep.mubr.f32.mxu0 0.0
        %8007 = vmatmul.mubr.f32.gmra.mrb[0].mxu0 %v7771
        %v8008 = vpop.f32.mrb[0].mxu0
        %v8009 = vadd.f32 0.0, %v8008
        %v8010 = vpop.f32.mrb[0].mxu0
        %8011 = vmatprep.mubr.f32.mxu0 0.0
        %8012 = vmatmul.mubr.f32.gmra.mrb[0].mxu0 %v7774
        %v8013 = vpop.f32.mrb[0].mxu0
        %v8014 = vadd.f32 0.0, %v8013
        %v8015 = vpop.f32.mrb[0].mxu0
        %8016 = vmatprep.mubr.f32.mxu0 0.0
        %8017 = vmatmul.mubr.f32.gmra.mrb[0].mxu0 %v7777
        %v8018 = vpop.f32.mrb[0].mxu0
        %v8019 = vadd.f32 0.0, %v8018
        %v8020 = vpop.f32.mrb[0].mxu0
        %8021 = vmatprep.mubr.f32.mxu0 0.0
        %8022 = vmatmul.mubr.f32.gmra.mrb[0].mxu0 %v7780
        %v8023 = vpop.f32.mrb[0].mxu0
        %v8024 = vadd.f32 0.0, %v8023
        %v8025 = vpop.f32.mrb[0].mxu0
        %8026 = vdwg.mxu0
        %v8027 = vadd.f32 %v7600, %v7849
        %v8028 = vadd.f32 %v7601, %v7854
        %v8029 = vadd.f32 %v7602, %v7859
        %v8030 = vadd.f32 %v7603, %v7864
        %v8031 = vadd.f32 %v7604, %v7869
        %v8032 = vadd.f32 %v7605, %v7874
        %v8033 = vadd.f32 %v7606, %v7879
        %v8034 = vadd.f32 %v7607, %v7884
        %v8035 = vadd.f32 %v7608, %v7889
        %v8036 = vadd.f32 %v7609, %v7894
        %v8037 = vadd.f32 %v7610, %v7899
        %v8038 = vadd.f32 %v7611, %v7904
        %v8039 = vadd.f32 %v7612, %v7909
        %v8040 = vadd.f32 %v7613, %v7914
        %v8041 = vadd.f32 %v7614, %v7919
        %v8042 = vadd.f32 %v7615, %v7924
        %v8043 = vadd.f32 %v7616, %v7929
        %v8044 = vadd.f32 %v7617, %v7934
        %v8045 = vadd.f32 %v7618, %v7939
        %v8046 = vadd.f32 %v7619, %v7944
        %v8047 = vadd.f32 %v7620, %v7949
        %v8048 = vadd.f32 %v7621, %v7954
        %v8049 = vadd.f32 %v7622, %v7959
        %v8050 = vadd.f32 %v7623, %v7964
        %v8051 = vadd.f32 %v7624, %v7969
        %v8052 = vadd.f32 %v7625, %v7974
        %v8053 = vadd.f32 %v7626, %v7979
        %v8054 = vadd.f32 %v7627, %v7984
        %v8055 = vadd.f32 %v7628, %v7989
        %v8056 = vadd.f32 %v7629, %v7994
        %v8057 = vadd.f32 %v7630, %v7999
        %v8058 = vadd.f32 %v7631, %v8004
        %v8059 = vadd.f32 %v7632, %v8009
        %v8060 = vadd.f32 %v7633, %v8014
        %v8061 = vadd.f32 %v7634, %v8019
        %v8062 = vadd.f32 %v7635, %v8024
        %v8063 = vld [vmem:[#allocation2 + $0x2b] sm:$0xff]
        %v8064 = vld [vmem:[#allocation2 + $0x33] sm:$0xff]
        %v8065 = vld [vmem:[#allocation2 + $0x3b] sm:$0xff]
        %v8066 = vld [vmem:[#allocation2 + $0x43] sm:$0xff]
        %v8067 = vld [vmem:[#allocation2 + $0x4b] sm:$0xff]
        %v8068 = vld [vmem:[#allocation2 + $0x53] sm:$0xff]
        %v8069 = vld [vmem:[#allocation2 + $0x5b] sm:$0xff]
        %v8070 = vld [vmem:[#allocation2 + $0x63] sm:$0xff]
        %v8071 = vld [vmem:[#allocation2 + $0x6b] sm:$0xff]
        %v8072 = vld [vmem:[#allocation2 + $0x73] sm:$0xff]
        %v8073 = vld [vmem:[#allocation2 + $0x7b] sm:$0xff]
        %v8074 = vld [vmem:[#allocation2 + $0x83] sm:$0xff]
        %v8075 = vld [vmem:[#allocation2 + $0x8b] sm:$0xff]
        %v8076 = vld [vmem:[#allocation2 + $0x93] sm:$0xff]
        %v8077 = vld [vmem:[#allocation2 + $0x9b] sm:$0xff]
        %v8078 = vld [vmem:[#allocation2 + $0xa3] sm:$0xff]
        %v8079 = vld [vmem:[#allocation2 + $0xab] sm:$0xff]
        %v8080 = vld [vmem:[#allocation2 + $0xb3] sm:$0xff]
        %v8081 = vld [vmem:[#allocation2 + $0xbb] sm:$0xff]
        %v8082 = vld [vmem:[#allocation2 + $0xc3] sm:$0xff]
        %v8083 = vld [vmem:[#allocation2 + $0xcb] sm:$0xff]
        %v8084 = vld [vmem:[#allocation2 + $0xd3] sm:$0xff]
        %v8085 = vld [vmem:[#allocation2 + $0xdb] sm:$0xff]
        %v8086 = vld [vmem:[#allocation2 + $0xe3] sm:$0xff]
        %v8087 = vld [vmem:[#allocation2 + $0xeb] sm:$0xff]
        %v8088 = vld [vmem:[#allocation2 + $0xf3] sm:$0xff]
        %v8089 = vld [vmem:[#allocation2 + $0xfb] sm:$0xff]
        %v8090 = vld [vmem:[#allocation2 + $0x103] sm:$0xff]
        %v8091 = vld [vmem:[#allocation2 + $0x10b] sm:$0xff]
        %v8092 = vld [vmem:[#allocation2 + $0x113] sm:$0xff]
        %v8093 = vld [vmem:[#allocation2 + $0x11b] sm:$0xff]
        %v8094 = vld [vmem:[#allocation2 + $0x123] sm:$0xff]
        %v8095 = vld [vmem:[#allocation2 + $0x12b] sm:$0xff]
        %v8096 = vld [vmem:[#allocation2 + $0x133] sm:$0xff]
        %v8097 = vld [vmem:[#allocation2 + $0x13b] sm:$0xff]
        %v8098 = vld [vmem:[#allocation2 + $0x143] sm:$0xff]
        %s8099 = scalar_lea.vmem %s4, 64
        %v8100 = vld [vmem:[%s8099] sm:$0xff]
        %v8102 = vsel %vm506, %v8063, 0
        %v8105 = vsel %vm506, %v8064, 0
        %v8108 = vsel %vm506, %v8065, 0
        %v8111 = vsel %vm506, %v8066, 0
        %v8114 = vsel %vm506, %v8067, 0
        %v8117 = vsel %vm506, %v8068, 0
        %v8120 = vsel %vm506, %v8069, 0
        %v8123 = vsel %vm506, %v8070, 0
        %v8126 = vsel %vm506, %v8071, 0
        %v8129 = vsel %vm506, %v8072, 0
        %v8132 = vsel %vm506, %v8073, 0
        %v8135 = vsel %vm506, %v8074, 0
        %v8138 = vsel %vm506, %v8075, 0
        %v8141 = vsel %vm506, %v8076, 0
        %v8144 = vsel %vm506, %v8077, 0
        %v8147 = vsel %vm506, %v8078, 0
        %v8150 = vsel %vm506, %v8079, 0
        %v8153 = vsel %vm506, %v8080, 0
        %v8156 = vsel %vm506, %v8081, 0
        %v8159 = vsel %vm506, %v8082, 0
        %v8162 = vsel %vm506, %v8083, 0
        %v8165 = vsel %vm506, %v8084, 0
        %v8168 = vsel %vm506, %v8085, 0
        %v8171 = vsel %vm506, %v8086, 0
        %v8174 = vsel %vm506, %v8087, 0
        %v8177 = vsel %vm506, %v8088, 0
        %v8180 = vsel %vm506, %v8089, 0
        %v8183 = vsel %vm506, %v8090, 0
        %v8186 = vsel %vm506, %v8091, 0
        %v8189 = vsel %vm506, %v8092, 0
        %v8192 = vsel %vm506, %v8093, 0
        %v8195 = vsel %vm506, %v8094, 0
        %v8198 = vsel %vm506, %v8095, 0
        %v8201 = vsel %vm506, %v8096, 0
        %v8204 = vsel %vm506, %v8097, 0
        %v8207 = vsel %vm506, %v8098, 0
        %8209 = vmatprep.subr.mxu0 0.0
        %8210 = vmatpush1.msra.mxu0 %v8100
        %8211 = vmatprep.subr.mxu0 0.0
        %8212 = vmatpush1.msra.mxu0 0.0
        %8213 = vmatprep.subr.mxu0 0.0
        %8214 = vmatpush1.msra.mxu0 0.0
        %8215 = vmatprep.subr.mxu0 0.0
        %8216 = vmatpush1.msra.mxu0 0.0
        %8217 = vmatprep.subr.mxu0 0.0
        %8218 = vmatpush1.msra.mxu0 0.0
        %8219 = vmatprep.subr.mxu0 0.0
        %8220 = vmatpush1.msra.mxu0 0.0
        %8221 = vmatprep.subr.mxu0 0.0
        %8222 = vmatpush1.msra.mxu0 0.0
        %8223 = vmatprep.subr.mxu0 0.0
        %8224 = vmatpush1.msra.mxu0 0.0
        %8225 = vmatprep.subr.mxu0 0.0
        %8226 = vmatpush1.msra.mxu0 0.0
        %8227 = vmatprep.subr.mxu0 0.0
        %8228 = vmatpush1.msra.mxu0 0.0
        %8229 = vmatprep.subr.mxu0 0.0
        %8230 = vmatpush1.msra.mxu0 0.0
        %8231 = vmatprep.subr.mxu0 0.0
        %8232 = vmatpush1.msra.mxu0 0.0
        %8233 = vmatprep.subr.mxu0 0.0
        %8234 = vmatpush1.msra.mxu0 0.0
        %8235 = vmatprep.subr.mxu0 0.0
        %8236 = vmatpush1.msra.mxu0 0.0
        %8237 = vmatprep.subr.mxu0 0.0
        %8238 = vmatpush1.msra.mxu0 0.0
        %8239 = vmatprep.subr.mxu0 0.0
        %8240 = vmatpush1.msra.mxu0 0.0
        %8241 = vmatprep.subr.mxu0 0.0
        %8242 = vmatpush1.msra.mxu0 0.0
        %8243 = vmatprep.subr.mxu0 0.0
        %8244 = vmatpush1.msra.mxu0 0.0
        %8245 = vmatprep.subr.mxu0 0.0
        %8246 = vmatpush1.msra.mxu0 0.0
        %8247 = vmatprep.subr.mxu0 0.0
        %8248 = vmatpush1.msra.mxu0 0.0
        %8249 = vmatprep.subr.mxu0 0.0
        %8250 = vmatpush1.msra.mxu0 0.0
        %8251 = vmatprep.subr.mxu0 0.0
        %8252 = vmatpush1.msra.mxu0 0.0
        %8253 = vmatprep.subr.mxu0 0.0
        %8254 = vmatpush1.msra.mxu0 0.0
        %8255 = vmatprep.subr.mxu0 0.0
        %8256 = vmatpush1.msra.mxu0 0.0
        %8257 = vmatprep.subr.mxu0 0.0
        %8258 = vmatpush1.msra.mxu0 0.0
        %8259 = vmatprep.subr.mxu0 0.0
        %8260 = vmatpush1.msra.mxu0 0.0
        %8261 = vmatprep.subr.mxu0 0.0
        %8262 = vmatpush1.msra.mxu0 0.0
        %8263 = vmatprep.subr.mxu0 0.0
        %8264 = vmatpush1.msra.mxu0 0.0
        %8265 = vmatprep.subr.mxu0 0.0
        %8266 = vmatpush1.msra.mxu0 0.0
        %8267 = vmatprep.subr.mxu0 0.0
        %8268 = vmatpush1.msra.mxu0 0.0
        %8269 = vmatprep.subr.mxu0 0.0
        %8270 = vmatpush1.msra.mxu0 0.0
        %8271 = vmatprep.subr.mxu0 0.0
        %8272 = vmatpush1.msra.mxu0 0.0
        %8273 = vmatprep.mubr.f32.mxu0 0.0
        %8274 = vmatmul.mubr.f32.gmra.mrb[0].mxu0 %v8102
        %v8275 = vpop.f32.mrb[0].mxu0
        %v8276 = vadd.f32 0.0, %v8275
        %v8277 = vpop.f32.mrb[0].mxu0
        %8278 = vmatprep.mubr.f32.mxu0 0.0
        %8279 = vmatmul.mubr.f32.gmra.mrb[0].mxu0 %v8105
        %v8280 = vpop.f32.mrb[0].mxu0
        %v8281 = vadd.f32 0.0, %v8280
        %v8282 = vpop.f32.mrb[0].mxu0
        %8283 = vmatprep.mubr.f32.mxu0 0.0
        %8284 = vmatmul.mubr.f32.gmra.mrb[0].mxu0 %v8108
        %v8285 = vpop.f32.mrb[0].mxu0
        %v8286 = vadd.f32 0.0, %v8285
        %v8287 = vpop.f32.mrb[0].mxu0
        %8288 = vmatprep.mubr.f32.mxu0 0.0
        %8289 = vmatmul.mubr.f32.gmra.mrb[0].mxu0 %v8111
        %v8290 = vpop.f32.mrb[0].mxu0
        %v8291 = vadd.f32 0.0, %v8290
        %v8292 = vpop.f32.mrb[0].mxu0
        %8293 = vmatprep.mubr.f32.mxu0 0.0
        %8294 = vmatmul.mubr.f32.gmra.mrb[0].mxu0 %v8114
        %v8295 = vpop.f32.mrb[0].mxu0
        %v8296 = vadd.f32 0.0, %v8295
        %v8297 = vpop.f32.mrb[0].mxu0
        %8298 = vmatprep.mubr.f32.mxu0 0.0
        %8299 = vmatmul.mubr.f32.gmra.mrb[0].mxu0 %v8117
        %v8300 = vpop.f32.mrb[0].mxu0
        %v8301 = vadd.f32 0.0, %v8300
        %v8302 = vpop.f32.mrb[0].mxu0
        %8303 = vmatprep.mubr.f32.mxu0 0.0
        %8304 = vmatmul.mubr.f32.gmra.mrb[0].mxu0 %v8120
        %v8305 = vpop.f32.mrb[0].mxu0
        %v8306 = vadd.f32 0.0, %v8305
        %v8307 = vpop.f32.mrb[0].mxu0
        %8308 = vmatprep.mubr.f32.mxu0 0.0
        %8309 = vmatmul.mubr.f32.gmra.mrb[0].mxu0 %v8123
        %v8310 = vpop.f32.mrb[0].mxu0
        %v8311 = vadd.f32 0.0, %v8310
        %v8312 = vpop.f32.mrb[0].mxu0
        %8313 = vmatprep.mubr.f32.mxu0 0.0
        %8314 = vmatmul.mubr.f32.gmra.mrb[0].mxu0 %v8126
        %v8315 = vpop.f32.mrb[0].mxu0
        %v8316 = vadd.f32 0.0, %v8315
        %v8317 = vpop.f32.mrb[0].mxu0
        %8318 = vmatprep.mubr.f32.mxu0 0.0
        %8319 = vmatmul.mubr.f32.gmra.mrb[0].mxu0 %v8129
        %v8320 = vpop.f32.mrb[0].mxu0
        %v8321 = vadd.f32 0.0, %v8320
        %v8322 = vpop.f32.mrb[0].mxu0
        %8323 = vmatprep.mubr.f32.mxu0 0.0
        %8324 = vmatmul.mubr.f32.gmra.mrb[0].mxu0 %v8132
        %v8325 = vpop.f32.mrb[0].mxu0
        %v8326 = vadd.f32 0.0, %v8325
        %v8327 = vpop.f32.mrb[0].mxu0
        %8328 = vmatprep.mubr.f32.mxu0 0.0
        %8329 = vmatmul.mubr.f32.gmra.mrb[0].mxu0 %v8135
        %v8330 = vpop.f32.mrb[0].mxu0
        %v8331 = vadd.f32 0.0, %v8330
        %v8332 = vpop.f32.mrb[0].mxu0
        %8333 = vmatprep.mubr.f32.mxu0 0.0
        %8334 = vmatmul.mubr.f32.gmra.mrb[0].mxu0 %v8138
        %v8335 = vpop.f32.mrb[0].mxu0
        %v8336 = vadd.f32 0.0, %v8335
        %v8337 = vpop.f32.mrb[0].mxu0
        %8338 = vmatprep.mubr.f32.mxu0 0.0
        %8339 = vmatmul.mubr.f32.gmra.mrb[0].mxu0 %v8141
        %v8340 = vpop.f32.mrb[0].mxu0
        %v8341 = vadd.f32 0.0, %v8340
        %v8342 = vpop.f32.mrb[0].mxu0
        %8343 = vmatprep.mubr.f32.mxu0 0.0
        %8344 = vmatmul.mubr.f32.gmra.mrb[0].mxu0 %v8144
        %v8345 = vpop.f32.mrb[0].mxu0
        %v8346 = vadd.f32 0.0, %v8345
        %v8347 = vpop.f32.mrb[0].mxu0
        %8348 = vmatprep.mubr.f32.mxu0 0.0
        %8349 = vmatmul.mubr.f32.gmra.mrb[0].mxu0 %v8147
        %v8350 = vpop.f32.mrb[0].mxu0
        %v8351 = vadd.f32 0.0, %v8350
        %v8352 = vpop.f32.mrb[0].mxu0
        %8353 = vmatprep.mubr.f32.mxu0 0.0
        %8354 = vmatmul.mubr.f32.gmra.mrb[0].mxu0 %v8150
        %v8355 = vpop.f32.mrb[0].mxu0
        %v8356 = vadd.f32 0.0, %v8355
        %v8357 = vpop.f32.mrb[0].mxu0
        %8358 = vmatprep.mubr.f32.mxu0 0.0
        %8359 = vmatmul.mubr.f32.gmra.mrb[0].mxu0 %v8153
        %v8360 = vpop.f32.mrb[0].mxu0
        %v8361 = vadd.f32 0.0, %v8360
        %v8362 = vpop.f32.mrb[0].mxu0
        %8363 = vmatprep.mubr.f32.mxu0 0.0
        %8364 = vmatmul.mubr.f32.gmra.mrb[0].mxu0 %v8156
        %v8365 = vpop.f32.mrb[0].mxu0
        %v8366 = vadd.f32 0.0, %v8365
        %v8367 = vpop.f32.mrb[0].mxu0
        %8368 = vmatprep.mubr.f32.mxu0 0.0
        %8369 = vmatmul.mubr.f32.gmra.mrb[0].mxu0 %v8159
        %v8370 = vpop.f32.mrb[0].mxu0
        %v8371 = vadd.f32 0.0, %v8370
        %v8372 = vpop.f32.mrb[0].mxu0
        %8373 = vmatprep.mubr.f32.mxu0 0.0
        %8374 = vmatmul.mubr.f32.gmra.mrb[0].mxu0 %v8162
        %v8375 = vpop.f32.mrb[0].mxu0
        %v8376 = vadd.f32 0.0, %v8375
        %v8377 = vpop.f32.mrb[0].mxu0
        %8378 = vmatprep.mubr.f32.mxu0 0.0
        %8379 = vmatmul.mubr.f32.gmra.mrb[0].mxu0 %v8165
        %v8380 = vpop.f32.mrb[0].mxu0
        %v8381 = vadd.f32 0.0, %v8380
        %v8382 = vpop.f32.mrb[0].mxu0
        %8383 = vmatprep.mubr.f32.mxu0 0.0
        %8384 = vmatmul.mubr.f32.gmra.mrb[0].mxu0 %v8168
        %v8385 = vpop.f32.mrb[0].mxu0
        %v8386 = vadd.f32 0.0, %v8385
        %v8387 = vpop.f32.mrb[0].mxu0
        %8388 = vmatprep.mubr.f32.mxu0 0.0
        %8389 = vmatmul.mubr.f32.gmra.mrb[0].mxu0 %v8171
        %v8390 = vpop.f32.mrb[0].mxu0
        %v8391 = vadd.f32 0.0, %v8390
        %v8392 = vpop.f32.mrb[0].mxu0
        %8393 = vmatprep.mubr.f32.mxu0 0.0
        %8394 = vmatmul.mubr.f32.gmra.mrb[0].mxu0 %v8174
        %v8395 = vpop.f32.mrb[0].mxu0
        %v8396 = vadd.f32 0.0, %v8395
        %v8397 = vpop.f32.mrb[0].mxu0
        %8398 = vmatprep.mubr.f32.mxu0 0.0
        %8399 = vmatmul.mubr.f32.gmra.mrb[0].mxu0 %v8177
        %v8400 = vpop.f32.mrb[0].mxu0
        %v8401 = vadd.f32 0.0, %v8400
        %v8402 = vpop.f32.mrb[0].mxu0
        %8403 = vmatprep.mubr.f32.mxu0 0.0
        %8404 = vmatmul.mubr.f32.gmra.mrb[0].mxu0 %v8180
        %v8405 = vpop.f32.mrb[0].mxu0
        %v8406 = vadd.f32 0.0, %v8405
        %v8407 = vpop.f32.mrb[0].mxu0
        %8408 = vmatprep.mubr.f32.mxu0 0.0
        %8409 = vmatmul.mubr.f32.gmra.mrb[0].mxu0 %v8183
        %v8410 = vpop.f32.mrb[0].mxu0
        %v8411 = vadd.f32 0.0, %v8410
        %v8412 = vpop.f32.mrb[0].mxu0
        %8413 = vmatprep.mubr.f32.mxu0 0.0
        %8414 = vmatmul.mubr.f32.gmra.mrb[0].mxu0 %v8186
        %v8415 = vpop.f32.mrb[0].mxu0
        %v8416 = vadd.f32 0.0, %v8415
        %v8417 = vpop.f32.mrb[0].mxu0
        %8418 = vmatprep.mubr.f32.mxu0 0.0
        %8419 = vmatmul.mubr.f32.gmra.mrb[0].mxu0 %v8189
        %v8420 = vpop.f32.mrb[0].mxu0
        %v8421 = vadd.f32 0.0, %v8420
        %v8422 = vpop.f32.mrb[0].mxu0
        %8423 = vmatprep.mubr.f32.mxu0 0.0
        %8424 = vmatmul.mubr.f32.gmra.mrb[0].mxu0 %v8192
        %v8425 = vpop.f32.mrb[0].mxu0
        %v8426 = vadd.f32 0.0, %v8425
        %v8427 = vpop.f32.mrb[0].mxu0
        %8428 = vmatprep.mubr.f32.mxu0 0.0
        %8429 = vmatmul.mubr.f32.gmra.mrb[0].mxu0 %v8195
        %v8430 = vpop.f32.mrb[0].mxu0
        %v8431 = vadd.f32 0.0, %v8430
        %v8432 = vpop.f32.mrb[0].mxu0
        %8433 = vmatprep.mubr.f32.mxu0 0.0
        %8434 = vmatmul.mubr.f32.gmra.mrb[0].mxu0 %v8198
        %v8435 = vpop.f32.mrb[0].mxu0
        %v8436 = vadd.f32 0.0, %v8435
        %v8437 = vpop.f32.mrb[0].mxu0
        %8438 = vmatprep.mubr.f32.mxu0 0.0
        %8439 = vmatmul.mubr.f32.gmra.mrb[0].mxu0 %v8201
        %v8440 = vpop.f32.mrb[0].mxu0
        %v8441 = vadd.f32 0.0, %v8440
        %v8442 = vpop.f32.mrb[0].mxu0
        %8443 = vmatprep.mubr.f32.mxu0 0.0
        %8444 = vmatmul.mubr.f32.gmra.mrb[0].mxu0 %v8204
        %v8445 = vpop.f32.mrb[0].mxu0
        %v8446 = vadd.f32 0.0, %v8445
        %v8447 = vpop.f32.mrb[0].mxu0
        %8448 = vmatprep.mubr.f32.mxu0 0.0
        %8449 = vmatmul.mubr.f32.gmra.mrb[0].mxu0 %v8207
        %v8450 = vpop.f32.mrb[0].mxu0
        %v8451 = vadd.f32 0.0, %v8450
        %v8452 = vpop.f32.mrb[0].mxu0
        %8453 = vdwg.mxu0
        %v8454 = vadd.f32 %v8027, %v8276
        %v8455 = vadd.f32 %v8028, %v8281
        %v8456 = vadd.f32 %v8029, %v8286
        %v8457 = vadd.f32 %v8030, %v8291
        %v8458 = vadd.f32 %v8031, %v8296
        %v8459 = vadd.f32 %v8032, %v8301
        %v8460 = vadd.f32 %v8033, %v8306
        %v8461 = vadd.f32 %v8034, %v8311
        %v8462 = vadd.f32 %v8035, %v8316
        %v8463 = vadd.f32 %v8036, %v8321
        %v8464 = vadd.f32 %v8037, %v8326
        %v8465 = vadd.f32 %v8038, %v8331
        %v8466 = vadd.f32 %v8039, %v8336
        %v8467 = vadd.f32 %v8040, %v8341
        %v8468 = vadd.f32 %v8041, %v8346
        %v8469 = vadd.f32 %v8042, %v8351
        %v8470 = vadd.f32 %v8043, %v8356
        %v8471 = vadd.f32 %v8044, %v8361
        %v8472 = vadd.f32 %v8045, %v8366
        %v8473 = vadd.f32 %v8046, %v8371
        %v8474 = vadd.f32 %v8047, %v8376
        %v8475 = vadd.f32 %v8048, %v8381
        %v8476 = vadd.f32 %v8049, %v8386
        %v8477 = vadd.f32 %v8050, %v8391
        %v8478 = vadd.f32 %v8051, %v8396
        %v8479 = vadd.f32 %v8052, %v8401
        %v8480 = vadd.f32 %v8053, %v8406
        %v8481 = vadd.f32 %v8054, %v8411
        %v8482 = vadd.f32 %v8055, %v8416
        %v8483 = vadd.f32 %v8056, %v8421
        %v8484 = vadd.f32 %v8057, %v8426
        %v8485 = vadd.f32 %v8058, %v8431
        %v8486 = vadd.f32 %v8059, %v8436
        %v8487 = vadd.f32 %v8060, %v8441
        %v8488 = vadd.f32 %v8061, %v8446
        %v8489 = vadd.f32 %v8062, %v8451
        %v8490 = vld [vmem:[%s5] sm:$0x1]
        %v8492 = vlaneseq
        %v8493 = vshrl.u32 %v8492, 7
        %v8494 = vsub.s32 0, %v8493
        %v8495 = vrot.slane %v8490, %v8494
        %v8497 = vadd.f32 %v8454, %v8495
        %v8498 = vadd.f32 %v8455, %v8495
        %v8499 = vadd.f32 %v8456, %v8495
        %v8500 = vadd.f32 %v8457, %v8495
        %v8501 = vadd.f32 %v8458, %v8495
        %v8502 = vadd.f32 %v8459, %v8495
        %v8503 = vadd.f32 %v8460, %v8495
        %v8504 = vadd.f32 %v8461, %v8495
        %v8505 = vadd.f32 %v8462, %v8495
        %v8506 = vadd.f32 %v8463, %v8495
        %v8507 = vadd.f32 %v8464, %v8495
        %v8508 = vadd.f32 %v8465, %v8495
        %v8509 = vadd.f32 %v8466, %v8495
        %v8510 = vadd.f32 %v8467, %v8495
        %v8511 = vadd.f32 %v8468, %v8495
        %v8512 = vadd.f32 %v8469, %v8495
        %v8513 = vadd.f32 %v8470, %v8495
        %v8514 = vadd.f32 %v8471, %v8495
        %v8515 = vadd.f32 %v8472, %v8495
        %v8516 = vadd.f32 %v8473, %v8495
        %v8517 = vadd.f32 %v8474, %v8495
        %v8518 = vadd.f32 %v8475, %v8495
        %v8519 = vadd.f32 %v8476, %v8495
        %v8520 = vadd.f32 %v8477, %v8495
        %v8521 = vadd.f32 %v8478, %v8495
        %v8522 = vadd.f32 %v8479, %v8495
        %v8523 = vadd.f32 %v8480, %v8495
        %v8524 = vadd.f32 %v8481, %v8495
        %v8525 = vadd.f32 %v8482, %v8495
        %v8526 = vadd.f32 %v8483, %v8495
        %v8527 = vadd.f32 %v8484, %v8495
        %v8528 = vadd.f32 %v8485, %v8495
        %v8529 = vadd.f32 %v8486, %v8495
        %v8530 = vadd.f32 %v8487, %v8495
        %v8531 = vadd.f32 %v8488, %v8495
        %v8532 = vadd.f32 %v8489, %v8495
        %v8533 = vmax.f32 %v8497, 0.0
        %v8534 = vmax.f32 %v8498, 0.0
        %v8535 = vmax.f32 %v8499, 0.0
        %v8536 = vmax.f32 %v8500, 0.0
        %v8537 = vmax.f32 %v8501, 0.0
        %v8538 = vmax.f32 %v8502, 0.0
        %v8539 = vmax.f32 %v8503, 0.0
        %v8540 = vmax.f32 %v8504, 0.0
        %v8541 = vmax.f32 %v8505, 0.0
        %v8542 = vmax.f32 %v8506, 0.0
        %v8543 = vmax.f32 %v8507, 0.0
        %v8544 = vmax.f32 %v8508, 0.0
        %v8545 = vmax.f32 %v8509, 0.0
        %v8546 = vmax.f32 %v8510, 0.0
        %v8547 = vmax.f32 %v8511, 0.0
        %v8548 = vmax.f32 %v8512, 0.0
        %v8549 = vmax.f32 %v8513, 0.0
        %v8550 = vmax.f32 %v8514, 0.0
        %v8551 = vmax.f32 %v8515, 0.0
        %v8552 = vmax.f32 %v8516, 0.0
        %v8553 = vmax.f32 %v8517, 0.0
        %v8554 = vmax.f32 %v8518, 0.0
        %v8555 = vmax.f32 %v8519, 0.0
        %v8556 = vmax.f32 %v8520, 0.0
        %v8557 = vmax.f32 %v8521, 0.0
        %v8558 = vmax.f32 %v8522, 0.0
        %v8559 = vmax.f32 %v8523, 0.0
        %v8560 = vmax.f32 %v8524, 0.0
        %v8561 = vmax.f32 %v8525, 0.0
        %v8562 = vmax.f32 %v8526, 0.0
        %v8563 = vmax.f32 %v8527, 0.0
        %v8564 = vmax.f32 %v8528, 0.0
        %v8565 = vmax.f32 %v8529, 0.0
        %v8566 = vmax.f32 %v8530, 0.0
        %v8567 = vmax.f32 %v8531, 0.0
        %v8568 = vmax.f32 %v8532, 0.0
        %v8569 = vmul.f32 %v8533, %v4284
        %v8570 = vmul.f32 %v8534, %v4289
        %v8571 = vmul.f32 %v8535, %v4294
        %v8572 = vmul.f32 %v8536, %v4299
        %v8573 = vmul.f32 %v8537, %v4304
        %v8574 = vmul.f32 %v8538, %v4309
        %v8575 = vmul.f32 %v8539, %v4314
        %v8576 = vmul.f32 %v8540, %v4319
        %v8577 = vmul.f32 %v8541, %v4324
        %v8578 = vmul.f32 %v8542, %v4329
        %v8579 = vmul.f32 %v8543, %v4334
        %v8580 = vmul.f32 %v8544, %v4339
        %v8581 = vmul.f32 %v8545, %v4344
        %v8582 = vmul.f32 %v8546, %v4349
        %v8583 = vmul.f32 %v8547, %v4354
        %v8584 = vmul.f32 %v8548, %v4359
        %v8585 = vmul.f32 %v8549, %v4364
        %v8586 = vmul.f32 %v8550, %v4369
        %v8587 = vmul.f32 %v8551, %v4374
        %v8588 = vmul.f32 %v8552, %v4379
        %v8589 = vmul.f32 %v8553, %v4384
        %v8590 = vmul.f32 %v8554, %v4389
        %v8591 = vmul.f32 %v8555, %v4394
        %v8592 = vmul.f32 %v8556, %v4399
        %v8593 = vmul.f32 %v8557, %v4404
        %v8594 = vmul.f32 %v8558, %v4409
        %v8595 = vmul.f32 %v8559, %v4414
        %v8596 = vmul.f32 %v8560, %v4419
        %v8597 = vmul.f32 %v8561, %v4424
        %v8598 = vmul.f32 %v8562, %v4429
        %v8599 = vmul.f32 %v8563, %v4434
        %v8600 = vmul.f32 %v8564, %v4439
        %v8601 = vmul.f32 %v8565, %v4444
        %v8602 = vmul.f32 %v8566, %v4449
        %v8603 = vmul.f32 %v8567, %v4454
        %v8604 = vmul.f32 %v8568, %v4459
        %8605 = vmatprep.subr.mxu0 0.0
        %8606 = vmatpush1.msra.mxu0 %v8569
        %8607 = vmatprep.subr.mxu0 0.0
        %8608 = vmatpush1.msra.mxu0 %v8570
        %8609 = vmatprep.subr.mxu0 0.0
        %8610 = vmatpush1.msra.mxu0 %v8571
        %8611 = vmatprep.subr.mxu0 0.0
        %8612 = vmatpush1.msra.mxu0 %v8572
        %8613 = vmatprep.subr.mxu0 0.0
        %8614 = vmatpush1.msra.mxu0 %v8573
        %8615 = vmatprep.subr.mxu0 0.0
        %8616 = vmatpush1.msra.mxu0 %v8574
        %8617 = vmatprep.subr.mxu0 0.0
        %8618 = vmatpush1.msra.mxu0 %v8575
        %8619 = vmatprep.subr.mxu0 0.0
        %8620 = vmatpush1.msra.mxu0 %v8576
        %8621 = vmatprep.subr.mxu0 0.0
        %8622 = vmatpush1.msra.mxu0 %v8577
        %8623 = vmatprep.subr.mxu0 0.0
        %8624 = vmatpush1.msra.mxu0 %v8578
        %8625 = vmatprep.subr.mxu0 0.0
        %8626 = vmatpush1.msra.mxu0 %v8579
        %8627 = vmatprep.subr.mxu0 0.0
        %8628 = vmatpush1.msra.mxu0 %v8580
        %8629 = vmatprep.subr.mxu0 0.0
        %8630 = vmatpush1.msra.mxu0 %v8581
        %8631 = vmatprep.subr.mxu0 0.0
        %8632 = vmatpush1.msra.mxu0 %v8582
        %8633 = vmatprep.subr.mxu0 0.0
        %8634 = vmatpush1.msra.mxu0 %v8583
        %8635 = vmatprep.subr.mxu0 0.0
        %8636 = vmatpush1.msra.mxu0 %v8584
        %8637 = vmatprep.subr.mxu0 0.0
        %8638 = vmatpush1.msra.mxu0 %v8585
        %8639 = vmatprep.subr.mxu0 0.0
        %8640 = vmatpush1.msra.mxu0 %v8586
        %8641 = vmatprep.subr.mxu0 0.0
        %8642 = vmatpush1.msra.mxu0 %v8587
        %8643 = vmatprep.subr.mxu0 0.0
        %8644 = vmatpush1.msra.mxu0 %v8588
        %8645 = vmatprep.subr.mxu0 0.0
        %8646 = vmatpush1.msra.mxu0 %v8589
        %8647 = vmatprep.subr.mxu0 0.0
        %8648 = vmatpush1.msra.mxu0 %v8590
        %8649 = vmatprep.subr.mxu0 0.0
        %8650 = vmatpush1.msra.mxu0 %v8591
        %8651 = vmatprep.subr.mxu0 0.0
        %8652 = vmatpush1.msra.mxu0 %v8592
        %8653 = vmatprep.subr.mxu0 0.0
        %8654 = vmatpush1.msra.mxu0 %v8593
        %8655 = vmatprep.subr.mxu0 0.0
        %8656 = vmatpush1.msra.mxu0 %v8594
        %8657 = vmatprep.subr.mxu0 0.0
        %8658 = vmatpush1.msra.mxu0 %v8595
        %8659 = vmatprep.subr.mxu0 0.0
        %8660 = vmatpush1.msra.mxu0 %v8596
        %8661 = vmatprep.subr.mxu0 0.0
        %8662 = vmatpush1.msra.mxu0 %v8597
        %8663 = vmatprep.subr.mxu0 0.0
        %8664 = vmatpush1.msra.mxu0 %v8598
        %8665 = vmatprep.subr.mxu0 0.0
        %8666 = vmatpush1.msra.mxu0 %v8599
        %8667 = vmatprep.subr.mxu0 0.0
        %8668 = vmatpush1.msra.mxu0 %v8600
        %8669 = vmatprep.mubr.f32.mxu0 1.0
        %8670 = vmatmul.mubr.f32.gmra.mrb[0].mxu0 1.0
        %v8671 = vpop.f32.mrb[0].mxu0
        %v8672 = vadd.f32 0.0, %v8671
        %v8673 = vpop.f32.mrb[0].mxu0
        %8674 = vdwg.mxu0
        %8675 = vmatprep.subr.mxu0 0.0
        %8676 = vmatpush1.msra.mxu0 %v8601
        %8677 = vmatprep.subr.mxu0 0.0
        %8678 = vmatpush1.msra.mxu0 %v8602
        %8679 = vmatprep.subr.mxu0 0.0
        %8680 = vmatpush1.msra.mxu0 %v8603
        %8681 = vmatprep.subr.mxu0 0.0
        %8682 = vmatpush1.msra.mxu0 %v8604
        %8683 = vmatprep.subr.mxu0 0.0
        %8684 = vmatpush1.msra.mxu0 0.0
        %8685 = vmatprep.subr.mxu0 0.0
        %8686 = vmatpush1.msra.mxu0 0.0
        %8687 = vmatprep.subr.mxu0 0.0
        %8688 = vmatpush1.msra.mxu0 0.0
        %8689 = vmatprep.subr.mxu0 0.0
        %8690 = vmatpush1.msra.mxu0 0.0
        %8691 = vmatprep.subr.mxu0 0.0
        %8692 = vmatpush1.msra.mxu0 0.0
        %8693 = vmatprep.subr.mxu0 0.0
        %8694 = vmatpush1.msra.mxu0 0.0
        %8695 = vmatprep.subr.mxu0 0.0
        %8696 = vmatpush1.msra.mxu0 0.0
        %8697 = vmatprep.subr.mxu0 0.0
        %8698 = vmatpush1.msra.mxu0 0.0
        %8699 = vmatprep.subr.mxu0 0.0
        %8700 = vmatpush1.msra.mxu0 0.0
        %8701 = vmatprep.subr.mxu0 0.0
        %8702 = vmatpush1.msra.mxu0 0.0
        %8703 = vmatprep.subr.mxu0 0.0
        %8704 = vmatpush1.msra.mxu0 0.0
        %8705 = vmatprep.subr.mxu0 0.0
        %8706 = vmatpush1.msra.mxu0 0.0
        %8707 = vmatprep.subr.mxu0 0.0
        %8708 = vmatpush1.msra.mxu0 0.0
        %8709 = vmatprep.subr.mxu0 0.0
        %8710 = vmatpush1.msra.mxu0 0.0
        %8711 = vmatprep.subr.mxu0 0.0
        %8712 = vmatpush1.msra.mxu0 0.0
        %8713 = vmatprep.subr.mxu0 0.0
        %8714 = vmatpush1.msra.mxu0 0.0
        %8715 = vmatprep.subr.mxu0 0.0
        %8716 = vmatpush1.msra.mxu0 0.0
        %8717 = vmatprep.subr.mxu0 0.0
        %8718 = vmatpush1.msra.mxu0 0.0
        %8719 = vmatprep.subr.mxu0 0.0
        %8720 = vmatpush1.msra.mxu0 0.0
        %8721 = vmatprep.subr.mxu0 0.0
        %8722 = vmatpush1.msra.mxu0 0.0
        %8723 = vmatprep.subr.mxu0 0.0
        %8724 = vmatpush1.msra.mxu0 0.0
        %8725 = vmatprep.subr.mxu0 0.0
        %8726 = vmatpush1.msra.mxu0 0.0
        %8727 = vmatprep.subr.mxu0 0.0
        %8728 = vmatpush1.msra.mxu0 0.0
        %8729 = vmatprep.subr.mxu0 0.0
        %8730 = vmatpush1.msra.mxu0 0.0
        %8731 = vmatprep.subr.mxu0 0.0
        %8732 = vmatpush1.msra.mxu0 0.0
        %8733 = vmatprep.subr.mxu0 0.0
        %8734 = vmatpush1.msra.mxu0 0.0
        %8735 = vmatprep.subr.mxu0 0.0
        %8736 = vmatpush1.msra.mxu0 0.0
        %8737 = vmatprep.subr.mxu0 0.0
        %8738 = vmatpush1.msra.mxu0 0.0
        %8739 = vmatprep.mubr.f32.mxu0 0.0
        %8740 = vmatmul.mubr.f32.gmra.mrb[0].mxu0 %v4499
        %v8741 = vpop.f32.mrb[0].mxu0
        %v8742 = vadd.f32 %v8672, %v8741
        %v8743 = vpop.f32.mrb[0].mxu0
        %8744 = vdwg.mxu0
        %v8745 = vmul.f32 %v8742, 0.00390625
        %v8746 = vld [vmem:[%s6] sm:$0xff]
        %v8747 = vld [vmem:[%s6 + $0x8] sm:$0xff]
        %v8748 = vld [vmem:[%s7] sm:$0x1]
        %vm8749 = vcmask 130048
        %v8751 = vsel %vm8749, %v8745, 0
        %8753 = vmatprep.subr.mxu0 0.0
        %8754 = vmatpush1.msra.mxu0 %v8746
        %8755 = vmatprep.subr.mxu0 0.0
        %8756 = vmatpush1.msra.mxu0 %v8747
        %8757 = vmatprep.subr.mxu0 0.0
        %8758 = vmatpush1.msra.mxu0 0.0
        %8759 = vmatprep.subr.mxu0 0.0
        %8760 = vmatpush1.msra.mxu0 0.0
        %8761 = vmatprep.subr.mxu0 0.0
        %8762 = vmatpush1.msra.mxu0 0.0
        %8763 = vmatprep.subr.mxu0 0.0
        %8764 = vmatpush1.msra.mxu0 0.0
        %8765 = vmatprep.subr.mxu0 0.0
        %8766 = vmatpush1.msra.mxu0 0.0
        %8767 = vmatprep.subr.mxu0 0.0
        %8768 = vmatpush1.msra.mxu0 0.0
        %8769 = vmatprep.subr.mxu0 0.0
        %8770 = vmatpush1.msra.mxu0 0.0
        %8771 = vmatprep.subr.mxu0 0.0
        %8772 = vmatpush1.msra.mxu0 0.0
        %8773 = vmatprep.subr.mxu0 0.0
        %8774 = vmatpush1.msra.mxu0 0.0
        %8775 = vmatprep.subr.mxu0 0.0
        %8776 = vmatpush1.msra.mxu0 0.0
        %8777 = vmatprep.subr.mxu0 0.0
        %8778 = vmatpush1.msra.mxu0 0.0
        %8779 = vmatprep.subr.mxu0 0.0
        %8780 = vmatpush1.msra.mxu0 0.0
        %8781 = vmatprep.subr.mxu0 0.0
        %8782 = vmatpush1.msra.mxu0 0.0
        %8783 = vmatprep.subr.mxu0 0.0
        %8784 = vmatpush1.msra.mxu0 0.0
        %8785 = vmatprep.subr.mxu0 0.0
        %8786 = vmatpush1.msra.mxu0 0.0
        %8787 = vmatprep.subr.mxu0 0.0
        %8788 = vmatpush1.msra.mxu0 0.0
        %8789 = vmatprep.subr.mxu0 0.0
        %8790 = vmatpush1.msra.mxu0 0.0
        %8791 = vmatprep.subr.mxu0 0.0
        %8792 = vmatpush1.msra.mxu0 0.0
        %8793 = vmatprep.subr.mxu0 0.0
        %8794 = vmatpush1.msra.mxu0 0.0
        %8795 = vmatprep.subr.mxu0 0.0
        %8796 = vmatpush1.msra.mxu0 0.0
        %8797 = vmatprep.subr.mxu0 0.0
        %8798 = vmatpush1.msra.mxu0 0.0
        %8799 = vmatprep.subr.mxu0 0.0
        %8800 = vmatpush1.msra.mxu0 0.0
        %8801 = vmatprep.subr.mxu0 0.0
        %8802 = vmatpush1.msra.mxu0 0.0
        %8803 = vmatprep.subr.mxu0 0.0
        %8804 = vmatpush1.msra.mxu0 0.0
        %8805 = vmatprep.subr.mxu0 0.0
        %8806 = vmatpush1.msra.mxu0 0.0
        %8807 = vmatprep.subr.mxu0 0.0
        %8808 = vmatpush1.msra.mxu0 0.0
        %8809 = vmatprep.subr.mxu0 0.0
        %8810 = vmatpush1.msra.mxu0 0.0
        %8811 = vmatprep.subr.mxu0 0.0
        %8812 = vmatpush1.msra.mxu0 0.0
        %8813 = vmatprep.subr.mxu0 0.0
        %8814 = vmatpush1.msra.mxu0 0.0
        %8815 = vmatprep.subr.mxu0 0.0
        %8816 = vmatpush1.msra.mxu0 0.0
        %8817 = vmatprep.mubr.f32.mxu0 0.0
        %8818 = vmatmul.mubr.f32.gmra.mrb[0].mxu0 %v8751
        %v8819 = vpop.f32.mrb[0].mxu0
        %v8820 = vadd.f32 %v8748, %v8819
        %v8821 = vpop.f32.mrb[0].mxu0
        %8822 = vdwg.mxu0
        %8823 = vst [vmem:[%s379] sm:$0x1] %v8820
        %v8824 = vld [vmem:[%s8] sm:$0xff]
        %v8825 = vld [vmem:[%s8 + $0x8] sm:$0xff]
        %v8826 = vld [vmem:[%s9] sm:$0x3]
        %v8828 = vlaneseq
        %v8829 = vshrl.u32 %v8828, 7
        %v8830 = vsub.s32 0, %v8829
        %v8831 = vrot.slane %v8826, %v8830
        %v8832 = vlaneseq
        %v8833 = vshrl.u32 %v8832, 7
        %v8834 = vsub.s32 1, %v8833
        %v8835 = vrot.slane %v8826, %v8834
        %v8839 = vsel %vm506, %v4641, 0
        %8841 = vmatprep.subr.mxu0 %v8825
        %8842 = vmatpush1.msra.mxu0 %v8824
        %8843 = vmatprep.subr.mxu0 0.0
        %8844 = vmatpush1.msra.mxu0 0.0
        %8845 = vmatprep.subr.mxu0 0.0
        %8846 = vmatpush1.msra.mxu0 0.0
        %8847 = vmatprep.subr.mxu0 0.0
        %8848 = vmatpush1.msra.mxu0 0.0
        %8849 = vmatprep.subr.mxu0 0.0
        %8850 = vmatpush1.msra.mxu0 0.0
        %8851 = vmatprep.subr.mxu0 0.0
        %8852 = vmatpush1.msra.mxu0 0.0
        %8853 = vmatprep.subr.mxu0 0.0
        %8854 = vmatpush1.msra.mxu0 0.0
        %8855 = vmatprep.subr.mxu0 0.0
        %8856 = vmatpush1.msra.mxu0 0.0
        %8857 = vmatprep.subr.mxu0 0.0
        %8858 = vmatpush1.msra.mxu0 0.0
        %8859 = vmatprep.subr.mxu0 0.0
        %8860 = vmatpush1.msra.mxu0 0.0
        %8861 = vmatprep.subr.mxu0 0.0
        %8862 = vmatpush1.msra.mxu0 0.0
        %8863 = vmatprep.subr.mxu0 0.0
        %8864 = vmatpush1.msra.mxu0 0.0
        %8865 = vmatprep.subr.mxu0 0.0
        %8866 = vmatpush1.msra.mxu0 0.0
        %8867 = vmatprep.subr.mxu0 0.0
        %8868 = vmatpush1.msra.mxu0 0.0
        %8869 = vmatprep.subr.mxu0 0.0
        %8870 = vmatpush1.msra.mxu0 0.0
        %8871 = vmatprep.subr.mxu0 0.0
        %8872 = vmatpush1.msra.mxu0 0.0
        %8873 = vmatprep.subr.mxu0 0.0
        %8874 = vmatpush1.msra.mxu0 0.0
        %8875 = vmatprep.subr.mxu0 0.0
        %8876 = vmatpush1.msra.mxu0 0.0
        %8877 = vmatprep.subr.mxu0 0.0
        %8878 = vmatpush1.msra.mxu0 0.0
        %8879 = vmatprep.subr.mxu0 0.0
        %8880 = vmatpush1.msra.mxu0 0.0
        %8881 = vmatprep.subr.mxu0 0.0
        %8882 = vmatpush1.msra.mxu0 0.0
        %8883 = vmatprep.subr.mxu0 0.0
        %8884 = vmatpush1.msra.mxu0 0.0
        %8885 = vmatprep.subr.mxu0 0.0
        %8886 = vmatpush1.msra.mxu0 0.0
        %8887 = vmatprep.subr.mxu0 0.0
        %8888 = vmatpush1.msra.mxu0 0.0
        %8889 = vmatprep.subr.mxu0 0.0
        %8890 = vmatpush1.msra.mxu0 0.0
        %8891 = vmatprep.subr.mxu0 0.0
        %8892 = vmatpush1.msra.mxu0 0.0
        %8893 = vmatprep.subr.mxu0 0.0
        %8894 = vmatpush1.msra.mxu0 0.0
        %8895 = vmatprep.subr.mxu0 0.0
        %8896 = vmatpush1.msra.mxu0 0.0
        %8897 = vmatprep.subr.mxu0 0.0
        %8898 = vmatpush1.msra.mxu0 0.0
        %8899 = vmatprep.subr.mxu0 0.0
        %8900 = vmatpush1.msra.mxu0 0.0
        %8901 = vmatprep.subr.mxu0 0.0
        %8902 = vmatpush1.msra.mxu0 0.0
        %8903 = vmatprep.subr.mxu0 0.0
        %8904 = vmatpush1.msra.mxu0 0.0
        %8905 = vmatprep.mubr.f32.mxu0 0.0
        %8906 = vmatmul.mubr.f32.gmra.mrb[0].mxu0 %v8839
        %v8907 = vpop.f32.mrb[0].mxu0
        %v8908 = vadd.f32 %v8831, %v8907
        %v8909 = vpop.f32.mrb[0].mxu0
        %v8910 = vadd.f32 %v8835, %v8909
        %8911 = vdwg.mxu0
        %vm8912 = vcmp.gt.f32.partialorder %v8908, 0.0
        %vm8913 = vcmp.gt.f32.partialorder %v8910, 0.0
        %v8914 = vmin.f32 %v8908, 0.0
        %v8915 = vmin.f32 %v8910, 0.0
        %v8916 = vmul.f32 %v8914, 1.442695
        %v8917 = vpow.pop %v8916
        %v8918 = vmul.f32 %v8915, 1.442695
        %v8919 = vpow.pop %v8918
        %v8920 = vsub.f32 %v8917, 1.0
        %v8921 = vsub.f32 %v8919, 1.0
        %v8922 = vsel %vm8912, %v8908, %v8920
        %v8923 = vsel %vm8913, %v8910, %v8921
        %v8924 = vadd.f32 %v8922, 1.0
        %v8925 = vadd.f32 %v8923, 1.0
        %v8928 = vcombine.low %v8924, %v8925
        %v8930 = vunpack.c.l.s4 1966171168
        %v8931 = vunpack.c.0.s8 %v8930
        %v8932 = vlaneseq
        %v8933 = vshrl.u32 %v8932, 7
        %v8934 = vsub.s32 %v8931, %v8933
        %v8935 = vrot.slane %v8928, %v8934
        %v8937 = vunpack.c.l.s4 1966171168
        %v8938 = vunpack.c.0.s8 %v8937
        %v8939 = vlaneseq
        %v8940 = vshrl.u32 %v8939, 7
        %v8941 = vsub.s32 %v8938, %v8940
        %v8942 = vrot.slane %v8935, %v8941
        %v8944 = vlaneseq
        %vm8945 = vcmp.ge.s32.totalorder %v8944, 0
        %vm8946 = vcmp.lt.s32.totalorder %v8944, 256
        %vm8947 = vmand %vm8945, %vm8946
        %8948 = vst.msk [vmem:[%s394] sm:$0x3] %vm8947, %v8942
        %s8949 = sand.u32 %s249, 1
        %s8950 = scalar_lea.sflag [#allocation4], %s8949
        %s8951 = sand.u32 %s249, 1
        %s8952 = scalar_lea.vmem [#allocation3], %s8951
        %p8953 = scmp.lt.s32.totalorder %s26, 1
        %s8954 = scalar_select %p8953, %s26, 1
        %s8955 = smul.addr %s8954, 2
        %s8956 = scalar_lea.vmem %s11, %s8955
        // Predicated region
        $region61: #{neuron_net_forward.1} parent=59 // pred_check
          %p8957 = pneg %p259
        $region62: #{neuron_net_forward.1} parent=59 // pred_check_branch
          %8959 = sbr.rel (%p8957) target = $region64
        $region63: #{neuron_net_forward.1} parent=59 // pred_region
          %s8961 = ssub.s32 16, 16
          %8962 = vsyncadd %s8950, %s8961
          %s8963 = smul.addr %s26, 16
          %s8964 = scalar_lea.hbm %s10, %s8963
          %s8966 = sshll.u32 %s8952, 4
          %s8967 = int_to_ptr.vmem [resolvable:$true] %s8966
          %8969 = dma.vmem_to_hbm [thread:$0]  %s8967, 16, %s8964, %s8950
        $region64: #{neuron_net_forward.1} parent=59 // pred_fallthru
          _
        // Predicated region
        $region65: #{neuron_net_forward.1} parent=59 // pred_check
          %p8970 = pneg %p285
        $region66: #{neuron_net_forward.1} parent=59 // pred_check_branch
          %8972 = sbr.rel (%p8970) target = $region68
        $region67: #{neuron_net_forward.1} parent=59 // pred_region
          _
        $region68: #{neuron_net_forward.1} parent=59 // pred_fallthru
          _
      $region60: #{neuron_net_forward.1} parent=5 // pred_fallthru
        _
      %p8973 = scmp.le.s32.totalorder 2, %s21
      // Predicated region
      $region69: #{neuron_net_forward.1} parent=5 // pred_check
        %p8974 = pneg %p8973
      $region70: #{neuron_net_forward.1} parent=5 // pred_check_branch
        %8976 = sbr.rel (%p8974) target = $region72
      $region71: #{neuron_net_forward.1} parent=5 // pred_region
        %s8977 = ssub.s32 %s21, 2
        // Predicated region
        $region73: #{neuron_net_forward.1} parent=71 // pred_check
          %p8978 = pneg %p265
        $region74: #{neuron_net_forward.1} parent=71 // pred_check_branch
          %8980 = sbr.rel (%p8978) target = $region76
        $region75: #{neuron_net_forward.1} parent=71 // pred_region
          %s8981 = sand.u32 %s250, 1
          %s8982 = scalar_lea.sflag [#allocation4], %s8981
          %s8983 = sand.u32 %s250, 1
          %s8984 = scalar_lea.vmem [#allocation3], %s8983
          %8985 = dma.done %s8982, 16
        $region76: #{neuron_net_forward.1} parent=71 // pred_fallthru
          _
        // Predicated region
        $region77: #{neuron_net_forward.1} parent=71 // pred_check
          %p8986 = pneg %p291
        $region78: #{neuron_net_forward.1} parent=71 // pred_check_branch
          %8988 = sbr.rel (%p8986) target = $region80
        $region79: #{neuron_net_forward.1} parent=71 // pred_region
          %p8989 = scmp.lt.s32.totalorder %s27, 1
          %s8990 = scalar_select %p8989, %s27, 1
          %s8991 = smul.addr %s8990, 2
          %s8992 = scalar_lea.vmem %s11, %s8991
        $region80: #{neuron_net_forward.1} parent=71 // pred_fallthru
          _
      $region72: #{neuron_net_forward.1} parent=5 // pred_fallthru
        _
    $region6: #{neuron_net_forward.1} parent=1 // loop_footer
      %s25 = sadd.s32 1, %s21
    $region7: #{neuron_net_forward.1} parent=1 // loop_footer_branch
      %20 = sbr.rel target = $region3
    $region8: #{neuron_net_forward.1} parent=1 // loop_exit
      _
    %8993 = vsyncpa [#allocation4], 1
    %s8994 = scalar_lea.sflag [#allocation4], 1
    %8995 = vsyncpa %s8994, 1

</llo_original>
